<compile_context>
chip_gen: v6e
topology: v6e:2x2x1
jax: 0.10.0
libtpu: 0.0.40
codegen_flags: <defaults>
</compile_context>

<pallas_src>
import functools

import jax
import jax.numpy as jnp
import numpy as np
from jax.experimental import pallas as pl
from jax.experimental.pallas import tpu as pltpu

BN_EPS = 1e-5
LANE = 128
# Per-step VMEM budget used to auto-pick the Ho tile (v7x-safe: 64 MiB minus
# pipeline / compiler headroom).
VMEM_BUDGET_BYTES = 40 << 20


def _round_up(x, m):
    return ((x + m - 1) // m) * m


def _largest_divisor_at_most(n, cap):
    cap = max(1, min(int(cap), n))
    for d in range(cap, 0, -1):
        if n % d == 0:
            return d
    return 1


def _per_step_vmem_bytes(ho_t, halo, Wo, Wp, Cp, Cop):
    """Approximate VMEM footprint of one grid step (blocks + scratch)."""
    xpad = (ho_t + halo) * Wp * Cp * 2        # bf16 padded row-tile scratch
    wblk = 2 * 9 * Cp * Cop * 2               # double-buffered branch weights
    oblk = 2 * ho_t * Wo * Cop * 2            # double-buffered bf16 out block
    acc = ho_t * Wo * Cop * 4                 # f32 accumulator (vregs/VMEM)
    misc = 2 << 20                            # shift block, relayouts, slack
    return xpad + wblk + oblk + 2 * acc + misc


def _pick_ho_tile(Ho, halo, Wo, Wp, Cp, Cop, budget):
    """Largest divisor of Ho whose per-step footprint fits the VMEM budget."""
    best = 1
    for cand in range(1, Ho + 1):
        if Ho % cand == 0 and _per_step_vmem_bytes(cand, halo, Wo, Wp, Cp,
                                                   Cop) <= budget:
            best = cand
    return best


def _aspp_kernel(x_hbm, w_ref, shift_ref, o_ref, xpad_ref, sem, *,
                 Ho_t, Wo, Cp, Cop, dils, offs):
    """One (batch, row-tile, branch) grid step.

    x_hbm     : ANY/HBM (N, Hp, Wp, Cp) bf16, spatially pre-padded NHWC input
    w_ref     : VMEM (1, 9, Cp, Cop)    bf16 folded weights for this branch
    shift_ref : VMEM (1, 1, Cop)        f32 folded bias/BN shift for this branch
    o_ref     : VMEM (1, 1, Ho_t, Wo, Cop) bf16 output row-tile
    xpad_ref  : VMEM (Ho_t + halo, Wp, Cp) bf16 padded row-tile scratch
    sem       : DMA semaphore
    """
    n = pl.program_id(0)
    t = pl.program_id(1)
    b = pl.program_id(2)
    nb = len(dils)
    Hpad_t = xpad_ref.shape[0]

    # Fill the padded row-tile scratch once per (n, t): direct HBM -> VMEM DMA
    # of the pre-padded image (no memset, no VMEM->VMEM copy).  The branch
    # axis is "arbitrary" (sequential on a core), so b == 0 always executes
    # first for every (n, t) a core is assigned.
    @pl.when(b == 0)
    def _():
        cp = pltpu.make_async_copy(
            x_hbm.at[n, pl.ds(t * Ho_t, Hpad_t), :, :], xpad_ref, sem)
        cp.start()
        cp.wait()

    # Static unroll over branches so every slice start (off + k*dil) is a
    # compile-time constant; only the matching branch runs at runtime.
    for bi in range(nb):
        @pl.when(b == bi)
        def _(bi=bi):
            d, off = dils[bi], offs[bi]
            acc = None
            for ky in range(3):                  # static taps -> static slices
                for kx in range(3):
                    y0 = off + ky * d
                    x0 = off + kx * d
                    patch = xpad_ref[y0:y0 + Ho_t, x0:x0 + Wo, :]
                    patch = patch.reshape(Ho_t * Wo, Cp)
                    w = w_ref[0, ky * 3 + kx]    # (Cp, Cop), bf16
                    contrib = jnp.dot(patch, w,
                                      preferred_element_type=jnp.float32)
                    acc = contrib if acc is None else acc + contrib
            y = jnp.maximum(acc + shift_ref[0], 0.0)   # (M, Cop) + (1, Cop)
            o_ref[0, 0] = y.reshape(Ho_t, Wo, Cop).astype(o_ref.dtype)


def aspp_v2plus_pallas(x_nchw, weights, biases, dilation_series, padding_series,
                       bn_gamma=None, bn_beta=None, bn_mean=None, bn_var=None,
                       bn_eps=BN_EPS, ho_tile=None,
                       vmem_budget_bytes=VMEM_BUDGET_BYTES):
    """Pallas implementation of ASPP_V2Plus.forward (eval-mode BN).

    x_nchw  : (N, Cin, H, W) float32
    weights : (nb, Cout, Cin, 3, 3) float32 (PyTorch OIHW layout)
    biases  : (nb, Cout) float32
    BN params default to freshly-initialized stats (gamma=1, beta=0, mean=0,
    var=1), matching the module right after __init__.
    returns : (N, nb*Cout, Ho, Wo) float32  == torch.cat([...], dim=1)
    """
    nb = len(dilation_series)
    N, Cin, H, W = x_nchw.shape
    Cout = weights.shape[1]

    # Per-branch output sizes must agree (required by the channel concat).
    ho_sizes = [H + 2 * p - 2 * d for d, p in zip(dilation_series, padding_series)]
    wo_sizes = [W + 2 * p - 2 * d for d, p in zip(dilation_series, padding_series)]
    assert len(set(ho_sizes)) == 1 and len(set(wo_sizes)) == 1, \
        "branches must agree on output spatial size"
    Ho, Wo = ho_sizes[0], wo_sizes[0]

    p_max = max(padding_series)
    dils = tuple(int(d) for d in dilation_series)
    offs = tuple(p_max - int(p) for p in padding_series)
    halo = max(o + 2 * d for o, d in zip(offs, dils))   # halo rows/cols per tile

    # Lane-dense channel padding (no-op when already a multiple of 128).
    Cp = _round_up(Cin, LANE)
    Cop = _round_up(Cout, LANE)

    # Padded image extent actually touched by the kernel.
    Hp = Ho + halo
    Wp = Wo + halo
    pad_top, pad_left = p_max, p_max
    pad_bottom = Hp - p_max - H
    pad_right = Wp - p_max - W
    assert pad_bottom >= 0 and pad_right >= 0

    # Row-tile size: auto from VMEM budget, or largest divisor <= override.
    if ho_tile is None:
        ho_t = _pick_ho_tile(Ho, halo, Wo, Wp, Cp, Cop, vmem_budget_bytes)
    else:
        ho_t = _largest_divisor_at_most(Ho, ho_tile)
    HT = Ho // ho_t
    Hpad_t = ho_t + halo

    for o, d in zip(offs, dils):                 # static bounds checks
        assert o + 2 * d + ho_t <= Hpad_t
        assert o + 2 * d + Wo <= Wp

    # ---- eval-mode BN folded into weights / shift --------------------------
    if bn_gamma is None:
        bn_gamma = jnp.ones((nb, Cout), jnp.float32)
    if bn_beta is None:
        bn_beta = jnp.zeros((nb, Cout), jnp.float32)
    if bn_mean is None:
        bn_mean = jnp.zeros((nb, Cout), jnp.float32)
    if bn_var is None:
        bn_var = jnp.ones((nb, Cout), jnp.float32)

    scale = bn_gamma / jnp.sqrt(bn_var + bn_eps)               # (nb, Cout)
    shift = (biases - bn_mean) * scale + bn_beta               # (nb, Cout)

    # OIHW -> (nb, 3, 3, Cin, Cout) -> (nb, 9, Cin, Cout), BN scale folded in.
    w = weights * scale[:, :, None, None, None]
    w = jnp.transpose(w, (0, 3, 4, 2, 1)).reshape(nb, 9, Cin, Cout)
    w = jnp.pad(w, ((0, 0), (0, 0), (0, Cp - Cin), (0, Cop - Cout)))
    w = w.astype(jnp.bfloat16)
    shift = jnp.pad(shift, ((0, 0), (0, Cop - Cout))).astype(jnp.float32)
    shift = shift[:, None, :]                                  # (nb, 1, Cop)

    # NCHW -> NHWC, spatial zero-pad (done once here; the kernel DMAs directly
    # into its padded scratch), lane-pad channels, bf16 for a single MXU pass.
    x_nhwc = jnp.transpose(x_nchw, (0, 2, 3, 1))
    x_pad = jnp.pad(x_nhwc, ((0, 0), (pad_top, pad_bottom),
                             (pad_left, pad_right), (0, Cp - Cin)))
    x_pad = x_pad.astype(jnp.bfloat16)

    kernel = functools.partial(_aspp_kernel, Ho_t=ho_t, Wo=Wo, Cp=Cp, Cop=Cop,
                               dils=dils, offs=offs)

    vmem_limit = int(min(128 << 20,
                         max(32 << 20,
                             _per_step_vmem_bytes(ho_t, halo, Wo, Wp, Cp, Cop)
                             + (8 << 20))))

    out5 = pl.pallas_call(
        kernel,
        out_shape=jax.ShapeDtypeStruct((N, nb, Ho, Wo, Cop), jnp.bfloat16),
        grid=(N, HT, nb),
        in_specs=[
            pl.BlockSpec(memory_space=pl.ANY),                      # padded image, HBM
            pl.BlockSpec((1, 9, Cp, Cop), lambda n, t, b: (b, 0, 0, 0)),
            pl.BlockSpec((1, 1, Cop), lambda n, t, b: (b, 0, 0)),
        ],
        out_specs=pl.BlockSpec((1, 1, ho_t, Wo, Cop),
                               lambda n, t, b: (n, b, t, 0, 0)),
        scratch_shapes=[pltpu.VMEM((Hpad_t, Wp, Cp), jnp.bfloat16),
                        pltpu.SemaphoreType.DMA],
        compiler_params=pltpu.CompilerParams(
            dimension_semantics=("parallel", "parallel", "arbitrary"),
            vmem_limit_bytes=vmem_limit),
    )(x_pad, w, shift)

    # (N, nb, Ho, Wo, Cop) -> drop channel padding -> (N, nb*Cout, Ho, Wo).
    out = out5[..., :Cout].astype(jnp.float32)
    out = jnp.transpose(out, (0, 1, 4, 2, 3)).reshape(N, nb * Cout, Ho, Wo)
    return out


def aspp_v2plus_reference(x_nchw, weights, biases, dilation_series, padding_series):
    """Plain-JAX reference matching the PyTorch module (eval-mode BN, f32)."""
    outs = []
    bn_scale = 1.0 / np.sqrt(1.0 + BN_EPS)
    for i, (d, p) in enumerate(zip(dilation_series, padding_series)):
        y = jax.lax.conv_general_dilated(
            x_nchw, weights[i],
            window_strides=(1, 1),
            padding=[(p, p), (p, p)],
            rhs_dilation=(d, d),
            dimension_numbers=("NCHW", "OIHW", "NCHW"),
            precision=jax.lax.Precision.HIGHEST)
        y = (y + biases[i][None, :, None, None]) * bn_scale
        outs.append(jnp.maximum(y, 0.0))
    return jnp.concatenate(outs, axis=1)


if __name__ == "__main__":
    # Small shapes consistent with the module: ASPP with 3 dilated branches.
    N, Cin, H, W = 2, 8, 16, 16
    Cout = 8
    dilation_series = [1, 2, 4]
    padding_series = [1, 2, 4]
    nb = len(dilation_series)

    key = jax.random.PRNGKey(0)
    k_x, k_w, k_b = jax.random.split(key, 3)

    x = jax.random.normal(k_x, (N, Cin, H, W), dtype=jnp.float32)

    # kaiming-normal-ish init (fan_in mode, a=0): std = sqrt(2/fan_in)
    fan_in = Cin * 3 * 3
    weights = jax.random.normal(k_w, (nb, Cout, Cin, 3, 3), dtype=jnp.float32)
    weights = weights * np.sqrt(2.0 / fan_in)
    biases = 0.1 * jax.random.normal(k_b, (nb, Cout), dtype=jnp.float32)

    # ho_tile=8 -> 2 row tiles, exercising the halo-tiled path on top of the
    # 2-batch "parallel" axis (4 parallel grid points x 3 sequential branches).
    out = aspp_v2plus_pallas(x, weights, biases, dilation_series, padding_series,
                             ho_tile=8)
    out = jax.block_until_ready(out)

    ref = aspp_v2plus_reference(x, weights, biases, dilation_series, padding_series)
    # bf16 MXU inputs/weights + bf16 output store (f32 accumulation) vs the
    # f32 HIGHEST reference -> loose tolerance.
    np.testing.assert_allclose(np.asarray(out), np.asarray(ref),
                               rtol=2e-2, atol=2e-2)
    assert out.shape == (N, nb * Cout, H, W)

    print("KERNEL_OK")
</pallas_src>

<mosaic_0001>
module attributes {stable_mosaic.version = 11 : i64} {
  func.func @_aspp_kernel(%arg0: i32, %arg1: i32, %arg2: i32, %arg3: memref<2x24x24x128xbf16, #tpu.memory_space<any>>, %arg4: memref<1x9x128x128xbf16, #tpu.memory_space<vmem>>, %arg5: memref<1x1x128xf32, #tpu.memory_space<vmem>>, %arg6: memref<1x1x8x16x128xbf16, #tpu.memory_space<vmem>>, %arg7: memref<16x24x128xbf16, #tpu.memory_space<vmem>>, %arg8: memref<!tpu.dma_semaphore, #tpu.memory_space<semaphore_mem>>) attributes {dimension_semantics = [#tpu.dimension_semantics<parallel>, #tpu.dimension_semantics<parallel>, #tpu.dimension_semantics<arbitrary>], iteration_bounds = array<i64: 2, 2, 3>, scalar_prefetch = 0 : i64, scratch_operands = 2 : i64, tpu.core_type = #tpu.core_type<tc>, window_params = [{}, {transform_indices = @transform_1, window_bounds = array<i64: 1, 9, 128, 128>}, {transform_indices = @transform_2, window_bounds = array<i64: 1, 1, 128>}, {transform_indices = @transform_3, window_bounds = array<i64: 1, 1, 8, 16, 128>}]} {
    %c0_i32 = arith.constant 0 : i32
    %0 = arith.cmpi eq, %arg2, %c0_i32 : i32
    %1 = arith.extui %0 : i1 to i32
    %c0_i32_0 = arith.constant 0 : i32
    %2 = arith.cmpi ne, %1, %c0_i32_0 : i32
    scf.if %2 {
      %c8_i32 = arith.constant 8 : i32
      %12 = arith.muli %arg1, %c8_i32 : i32
      %c0_i32_5 = arith.constant 0 : i32
      %c0_i32_6 = arith.constant 0 : i32
      %13 = tpu.memref_slice %arg3[%arg0, %12, %c0_i32_5, %c0_i32_6] : memref<2x24x24x128xbf16, #tpu.memory_space<any>> -> memref<1x16x24x128xbf16, #tpu.memory_space<any>>
      %14 = tpu.memref_squeeze %13 : memref<1x16x24x128xbf16, #tpu.memory_space<any>> -> memref<16x24x128xbf16, #tpu.memory_space<any>>
      tpu.enqueue_dma source(%14 : memref<16x24x128xbf16, #tpu.memory_space<any>>) target(%arg7 : memref<16x24x128xbf16, #tpu.memory_space<vmem>>) target_semaphore(%arg8 : memref<!tpu.dma_semaphore, #tpu.memory_space<semaphore_mem>>)
      %c0_i32_7 = arith.constant 0 : i32
      %c0_i32_8 = arith.constant 0 : i32
      %15 = tpu.memref_slice %arg3[%arg0, %12, %c0_i32_7, %c0_i32_8] : memref<2x24x24x128xbf16, #tpu.memory_space<any>> -> memref<1x16x24x128xbf16, #tpu.memory_space<any>>
      %16 = tpu.memref_squeeze %15 : memref<1x16x24x128xbf16, #tpu.memory_space<any>> -> memref<16x24x128xbf16, #tpu.memory_space<any>>
      tpu.wait_dma2 semaphore(%arg8 : memref<!tpu.dma_semaphore, #tpu.memory_space<semaphore_mem>>) src(%16 : memref<16x24x128xbf16, #tpu.memory_space<any>>) dst(%arg7 : memref<16x24x128xbf16, #tpu.memory_space<vmem>>)
    } else {
    }
    %c0_i32_1 = arith.constant 0 : i32
    %3 = arith.cmpi eq, %arg2, %c0_i32_1 : i32
    %4 = arith.extui %3 : i1 to i32
    %c0_i32_2 = arith.constant 0 : i32
    %5 = arith.cmpi ne, %4, %c0_i32_2 : i32
    scf.if %5 {
      %c3 = arith.constant 3 : index
      %c3_5 = arith.constant 3 : index
      %c0 = arith.constant 0 : index
      %12 = vector.load %arg7[%c3, %c3_5, %c0] : memref<16x24x128xbf16, #tpu.memory_space<vmem>>, vector<8x16x128xbf16>
      %13 = vector.shape_cast %12 : vector<8x16x128xbf16> to vector<128x128xbf16>
      %c0_6 = arith.constant 0 : index
      %c0_7 = arith.constant 0 : index
      %c0_8 = arith.constant 0 : index
      %c0_9 = arith.constant 0 : index
      %14 = vector.load %arg4[%c0_6, %c0_7, %c0_8, %c0_9] : memref<1x9x128x128xbf16, #tpu.memory_space<vmem>>, vector<1x1x128x128xbf16>
      %15 = vector.shape_cast %14 : vector<1x1x128x128xbf16> to vector<128x128xbf16>
      %cst = arith.constant dense<0.000000e+00> : vector<128x128xf32>
      %16 = tpu.matmul %13, %15, %cst {dimension_numbers = #tpu.dot_dimension_numbers<[1], [0], [0], [1], [0, 0, 1, 1], [], []>} : vector<128x128xbf16>, vector<128x128xbf16>, vector<128x128xf32> -> vector<128x128xf32>
      %c3_10 = arith.constant 3 : index
      %c4 = arith.constant 4 : index
      %c0_11 = arith.constant 0 : index
      %17 = vector.load %arg7[%c3_10, %c4, %c0_11] : memref<16x24x128xbf16, #tpu.memory_space<vmem>>, vector<8x16x128xbf16>
      %18 = vector.shape_cast %17 : vector<8x16x128xbf16> to vector<128x128xbf16>
      %c0_12 = arith.constant 0 : index
      %c1 = arith.constant 1 : index
      %c0_13 = arith.constant 0 : index
      %c0_14 = arith.constant 0 : index
      %19 = vector.load %arg4[%c0_12, %c1, %c0_13, %c0_14] : memref<1x9x128x128xbf16, #tpu.memory_space<vmem>>, vector<1x1x128x128xbf16>
      %20 = vector.shape_cast %19 : vector<1x1x128x128xbf16> to vector<128x128xbf16>
      %cst_15 = arith.constant dense<0.000000e+00> : vector<128x128xf32>
      %21 = tpu.matmul %18, %20, %cst_15 {dimension_numbers = #tpu.dot_dimension_numbers<[1], [0], [0], [1], [0, 0, 1, 1], [], []>} : vector<128x128xbf16>, vector<128x128xbf16>, vector<128x128xf32> -> vector<128x128xf32>
      %22 = arith.addf %16, %21 : vector<128x128xf32>
      %c3_16 = arith.constant 3 : index
      %c5 = arith.constant 5 : index
      %c0_17 = arith.constant 0 : index
      %23 = vector.load %arg7[%c3_16, %c5, %c0_17] : memref<16x24x128xbf16, #tpu.memory_space<vmem>>, vector<8x16x128xbf16>
      %24 = vector.shape_cast %23 : vector<8x16x128xbf16> to vector<128x128xbf16>
      %c0_18 = arith.constant 0 : index
      %c2 = arith.constant 2 : index
      %c0_19 = arith.constant 0 : index
      %c0_20 = arith.constant 0 : index
      %25 = vector.load %arg4[%c0_18, %c2, %c0_19, %c0_20] : memref<1x9x128x128xbf16, #tpu.memory_space<vmem>>, vector<1x1x128x128xbf16>
      %26 = vector.shape_cast %25 : vector<1x1x128x128xbf16> to vector<128x128xbf16>
      %cst_21 = arith.constant dense<0.000000e+00> : vector<128x128xf32>
      %27 = tpu.matmul %24, %26, %cst_21 {dimension_numbers = #tpu.dot_dimension_numbers<[1], [0], [0], [1], [0, 0, 1, 1], [], []>} : vector<128x128xbf16>, vector<128x128xbf16>, vector<128x128xf32> -> vector<128x128xf32>
      %28 = arith.addf %22, %27 : vector<128x128xf32>
      %c4_22 = arith.constant 4 : index
      %c3_23 = arith.constant 3 : index
      %c0_24 = arith.constant 0 : index
      %29 = vector.load %arg7[%c4_22, %c3_23, %c0_24] : memref<16x24x128xbf16, #tpu.memory_space<vmem>>, vector<8x16x128xbf16>
      %30 = vector.shape_cast %29 : vector<8x16x128xbf16> to vector<128x128xbf16>
      %c0_25 = arith.constant 0 : index
      %c3_26 = arith.constant 3 : index
      %c0_27 = arith.constant 0 : index
      %c0_28 = arith.constant 0 : index
      %31 = vector.load %arg4[%c0_25, %c3_26, %c0_27, %c0_28] : memref<1x9x128x128xbf16, #tpu.memory_space<vmem>>, vector<1x1x128x128xbf16>
      %32 = vector.shape_cast %31 : vector<1x1x128x128xbf16> to vector<128x128xbf16>
      %cst_29 = arith.constant dense<0.000000e+00> : vector<128x128xf32>
      %33 = tpu.matmul %30, %32, %cst_29 {dimension_numbers = #tpu.dot_dimension_numbers<[1], [0], [0], [1], [0, 0, 1, 1], [], []>} : vector<128x128xbf16>, vector<128x128xbf16>, vector<128x128xf32> -> vector<128x128xf32>
      %34 = arith.addf %28, %33 : vector<128x128xf32>
      %c4_30 = arith.constant 4 : index
      %c4_31 = arith.constant 4 : index
      %c0_32 = arith.constant 0 : index
      %35 = vector.load %arg7[%c4_30, %c4_31, %c0_32] : memref<16x24x128xbf16, #tpu.memory_space<vmem>>, vector<8x16x128xbf16>
      %36 = vector.shape_cast %35 : vector<8x16x128xbf16> to vector<128x128xbf16>
      %c0_33 = arith.constant 0 : index
      %c4_34 = arith.constant 4 : index
      %c0_35 = arith.constant 0 : index
      %c0_36 = arith.constant 0 : index
      %37 = vector.load %arg4[%c0_33, %c4_34, %c0_35, %c0_36] : memref<1x9x128x128xbf16, #tpu.memory_space<vmem>>, vector<1x1x128x128xbf16>
      %38 = vector.shape_cast %37 : vector<1x1x128x128xbf16> to vector<128x128xbf16>
      %cst_37 = arith.constant dense<0.000000e+00> : vector<128x128xf32>
      %39 = tpu.matmul %36, %38, %cst_37 {dimension_numbers = #tpu.dot_dimension_numbers<[1], [0], [0], [1], [0, 0, 1, 1], [], []>} : vector<128x128xbf16>, vector<128x128xbf16>, vector<128x128xf32> -> vector<128x128xf32>
      %40 = arith.addf %34, %39 : vector<128x128xf32>
      %c4_38 = arith.constant 4 : index
      %c5_39 = arith.constant 5 : index
      %c0_40 = arith.constant 0 : index
      %41 = vector.load %arg7[%c4_38, %c5_39, %c0_40] : memref<16x24x128xbf16, #tpu.memory_space<vmem>>, vector<8x16x128xbf16>
      %42 = vector.shape_cast %41 : vector<8x16x128xbf16> to vector<128x128xbf16>
      %c0_41 = arith.constant 0 : index
      %c5_42 = arith.constant 5 : index
      %c0_43 = arith.constant 0 : index
      %c0_44 = arith.constant 0 : index
      %43 = vector.load %arg4[%c0_41, %c5_42, %c0_43, %c0_44] : memref<1x9x128x128xbf16, #tpu.memory_space<vmem>>, vector<1x1x128x128xbf16>
      %44 = vector.shape_cast %43 : vector<1x1x128x128xbf16> to vector<128x128xbf16>
      %cst_45 = arith.constant dense<0.000000e+00> : vector<128x128xf32>
      %45 = tpu.matmul %42, %44, %cst_45 {dimension_numbers = #tpu.dot_dimension_numbers<[1], [0], [0], [1], [0, 0, 1, 1], [], []>} : vector<128x128xbf16>, vector<128x128xbf16>, vector<128x128xf32> -> vector<128x128xf32>
      %46 = arith.addf %40, %45 : vector<128x128xf32>
      %c5_46 = arith.constant 5 : index
      %c3_47 = arith.constant 3 : index
      %c0_48 = arith.constant 0 : index
      %47 = vector.load %arg7[%c5_46, %c3_47, %c0_48] : memref<16x24x128xbf16, #tpu.memory_space<vmem>>, vector<8x16x128xbf16>
      %48 = vector.shape_cast %47 : vector<8x16x128xbf16> to vector<128x128xbf16>
      %c0_49 = arith.constant 0 : index
      %c6 = arith.constant 6 : index
      %c0_50 = arith.constant 0 : index
      %c0_51 = arith.constant 0 : index
      %49 = vector.load %arg4[%c0_49, %c6, %c0_50, %c0_51] : memref<1x9x128x128xbf16, #tpu.memory_space<vmem>>, vector<1x1x128x128xbf16>
      %50 = vector.shape_cast %49 : vector<1x1x128x128xbf16> to vector<128x128xbf16>
      %cst_52 = arith.constant dense<0.000000e+00> : vector<128x128xf32>
      %51 = tpu.matmul %48, %50, %cst_52 {dimension_numbers = #tpu.dot_dimension_numbers<[1], [0], [0], [1], [0, 0, 1, 1], [], []>} : vector<128x128xbf16>, vector<128x128xbf16>, vector<128x128xf32> -> vector<128x128xf32>
      %52 = arith.addf %46, %51 : vector<128x128xf32>
      %c5_53 = arith.constant 5 : index
      %c4_54 = arith.constant 4 : index
      %c0_55 = arith.constant 0 : index
      %53 = vector.load %arg7[%c5_53, %c4_54, %c0_55] : memref<16x24x128xbf16, #tpu.memory_space<vmem>>, vector<8x16x128xbf16>
      %54 = vector.shape_cast %53 : vector<8x16x128xbf16> to vector<128x128xbf16>
      %c0_56 = arith.constant 0 : index
      %c7 = arith.constant 7 : index
      %c0_57 = arith.constant 0 : index
      %c0_58 = arith.constant 0 : index
      %55 = vector.load %arg4[%c0_56, %c7, %c0_57, %c0_58] : memref<1x9x128x128xbf16, #tpu.memory_space<vmem>>, vector<1x1x128x128xbf16>
      %56 = vector.shape_cast %55 : vector<1x1x128x128xbf16> to vector<128x128xbf16>
      %cst_59 = arith.constant dense<0.000000e+00> : vector<128x128xf32>
      %57 = tpu.matmul %54, %56, %cst_59 {dimension_numbers = #tpu.dot_dimension_numbers<[1], [0], [0], [1], [0, 0, 1, 1], [], []>} : vector<128x128xbf16>, vector<128x128xbf16>, vector<128x128xf32> -> vector<128x128xf32>
      %58 = arith.addf %52, %57 : vector<128x128xf32>
      %c5_60 = arith.constant 5 : index
      %c5_61 = arith.constant 5 : index
      %c0_62 = arith.constant 0 : index
      %59 = vector.load %arg7[%c5_60, %c5_61, %c0_62] : memref<16x24x128xbf16, #tpu.memory_space<vmem>>, vector<8x16x128xbf16>
      %60 = vector.shape_cast %59 : vector<8x16x128xbf16> to vector<128x128xbf16>
      %c0_63 = arith.constant 0 : index
      %c8 = arith.constant 8 : index
      %c0_64 = arith.constant 0 : index
      %c0_65 = arith.constant 0 : index
      %61 = vector.load %arg4[%c0_63, %c8, %c0_64, %c0_65] : memref<1x9x128x128xbf16, #tpu.memory_space<vmem>>, vector<1x1x128x128xbf16>
      %62 = vector.shape_cast %61 : vector<1x1x128x128xbf16> to vector<128x128xbf16>
      %cst_66 = arith.constant dense<0.000000e+00> : vector<128x128xf32>
      %63 = tpu.matmul %60, %62, %cst_66 {dimension_numbers = #tpu.dot_dimension_numbers<[1], [0], [0], [1], [0, 0, 1, 1], [], []>} : vector<128x128xbf16>, vector<128x128xbf16>, vector<128x128xf32> -> vector<128x128xf32>
      %64 = arith.addf %58, %63 : vector<128x128xf32>
      %c0_67 = arith.constant 0 : index
      %c0_68 = arith.constant 0 : index
      %c0_69 = arith.constant 0 : index
      %65 = vector.load %arg5[%c0_67, %c0_68, %c0_69] : memref<1x1x128xf32, #tpu.memory_space<vmem>>, vector<1x1x128xf32>
      %66 = vector.shape_cast %65 : vector<1x1x128xf32> to vector<1x128xf32>
      %67 = vector.broadcast %66 : vector<1x128xf32> to vector<128x128xf32>
      %68 = arith.addf %64, %67 : vector<128x128xf32>
      %cst_70 = arith.constant 0.000000e+00 : f32
      %69 = vector.broadcast %cst_70 : f32 to vector<128x128xf32>
      %70 = arith.maximumf %68, %69 : vector<128x128xf32>
      %71 = vector.shape_cast %70 : vector<128x128xf32> to vector<8x16x128xf32>
      %72 = arith.truncf %71 : vector<8x16x128xf32> to vector<8x16x128xbf16>
      %c0_71 = arith.constant 0 : index
      %c0_72 = arith.constant 0 : index
      %c0_73 = arith.constant 0 : index
      %c0_74 = arith.constant 0 : index
      %c0_75 = arith.constant 0 : index
      %73 = vector.load %arg6[%c0_71, %c0_72, %c0_73, %c0_74, %c0_75] : memref<1x1x8x16x128xbf16, #tpu.memory_space<vmem>>, vector<1x1x8x16x128xbf16>
      %74 = vector.shape_cast %73 : vector<1x1x8x16x128xbf16> to vector<8x16x128xbf16>
      %75 = vector.shape_cast %72 : vector<8x16x128xbf16> to vector<1x1x8x16x128xbf16>
      tpu.vector_store %arg6[%c0_71, %c0_72, %c0_73, %c0_74, %c0_75], %75 {strides = array<i32>} : memref<1x1x8x16x128xbf16, #tpu.memory_space<vmem>>, vector<1x1x8x16x128xbf16>,
    } else {
    }
    %c1_i32 = arith.constant 1 : i32
    %6 = arith.cmpi eq, %arg2, %c1_i32 : i32
    %7 = arith.extui %6 : i1 to i32
    %c0_i32_3 = arith.constant 0 : i32
    %8 = arith.cmpi ne, %7, %c0_i32_3 : i32
    scf.if %8 {
      %c2 = arith.constant 2 : index
      %c2_5 = arith.constant 2 : index
      %c0 = arith.constant 0 : index
      %12 = vector.load %arg7[%c2, %c2_5, %c0] : memref<16x24x128xbf16, #tpu.memory_space<vmem>>, vector<8x16x128xbf16>
      %13 = vector.shape_cast %12 : vector<8x16x128xbf16> to vector<128x128xbf16>
      %c0_6 = arith.constant 0 : index
      %c0_7 = arith.constant 0 : index
      %c0_8 = arith.constant 0 : index
      %c0_9 = arith.constant 0 : index
      %14 = vector.load %arg4[%c0_6, %c0_7, %c0_8, %c0_9] : memref<1x9x128x128xbf16, #tpu.memory_space<vmem>>, vector<1x1x128x128xbf16>
      %15 = vector.shape_cast %14 : vector<1x1x128x128xbf16> to vector<128x128xbf16>
      %cst = arith.constant dense<0.000000e+00> : vector<128x128xf32>
      %16 = tpu.matmul %13, %15, %cst {dimension_numbers = #tpu.dot_dimension_numbers<[1], [0], [0], [1], [0, 0, 1, 1], [], []>} : vector<128x128xbf16>, vector<128x128xbf16>, vector<128x128xf32> -> vector<128x128xf32>
      %c2_10 = arith.constant 2 : index
      %c4 = arith.constant 4 : index
      %c0_11 = arith.constant 0 : index
      %17 = vector.load %arg7[%c2_10, %c4, %c0_11] : memref<16x24x128xbf16, #tpu.memory_space<vmem>>, vector<8x16x128xbf16>
      %18 = vector.shape_cast %17 : vector<8x16x128xbf16> to vector<128x128xbf16>
      %c0_12 = arith.constant 0 : index
      %c1 = arith.constant 1 : index
      %c0_13 = arith.constant 0 : index
      %c0_14 = arith.constant 0 : index
      %19 = vector.load %arg4[%c0_12, %c1, %c0_13, %c0_14] : memref<1x9x128x128xbf16, #tpu.memory_space<vmem>>, vector<1x1x128x128xbf16>
      %20 = vector.shape_cast %19 : vector<1x1x128x128xbf16> to vector<128x128xbf16>
      %cst_15 = arith.constant dense<0.000000e+00> : vector<128x128xf32>
      %21 = tpu.matmul %18, %20, %cst_15 {dimension_numbers = #tpu.dot_dimension_numbers<[1], [0], [0], [1], [0, 0, 1, 1], [], []>} : vector<128x128xbf16>, vector<128x128xbf16>, vector<128x128xf32> -> vector<128x128xf32>
      %22 = arith.addf %16, %21 : vector<128x128xf32>
      %c2_16 = arith.constant 2 : index
      %c6 = arith.constant 6 : index
      %c0_17 = arith.constant 0 : index
      %23 = vector.load %arg7[%c2_16, %c6, %c0_17] : memref<16x24x128xbf16, #tpu.memory_space<vmem>>, vector<8x16x128xbf16>
      %24 = vector.shape_cast %23 : vector<8x16x128xbf16> to vector<128x128xbf16>
      %c0_18 = arith.constant 0 : index
      %c2_19 = arith.constant 2 : index
      %c0_20 = arith.constant 0 : index
      %c0_21 = arith.constant 0 : index
      %25 = vector.load %arg4[%c0_18, %c2_19, %c0_20, %c0_21] : memref<1x9x128x128xbf16, #tpu.memory_space<vmem>>, vector<1x1x128x128xbf16>
      %26 = vector.shape_cast %25 : vector<1x1x128x128xbf16> to vector<128x128xbf16>
      %cst_22 = arith.constant dense<0.000000e+00> : vector<128x128xf32>
      %27 = tpu.matmul %24, %26, %cst_22 {dimension_numbers = #tpu.dot_dimension_numbers<[1], [0], [0], [1], [0, 0, 1, 1], [], []>} : vector<128x128xbf16>, vector<128x128xbf16>, vector<128x128xf32> -> vector<128x128xf32>
      %28 = arith.addf %22, %27 : vector<128x128xf32>
      %c4_23 = arith.constant 4 : index
      %c2_24 = arith.constant 2 : index
      %c0_25 = arith.constant 0 : index
      %29 = vector.load %arg7[%c4_23, %c2_24, %c0_25] : memref<16x24x128xbf16, #tpu.memory_space<vmem>>, vector<8x16x128xbf16>
      %30 = vector.shape_cast %29 : vector<8x16x128xbf16> to vector<128x128xbf16>
      %c0_26 = arith.constant 0 : index
      %c3 = arith.constant 3 : index
      %c0_27 = arith.constant 0 : index
      %c0_28 = arith.constant 0 : index
      %31 = vector.load %arg4[%c0_26, %c3, %c0_27, %c0_28] : memref<1x9x128x128xbf16, #tpu.memory_space<vmem>>, vector<1x1x128x128xbf16>
      %32 = vector.shape_cast %31 : vector<1x1x128x128xbf16> to vector<128x128xbf16>
      %cst_29 = arith.constant dense<0.000000e+00> : vector<128x128xf32>
      %33 = tpu.matmul %30, %32, %cst_29 {dimension_numbers = #tpu.dot_dimension_numbers<[1], [0], [0], [1], [0, 0, 1, 1], [], []>} : vector<128x128xbf16>, vector<128x128xbf16>, vector<128x128xf32> -> vector<128x128xf32>
      %34 = arith.addf %28, %33 : vector<128x128xf32>
      %c4_30 = arith.constant 4 : index
      %c4_31 = arith.constant 4 : index
      %c0_32 = arith.constant 0 : index
      %35 = vector.load %arg7[%c4_30, %c4_31, %c0_32] : memref<16x24x128xbf16, #tpu.memory_space<vmem>>, vector<8x16x128xbf16>
      %36 = vector.shape_cast %35 : vector<8x16x128xbf16> to vector<128x128xbf16>
      %c0_33 = arith.constant 0 : index
      %c4_34 = arith.constant 4 : index
      %c0_35 = arith.constant 0 : index
      %c0_36 = arith.constant 0 : index
      %37 = vector.load %arg4[%c0_33, %c4_34, %c0_35, %c0_36] : memref<1x9x128x128xbf16, #tpu.memory_space<vmem>>, vector<1x1x128x128xbf16>
      %38 = vector.shape_cast %37 : vector<1x1x128x128xbf16> to vector<128x128xbf16>
      %cst_37 = arith.constant dense<0.000000e+00> : vector<128x128xf32>
      %39 = tpu.matmul %36, %38, %cst_37 {dimension_numbers = #tpu.dot_dimension_numbers<[1], [0], [0], [1], [0, 0, 1, 1], [], []>} : vector<128x128xbf16>, vector<128x128xbf16>, vector<128x128xf32> -> vector<128x128xf32>
      %40 = arith.addf %34, %39 : vector<128x128xf32>
      %c4_38 = arith.constant 4 : index
      %c6_39 = arith.constant 6 : index
      %c0_40 = arith.constant 0 : index
      %41 = vector.load %arg7[%c4_38, %c6_39, %c0_40] : memref<16x24x128xbf16, #tpu.memory_space<vmem>>, vector<8x16x128xbf16>
      %42 = vector.shape_cast %41 : vector<8x16x128xbf16> to vector<128x128xbf16>
      %c0_41 = arith.constant 0 : index
      %c5 = arith.constant 5 : index
      %c0_42 = arith.constant 0 : index
      %c0_43 = arith.constant 0 : index
      %43 = vector.load %arg4[%c0_41, %c5, %c0_42, %c0_43] : memref<1x9x128x128xbf16, #tpu.memory_space<vmem>>, vector<1x1x128x128xbf16>
      %44 = vector.shape_cast %43 : vector<1x1x128x128xbf16> to vector<128x128xbf16>
      %cst_44 = arith.constant dense<0.000000e+00> : vector<128x128xf32>
      %45 = tpu.matmul %42, %44, %cst_44 {dimension_numbers = #tpu.dot_dimension_numbers<[1], [0], [0], [1], [0, 0, 1, 1], [], []>} : vector<128x128xbf16>, vector<128x128xbf16>, vector<128x128xf32> -> vector<128x128xf32>
      %46 = arith.addf %40, %45 : vector<128x128xf32>
      %c6_45 = arith.constant 6 : index
      %c2_46 = arith.constant 2 : index
      %c0_47 = arith.constant 0 : index
      %47 = vector.load %arg7[%c6_45, %c2_46, %c0_47] : memref<16x24x128xbf16, #tpu.memory_space<vmem>>, vector<8x16x128xbf16>
      %48 = vector.shape_cast %47 : vector<8x16x128xbf16> to vector<128x128xbf16>
      %c0_48 = arith.constant 0 : index
      %c6_49 = arith.constant 6 : index
      %c0_50 = arith.constant 0 : index
      %c0_51 = arith.constant 0 : index
      %49 = vector.load %arg4[%c0_48, %c6_49, %c0_50, %c0_51] : memref<1x9x128x128xbf16, #tpu.memory_space<vmem>>, vector<1x1x128x128xbf16>
      %50 = vector.shape_cast %49 : vector<1x1x128x128xbf16> to vector<128x128xbf16>
      %cst_52 = arith.constant dense<0.000000e+00> : vector<128x128xf32>
      %51 = tpu.matmul %48, %50, %cst_52 {dimension_numbers = #tpu.dot_dimension_numbers<[1], [0], [0], [1], [0, 0, 1, 1], [], []>} : vector<128x128xbf16>, vector<128x128xbf16>, vector<128x128xf32> -> vector<128x128xf32>
      %52 = arith.addf %46, %51 : vector<128x128xf32>
      %c6_53 = arith.constant 6 : index
      %c4_54 = arith.constant 4 : index
      %c0_55 = arith.constant 0 : index
      %53 = vector.load %arg7[%c6_53, %c4_54, %c0_55] : memref<16x24x128xbf16, #tpu.memory_space<vmem>>, vector<8x16x128xbf16>
      %54 = vector.shape_cast %53 : vector<8x16x128xbf16> to vector<128x128xbf16>
      %c0_56 = arith.constant 0 : index
      %c7 = arith.constant 7 : index
      %c0_57 = arith.constant 0 : index
      %c0_58 = arith.constant 0 : index
      %55 = vector.load %arg4[%c0_56, %c7, %c0_57, %c0_58] : memref<1x9x128x128xbf16, #tpu.memory_space<vmem>>, vector<1x1x128x128xbf16>
      %56 = vector.shape_cast %55 : vector<1x1x128x128xbf16> to vector<128x128xbf16>
      %cst_59 = arith.constant dense<0.000000e+00> : vector<128x128xf32>
      %57 = tpu.matmul %54, %56, %cst_59 {dimension_numbers = #tpu.dot_dimension_numbers<[1], [0], [0], [1], [0, 0, 1, 1], [], []>} : vector<128x128xbf16>, vector<128x128xbf16>, vector<128x128xf32> -> vector<128x128xf32>
      %58 = arith.addf %52, %57 : vector<128x128xf32>
      %c6_60 = arith.constant 6 : index
      %c6_61 = arith.constant 6 : index
      %c0_62 = arith.constant 0 : index
      %59 = vector.load %arg7[%c6_60, %c6_61, %c0_62] : memref<16x24x128xbf16, #tpu.memory_space<vmem>>, vector<8x16x128xbf16>
      %60 = vector.shape_cast %59 : vector<8x16x128xbf16> to vector<128x128xbf16>
      %c0_63 = arith.constant 0 : index
      %c8 = arith.constant 8 : index
      %c0_64 = arith.constant 0 : index
      %c0_65 = arith.constant 0 : index
      %61 = vector.load %arg4[%c0_63, %c8, %c0_64, %c0_65] : memref<1x9x128x128xbf16, #tpu.memory_space<vmem>>, vector<1x1x128x128xbf16>
      %62 = vector.shape_cast %61 : vector<1x1x128x128xbf16> to vector<128x128xbf16>
      %cst_66 = arith.constant dense<0.000000e+00> : vector<128x128xf32>
      %63 = tpu.matmul %60, %62, %cst_66 {dimension_numbers = #tpu.dot_dimension_numbers<[1], [0], [0], [1], [0, 0, 1, 1], [], []>} : vector<128x128xbf16>, vector<128x128xbf16>, vector<128x128xf32> -> vector<128x128xf32>
      %64 = arith.addf %58, %63 : vector<128x128xf32>
      %c0_67 = arith.constant 0 : index
      %c0_68 = arith.constant 0 : index
      %c0_69 = arith.constant 0 : index
      %65 = vector.load %arg5[%c0_67, %c0_68, %c0_69] : memref<1x1x128xf32, #tpu.memory_space<vmem>>, vector<1x1x128xf32>
      %66 = vector.shape_cast %65 : vector<1x1x128xf32> to vector<1x128xf32>
      %67 = vector.broadcast %66 : vector<1x128xf32> to vector<128x128xf32>
      %68 = arith.addf %64, %67 : vector<128x128xf32>
      %cst_70 = arith.constant 0.000000e+00 : f32
      %69 = vector.broadcast %cst_70 : f32 to vector<128x128xf32>
      %70 = arith.maximumf %68, %69 : vector<128x128xf32>
      %71 = vector.shape_cast %70 : vector<128x128xf32> to vector<8x16x128xf32>
      %72 = arith.truncf %71 : vector<8x16x128xf32> to vector<8x16x128xbf16>
      %c0_71 = arith.constant 0 : index
      %c0_72 = arith.constant 0 : index
      %c0_73 = arith.constant 0 : index
      %c0_74 = arith.constant 0 : index
      %c0_75 = arith.constant 0 : index
      %73 = vector.load %arg6[%c0_71, %c0_72, %c0_73, %c0_74, %c0_75] : memref<1x1x8x16x128xbf16, #tpu.memory_space<vmem>>, vector<1x1x8x16x128xbf16>
      %74 = vector.shape_cast %73 : vector<1x1x8x16x128xbf16> to vector<8x16x128xbf16>
      %75 = vector.shape_cast %72 : vector<8x16x128xbf16> to vector<1x1x8x16x128xbf16>
      tpu.vector_store %arg6[%c0_71, %c0_72, %c0_73, %c0_74, %c0_75], %75 {strides = array<i32>} : memref<1x1x8x16x128xbf16, #tpu.memory_space<vmem>>, vector<1x1x8x16x128xbf16>,
    } else {
    }
    %c2_i32 = arith.constant 2 : i32
    %9 = arith.cmpi eq, %arg2, %c2_i32 : i32
    %10 = arith.extui %9 : i1 to i32
    %c0_i32_4 = arith.constant 0 : i32
    %11 = arith.cmpi ne, %10, %c0_i32_4 : i32
    scf.if %11 {
      %c0 = arith.constant 0 : index
      %c0_5 = arith.constant 0 : index
      %c0_6 = arith.constant 0 : index
      %12 = vector.load %arg7[%c0, %c0_5, %c0_6] : memref<16x24x128xbf16, #tpu.memory_space<vmem>>, vector<8x16x128xbf16>
      %13 = vector.shape_cast %12 : vector<8x16x128xbf16> to vector<128x128xbf16>
      %c0_7 = arith.constant 0 : index
      %c0_8 = arith.constant 0 : index
      %c0_9 = arith.constant 0 : index
      %c0_10 = arith.constant 0 : index
      %14 = vector.load %arg4[%c0_7, %c0_8, %c0_9, %c0_10] : memref<1x9x128x128xbf16, #tpu.memory_space<vmem>>, vector<1x1x128x128xbf16>
      %15 = vector.shape_cast %14 : vector<1x1x128x128xbf16> to vector<128x128xbf16>
      %cst = arith.constant dense<0.000000e+00> : vector<128x128xf32>
      %16 = tpu.matmul %13, %15, %cst {dimension_numbers = #tpu.dot_dimension_numbers<[1], [0], [0], [1], [0, 0, 1, 1], [], []>} : vector<128x128xbf16>, vector<128x128xbf16>, vector<128x128xf32> -> vector<128x128xf32>
      %c0_11 = arith.constant 0 : index
      %c4 = arith.constant 4 : index
      %c0_12 = arith.constant 0 : index
      %17 = vector.load %arg7[%c0_11, %c4, %c0_12] : memref<16x24x128xbf16, #tpu.memory_space<vmem>>, vector<8x16x128xbf16>
      %18 = vector.shape_cast %17 : vector<8x16x128xbf16> to vector<128x128xbf16>
      %c0_13 = arith.constant 0 : index
      %c1 = arith.constant 1 : index
      %c0_14 = arith.constant 0 : index
      %c0_15 = arith.constant 0 : index
      %19 = vector.load %arg4[%c0_13, %c1, %c0_14, %c0_15] : memref<1x9x128x128xbf16, #tpu.memory_space<vmem>>, vector<1x1x128x128xbf16>
      %20 = vector.shape_cast %19 : vector<1x1x128x128xbf16> to vector<128x128xbf16>
      %cst_16 = arith.constant dense<0.000000e+00> : vector<128x128xf32>
      %21 = tpu.matmul %18, %20, %cst_16 {dimension_numbers = #tpu.dot_dimension_numbers<[1], [0], [0], [1], [0, 0, 1, 1], [], []>} : vector<128x128xbf16>, vector<128x128xbf16>, vector<128x128xf32> -> vector<128x128xf32>
      %22 = arith.addf %16, %21 : vector<128x128xf32>
      %c0_17 = arith.constant 0 : index
      %c8 = arith.constant 8 : index
      %c0_18 = arith.constant 0 : index
      %23 = vector.load %arg7[%c0_17, %c8, %c0_18] : memref<16x24x128xbf16, #tpu.memory_space<vmem>>, vector<8x16x128xbf16>
      %24 = vector.shape_cast %23 : vector<8x16x128xbf16> to vector<128x128xbf16>
      %c0_19 = arith.constant 0 : index
      %c2 = arith.constant 2 : index
      %c0_20 = arith.constant 0 : index
      %c0_21 = arith.constant 0 : index
      %25 = vector.load %arg4[%c0_19, %c2, %c0_20, %c0_21] : memref<1x9x128x128xbf16, #tpu.memory_space<vmem>>, vector<1x1x128x128xbf16>
      %26 = vector.shape_cast %25 : vector<1x1x128x128xbf16> to vector<128x128xbf16>
      %cst_22 = arith.constant dense<0.000000e+00> : vector<128x128xf32>
      %27 = tpu.matmul %24, %26, %cst_22 {dimension_numbers = #tpu.dot_dimension_numbers<[1], [0], [0], [1], [0, 0, 1, 1], [], []>} : vector<128x128xbf16>, vector<128x128xbf16>, vector<128x128xf32> -> vector<128x128xf32>
      %28 = arith.addf %22, %27 : vector<128x128xf32>
      %c4_23 = arith.constant 4 : index
      %c0_24 = arith.constant 0 : index
      %c0_25 = arith.constant 0 : index
      %29 = vector.load %arg7[%c4_23, %c0_24, %c0_25] : memref<16x24x128xbf16, #tpu.memory_space<vmem>>, vector<8x16x128xbf16>
      %30 = vector.shape_cast %29 : vector<8x16x128xbf16> to vector<128x128xbf16>
      %c0_26 = arith.constant 0 : index
      %c3 = arith.constant 3 : index
      %c0_27 = arith.constant 0 : index
      %c0_28 = arith.constant 0 : index
      %31 = vector.load %arg4[%c0_26, %c3, %c0_27, %c0_28] : memref<1x9x128x128xbf16, #tpu.memory_space<vmem>>, vector<1x1x128x128xbf16>
      %32 = vector.shape_cast %31 : vector<1x1x128x128xbf16> to vector<128x128xbf16>
      %cst_29 = arith.constant dense<0.000000e+00> : vector<128x128xf32>
      %33 = tpu.matmul %30, %32, %cst_29 {dimension_numbers = #tpu.dot_dimension_numbers<[1], [0], [0], [1], [0, 0, 1, 1], [], []>} : vector<128x128xbf16>, vector<128x128xbf16>, vector<128x128xf32> -> vector<128x128xf32>
      %34 = arith.addf %28, %33 : vector<128x128xf32>
      %c4_30 = arith.constant 4 : index
      %c4_31 = arith.constant 4 : index
      %c0_32 = arith.constant 0 : index
      %35 = vector.load %arg7[%c4_30, %c4_31, %c0_32] : memref<16x24x128xbf16, #tpu.memory_space<vmem>>, vector<8x16x128xbf16>
      %36 = vector.shape_cast %35 : vector<8x16x128xbf16> to vector<128x128xbf16>
      %c0_33 = arith.constant 0 : index
      %c4_34 = arith.constant 4 : index
      %c0_35 = arith.constant 0 : index
      %c0_36 = arith.constant 0 : index
      %37 = vector.load %arg4[%c0_33, %c4_34, %c0_35, %c0_36] : memref<1x9x128x128xbf16, #tpu.memory_space<vmem>>, vector<1x1x128x128xbf16>
      %38 = vector.shape_cast %37 : vector<1x1x128x128xbf16> to vector<128x128xbf16>
      %cst_37 = arith.constant dense<0.000000e+00> : vector<128x128xf32>
      %39 = tpu.matmul %36, %38, %cst_37 {dimension_numbers = #tpu.dot_dimension_numbers<[1], [0], [0], [1], [0, 0, 1, 1], [], []>} : vector<128x128xbf16>, vector<128x128xbf16>, vector<128x128xf32> -> vector<128x128xf32>
      %40 = arith.addf %34, %39 : vector<128x128xf32>
      %c4_38 = arith.constant 4 : index
      %c8_39 = arith.constant 8 : index
      %c0_40 = arith.constant 0 : index
      %41 = vector.load %arg7[%c4_38, %c8_39, %c0_40] : memref<16x24x128xbf16, #tpu.memory_space<vmem>>, vector<8x16x128xbf16>
      %42 = vector.shape_cast %41 : vector<8x16x128xbf16> to vector<128x128xbf16>
      %c0_41 = arith.constant 0 : index
      %c5 = arith.constant 5 : index
      %c0_42 = arith.constant 0 : index
      %c0_43 = arith.constant 0 : index
      %43 = vector.load %arg4[%c0_41, %c5, %c0_42, %c0_43] : memref<1x9x128x128xbf16, #tpu.memory_space<vmem>>, vector<1x1x128x128xbf16>
      %44 = vector.shape_cast %43 : vector<1x1x128x128xbf16> to vector<128x128xbf16>
      %cst_44 = arith.constant dense<0.000000e+00> : vector<128x128xf32>
      %45 = tpu.matmul %42, %44, %cst_44 {dimension_numbers = #tpu.dot_dimension_numbers<[1], [0], [0], [1], [0, 0, 1, 1], [], []>} : vector<128x128xbf16>, vector<128x128xbf16>, vector<128x128xf32> -> vector<128x128xf32>
      %46 = arith.addf %40, %45 : vector<128x128xf32>
      %c8_45 = arith.constant 8 : index
      %c0_46 = arith.constant 0 : index
      %c0_47 = arith.constant 0 : index
      %47 = vector.load %arg7[%c8_45, %c0_46, %c0_47] : memref<16x24x128xbf16, #tpu.memory_space<vmem>>, vector<8x16x128xbf16>
      %48 = vector.shape_cast %47 : vector<8x16x128xbf16> to vector<128x128xbf16>
      %c0_48 = arith.constant 0 : index
      %c6 = arith.constant 6 : index
      %c0_49 = arith.constant 0 : index
      %c0_50 = arith.constant 0 : index
      %49 = vector.load %arg4[%c0_48, %c6, %c0_49, %c0_50] : memref<1x9x128x128xbf16, #tpu.memory_space<vmem>>, vector<1x1x128x128xbf16>
      %50 = vector.shape_cast %49 : vector<1x1x128x128xbf16> to vector<128x128xbf16>
      %cst_51 = arith.constant dense<0.000000e+00> : vector<128x128xf32>
      %51 = tpu.matmul %48, %50, %cst_51 {dimension_numbers = #tpu.dot_dimension_numbers<[1], [0], [0], [1], [0, 0, 1, 1], [], []>} : vector<128x128xbf16>, vector<128x128xbf16>, vector<128x128xf32> -> vector<128x128xf32>
      %52 = arith.addf %46, %51 : vector<128x128xf32>
      %c8_52 = arith.constant 8 : index
      %c4_53 = arith.constant 4 : index
      %c0_54 = arith.constant 0 : index
      %53 = vector.load %arg7[%c8_52, %c4_53, %c0_54] : memref<16x24x128xbf16, #tpu.memory_space<vmem>>, vector<8x16x128xbf16>
      %54 = vector.shape_cast %53 : vector<8x16x128xbf16> to vector<128x128xbf16>
      %c0_55 = arith.constant 0 : index
      %c7 = arith.constant 7 : index
      %c0_56 = arith.constant 0 : index
      %c0_57 = arith.constant 0 : index
      %55 = vector.load %arg4[%c0_55, %c7, %c0_56, %c0_57] : memref<1x9x128x128xbf16, #tpu.memory_space<vmem>>, vector<1x1x128x128xbf16>
      %56 = vector.shape_cast %55 : vector<1x1x128x128xbf16> to vector<128x128xbf16>
      %cst_58 = arith.constant dense<0.000000e+00> : vector<128x128xf32>
      %57 = tpu.matmul %54, %56, %cst_58 {dimension_numbers = #tpu.dot_dimension_numbers<[1], [0], [0], [1], [0, 0, 1, 1], [], []>} : vector<128x128xbf16>, vector<128x128xbf16>, vector<128x128xf32> -> vector<128x128xf32>
      %58 = arith.addf %52, %57 : vector<128x128xf32>
      %c8_59 = arith.constant 8 : index
      %c8_60 = arith.constant 8 : index
      %c0_61 = arith.constant 0 : index
      %59 = vector.load %arg7[%c8_59, %c8_60, %c0_61] : memref<16x24x128xbf16, #tpu.memory_space<vmem>>, vector<8x16x128xbf16>
      %60 = vector.shape_cast %59 : vector<8x16x128xbf16> to vector<128x128xbf16>
      %c0_62 = arith.constant 0 : index
      %c8_63 = arith.constant 8 : index
      %c0_64 = arith.constant 0 : index
      %c0_65 = arith.constant 0 : index
      %61 = vector.load %arg4[%c0_62, %c8_63, %c0_64, %c0_65] : memref<1x9x128x128xbf16, #tpu.memory_space<vmem>>, vector<1x1x128x128xbf16>
      %62 = vector.shape_cast %61 : vector<1x1x128x128xbf16> to vector<128x128xbf16>
      %cst_66 = arith.constant dense<0.000000e+00> : vector<128x128xf32>
      %63 = tpu.matmul %60, %62, %cst_66 {dimension_numbers = #tpu.dot_dimension_numbers<[1], [0], [0], [1], [0, 0, 1, 1], [], []>} : vector<128x128xbf16>, vector<128x128xbf16>, vector<128x128xf32> -> vector<128x128xf32>
      %64 = arith.addf %58, %63 : vector<128x128xf32>
      %c0_67 = arith.constant 0 : index
      %c0_68 = arith.constant 0 : index
      %c0_69 = arith.constant 0 : index
      %65 = vector.load %arg5[%c0_67, %c0_68, %c0_69] : memref<1x1x128xf32, #tpu.memory_space<vmem>>, vector<1x1x128xf32>
      %66 = vector.shape_cast %65 : vector<1x1x128xf32> to vector<1x128xf32>
      %67 = vector.broadcast %66 : vector<1x128xf32> to vector<128x128xf32>
      %68 = arith.addf %64, %67 : vector<128x128xf32>
      %cst_70 = arith.constant 0.000000e+00 : f32
      %69 = vector.broadcast %cst_70 : f32 to vector<128x128xf32>
      %70 = arith.maximumf %68, %69 : vector<128x128xf32>
      %71 = vector.shape_cast %70 : vector<128x128xf32> to vector<8x16x128xf32>
      %72 = arith.truncf %71 : vector<8x16x128xf32> to vector<8x16x128xbf16>
      %c0_71 = arith.constant 0 : index
      %c0_72 = arith.constant 0 : index
      %c0_73 = arith.constant 0 : index
      %c0_74 = arith.constant 0 : index
      %c0_75 = arith.constant 0 : index
      %73 = vector.load %arg6[%c0_71, %c0_72, %c0_73, %c0_74, %c0_75] : memref<1x1x8x16x128xbf16, #tpu.memory_space<vmem>>, vector<1x1x8x16x128xbf16>
      %74 = vector.shape_cast %73 : vector<1x1x8x16x128xbf16> to vector<8x16x128xbf16>
      %75 = vector.shape_cast %72 : vector<8x16x128xbf16> to vector<1x1x8x16x128xbf16>
      tpu.vector_store %arg6[%c0_71, %c0_72, %c0_73, %c0_74, %c0_75], %75 {strides = array<i32>} : memref<1x1x8x16x128xbf16, #tpu.memory_space<vmem>>, vector<1x1x8x16x128xbf16>,
    } else {
    }
    return
  }
  func.func @transform_1(%arg0: i32, %arg1: i32, %arg2: i32) -> (i32, i32, i32, i32) {
    %c0_i32 = arith.constant 0 : i32
    %c0_i32_0 = arith.constant 0 : i32
    %c0_i32_1 = arith.constant 0 : i32
    %c0_i32_2 = arith.constant 0 : i32
    return %arg2, %c0_i32, %c0_i32_0, %c0_i32_1 : i32, i32, i32, i32
  }
  func.func @transform_2(%arg0: i32, %arg1: i32, %arg2: i32) -> (i32, i32, i32) {
    %c0_i32 = arith.constant 0 : i32
    %c0_i32_0 = arith.constant 0 : i32
    %c0_i32_1 = arith.constant 0 : i32
    return %arg2, %c0_i32, %c0_i32_0 : i32, i32, i32
  }
  func.func @transform_3(%arg0: i32, %arg1: i32, %arg2: i32) -> (i32, i32, i32, i32, i32) {
    %c0_i32 = arith.constant 0 : i32
    %c0_i32_0 = arith.constant 0 : i32
    %c0_i32_1 = arith.constant 0 : i32
    return %arg0, %arg2, %arg1, %c0_i32, %c0_i32_0 : i32, i32, i32, i32, i32
  }
}

</mosaic_0001>

<llo_original>
// kernel: tpu_custom_call.1
$region0: #{tpu_custom_call.1}
  #allocation0 [shape = 'u32[]', space=smem, size = 0x4, offset = 0x4, fixed_abs, tag = 'smem constant byte address 0x4 - core index']
  #allocation1 [shape = 'u32[144,128]{1,0:T(1,128)}', space=vmem, size = 0x12000, scoped, tag = 'internal scratch']
  #allocation2 [shape = 'bf16[16,24,128]{2,1,0:T(8,128)(2,1)}', space=vmem, size = 0x18000, scoped, tag = 'scratch operand']
  #allocation3 [shape = 's32[1]{0}', space=sflag, size = 0x4, scoped, tag = 'scratch operand']
  #allocation8 [shape = 's32[]', space=sflag, size = 0x4, offset = 0, fixed_abs, tag = 'sflag constant byte address 0x0 - dummy sync flag']
  #allocation9 [shape = 's32[]', space=sflag, size = 0x4, offset = 0, fixed_abs, tag = 'sflag constant byte address 0x0 - dummy sync flag']
  #allocation10 [shape = 'u32[]', space=smem, size = 0x4, offset = 0x44, fixed_abs, tag = 'smem constant byte address 0x44 - assertion arg 0']
  #allocation11 [shape = 'u32[]', space=smem, size = 0x4, offset = 0x48, fixed_abs, tag = 'smem constant byte address 0x48 - assertion arg 1']
  %s0 = inlined_call_operand.hbm [shape: bf16[2,24,24,128], index: 0, kind: input, shape index: {}]
  %s1 = inlined_call_operand.hbm [shape: bf16[3,9,128,128], index: 1, kind: input, shape index: {}]
  %s2 = inlined_call_operand.vmem [shape: f32[3,1,128], index: 2, kind: input, shape index: {}]
  %s3 = inlined_call_operand.hbm [shape: bf16[2,3,16,16,128], index: 3, kind: output, shape index: {}]
  %s4 = sld [smem:[#allocation0]]
  $region61: #{tpu_custom_call.1} parent=0
    _
  %s6 = ssub.s32 1, %s4
  %s7 = scalar_select 0, %s6, %s4
  $region1: #{tpu_custom_call.1} parent=0
    #allocation4 [shape = 'u8[589824]{0}', space=vmem, size = 0x90000, scoped, tag = 'input window, operand 1']
    #allocation5 [shape = 's32[2]{0}', space=sflag, size = 0x8, scoped, tag = 'scoped memory for tpu_custom_call.1']
    #allocation6 [shape = 's32[2]{0}', space=sflag, size = 0x8, scoped, tag = 'scoped memory for tpu_custom_call.1']
    #allocation7 [shape = 'u8[65536]{0}', space=vmem, size = 0x10000, scoped, tag = 'output window, operand 0']
    %8 = vsyncpa [#allocation5], 0
    %s9 = scalar_lea.sflag [#allocation5], 1
    %10 = vsyncpa %s9, 0
    %11 = vsyncpa [#allocation6], 0
    %s12 = scalar_lea.sflag [#allocation6], 1
    %13 = vsyncpa %s12, 0
    loop: start=0, step=1, limit=14
    $region2: #{tpu_custom_call.1} parent=1 // loop_pre_header
      _
    $region3: #{tpu_custom_call.1} parent=1 // loop_header
      %s15 = sphi 0, %s19
      %p16 = scmp.ge.s32.totalorder %s15, 14
      %s22 = sphi 0, %s41
      %s23 = sphi 0, %s37
      %s24 = sphi 0, %s33
      %s25 = sphi 0, %s22
      %s26 = sphi 0, %s23
      %s27 = sphi 0, %s24
      %s28 = sphi 0, %s25
      %s29 = sphi 0, %s26
      %s30 = sphi 0, %s27
      %s44 = sphi 0, %s46
      %s47 = sphi 0, %s44
      %s48 = sphi 0, %s47
      %s64 = sphi 0, %s48
      %s70 = sphi 0, %s72
      %s73 = sphi 0, %s70
      %s74 = sphi 0, %s73
      %s90 = sphi 0, %s74
      %s100 = sphi 0, %s102
      %s103 = sphi 0, %s100
      %s104 = sphi 0, %s103
      %s120 = sphi 0, %s104
    $region4: #{tpu_custom_call.1} parent=1 // loop_header_branch
      %18 = sbr.rel (%p16) target = $region8
    $region5: #{tpu_custom_call.1} parent=1 // loop_body
      %s20 = ssub.s32 %s15, 1
      %s21 = ssub.s32 %s15, 2
      %s31 = sadd.s32 1, %s24
      %p32 = scmp.ge.s32.totalorder %s31, 3
      %s33 = scalar_select %p32, 0, %s31
      %s34 = sadd.s32 1, %s23
      %s35 = scalar_select %p32, %s34, %s23
      %p36 = scmp.ge.s32.totalorder %s35, 2
      %s37 = scalar_select %p36, 0, %s35
      %s38 = sadd.s32 1, %s22
      %s39 = scalar_select %p36, %s38, %s22
      %p40 = scmp.ge.s32.totalorder %s39, 2
      %s41 = scalar_select %p40, 0, %s39
      %s42 = ssub.s32 %s24, %s33
      %p43 = scmp.eq.s32.totalorder %s42, 0
      %s45 = sadd.s32 %s44, 1
      %s46 = scalar_select %p43, %s44, %s45
      %p49 = pneg %p43
      %p50 = scmp.eq.s32.totalorder %s15, 11
      %p51 = por %p49, %p50
      %p52 = scmp.ne.s32.totalorder %s44, %s47
      %p53 = scmp.eq.s32.totalorder %s15, 0
      %p54 = por %p52, %p53
      %p55 = scmp.ne.s32.totalorder %s44, %s47
      %p56 = scmp.eq.s32.totalorder %s20, 11
      %p57 = por %p55, %p56
      %p58 = scmp.ne.s32.totalorder %s47, %s48
      %p59 = scmp.eq.s32.totalorder %s20, 0
      %p60 = por %p58, %p59
      %p61 = scmp.ne.s32.totalorder %s47, %s48
      %p62 = scmp.eq.s32.totalorder %s21, 11
      %p63 = por %p61, %p62
      %p65 = scmp.ne.s32.totalorder %s48, %s64
      %p66 = scmp.eq.s32.totalorder %s21, 0
      %p67 = por %p65, %p66
      %s68 = ssub.s32 %s24, %s33
      %p69 = scmp.eq.s32.totalorder %s68, 0
      %s71 = sadd.s32 %s70, 1
      %s72 = scalar_select %p69, %s70, %s71
      %p75 = pneg %p69
      %p76 = scmp.eq.s32.totalorder %s15, 11
      %p77 = por %p75, %p76
      %p78 = scmp.ne.s32.totalorder %s70, %s73
      %p79 = scmp.eq.s32.totalorder %s15, 0
      %p80 = por %p78, %p79
      %p81 = scmp.ne.s32.totalorder %s70, %s73
      %p82 = scmp.eq.s32.totalorder %s20, 11
      %p83 = por %p81, %p82
      %p84 = scmp.ne.s32.totalorder %s73, %s74
      %p85 = scmp.eq.s32.totalorder %s20, 0
      %p86 = por %p84, %p85
      %p87 = scmp.ne.s32.totalorder %s73, %s74
      %p88 = scmp.eq.s32.totalorder %s21, 11
      %p89 = por %p87, %p88
      %p91 = scmp.ne.s32.totalorder %s74, %s90
      %p92 = scmp.eq.s32.totalorder %s21, 0
      %p93 = por %p91, %p92
      %s94 = ssub.s32 %s22, %s41
      %s95 = ssub.s32 %s24, %s33
      %s96 = sor.u32 %s94, %s95
      %s97 = ssub.s32 %s23, %s37
      %s98 = sor.u32 %s96, %s97
      %p99 = scmp.eq.s32.totalorder %s98, 0
      %s101 = sadd.s32 %s100, 1
      %s102 = scalar_select %p99, %s100, %s101
      %p105 = pneg %p99
      %p106 = scmp.eq.s32.totalorder %s15, 11
      %p107 = por %p105, %p106
      %p108 = scmp.ne.s32.totalorder %s100, %s103
      %p109 = scmp.eq.s32.totalorder %s15, 0
      %p110 = por %p108, %p109
      %p111 = scmp.ne.s32.totalorder %s100, %s103
      %p112 = scmp.eq.s32.totalorder %s20, 11
      %p113 = por %p111, %p112
      %p114 = scmp.ne.s32.totalorder %s103, %s104
      %p115 = scmp.eq.s32.totalorder %s20, 0
      %p116 = por %p114, %p115
      %p117 = scmp.ne.s32.totalorder %s103, %s104
      %p118 = scmp.eq.s32.totalorder %s21, 11
      %p119 = por %p117, %p118
      %p121 = scmp.ne.s32.totalorder %s104, %s120
      %p122 = scmp.eq.s32.totalorder %s21, 0
      %p123 = por %p121, %p122
      %p124 = scmp.le.s32.totalorder 1, %s15
      %p125 = scmp.lt.s32.totalorder %s15, 13
      %p126 = pnand %p124, %p125
      %p127 = pneg %p126
      // Predicated region
      $region9: #{tpu_custom_call.1} parent=5 // pred_check
        _
      $region10: #{tpu_custom_call.1} parent=5 // pred_check_branch
        %129 = sbr.rel (%p126) target = $region12
      $region11: #{tpu_custom_call.1} parent=5 // pred_region
        %s130 = ssub.s32 %s15, 1
      $region12: #{tpu_custom_call.1} parent=5 // pred_fallthru
        _
      %p131 = scmp.lt.s32.totalorder %s15, 12
      // Predicated region
      $region13: #{tpu_custom_call.1} parent=5 // pred_check
        %p132 = pneg %p131
      $region14: #{tpu_custom_call.1} parent=5 // pred_check_branch
        %134 = sbr.rel (%p132) target = $region16
      $region15: #{tpu_custom_call.1} parent=5 // pred_region
        // Predicated region
        $region17: #{tpu_custom_call.1} parent=15 // pred_check
          %p135 = pneg %p54
        $region18: #{tpu_custom_call.1} parent=15 // pred_check_branch
          %137 = sbr.rel (%p135) target = $region20
        $region19: #{tpu_custom_call.1} parent=15 // pred_region
          %s138 = sand.u32 %s44, 1
          %s139 = scalar_lea.sflag [#allocation5], %s138
          %s140 = sand.u32 %s44, 1
          %s141 = smul.addr %s140, 576
          %s142 = scalar_lea.vmem [#allocation4], %s141
          %s144 = ssub.s32 9216, 9216
          %145 = vsyncadd %s139, %s144
          %s146 = smul.addr %s24, 144
          %s147 = smul.addr %s146, 64
          %s148 = scalar_lea.hbm %s1, %s147
          %s149 = sshll.u32 %s142, 4
          %s150 = int_to_ptr.vmem [resolvable:$true] %s149
          %155 = dma.hbm_to_vmem [thread:$0]  %s148, 9216, %s150, %s139, 64, 64, 4
        $region20: #{tpu_custom_call.1} parent=15 // pred_fallthru
          _
        // Predicated region
        $region21: #{tpu_custom_call.1} parent=15 // pred_check
          %p156 = pneg %p80
        $region22: #{tpu_custom_call.1} parent=15 // pred_check_branch
          %158 = sbr.rel (%p156) target = $region24
        $region23: #{tpu_custom_call.1} parent=15 // pred_region
          %p159 = scmp.lt.s32.totalorder %s24, 2
          %s160 = scalar_select %p159, %s24, 2
          %s161 = scalar_lea.vmem %s2, %s160
        $region24: #{tpu_custom_call.1} parent=15 // pred_fallthru
          _
      $region16: #{tpu_custom_call.1} parent=5 // pred_fallthru
        _
      %p162 = scmp.le.s32.totalorder 1, %s15
      %p163 = scmp.lt.s32.totalorder %s15, 13
      %p164 = pnand %p162, %p163
      %p165 = pneg %p164
      // Predicated region
      $region25: #{tpu_custom_call.1} parent=5 // pred_check
        _
      $region26: #{tpu_custom_call.1} parent=5 // pred_check_branch
        %167 = sbr.rel (%p164) target = $region28
      $region27: #{tpu_custom_call.1} parent=5 // pred_region
        %s168 = ssub.s32 %s15, 1
        %s169 = sand.u32 %s47, 1
        %s170 = scalar_lea.sflag [#allocation5], %s169
        %s171 = sand.u32 %s47, 1
        %s172 = smul.addr %s171, 576
        %s173 = scalar_lea.vmem [#allocation4], %s172
        // Predicated region
        $region29: #{tpu_custom_call.1} parent=27 // pred_check
          %p174 = pneg %p60
        $region30: #{tpu_custom_call.1} parent=27 // pred_check_branch
          %176 = sbr.rel (%p174) target = $region32
        $region31: #{tpu_custom_call.1} parent=27 // pred_region
          %177 = dma.done %s170, 9216
        $region32: #{tpu_custom_call.1} parent=27 // pred_fallthru
          _
        %s178 = sand.u32 %s47, 1
        %s179 = scalar_lea.sflag [#allocation5], %s178
        %s180 = sand.u32 %s47, 1
        %s181 = smul.addr %s180, 576
        %s182 = scalar_lea.vmem [#allocation4], %s181
        %p183 = pneg %p60
        %p184 = pneg %p57
        %p185 = scmp.lt.s32.totalorder %s27, 2
        %s186 = scalar_select %p185, %s27, 2
        %s187 = scalar_lea.vmem %s2, %s186
        %p188 = pneg %p86
        %p189 = pneg %p83
        %p190 = pneg %p116
        %p191 = pneg %p113
        %s192 = sand.u32 %s103, 1
        %s193 = scalar_lea.sflag [#allocation6], %s192
        %s194 = sand.u32 %s103, 1
        %s195 = smul.addr %s194, 64
        %s196 = scalar_lea.vmem [#allocation7], %s195
        %p197 = scmp.lt.s32.totalorder %s27, 2
        %s198 = scalar_select %p197, %s27, 2
        %s199 = scalar_lea.vmem %s2, %s198
        %s200 = smul.u32 8, %s26
        %p202 = scmp.eq.s32.totalorder %s27, 0
        // Predicated region
        $region33: #{tpu_custom_call.1} parent=27 // pred_check
          %p203 = pneg %p202
        $region34: #{tpu_custom_call.1} parent=27 // pred_check_branch
          %205 = sbr.rel (%p203) target = $region36
        $region35: #{tpu_custom_call.1} parent=27 // pred_region
          %s206 = smul.u32 %s26, 8
          %s207 = smul.u32 %s206, 3
          %s208 = smul.u32 %s25, 72
          %s209 = sadd.s32 %s207, %s208
          %s210 = smul.addr %s209, 64
          %s211 = scalar_lea.hbm %s0, %s210
          // Predicated region
          $region37: #{tpu_custom_call.1} parent=35 // pred_check
            _
          $region38: #{tpu_custom_call.1} parent=35 // pred_check_branch
            %213 = sbr.rel target = $region40
          $region39: #{tpu_custom_call.1} parent=35 // pred_region
            %214 = sst [smem:[#allocation10]] [#allocation9]
            %215 = sst [smem:[#allocation11]] [#allocation8]
          $region40: #{tpu_custom_call.1} parent=35 // pred_fallthru
            _
          %217 = shalt.err (0)
          %s219 = sshll.u32 [#allocation2], 4
          %s220 = int_to_ptr.vmem [resolvable:$true] %s219
          %222 = dma.hbm_to_vmem [thread:$0]  %s211, 3072, %s220, [#allocation3]
          %s223 = smul.u32 4, 16
          %s224 = smul.u32 %s223, 3
          %s225 = smul.u32 %s224, 1
          %s226 = sshll.u32 %s225, 4
          %227 = dma.done [#allocation3], %s226
          %s228 = scalar_lea.vmem [#allocation2], 36
          %v229 = vld [vmem:[%s228] sm:$0xe]
          %v230 = vld [vmem:[%s228 + $0x4] sm:$0xf]
          %v231 = vld [vmem:[%s228 + $0x8] sm:$0x3]
          %v232 = vld [vmem:[%s228 + $0xc] sm:$0xe]
          %v233 = vld [vmem:[%s228 + $0x10] sm:$0xf]
          %v234 = vld [vmem:[%s228 + $0x14] sm:$0x3]
          %v235 = vld [vmem:[%s228 + $0x18] sm:$0xe]
          %v236 = vld [vmem:[%s228 + $0x1c] sm:$0xf]
          %v237 = vld [vmem:[%s228 + $0x20] sm:$0x3]
          %v238 = vld [vmem:[%s228 + $0x24] sm:$0xe]
          %v239 = vld [vmem:[%s228 + $0x28] sm:$0xf]
          %v240 = vld [vmem:[%s228 + $0x2c] sm:$0x3]
          %v241 = vld [vmem:[%s228 + $0x30] sm:$0xe]
          %v242 = vld [vmem:[%s228 + $0x34] sm:$0xf]
          %v243 = vld [vmem:[%s228 + $0x38] sm:$0x3]
          %v244 = vld [vmem:[%s228 + $0x3c] sm:$0xe]
          %v245 = vld [vmem:[%s228 + $0x40] sm:$0xf]
          %v246 = vld [vmem:[%s228 + $0x44] sm:$0x3]
          %v247 = vld [vmem:[%s228 + $0x48] sm:$0xe]
          %v248 = vld [vmem:[%s228 + $0x4c] sm:$0xf]
          %v249 = vld [vmem:[%s228 + $0x50] sm:$0x3]
          %v250 = vld [vmem:[%s228 + $0x54] sm:$0xe]
          %v251 = vld [vmem:[%s228 + $0x58] sm:$0xf]
          %v252 = vld [vmem:[%s228 + $0x5c] sm:$0x3]
          %vm253 = vsmask.f32 2304
          %vm254 = vsmask.f32 6416
          %vm255 = vmor %vm253, %vm254
          %v257 = vshrl.u32 %v229, 16
          %v259 = vrot.slane %v257, 5
          %v260 = vshll.u32 %v229, 16
          %v262 = vrot.slane %v260, 6
          %v263 = vor.u32 %v259, %v262
          %v264 = vrot.slane %v263, 4
          %v266 = vshrl.u32 %v230, 16
          %v268 = vrot.slane %v266, 5
          %v269 = vshll.u32 %v230, 16
          %v271 = vrot.slane %v269, 6
          %v272 = vor.u32 %v268, %v271
          %v273 = vsel %vm255, %v264, %v272
          %v274 = vrot.slane %v272, 4
          %v276 = vshrl.u32 %v231, 16
          %v278 = vrot.slane %v276, 5
          %v279 = vshll.u32 %v231, 16
          %v281 = vrot.slane %v279, 6
          %v282 = vor.u32 %v278, %v281
          %v283 = vsel %vm255, %v274, %v282
          %v285 = vshrl.u32 %v232, 16
          %v287 = vrot.slane %v285, 5
          %v288 = vshll.u32 %v232, 16
          %v290 = vrot.slane %v288, 6
          %v291 = vor.u32 %v287, %v290
          %v292 = vrot.slane %v291, 4
          %v294 = vshrl.u32 %v233, 16
          %v296 = vrot.slane %v294, 5
          %v297 = vshll.u32 %v233, 16
          %v299 = vrot.slane %v297, 6
          %v300 = vor.u32 %v296, %v299
          %v301 = vsel %vm255, %v292, %v300
          %v302 = vrot.slane %v300, 4
          %v304 = vshrl.u32 %v234, 16
          %v306 = vrot.slane %v304, 5
          %v307 = vshll.u32 %v234, 16
          %v309 = vrot.slane %v307, 6
          %v310 = vor.u32 %v306, %v309
          %v311 = vsel %vm255, %v302, %v310
          %v313 = vshrl.u32 %v235, 16
          %v315 = vrot.slane %v313, 5
          %v316 = vshll.u32 %v235, 16
          %v318 = vrot.slane %v316, 6
          %v319 = vor.u32 %v315, %v318
          %v320 = vrot.slane %v319, 4
          %v322 = vshrl.u32 %v236, 16
          %v324 = vrot.slane %v322, 5
          %v325 = vshll.u32 %v236, 16
          %v327 = vrot.slane %v325, 6
          %v328 = vor.u32 %v324, %v327
          %v329 = vsel %vm255, %v320, %v328
          %v330 = vrot.slane %v328, 4
          %v332 = vshrl.u32 %v237, 16
          %v334 = vrot.slane %v332, 5
          %v335 = vshll.u32 %v237, 16
          %v337 = vrot.slane %v335, 6
          %v338 = vor.u32 %v334, %v337
          %v339 = vsel %vm255, %v330, %v338
          %v341 = vshrl.u32 %v238, 16
          %v343 = vrot.slane %v341, 5
          %v344 = vshll.u32 %v238, 16
          %v346 = vrot.slane %v344, 6
          %v347 = vor.u32 %v343, %v346
          %v348 = vrot.slane %v347, 4
          %v350 = vshrl.u32 %v239, 16
          %v352 = vrot.slane %v350, 5
          %v353 = vshll.u32 %v239, 16
          %v355 = vrot.slane %v353, 6
          %v356 = vor.u32 %v352, %v355
          %v357 = vsel %vm255, %v348, %v356
          %v358 = vrot.slane %v356, 4
          %v360 = vshrl.u32 %v240, 16
          %v362 = vrot.slane %v360, 5
          %v363 = vshll.u32 %v240, 16
          %v365 = vrot.slane %v363, 6
          %v366 = vor.u32 %v362, %v365
          %v367 = vsel %vm255, %v358, %v366
          %v369 = vshrl.u32 %v241, 16
          %v371 = vrot.slane %v369, 5
          %v372 = vshll.u32 %v241, 16
          %v374 = vrot.slane %v372, 6
          %v375 = vor.u32 %v371, %v374
          %v376 = vrot.slane %v375, 4
          %v378 = vshrl.u32 %v242, 16
          %v380 = vrot.slane %v378, 5
          %v381 = vshll.u32 %v242, 16
          %v383 = vrot.slane %v381, 6
          %v384 = vor.u32 %v380, %v383
          %v385 = vsel %vm255, %v376, %v384
          %v386 = vrot.slane %v384, 4
          %v388 = vshrl.u32 %v243, 16
          %v390 = vrot.slane %v388, 5
          %v391 = vshll.u32 %v243, 16
          %v393 = vrot.slane %v391, 6
          %v394 = vor.u32 %v390, %v393
          %v395 = vsel %vm255, %v386, %v394
          %v397 = vshrl.u32 %v244, 16
          %v399 = vrot.slane %v397, 5
          %v400 = vshll.u32 %v244, 16
          %v402 = vrot.slane %v400, 6
          %v403 = vor.u32 %v399, %v402
          %v404 = vrot.slane %v403, 4
          %v406 = vshrl.u32 %v245, 16
          %v408 = vrot.slane %v406, 5
          %v409 = vshll.u32 %v245, 16
          %v411 = vrot.slane %v409, 6
          %v412 = vor.u32 %v408, %v411
          %v413 = vsel %vm255, %v404, %v412
          %v414 = vrot.slane %v412, 4
          %v416 = vshrl.u32 %v246, 16
          %v418 = vrot.slane %v416, 5
          %v419 = vshll.u32 %v246, 16
          %v421 = vrot.slane %v419, 6
          %v422 = vor.u32 %v418, %v421
          %v423 = vsel %vm255, %v414, %v422
          %v425 = vshrl.u32 %v247, 16
          %v427 = vrot.slane %v425, 5
          %v428 = vshll.u32 %v247, 16
          %v430 = vrot.slane %v428, 6
          %v431 = vor.u32 %v427, %v430
          %v432 = vrot.slane %v431, 4
          %v434 = vshrl.u32 %v248, 16
          %v436 = vrot.slane %v434, 5
          %v437 = vshll.u32 %v248, 16
          %v439 = vrot.slane %v437, 6
          %v440 = vor.u32 %v436, %v439
          %v441 = vsel %vm255, %v432, %v440
          %v442 = vrot.slane %v440, 4
          %v444 = vshrl.u32 %v249, 16
          %v446 = vrot.slane %v444, 5
          %v447 = vshll.u32 %v249, 16
          %v449 = vrot.slane %v447, 6
          %v450 = vor.u32 %v446, %v449
          %v451 = vsel %vm255, %v442, %v450
          %v453 = vshrl.u32 %v250, 16
          %v455 = vrot.slane %v453, 5
          %v456 = vshll.u32 %v250, 16
          %v458 = vrot.slane %v456, 6
          %v459 = vor.u32 %v455, %v458
          %v460 = vrot.slane %v459, 4
          %v462 = vshrl.u32 %v251, 16
          %v464 = vrot.slane %v462, 5
          %v465 = vshll.u32 %v251, 16
          %v467 = vrot.slane %v465, 6
          %v468 = vor.u32 %v464, %v467
          %v469 = vsel %vm255, %v460, %v468
          %v470 = vrot.slane %v468, 4
          %v472 = vshrl.u32 %v252, 16
          %v474 = vrot.slane %v472, 5
          %v475 = vshll.u32 %v252, 16
          %v477 = vrot.slane %v475, 6
          %v478 = vor.u32 %v474, %v477
          %v479 = vsel %vm255, %v470, %v478
          %v480 = vld [vmem:[%s173] sm:$0xf]
          %v481 = vld [vmem:[%s173 + $0x4] sm:$0xf]
          %v482 = vld [vmem:[%s173 + $0x8] sm:$0xf]
          %v483 = vld [vmem:[%s173 + $0xc] sm:$0xf]
          %v484 = vld [vmem:[%s173 + $0x10] sm:$0xf]
          %v485 = vld [vmem:[%s173 + $0x14] sm:$0xf]
          %v486 = vld [vmem:[%s173 + $0x18] sm:$0xf]
          %v487 = vld [vmem:[%s173 + $0x1c] sm:$0xf]
          %v488 = vld [vmem:[%s173 + $0x20] sm:$0xf]
          %v489 = vld [vmem:[%s173 + $0x24] sm:$0xf]
          %v490 = vld [vmem:[%s173 + $0x28] sm:$0xf]
          %v491 = vld [vmem:[%s173 + $0x2c] sm:$0xf]
          %v492 = vld [vmem:[%s173 + $0x30] sm:$0xf]
          %v493 = vld [vmem:[%s173 + $0x34] sm:$0xf]
          %v494 = vld [vmem:[%s173 + $0x38] sm:$0xf]
          %v495 = vld [vmem:[%s173 + $0x3c] sm:$0xf]
          %v496 = vld [vmem:[%s228] sm:$0xc]
          %v497 = vld [vmem:[%s228 + $0xc] sm:$0xc]
          %v498 = vld [vmem:[%s228 + $0x18] sm:$0xc]
          %v499 = vld [vmem:[%s228 + $0x24] sm:$0xc]
          %v500 = vld [vmem:[%s228 + $0x30] sm:$0xc]
          %v501 = vld [vmem:[%s228 + $0x3c] sm:$0xc]
          %v502 = vld [vmem:[%s228 + $0x48] sm:$0xc]
          %v503 = vld [vmem:[%s228 + $0x54] sm:$0xc]
          %vm528 = vcmask 1041408
          %vm529 = vcmask 1045508
          %vm530 = vmor %vm528, %vm529
          %v531 = vrot.slane %v496, 6
          %v532 = vrot.slane %v531, 4
          %v533 = vrot.slane %v230, 6
          %v534 = vsel %vm530, %v532, %v533
          %v535 = vrot.slane %v533, 4
          %v536 = vrot.slane %v231, 6
          %v537 = vsel %vm530, %v535, %v536
          %v538 = vrot.slane %v497, 6
          %v539 = vrot.slane %v538, 4
          %v540 = vrot.slane %v233, 6
          %v541 = vsel %vm530, %v539, %v540
          %v542 = vrot.slane %v540, 4
          %v543 = vrot.slane %v234, 6
          %v544 = vsel %vm530, %v542, %v543
          %v545 = vrot.slane %v498, 6
          %v546 = vrot.slane %v545, 4
          %v547 = vrot.slane %v236, 6
          %v548 = vsel %vm530, %v546, %v547
          %v549 = vrot.slane %v547, 4
          %v550 = vrot.slane %v237, 6
          %v551 = vsel %vm530, %v549, %v550
          %v552 = vrot.slane %v499, 6
          %v553 = vrot.slane %v552, 4
          %v554 = vrot.slane %v239, 6
          %v555 = vsel %vm530, %v553, %v554
          %v556 = vrot.slane %v554, 4
          %v557 = vrot.slane %v240, 6
          %v558 = vsel %vm530, %v556, %v557
          %v559 = vrot.slane %v500, 6
          %v560 = vrot.slane %v559, 4
          %v561 = vrot.slane %v242, 6
          %v562 = vsel %vm530, %v560, %v561
          %v563 = vrot.slane %v561, 4
          %v564 = vrot.slane %v243, 6
          %v565 = vsel %vm530, %v563, %v564
          %v566 = vrot.slane %v501, 6
          %v567 = vrot.slane %v566, 4
          %v568 = vrot.slane %v245, 6
          %v569 = vsel %vm530, %v567, %v568
          %v570 = vrot.slane %v568, 4
          %v571 = vrot.slane %v246, 6
          %v572 = vsel %vm530, %v570, %v571
          %v573 = vrot.slane %v502, 6
          %v574 = vrot.slane %v573, 4
          %v575 = vrot.slane %v248, 6
          %v576 = vsel %vm530, %v574, %v575
          %v577 = vrot.slane %v575, 4
          %v578 = vrot.slane %v249, 6
          %v579 = vsel %vm530, %v577, %v578
          %v580 = vrot.slane %v503, 6
          %v581 = vrot.slane %v580, 4
          %v582 = vrot.slane %v251, 6
          %v583 = vsel %vm530, %v581, %v582
          %v584 = vrot.slane %v582, 4
          %v585 = vrot.slane %v252, 6
          %v586 = vsel %vm530, %v584, %v585
          %s587 = scalar_lea.vmem %s173, 64 [#allocation4]
          %v588 = vld [vmem:[%s587] sm:$0xf]
          %v589 = vld [vmem:[%s587 + $0x4] sm:$0xf]
          %v590 = vld [vmem:[%s587 + $0x8] sm:$0xf]
          %v591 = vld [vmem:[%s587 + $0xc] sm:$0xf]
          %v592 = vld [vmem:[%s587 + $0x10] sm:$0xf]
          %v593 = vld [vmem:[%s587 + $0x14] sm:$0xf]
          %v594 = vld [vmem:[%s587 + $0x18] sm:$0xf]
          %v595 = vld [vmem:[%s587 + $0x1c] sm:$0xf]
          %v596 = vld [vmem:[%s587 + $0x20] sm:$0xf]
          %v597 = vld [vmem:[%s587 + $0x24] sm:$0xf]
          %v598 = vld [vmem:[%s587 + $0x28] sm:$0xf]
          %v599 = vld [vmem:[%s587 + $0x2c] sm:$0xf]
          %v600 = vld [vmem:[%s587 + $0x30] sm:$0xf]
          %v601 = vld [vmem:[%s587 + $0x34] sm:$0xf]
          %v602 = vld [vmem:[%s587 + $0x38] sm:$0xf]
          %v603 = vld [vmem:[%s587 + $0x3c] sm:$0xf]
          %v604 = vunpack.c.l.b16 %v534
          %v605 = vunpack.c.l.b16 %v537
          %v606 = vunpack.c.l.b16 %v541
          %v607 = vunpack.c.l.b16 %v544
          %v608 = vunpack.c.l.b16 %v548
          %v609 = vunpack.c.l.b16 %v551
          %v610 = vunpack.c.l.b16 %v555
          %v611 = vunpack.c.l.b16 %v558
          %v612 = vunpack.c.l.b16 %v562
          %v613 = vunpack.c.l.b16 %v565
          %v614 = vunpack.c.l.b16 %v569
          %v615 = vunpack.c.l.b16 %v572
          %v616 = vunpack.c.l.b16 %v576
          %v617 = vunpack.c.l.b16 %v579
          %v618 = vunpack.c.l.b16 %v583
          %v619 = vunpack.c.l.b16 %v586
          %v620 = vpack.c.b16 %v605, %v604
          %v621 = vpack.c.b16 %v607, %v606
          %v622 = vpack.c.b16 %v609, %v608
          %v623 = vpack.c.b16 %v611, %v610
          %v624 = vpack.c.b16 %v613, %v612
          %v625 = vpack.c.b16 %v615, %v614
          %v626 = vpack.c.b16 %v617, %v616
          %v627 = vpack.c.b16 %v619, %v618
          %v652 = vunpack.c.l.b16 %v588
          %v653 = vunpack.c.l.b16 %v589
          %v654 = vunpack.c.l.b16 %v590
          %v655 = vunpack.c.l.b16 %v591
          %v656 = vunpack.c.l.b16 %v592
          %v657 = vunpack.c.l.b16 %v593
          %v658 = vunpack.c.l.b16 %v594
          %v659 = vunpack.c.l.b16 %v595
          %v660 = vunpack.c.l.b16 %v596
          %v661 = vunpack.c.l.b16 %v597
          %v662 = vunpack.c.l.b16 %v598
          %v663 = vunpack.c.l.b16 %v599
          %v664 = vunpack.c.l.b16 %v600
          %v665 = vunpack.c.l.b16 %v601
          %v666 = vunpack.c.l.b16 %v602
          %v667 = vunpack.c.l.b16 %v603
          %v668 = vpack.c.b16 %v653, %v652
          %v669 = vpack.c.b16 %v655, %v654
          %v670 = vpack.c.b16 %v657, %v656
          %v671 = vpack.c.b16 %v659, %v658
          %v672 = vpack.c.b16 %v661, %v660
          %v673 = vpack.c.b16 %v663, %v662
          %v674 = vpack.c.b16 %v665, %v664
          %v675 = vpack.c.b16 %v667, %v666
          %684 = vmatprep.subr.bf16.mxu0 0
          %685 = vmatpush1.bf16.msra.mxu0 %v675
          %686 = vmatprep.subr.bf16.mxu0 0
          %687 = vmatpush1.bf16.msra.mxu0 %v674
          %688 = vmatprep.subr.bf16.mxu0 0
          %689 = vmatpush1.bf16.msra.mxu0 %v673
          %690 = vmatprep.subr.bf16.mxu0 0
          %691 = vmatpush1.bf16.msra.mxu0 %v672
          %692 = vmatprep.subr.bf16.mxu0 0
          %693 = vmatpush1.bf16.msra.mxu0 %v671
          %694 = vmatprep.subr.bf16.mxu0 0
          %695 = vmatpush1.bf16.msra.mxu0 %v670
          %696 = vmatprep.subr.bf16.mxu0 0
          %697 = vmatpush1.bf16.msra.mxu0 %v669
          %698 = vmatprep.subr.bf16.mxu0 0
          %699 = vmatpush1.bf16.msra.mxu0 %v668
          %700 = vmatprep.subr.bf16.mxu0 0
          %701 = vmatpush2.bf16.msra.mxu0 0
          %702 = vmatprep.subr.bf16.mxu0 0
          %703 = vmatpush2.bf16.msra.mxu0 0
          %704 = vmatprep.subr.bf16.mxu0 0
          %705 = vmatpush2.bf16.msra.mxu0 0
          %706 = vmatprep.subr.bf16.mxu0 0
          %707 = vmatpush2.bf16.msra.mxu0 0
          %708 = vmatprep.subr.bf16.mxu0 0
          %709 = vmatpush2.bf16.msra.mxu0 0
          %710 = vmatprep.subr.bf16.mxu0 0
          %711 = vmatpush2.bf16.msra.mxu0 0
          %712 = vmatprep.subr.bf16.mxu0 0
          %713 = vmatpush2.bf16.msra.mxu0 0
          %714 = vmatprep.subr.bf16.mxu0 0
          %715 = vmatpush2.bf16.msra.mxu0 0
          %716 = vmatprep.mubr.bf16.mxu0 0
          %717 = vmatmul.mubr.bf16.gmra.mxu0 %v620
          %v718 = vpop.f32.mrf.mxu0
          %v719 = vadd.f32 0.0, %v718
          %v720 = vpop.f32.mrf.mxu0
          %v721 = vpop.f32.mrf.mxu0
          %v722 = vadd.f32 0.0, %v721
          %v723 = vpop.f32.mrf.mxu0
          %724 = vmatprep.mubr.bf16.mxu0 0
          %725 = vmatmul.mubr.bf16.gmra.mxu0 %v621
          %v726 = vpop.f32.mrf.mxu0
          %v727 = vadd.f32 0.0, %v726
          %v728 = vpop.f32.mrf.mxu0
          %v729 = vpop.f32.mrf.mxu0
          %v730 = vadd.f32 0.0, %v729
          %v731 = vpop.f32.mrf.mxu0
          %732 = vmatprep.mubr.bf16.mxu0 0
          %733 = vmatmul.mubr.bf16.gmra.mxu0 %v622
          %v734 = vpop.f32.mrf.mxu0
          %v735 = vadd.f32 0.0, %v734
          %v736 = vpop.f32.mrf.mxu0
          %v737 = vpop.f32.mrf.mxu0
          %v738 = vadd.f32 0.0, %v737
          %v739 = vpop.f32.mrf.mxu0
          %740 = vmatprep.mubr.bf16.mxu0 0
          %741 = vmatmul.mubr.bf16.gmra.mxu0 %v623
          %v742 = vpop.f32.mrf.mxu0
          %v743 = vadd.f32 0.0, %v742
          %v744 = vpop.f32.mrf.mxu0
          %v745 = vpop.f32.mrf.mxu0
          %v746 = vadd.f32 0.0, %v745
          %v747 = vpop.f32.mrf.mxu0
          %748 = vmatprep.mubr.bf16.mxu0 0
          %749 = vmatmul.mubr.bf16.gmra.mxu0 %v624
          %v750 = vpop.f32.mrf.mxu0
          %v751 = vadd.f32 0.0, %v750
          %v752 = vpop.f32.mrf.mxu0
          %v753 = vpop.f32.mrf.mxu0
          %v754 = vadd.f32 0.0, %v753
          %v755 = vpop.f32.mrf.mxu0
          %756 = vmatprep.mubr.bf16.mxu0 0
          %757 = vmatmul.mubr.bf16.gmra.mxu0 %v625
          %v758 = vpop.f32.mrf.mxu0
          %v759 = vadd.f32 0.0, %v758
          %v760 = vpop.f32.mrf.mxu0
          %v761 = vpop.f32.mrf.mxu0
          %v762 = vadd.f32 0.0, %v761
          %v763 = vpop.f32.mrf.mxu0
          %764 = vmatprep.mubr.bf16.mxu0 0
          %765 = vmatmul.mubr.bf16.gmra.mxu0 %v626
          %v766 = vpop.f32.mrf.mxu0
          %v767 = vadd.f32 0.0, %v766
          %v768 = vpop.f32.mrf.mxu0
          %v769 = vpop.f32.mrf.mxu0
          %v770 = vadd.f32 0.0, %v769
          %v771 = vpop.f32.mrf.mxu0
          %772 = vmatprep.mubr.bf16.mxu0 0
          %773 = vmatmul.mubr.bf16.gmra.mxu0 %v627
          %v774 = vpop.f32.mrf.mxu0
          %v775 = vadd.f32 0.0, %v774
          %v776 = vpop.f32.mrf.mxu0
          %v777 = vpop.f32.mrf.mxu0
          %v778 = vadd.f32 0.0, %v777
          %v779 = vpop.f32.mrf.mxu0
          %780 = vdwg.mxu0
          %v781 = vunpack.c.l.b16 %v273
          %v782 = vunpack.c.l.b16 %v283
          %v783 = vunpack.c.l.b16 %v301
          %v784 = vunpack.c.l.b16 %v311
          %v785 = vunpack.c.l.b16 %v329
          %v786 = vunpack.c.l.b16 %v339
          %v787 = vunpack.c.l.b16 %v357
          %v788 = vunpack.c.l.b16 %v367
          %v789 = vunpack.c.l.b16 %v385
          %v790 = vunpack.c.l.b16 %v395
          %v791 = vunpack.c.l.b16 %v413
          %v792 = vunpack.c.l.b16 %v423
          %v793 = vunpack.c.l.b16 %v441
          %v794 = vunpack.c.l.b16 %v451
          %v795 = vunpack.c.l.b16 %v469
          %v796 = vunpack.c.l.b16 %v479
          %v797 = vpack.c.b16 %v782, %v781
          %v798 = vpack.c.b16 %v784, %v783
          %v799 = vpack.c.b16 %v786, %v785
          %v800 = vpack.c.b16 %v788, %v787
          %v801 = vpack.c.b16 %v790, %v789
          %v802 = vpack.c.b16 %v792, %v791
          %v803 = vpack.c.b16 %v794, %v793
          %v804 = vpack.c.b16 %v796, %v795
          %v829 = vunpack.c.l.b16 %v480
          %v830 = vunpack.c.l.b16 %v481
          %v831 = vunpack.c.l.b16 %v482
          %v832 = vunpack.c.l.b16 %v483
          %v833 = vunpack.c.l.b16 %v484
          %v834 = vunpack.c.l.b16 %v485
          %v835 = vunpack.c.l.b16 %v486
          %v836 = vunpack.c.l.b16 %v487
          %v837 = vunpack.c.l.b16 %v488
          %v838 = vunpack.c.l.b16 %v489
          %v839 = vunpack.c.l.b16 %v490
          %v840 = vunpack.c.l.b16 %v491
          %v841 = vunpack.c.l.b16 %v492
          %v842 = vunpack.c.l.b16 %v493
          %v843 = vunpack.c.l.b16 %v494
          %v844 = vunpack.c.l.b16 %v495
          %v845 = vpack.c.b16 %v830, %v829
          %v846 = vpack.c.b16 %v832, %v831
          %v847 = vpack.c.b16 %v834, %v833
          %v848 = vpack.c.b16 %v836, %v835
          %v849 = vpack.c.b16 %v838, %v837
          %v850 = vpack.c.b16 %v840, %v839
          %v851 = vpack.c.b16 %v842, %v841
          %v852 = vpack.c.b16 %v844, %v843
          %861 = vmatprep.subr.bf16.mxu0 0
          %862 = vmatpush1.bf16.msra.mxu0 %v852
          %863 = vmatprep.subr.bf16.mxu0 0
          %864 = vmatpush1.bf16.msra.mxu0 %v851
          %865 = vmatprep.subr.bf16.mxu0 0
          %866 = vmatpush1.bf16.msra.mxu0 %v850
          %867 = vmatprep.subr.bf16.mxu0 0
          %868 = vmatpush1.bf16.msra.mxu0 %v849
          %869 = vmatprep.subr.bf16.mxu0 0
          %870 = vmatpush1.bf16.msra.mxu0 %v848
          %871 = vmatprep.subr.bf16.mxu0 0
          %872 = vmatpush1.bf16.msra.mxu0 %v847
          %873 = vmatprep.subr.bf16.mxu0 0
          %874 = vmatpush1.bf16.msra.mxu0 %v846
          %875 = vmatprep.subr.bf16.mxu0 0
          %876 = vmatpush1.bf16.msra.mxu0 %v845
          %877 = vmatprep.subr.bf16.mxu0 0
          %878 = vmatpush2.bf16.msra.mxu0 0
          %879 = vmatprep.subr.bf16.mxu0 0
          %880 = vmatpush2.bf16.msra.mxu0 0
          %881 = vmatprep.subr.bf16.mxu0 0
          %882 = vmatpush2.bf16.msra.mxu0 0
          %883 = vmatprep.subr.bf16.mxu0 0
          %884 = vmatpush2.bf16.msra.mxu0 0
          %885 = vmatprep.subr.bf16.mxu0 0
          %886 = vmatpush2.bf16.msra.mxu0 0
          %887 = vmatprep.subr.bf16.mxu0 0
          %888 = vmatpush2.bf16.msra.mxu0 0
          %889 = vmatprep.subr.bf16.mxu0 0
          %890 = vmatpush2.bf16.msra.mxu0 0
          %891 = vmatprep.subr.bf16.mxu0 0
          %892 = vmatpush2.bf16.msra.mxu0 0
          %893 = vmatprep.mubr.bf16.mxu0 0
          %894 = vmatmul.mubr.bf16.gmra.mxu0 %v797
          %v895 = vpop.f32.mrf.mxu0
          %v896 = vadd.f32 %v719, %v895
          %v897 = vpop.f32.mrf.mxu0
          %v898 = vpop.f32.mrf.mxu0
          %v899 = vadd.f32 %v722, %v898
          %v900 = vpop.f32.mrf.mxu0
          %901 = vmatprep.mubr.bf16.mxu0 0
          %902 = vmatmul.mubr.bf16.gmra.mxu0 %v798
          %v903 = vpop.f32.mrf.mxu0
          %v904 = vadd.f32 %v727, %v903
          %v905 = vpop.f32.mrf.mxu0
          %v906 = vpop.f32.mrf.mxu0
          %v907 = vadd.f32 %v730, %v906
          %v908 = vpop.f32.mrf.mxu0
          %909 = vmatprep.mubr.bf16.mxu0 0
          %910 = vmatmul.mubr.bf16.gmra.mxu0 %v799
          %v911 = vpop.f32.mrf.mxu0
          %v912 = vadd.f32 %v735, %v911
          %v913 = vpop.f32.mrf.mxu0
          %v914 = vpop.f32.mrf.mxu0
          %v915 = vadd.f32 %v738, %v914
          %v916 = vpop.f32.mrf.mxu0
          %917 = vmatprep.mubr.bf16.mxu0 0
          %918 = vmatmul.mubr.bf16.gmra.mxu0 %v800
          %v919 = vpop.f32.mrf.mxu0
          %v920 = vadd.f32 %v743, %v919
          %v921 = vpop.f32.mrf.mxu0
          %v922 = vpop.f32.mrf.mxu0
          %v923 = vadd.f32 %v746, %v922
          %v924 = vpop.f32.mrf.mxu0
          %925 = vmatprep.mubr.bf16.mxu0 0
          %926 = vmatmul.mubr.bf16.gmra.mxu0 %v801
          %v927 = vpop.f32.mrf.mxu0
          %v928 = vadd.f32 %v751, %v927
          %v929 = vpop.f32.mrf.mxu0
          %v930 = vpop.f32.mrf.mxu0
          %v931 = vadd.f32 %v754, %v930
          %v932 = vpop.f32.mrf.mxu0
          %933 = vmatprep.mubr.bf16.mxu0 0
          %934 = vmatmul.mubr.bf16.gmra.mxu0 %v802
          %v935 = vpop.f32.mrf.mxu0
          %v936 = vadd.f32 %v759, %v935
          %v937 = vpop.f32.mrf.mxu0
          %v938 = vpop.f32.mrf.mxu0
          %v939 = vadd.f32 %v762, %v938
          %v940 = vpop.f32.mrf.mxu0
          %941 = vmatprep.mubr.bf16.mxu0 0
          %942 = vmatmul.mubr.bf16.gmra.mxu0 %v803
          %v943 = vpop.f32.mrf.mxu0
          %v944 = vadd.f32 %v767, %v943
          %v945 = vpop.f32.mrf.mxu0
          %v946 = vpop.f32.mrf.mxu0
          %v947 = vadd.f32 %v770, %v946
          %v948 = vpop.f32.mrf.mxu0
          %949 = vmatprep.mubr.bf16.mxu0 0
          %950 = vmatmul.mubr.bf16.gmra.mxu0 %v804
          %v951 = vpop.f32.mrf.mxu0
          %v952 = vadd.f32 %v775, %v951
          %v953 = vpop.f32.mrf.mxu0
          %v954 = vpop.f32.mrf.mxu0
          %v955 = vadd.f32 %v778, %v954
          %v956 = vpop.f32.mrf.mxu0
          %957 = vdwg.mxu0
          %v958 = vld [vmem:[%s228 + $0x8] sm:$0x7]
          %v959 = vld [vmem:[%s228 + $0x14] sm:$0x7]
          %v960 = vld [vmem:[%s228 + $0x20] sm:$0x7]
          %v961 = vld [vmem:[%s228 + $0x2c] sm:$0x7]
          %v962 = vld [vmem:[%s228 + $0x38] sm:$0x7]
          %v963 = vld [vmem:[%s228 + $0x44] sm:$0x7]
          %v964 = vld [vmem:[%s228 + $0x50] sm:$0x7]
          %v965 = vld [vmem:[%s228 + $0x5c] sm:$0x7]
          %vm966 = vsmask.f32 1280
          %vm967 = vsmask.f32 5392
          %vm968 = vmor %vm966, %vm967
          %v970 = vshrl.u32 %v496, 16
          %v972 = vrot.slane %v970, 6
          %v973 = vshll.u32 %v496, 16
          %v975 = vrot.slane %v973, 7
          %v976 = vor.u32 %v972, %v975
          %v977 = vrot.slane %v976, 4
          %v978 = vrot.slane %v266, 6
          %v979 = vrot.slane %v269, 7
          %v980 = vor.u32 %v978, %v979
          %v981 = vsel %vm968, %v977, %v980
          %v982 = vrot.slane %v980, 4
          %v984 = vshrl.u32 %v958, 16
          %v986 = vrot.slane %v984, 6
          %v987 = vshll.u32 %v958, 16
          %v989 = vrot.slane %v987, 7
          %v990 = vor.u32 %v986, %v989
          %v991 = vsel %vm968, %v982, %v990
          %v993 = vshrl.u32 %v497, 16
          %v995 = vrot.slane %v993, 6
          %v996 = vshll.u32 %v497, 16
          %v998 = vrot.slane %v996, 7
          %v999 = vor.u32 %v995, %v998
          %v1000 = vrot.slane %v999, 4
          %v1001 = vrot.slane %v294, 6
          %v1002 = vrot.slane %v297, 7
          %v1003 = vor.u32 %v1001, %v1002
          %v1004 = vsel %vm968, %v1000, %v1003
          %v1005 = vrot.slane %v1003, 4
          %v1007 = vshrl.u32 %v959, 16
          %v1009 = vrot.slane %v1007, 6
          %v1010 = vshll.u32 %v959, 16
          %v1012 = vrot.slane %v1010, 7
          %v1013 = vor.u32 %v1009, %v1012
          %v1014 = vsel %vm968, %v1005, %v1013
          %v1016 = vshrl.u32 %v498, 16
          %v1018 = vrot.slane %v1016, 6
          %v1019 = vshll.u32 %v498, 16
          %v1021 = vrot.slane %v1019, 7
          %v1022 = vor.u32 %v1018, %v1021
          %v1023 = vrot.slane %v1022, 4
          %v1024 = vrot.slane %v322, 6
          %v1025 = vrot.slane %v325, 7
          %v1026 = vor.u32 %v1024, %v1025
          %v1027 = vsel %vm968, %v1023, %v1026
          %v1028 = vrot.slane %v1026, 4
          %v1030 = vshrl.u32 %v960, 16
          %v1032 = vrot.slane %v1030, 6
          %v1033 = vshll.u32 %v960, 16
          %v1035 = vrot.slane %v1033, 7
          %v1036 = vor.u32 %v1032, %v1035
          %v1037 = vsel %vm968, %v1028, %v1036
          %v1039 = vshrl.u32 %v499, 16
          %v1041 = vrot.slane %v1039, 6
          %v1042 = vshll.u32 %v499, 16
          %v1044 = vrot.slane %v1042, 7
          %v1045 = vor.u32 %v1041, %v1044
          %v1046 = vrot.slane %v1045, 4
          %v1047 = vrot.slane %v350, 6
          %v1048 = vrot.slane %v353, 7
          %v1049 = vor.u32 %v1047, %v1048
          %v1050 = vsel %vm968, %v1046, %v1049
          %v1051 = vrot.slane %v1049, 4
          %v1053 = vshrl.u32 %v961, 16
          %v1055 = vrot.slane %v1053, 6
          %v1056 = vshll.u32 %v961, 16
          %v1058 = vrot.slane %v1056, 7
          %v1059 = vor.u32 %v1055, %v1058
          %v1060 = vsel %vm968, %v1051, %v1059
          %v1062 = vshrl.u32 %v500, 16
          %v1064 = vrot.slane %v1062, 6
          %v1065 = vshll.u32 %v500, 16
          %v1067 = vrot.slane %v1065, 7
          %v1068 = vor.u32 %v1064, %v1067
          %v1069 = vrot.slane %v1068, 4
          %v1070 = vrot.slane %v378, 6
          %v1071 = vrot.slane %v381, 7
          %v1072 = vor.u32 %v1070, %v1071
          %v1073 = vsel %vm968, %v1069, %v1072
          %v1074 = vrot.slane %v1072, 4
          %v1076 = vshrl.u32 %v962, 16
          %v1078 = vrot.slane %v1076, 6
          %v1079 = vshll.u32 %v962, 16
          %v1081 = vrot.slane %v1079, 7
          %v1082 = vor.u32 %v1078, %v1081
          %v1083 = vsel %vm968, %v1074, %v1082
          %v1085 = vshrl.u32 %v501, 16
          %v1087 = vrot.slane %v1085, 6
          %v1088 = vshll.u32 %v501, 16
          %v1090 = vrot.slane %v1088, 7
          %v1091 = vor.u32 %v1087, %v1090
          %v1092 = vrot.slane %v1091, 4
          %v1093 = vrot.slane %v406, 6
          %v1094 = vrot.slane %v409, 7
          %v1095 = vor.u32 %v1093, %v1094
          %v1096 = vsel %vm968, %v1092, %v1095
          %v1097 = vrot.slane %v1095, 4
          %v1099 = vshrl.u32 %v963, 16
          %v1101 = vrot.slane %v1099, 6
          %v1102 = vshll.u32 %v963, 16
          %v1104 = vrot.slane %v1102, 7
          %v1105 = vor.u32 %v1101, %v1104
          %v1106 = vsel %vm968, %v1097, %v1105
          %v1108 = vshrl.u32 %v502, 16
          %v1110 = vrot.slane %v1108, 6
          %v1111 = vshll.u32 %v502, 16
          %v1113 = vrot.slane %v1111, 7
          %v1114 = vor.u32 %v1110, %v1113
          %v1115 = vrot.slane %v1114, 4
          %v1116 = vrot.slane %v434, 6
          %v1117 = vrot.slane %v437, 7
          %v1118 = vor.u32 %v1116, %v1117
          %v1119 = vsel %vm968, %v1115, %v1118
          %v1120 = vrot.slane %v1118, 4
          %v1122 = vshrl.u32 %v964, 16
          %v1124 = vrot.slane %v1122, 6
          %v1125 = vshll.u32 %v964, 16
          %v1127 = vrot.slane %v1125, 7
          %v1128 = vor.u32 %v1124, %v1127
          %v1129 = vsel %vm968, %v1120, %v1128
          %v1131 = vshrl.u32 %v503, 16
          %v1133 = vrot.slane %v1131, 6
          %v1134 = vshll.u32 %v503, 16
          %v1136 = vrot.slane %v1134, 7
          %v1137 = vor.u32 %v1133, %v1136
          %v1138 = vrot.slane %v1137, 4
          %v1139 = vrot.slane %v462, 6
          %v1140 = vrot.slane %v465, 7
          %v1141 = vor.u32 %v1139, %v1140
          %v1142 = vsel %vm968, %v1138, %v1141
          %v1143 = vrot.slane %v1141, 4
          %v1145 = vshrl.u32 %v965, 16
          %v1147 = vrot.slane %v1145, 6
          %v1148 = vshll.u32 %v965, 16
          %v1150 = vrot.slane %v1148, 7
          %v1151 = vor.u32 %v1147, %v1150
          %v1152 = vsel %vm968, %v1143, %v1151
          %s1153 = scalar_lea.vmem %s173, 128 [#allocation4]
          %v1154 = vld [vmem:[%s1153] sm:$0xf]
          %v1155 = vld [vmem:[%s1153 + $0x4] sm:$0xf]
          %v1156 = vld [vmem:[%s1153 + $0x8] sm:$0xf]
          %v1157 = vld [vmem:[%s1153 + $0xc] sm:$0xf]
          %v1158 = vld [vmem:[%s1153 + $0x10] sm:$0xf]
          %v1159 = vld [vmem:[%s1153 + $0x14] sm:$0xf]
          %v1160 = vld [vmem:[%s1153 + $0x18] sm:$0xf]
          %v1161 = vld [vmem:[%s1153 + $0x1c] sm:$0xf]
          %v1162 = vld [vmem:[%s1153 + $0x20] sm:$0xf]
          %v1163 = vld [vmem:[%s1153 + $0x24] sm:$0xf]
          %v1164 = vld [vmem:[%s1153 + $0x28] sm:$0xf]
          %v1165 = vld [vmem:[%s1153 + $0x2c] sm:$0xf]
          %v1166 = vld [vmem:[%s1153 + $0x30] sm:$0xf]
          %v1167 = vld [vmem:[%s1153 + $0x34] sm:$0xf]
          %v1168 = vld [vmem:[%s1153 + $0x38] sm:$0xf]
          %v1169 = vld [vmem:[%s1153 + $0x3c] sm:$0xf]
          %v1170 = vunpack.c.l.b16 %v981
          %v1171 = vunpack.c.l.b16 %v991
          %v1172 = vunpack.c.l.b16 %v1004
          %v1173 = vunpack.c.l.b16 %v1014
          %v1174 = vunpack.c.l.b16 %v1027
          %v1175 = vunpack.c.l.b16 %v1037
          %v1176 = vunpack.c.l.b16 %v1050
          %v1177 = vunpack.c.l.b16 %v1060
          %v1178 = vunpack.c.l.b16 %v1073
          %v1179 = vunpack.c.l.b16 %v1083
          %v1180 = vunpack.c.l.b16 %v1096
          %v1181 = vunpack.c.l.b16 %v1106
          %v1182 = vunpack.c.l.b16 %v1119
          %v1183 = vunpack.c.l.b16 %v1129
          %v1184 = vunpack.c.l.b16 %v1142
          %v1185 = vunpack.c.l.b16 %v1152
          %v1186 = vpack.c.b16 %v1171, %v1170
          %v1187 = vpack.c.b16 %v1173, %v1172
          %v1188 = vpack.c.b16 %v1175, %v1174
          %v1189 = vpack.c.b16 %v1177, %v1176
          %v1190 = vpack.c.b16 %v1179, %v1178
          %v1191 = vpack.c.b16 %v1181, %v1180
          %v1192 = vpack.c.b16 %v1183, %v1182
          %v1193 = vpack.c.b16 %v1185, %v1184
          %v1218 = vunpack.c.l.b16 %v1154
          %v1219 = vunpack.c.l.b16 %v1155
          %v1220 = vunpack.c.l.b16 %v1156
          %v1221 = vunpack.c.l.b16 %v1157
          %v1222 = vunpack.c.l.b16 %v1158
          %v1223 = vunpack.c.l.b16 %v1159
          %v1224 = vunpack.c.l.b16 %v1160
          %v1225 = vunpack.c.l.b16 %v1161
          %v1226 = vunpack.c.l.b16 %v1162
          %v1227 = vunpack.c.l.b16 %v1163
          %v1228 = vunpack.c.l.b16 %v1164
          %v1229 = vunpack.c.l.b16 %v1165
          %v1230 = vunpack.c.l.b16 %v1166
          %v1231 = vunpack.c.l.b16 %v1167
          %v1232 = vunpack.c.l.b16 %v1168
          %v1233 = vunpack.c.l.b16 %v1169
          %v1234 = vpack.c.b16 %v1219, %v1218
          %v1235 = vpack.c.b16 %v1221, %v1220
          %v1236 = vpack.c.b16 %v1223, %v1222
          %v1237 = vpack.c.b16 %v1225, %v1224
          %v1238 = vpack.c.b16 %v1227, %v1226
          %v1239 = vpack.c.b16 %v1229, %v1228
          %v1240 = vpack.c.b16 %v1231, %v1230
          %v1241 = vpack.c.b16 %v1233, %v1232
          %1250 = vmatprep.subr.bf16.mxu0 0
          %1251 = vmatpush1.bf16.msra.mxu0 %v1241
          %1252 = vmatprep.subr.bf16.mxu0 0
          %1253 = vmatpush1.bf16.msra.mxu0 %v1240
          %1254 = vmatprep.subr.bf16.mxu0 0
          %1255 = vmatpush1.bf16.msra.mxu0 %v1239
          %1256 = vmatprep.subr.bf16.mxu0 0
          %1257 = vmatpush1.bf16.msra.mxu0 %v1238
          %1258 = vmatprep.subr.bf16.mxu0 0
          %1259 = vmatpush1.bf16.msra.mxu0 %v1237
          %1260 = vmatprep.subr.bf16.mxu0 0
          %1261 = vmatpush1.bf16.msra.mxu0 %v1236
          %1262 = vmatprep.subr.bf16.mxu0 0
          %1263 = vmatpush1.bf16.msra.mxu0 %v1235
          %1264 = vmatprep.subr.bf16.mxu0 0
          %1265 = vmatpush1.bf16.msra.mxu0 %v1234
          %1266 = vmatprep.subr.bf16.mxu0 0
          %1267 = vmatpush2.bf16.msra.mxu0 0
          %1268 = vmatprep.subr.bf16.mxu0 0
          %1269 = vmatpush2.bf16.msra.mxu0 0
          %1270 = vmatprep.subr.bf16.mxu0 0
          %1271 = vmatpush2.bf16.msra.mxu0 0
          %1272 = vmatprep.subr.bf16.mxu0 0
          %1273 = vmatpush2.bf16.msra.mxu0 0
          %1274 = vmatprep.subr.bf16.mxu0 0
          %1275 = vmatpush2.bf16.msra.mxu0 0
          %1276 = vmatprep.subr.bf16.mxu0 0
          %1277 = vmatpush2.bf16.msra.mxu0 0
          %1278 = vmatprep.subr.bf16.mxu0 0
          %1279 = vmatpush2.bf16.msra.mxu0 0
          %1280 = vmatprep.subr.bf16.mxu0 0
          %1281 = vmatpush2.bf16.msra.mxu0 0
          %1282 = vmatprep.mubr.bf16.mxu0 0
          %1283 = vmatmul.mubr.bf16.gmra.mxu0 %v1186
          %v1284 = vpop.f32.mrf.mxu0
          %v1285 = vadd.f32 0.0, %v1284
          %v1286 = vpop.f32.mrf.mxu0
          %v1287 = vpop.f32.mrf.mxu0
          %v1288 = vadd.f32 0.0, %v1287
          %v1289 = vpop.f32.mrf.mxu0
          %1290 = vmatprep.mubr.bf16.mxu0 0
          %1291 = vmatmul.mubr.bf16.gmra.mxu0 %v1187
          %v1292 = vpop.f32.mrf.mxu0
          %v1293 = vadd.f32 0.0, %v1292
          %v1294 = vpop.f32.mrf.mxu0
          %v1295 = vpop.f32.mrf.mxu0
          %v1296 = vadd.f32 0.0, %v1295
          %v1297 = vpop.f32.mrf.mxu0
          %1298 = vmatprep.mubr.bf16.mxu0 0
          %1299 = vmatmul.mubr.bf16.gmra.mxu0 %v1188
          %v1300 = vpop.f32.mrf.mxu0
          %v1301 = vadd.f32 0.0, %v1300
          %v1302 = vpop.f32.mrf.mxu0
          %v1303 = vpop.f32.mrf.mxu0
          %v1304 = vadd.f32 0.0, %v1303
          %v1305 = vpop.f32.mrf.mxu0
          %1306 = vmatprep.mubr.bf16.mxu0 0
          %1307 = vmatmul.mubr.bf16.gmra.mxu0 %v1189
          %v1308 = vpop.f32.mrf.mxu0
          %v1309 = vadd.f32 0.0, %v1308
          %v1310 = vpop.f32.mrf.mxu0
          %v1311 = vpop.f32.mrf.mxu0
          %v1312 = vadd.f32 0.0, %v1311
          %v1313 = vpop.f32.mrf.mxu0
          %1314 = vmatprep.mubr.bf16.mxu0 0
          %1315 = vmatmul.mubr.bf16.gmra.mxu0 %v1190
          %v1316 = vpop.f32.mrf.mxu0
          %v1317 = vadd.f32 0.0, %v1316
          %v1318 = vpop.f32.mrf.mxu0
          %v1319 = vpop.f32.mrf.mxu0
          %v1320 = vadd.f32 0.0, %v1319
          %v1321 = vpop.f32.mrf.mxu0
          %1322 = vmatprep.mubr.bf16.mxu0 0
          %1323 = vmatmul.mubr.bf16.gmra.mxu0 %v1191
          %v1324 = vpop.f32.mrf.mxu0
          %v1325 = vadd.f32 0.0, %v1324
          %v1326 = vpop.f32.mrf.mxu0
          %v1327 = vpop.f32.mrf.mxu0
          %v1328 = vadd.f32 0.0, %v1327
          %v1329 = vpop.f32.mrf.mxu0
          %1330 = vmatprep.mubr.bf16.mxu0 0
          %1331 = vmatmul.mubr.bf16.gmra.mxu0 %v1192
          %v1332 = vpop.f32.mrf.mxu0
          %v1333 = vadd.f32 0.0, %v1332
          %v1334 = vpop.f32.mrf.mxu0
          %v1335 = vpop.f32.mrf.mxu0
          %v1336 = vadd.f32 0.0, %v1335
          %v1337 = vpop.f32.mrf.mxu0
          %1338 = vmatprep.mubr.bf16.mxu0 0
          %1339 = vmatmul.mubr.bf16.gmra.mxu0 %v1193
          %v1340 = vpop.f32.mrf.mxu0
          %v1341 = vadd.f32 0.0, %v1340
          %v1342 = vpop.f32.mrf.mxu0
          %v1343 = vpop.f32.mrf.mxu0
          %v1344 = vadd.f32 0.0, %v1343
          %v1345 = vpop.f32.mrf.mxu0
          %1346 = vdwg.mxu0
          %v1347 = vadd.f32 %v896, %v1285
          %v1348 = vadd.f32 %v899, %v1288
          %v1349 = vadd.f32 %v904, %v1293
          %v1350 = vadd.f32 %v907, %v1296
          %v1351 = vadd.f32 %v912, %v1301
          %v1352 = vadd.f32 %v915, %v1304
          %v1353 = vadd.f32 %v920, %v1309
          %v1354 = vadd.f32 %v923, %v1312
          %v1355 = vadd.f32 %v928, %v1317
          %v1356 = vadd.f32 %v931, %v1320
          %v1357 = vadd.f32 %v936, %v1325
          %v1358 = vadd.f32 %v939, %v1328
          %v1359 = vadd.f32 %v944, %v1333
          %v1360 = vadd.f32 %v947, %v1336
          %v1361 = vadd.f32 %v952, %v1341
          %v1362 = vadd.f32 %v955, %v1344
          %s1363 = scalar_lea.vmem [#allocation2], 48
          %v1364 = vld [vmem:[%s1363] sm:$0xe]
          %v1365 = vld [vmem:[%s1363 + $0x4] sm:$0xf]
          %v1366 = vld [vmem:[%s1363 + $0x8] sm:$0x3]
          %v1367 = vld [vmem:[%s1363 + $0xc] sm:$0xe]
          %v1368 = vld [vmem:[%s1363 + $0x10] sm:$0xf]
          %v1369 = vld [vmem:[%s1363 + $0x14] sm:$0x3]
          %v1370 = vld [vmem:[%s1363 + $0x18] sm:$0xe]
          %v1371 = vld [vmem:[%s1363 + $0x1c] sm:$0xf]
          %v1372 = vld [vmem:[%s1363 + $0x20] sm:$0x3]
          %v1373 = vld [vmem:[%s1363 + $0x24] sm:$0xe]
          %v1374 = vld [vmem:[%s1363 + $0x28] sm:$0xf]
          %v1375 = vld [vmem:[%s1363 + $0x2c] sm:$0x3]
          %v1376 = vld [vmem:[%s1363 + $0x30] sm:$0xe]
          %v1377 = vld [vmem:[%s1363 + $0x34] sm:$0xf]
          %v1378 = vld [vmem:[%s1363 + $0x38] sm:$0x3]
          %v1379 = vld [vmem:[%s1363 + $0x3c] sm:$0xe]
          %v1380 = vld [vmem:[%s1363 + $0x40] sm:$0xf]
          %v1381 = vld [vmem:[%s1363 + $0x44] sm:$0x3]
          %v1382 = vld [vmem:[%s1363 + $0x48] sm:$0xe]
          %v1383 = vld [vmem:[%s1363 + $0x4c] sm:$0xf]
          %v1384 = vld [vmem:[%s1363 + $0x50] sm:$0x3]
          %v1385 = vld [vmem:[%s1363 + $0x54] sm:$0xe]
          %v1386 = vld [vmem:[%s1363 + $0x58] sm:$0xf]
          %v1387 = vld [vmem:[%s1363 + $0x5c] sm:$0x3]
          %v1389 = vshrl.u32 %v1364, 16
          %v1391 = vrot.slane %v1389, 5
          %v1392 = vshll.u32 %v1364, 16
          %v1394 = vrot.slane %v1392, 6
          %v1395 = vor.u32 %v1391, %v1394
          %v1396 = vrot.slane %v1395, 4
          %v1398 = vshrl.u32 %v1365, 16
          %v1400 = vrot.slane %v1398, 5
          %v1401 = vshll.u32 %v1365, 16
          %v1403 = vrot.slane %v1401, 6
          %v1404 = vor.u32 %v1400, %v1403
          %v1405 = vsel %vm255, %v1396, %v1404
          %v1406 = vrot.slane %v1404, 4
          %v1408 = vshrl.u32 %v1366, 16
          %v1410 = vrot.slane %v1408, 5
          %v1411 = vshll.u32 %v1366, 16
          %v1413 = vrot.slane %v1411, 6
          %v1414 = vor.u32 %v1410, %v1413
          %v1415 = vsel %vm255, %v1406, %v1414
          %v1417 = vshrl.u32 %v1367, 16
          %v1419 = vrot.slane %v1417, 5
          %v1420 = vshll.u32 %v1367, 16
          %v1422 = vrot.slane %v1420, 6
          %v1423 = vor.u32 %v1419, %v1422
          %v1424 = vrot.slane %v1423, 4
          %v1426 = vshrl.u32 %v1368, 16
          %v1428 = vrot.slane %v1426, 5
          %v1429 = vshll.u32 %v1368, 16
          %v1431 = vrot.slane %v1429, 6
          %v1432 = vor.u32 %v1428, %v1431
          %v1433 = vsel %vm255, %v1424, %v1432
          %v1434 = vrot.slane %v1432, 4
          %v1436 = vshrl.u32 %v1369, 16
          %v1438 = vrot.slane %v1436, 5
          %v1439 = vshll.u32 %v1369, 16
          %v1441 = vrot.slane %v1439, 6
          %v1442 = vor.u32 %v1438, %v1441
          %v1443 = vsel %vm255, %v1434, %v1442
          %v1445 = vshrl.u32 %v1370, 16
          %v1447 = vrot.slane %v1445, 5
          %v1448 = vshll.u32 %v1370, 16
          %v1450 = vrot.slane %v1448, 6
          %v1451 = vor.u32 %v1447, %v1450
          %v1452 = vrot.slane %v1451, 4
          %v1454 = vshrl.u32 %v1371, 16
          %v1456 = vrot.slane %v1454, 5
          %v1457 = vshll.u32 %v1371, 16
          %v1459 = vrot.slane %v1457, 6
          %v1460 = vor.u32 %v1456, %v1459
          %v1461 = vsel %vm255, %v1452, %v1460
          %v1462 = vrot.slane %v1460, 4
          %v1464 = vshrl.u32 %v1372, 16
          %v1466 = vrot.slane %v1464, 5
          %v1467 = vshll.u32 %v1372, 16
          %v1469 = vrot.slane %v1467, 6
          %v1470 = vor.u32 %v1466, %v1469
          %v1471 = vsel %vm255, %v1462, %v1470
          %v1473 = vshrl.u32 %v1373, 16
          %v1475 = vrot.slane %v1473, 5
          %v1476 = vshll.u32 %v1373, 16
          %v1478 = vrot.slane %v1476, 6
          %v1479 = vor.u32 %v1475, %v1478
          %v1480 = vrot.slane %v1479, 4
          %v1482 = vshrl.u32 %v1374, 16
          %v1484 = vrot.slane %v1482, 5
          %v1485 = vshll.u32 %v1374, 16
          %v1487 = vrot.slane %v1485, 6
          %v1488 = vor.u32 %v1484, %v1487
          %v1489 = vsel %vm255, %v1480, %v1488
          %v1490 = vrot.slane %v1488, 4
          %v1492 = vshrl.u32 %v1375, 16
          %v1494 = vrot.slane %v1492, 5
          %v1495 = vshll.u32 %v1375, 16
          %v1497 = vrot.slane %v1495, 6
          %v1498 = vor.u32 %v1494, %v1497
          %v1499 = vsel %vm255, %v1490, %v1498
          %v1501 = vshrl.u32 %v1376, 16
          %v1503 = vrot.slane %v1501, 5
          %v1504 = vshll.u32 %v1376, 16
          %v1506 = vrot.slane %v1504, 6
          %v1507 = vor.u32 %v1503, %v1506
          %v1508 = vrot.slane %v1507, 4
          %v1510 = vshrl.u32 %v1377, 16
          %v1512 = vrot.slane %v1510, 5
          %v1513 = vshll.u32 %v1377, 16
          %v1515 = vrot.slane %v1513, 6
          %v1516 = vor.u32 %v1512, %v1515
          %v1517 = vsel %vm255, %v1508, %v1516
          %v1518 = vrot.slane %v1516, 4
          %v1520 = vshrl.u32 %v1378, 16
          %v1522 = vrot.slane %v1520, 5
          %v1523 = vshll.u32 %v1378, 16
          %v1525 = vrot.slane %v1523, 6
          %v1526 = vor.u32 %v1522, %v1525
          %v1527 = vsel %vm255, %v1518, %v1526
          %v1529 = vshrl.u32 %v1379, 16
          %v1531 = vrot.slane %v1529, 5
          %v1532 = vshll.u32 %v1379, 16
          %v1534 = vrot.slane %v1532, 6
          %v1535 = vor.u32 %v1531, %v1534
          %v1536 = vrot.slane %v1535, 4
          %v1538 = vshrl.u32 %v1380, 16
          %v1540 = vrot.slane %v1538, 5
          %v1541 = vshll.u32 %v1380, 16
          %v1543 = vrot.slane %v1541, 6
          %v1544 = vor.u32 %v1540, %v1543
          %v1545 = vsel %vm255, %v1536, %v1544
          %v1546 = vrot.slane %v1544, 4
          %v1548 = vshrl.u32 %v1381, 16
          %v1550 = vrot.slane %v1548, 5
          %v1551 = vshll.u32 %v1381, 16
          %v1553 = vrot.slane %v1551, 6
          %v1554 = vor.u32 %v1550, %v1553
          %v1555 = vsel %vm255, %v1546, %v1554
          %v1557 = vshrl.u32 %v1382, 16
          %v1559 = vrot.slane %v1557, 5
          %v1560 = vshll.u32 %v1382, 16
          %v1562 = vrot.slane %v1560, 6
          %v1563 = vor.u32 %v1559, %v1562
          %v1564 = vrot.slane %v1563, 4
          %v1566 = vshrl.u32 %v1383, 16
          %v1568 = vrot.slane %v1566, 5
          %v1569 = vshll.u32 %v1383, 16
          %v1571 = vrot.slane %v1569, 6
          %v1572 = vor.u32 %v1568, %v1571
          %v1573 = vsel %vm255, %v1564, %v1572
          %v1574 = vrot.slane %v1572, 4
          %v1576 = vshrl.u32 %v1384, 16
          %v1578 = vrot.slane %v1576, 5
          %v1579 = vshll.u32 %v1384, 16
          %v1581 = vrot.slane %v1579, 6
          %v1582 = vor.u32 %v1578, %v1581
          %v1583 = vsel %vm255, %v1574, %v1582
          %v1585 = vshrl.u32 %v1385, 16
          %v1587 = vrot.slane %v1585, 5
          %v1588 = vshll.u32 %v1385, 16
          %v1590 = vrot.slane %v1588, 6
          %v1591 = vor.u32 %v1587, %v1590
          %v1592 = vrot.slane %v1591, 4
          %v1594 = vshrl.u32 %v1386, 16
          %v1596 = vrot.slane %v1594, 5
          %v1597 = vshll.u32 %v1386, 16
          %v1599 = vrot.slane %v1597, 6
          %v1600 = vor.u32 %v1596, %v1599
          %v1601 = vsel %vm255, %v1592, %v1600
          %v1602 = vrot.slane %v1600, 4
          %v1604 = vshrl.u32 %v1387, 16
          %v1606 = vrot.slane %v1604, 5
          %v1607 = vshll.u32 %v1387, 16
          %v1609 = vrot.slane %v1607, 6
          %v1610 = vor.u32 %v1606, %v1609
          %v1611 = vsel %vm255, %v1602, %v1610
          %s1612 = scalar_lea.vmem %s173, 192 [#allocation4]
          %v1613 = vld [vmem:[%s1612] sm:$0xf]
          %v1614 = vld [vmem:[%s1612 + $0x4] sm:$0xf]
          %v1615 = vld [vmem:[%s1612 + $0x8] sm:$0xf]
          %v1616 = vld [vmem:[%s1612 + $0xc] sm:$0xf]
          %v1617 = vld [vmem:[%s1612 + $0x10] sm:$0xf]
          %v1618 = vld [vmem:[%s1612 + $0x14] sm:$0xf]
          %v1619 = vld [vmem:[%s1612 + $0x18] sm:$0xf]
          %v1620 = vld [vmem:[%s1612 + $0x1c] sm:$0xf]
          %v1621 = vld [vmem:[%s1612 + $0x20] sm:$0xf]
          %v1622 = vld [vmem:[%s1612 + $0x24] sm:$0xf]
          %v1623 = vld [vmem:[%s1612 + $0x28] sm:$0xf]
          %v1624 = vld [vmem:[%s1612 + $0x2c] sm:$0xf]
          %v1625 = vld [vmem:[%s1612 + $0x30] sm:$0xf]
          %v1626 = vld [vmem:[%s1612 + $0x34] sm:$0xf]
          %v1627 = vld [vmem:[%s1612 + $0x38] sm:$0xf]
          %v1628 = vld [vmem:[%s1612 + $0x3c] sm:$0xf]
          %v1629 = vunpack.c.l.b16 %v1405
          %v1630 = vunpack.c.l.b16 %v1415
          %v1631 = vunpack.c.l.b16 %v1433
          %v1632 = vunpack.c.l.b16 %v1443
          %v1633 = vunpack.c.l.b16 %v1461
          %v1634 = vunpack.c.l.b16 %v1471
          %v1635 = vunpack.c.l.b16 %v1489
          %v1636 = vunpack.c.l.b16 %v1499
          %v1637 = vunpack.c.l.b16 %v1517
          %v1638 = vunpack.c.l.b16 %v1527
          %v1639 = vunpack.c.l.b16 %v1545
          %v1640 = vunpack.c.l.b16 %v1555
          %v1641 = vunpack.c.l.b16 %v1573
          %v1642 = vunpack.c.l.b16 %v1583
          %v1643 = vunpack.c.l.b16 %v1601
          %v1644 = vunpack.c.l.b16 %v1611
          %v1645 = vpack.c.b16 %v1630, %v1629
          %v1646 = vpack.c.b16 %v1632, %v1631
          %v1647 = vpack.c.b16 %v1634, %v1633
          %v1648 = vpack.c.b16 %v1636, %v1635
          %v1649 = vpack.c.b16 %v1638, %v1637
          %v1650 = vpack.c.b16 %v1640, %v1639
          %v1651 = vpack.c.b16 %v1642, %v1641
          %v1652 = vpack.c.b16 %v1644, %v1643
          %v1677 = vunpack.c.l.b16 %v1613
          %v1678 = vunpack.c.l.b16 %v1614
          %v1679 = vunpack.c.l.b16 %v1615
          %v1680 = vunpack.c.l.b16 %v1616
          %v1681 = vunpack.c.l.b16 %v1617
          %v1682 = vunpack.c.l.b16 %v1618
          %v1683 = vunpack.c.l.b16 %v1619
          %v1684 = vunpack.c.l.b16 %v1620
          %v1685 = vunpack.c.l.b16 %v1621
          %v1686 = vunpack.c.l.b16 %v1622
          %v1687 = vunpack.c.l.b16 %v1623
          %v1688 = vunpack.c.l.b16 %v1624
          %v1689 = vunpack.c.l.b16 %v1625
          %v1690 = vunpack.c.l.b16 %v1626
          %v1691 = vunpack.c.l.b16 %v1627
          %v1692 = vunpack.c.l.b16 %v1628
          %v1693 = vpack.c.b16 %v1678, %v1677
          %v1694 = vpack.c.b16 %v1680, %v1679
          %v1695 = vpack.c.b16 %v1682, %v1681
          %v1696 = vpack.c.b16 %v1684, %v1683
          %v1697 = vpack.c.b16 %v1686, %v1685
          %v1698 = vpack.c.b16 %v1688, %v1687
          %v1699 = vpack.c.b16 %v1690, %v1689
          %v1700 = vpack.c.b16 %v1692, %v1691
          %1709 = vmatprep.subr.bf16.mxu0 0
          %1710 = vmatpush1.bf16.msra.mxu0 %v1700
          %1711 = vmatprep.subr.bf16.mxu0 0
          %1712 = vmatpush1.bf16.msra.mxu0 %v1699
          %1713 = vmatprep.subr.bf16.mxu0 0
          %1714 = vmatpush1.bf16.msra.mxu0 %v1698
          %1715 = vmatprep.subr.bf16.mxu0 0
          %1716 = vmatpush1.bf16.msra.mxu0 %v1697
          %1717 = vmatprep.subr.bf16.mxu0 0
          %1718 = vmatpush1.bf16.msra.mxu0 %v1696
          %1719 = vmatprep.subr.bf16.mxu0 0
          %1720 = vmatpush1.bf16.msra.mxu0 %v1695
          %1721 = vmatprep.subr.bf16.mxu0 0
          %1722 = vmatpush1.bf16.msra.mxu0 %v1694
          %1723 = vmatprep.subr.bf16.mxu0 0
          %1724 = vmatpush1.bf16.msra.mxu0 %v1693
          %1725 = vmatprep.subr.bf16.mxu0 0
          %1726 = vmatpush2.bf16.msra.mxu0 0
          %1727 = vmatprep.subr.bf16.mxu0 0
          %1728 = vmatpush2.bf16.msra.mxu0 0
          %1729 = vmatprep.subr.bf16.mxu0 0
          %1730 = vmatpush2.bf16.msra.mxu0 0
          %1731 = vmatprep.subr.bf16.mxu0 0
          %1732 = vmatpush2.bf16.msra.mxu0 0
          %1733 = vmatprep.subr.bf16.mxu0 0
          %1734 = vmatpush2.bf16.msra.mxu0 0
          %1735 = vmatprep.subr.bf16.mxu0 0
          %1736 = vmatpush2.bf16.msra.mxu0 0
          %1737 = vmatprep.subr.bf16.mxu0 0
          %1738 = vmatpush2.bf16.msra.mxu0 0
          %1739 = vmatprep.subr.bf16.mxu0 0
          %1740 = vmatpush2.bf16.msra.mxu0 0
          %1741 = vmatprep.mubr.bf16.mxu0 0
          %1742 = vmatmul.mubr.bf16.gmra.mxu0 %v1645
          %v1743 = vpop.f32.mrf.mxu0
          %v1744 = vadd.f32 0.0, %v1743
          %v1745 = vpop.f32.mrf.mxu0
          %v1746 = vpop.f32.mrf.mxu0
          %v1747 = vadd.f32 0.0, %v1746
          %v1748 = vpop.f32.mrf.mxu0
          %1749 = vmatprep.mubr.bf16.mxu0 0
          %1750 = vmatmul.mubr.bf16.gmra.mxu0 %v1646
          %v1751 = vpop.f32.mrf.mxu0
          %v1752 = vadd.f32 0.0, %v1751
          %v1753 = vpop.f32.mrf.mxu0
          %v1754 = vpop.f32.mrf.mxu0
          %v1755 = vadd.f32 0.0, %v1754
          %v1756 = vpop.f32.mrf.mxu0
          %1757 = vmatprep.mubr.bf16.mxu0 0
          %1758 = vmatmul.mubr.bf16.gmra.mxu0 %v1647
          %v1759 = vpop.f32.mrf.mxu0
          %v1760 = vadd.f32 0.0, %v1759
          %v1761 = vpop.f32.mrf.mxu0
          %v1762 = vpop.f32.mrf.mxu0
          %v1763 = vadd.f32 0.0, %v1762
          %v1764 = vpop.f32.mrf.mxu0
          %1765 = vmatprep.mubr.bf16.mxu0 0
          %1766 = vmatmul.mubr.bf16.gmra.mxu0 %v1648
          %v1767 = vpop.f32.mrf.mxu0
          %v1768 = vadd.f32 0.0, %v1767
          %v1769 = vpop.f32.mrf.mxu0
          %v1770 = vpop.f32.mrf.mxu0
          %v1771 = vadd.f32 0.0, %v1770
          %v1772 = vpop.f32.mrf.mxu0
          %1773 = vmatprep.mubr.bf16.mxu0 0
          %1774 = vmatmul.mubr.bf16.gmra.mxu0 %v1649
          %v1775 = vpop.f32.mrf.mxu0
          %v1776 = vadd.f32 0.0, %v1775
          %v1777 = vpop.f32.mrf.mxu0
          %v1778 = vpop.f32.mrf.mxu0
          %v1779 = vadd.f32 0.0, %v1778
          %v1780 = vpop.f32.mrf.mxu0
          %1781 = vmatprep.mubr.bf16.mxu0 0
          %1782 = vmatmul.mubr.bf16.gmra.mxu0 %v1650
          %v1783 = vpop.f32.mrf.mxu0
          %v1784 = vadd.f32 0.0, %v1783
          %v1785 = vpop.f32.mrf.mxu0
          %v1786 = vpop.f32.mrf.mxu0
          %v1787 = vadd.f32 0.0, %v1786
          %v1788 = vpop.f32.mrf.mxu0
          %1789 = vmatprep.mubr.bf16.mxu0 0
          %1790 = vmatmul.mubr.bf16.gmra.mxu0 %v1651
          %v1791 = vpop.f32.mrf.mxu0
          %v1792 = vadd.f32 0.0, %v1791
          %v1793 = vpop.f32.mrf.mxu0
          %v1794 = vpop.f32.mrf.mxu0
          %v1795 = vadd.f32 0.0, %v1794
          %v1796 = vpop.f32.mrf.mxu0
          %1797 = vmatprep.mubr.bf16.mxu0 0
          %1798 = vmatmul.mubr.bf16.gmra.mxu0 %v1652
          %v1799 = vpop.f32.mrf.mxu0
          %v1800 = vadd.f32 0.0, %v1799
          %v1801 = vpop.f32.mrf.mxu0
          %v1802 = vpop.f32.mrf.mxu0
          %v1803 = vadd.f32 0.0, %v1802
          %v1804 = vpop.f32.mrf.mxu0
          %1805 = vdwg.mxu0
          %v1806 = vadd.f32 %v1347, %v1744
          %v1807 = vadd.f32 %v1348, %v1747
          %v1808 = vadd.f32 %v1349, %v1752
          %v1809 = vadd.f32 %v1350, %v1755
          %v1810 = vadd.f32 %v1351, %v1760
          %v1811 = vadd.f32 %v1352, %v1763
          %v1812 = vadd.f32 %v1353, %v1768
          %v1813 = vadd.f32 %v1354, %v1771
          %v1814 = vadd.f32 %v1355, %v1776
          %v1815 = vadd.f32 %v1356, %v1779
          %v1816 = vadd.f32 %v1357, %v1784
          %v1817 = vadd.f32 %v1358, %v1787
          %v1818 = vadd.f32 %v1359, %v1792
          %v1819 = vadd.f32 %v1360, %v1795
          %v1820 = vadd.f32 %v1361, %v1800
          %v1821 = vadd.f32 %v1362, %v1803
          %v1822 = vld [vmem:[%s1363] sm:$0xc]
          %v1823 = vld [vmem:[%s1363 + $0xc] sm:$0xc]
          %v1824 = vld [vmem:[%s1363 + $0x18] sm:$0xc]
          %v1825 = vld [vmem:[%s1363 + $0x24] sm:$0xc]
          %v1826 = vld [vmem:[%s1363 + $0x30] sm:$0xc]
          %v1827 = vld [vmem:[%s1363 + $0x3c] sm:$0xc]
          %v1828 = vld [vmem:[%s1363 + $0x48] sm:$0xc]
          %v1829 = vld [vmem:[%s1363 + $0x54] sm:$0xc]
          %v1854 = vrot.slane %v1822, 6
          %v1855 = vrot.slane %v1854, 4
          %v1856 = vrot.slane %v1365, 6
          %v1857 = vsel %vm530, %v1855, %v1856
          %v1858 = vrot.slane %v1856, 4
          %v1859 = vrot.slane %v1366, 6
          %v1860 = vsel %vm530, %v1858, %v1859
          %v1861 = vrot.slane %v1823, 6
          %v1862 = vrot.slane %v1861, 4
          %v1863 = vrot.slane %v1368, 6
          %v1864 = vsel %vm530, %v1862, %v1863
          %v1865 = vrot.slane %v1863, 4
          %v1866 = vrot.slane %v1369, 6
          %v1867 = vsel %vm530, %v1865, %v1866
          %v1868 = vrot.slane %v1824, 6
          %v1869 = vrot.slane %v1868, 4
          %v1870 = vrot.slane %v1371, 6
          %v1871 = vsel %vm530, %v1869, %v1870
          %v1872 = vrot.slane %v1870, 4
          %v1873 = vrot.slane %v1372, 6
          %v1874 = vsel %vm530, %v1872, %v1873
          %v1875 = vrot.slane %v1825, 6
          %v1876 = vrot.slane %v1875, 4
          %v1877 = vrot.slane %v1374, 6
          %v1878 = vsel %vm530, %v1876, %v1877
          %v1879 = vrot.slane %v1877, 4
          %v1880 = vrot.slane %v1375, 6
          %v1881 = vsel %vm530, %v1879, %v1880
          %v1882 = vrot.slane %v1826, 6
          %v1883 = vrot.slane %v1882, 4
          %v1884 = vrot.slane %v1377, 6
          %v1885 = vsel %vm530, %v1883, %v1884
          %v1886 = vrot.slane %v1884, 4
          %v1887 = vrot.slane %v1378, 6
          %v1888 = vsel %vm530, %v1886, %v1887
          %v1889 = vrot.slane %v1827, 6
          %v1890 = vrot.slane %v1889, 4
          %v1891 = vrot.slane %v1380, 6
          %v1892 = vsel %vm530, %v1890, %v1891
          %v1893 = vrot.slane %v1891, 4
          %v1894 = vrot.slane %v1381, 6
          %v1895 = vsel %vm530, %v1893, %v1894
          %v1896 = vrot.slane %v1828, 6
          %v1897 = vrot.slane %v1896, 4
          %v1898 = vrot.slane %v1383, 6
          %v1899 = vsel %vm530, %v1897, %v1898
          %v1900 = vrot.slane %v1898, 4
          %v1901 = vrot.slane %v1384, 6
          %v1902 = vsel %vm530, %v1900, %v1901
          %v1903 = vrot.slane %v1829, 6
          %v1904 = vrot.slane %v1903, 4
          %v1905 = vrot.slane %v1386, 6
          %v1906 = vsel %vm530, %v1904, %v1905
          %v1907 = vrot.slane %v1905, 4
          %v1908 = vrot.slane %v1387, 6
          %v1909 = vsel %vm530, %v1907, %v1908
          %s1910 = scalar_lea.vmem %s173, 256 [#allocation4]
          %v1911 = vld [vmem:[%s1910] sm:$0xf]
          %v1912 = vld [vmem:[%s1910 + $0x4] sm:$0xf]
          %v1913 = vld [vmem:[%s1910 + $0x8] sm:$0xf]
          %v1914 = vld [vmem:[%s1910 + $0xc] sm:$0xf]
          %v1915 = vld [vmem:[%s1910 + $0x10] sm:$0xf]
          %v1916 = vld [vmem:[%s1910 + $0x14] sm:$0xf]
          %v1917 = vld [vmem:[%s1910 + $0x18] sm:$0xf]
          %v1918 = vld [vmem:[%s1910 + $0x1c] sm:$0xf]
          %v1919 = vld [vmem:[%s1910 + $0x20] sm:$0xf]
          %v1920 = vld [vmem:[%s1910 + $0x24] sm:$0xf]
          %v1921 = vld [vmem:[%s1910 + $0x28] sm:$0xf]
          %v1922 = vld [vmem:[%s1910 + $0x2c] sm:$0xf]
          %v1923 = vld [vmem:[%s1910 + $0x30] sm:$0xf]
          %v1924 = vld [vmem:[%s1910 + $0x34] sm:$0xf]
          %v1925 = vld [vmem:[%s1910 + $0x38] sm:$0xf]
          %v1926 = vld [vmem:[%s1910 + $0x3c] sm:$0xf]
          %v1927 = vunpack.c.l.b16 %v1857
          %v1928 = vunpack.c.l.b16 %v1860
          %v1929 = vunpack.c.l.b16 %v1864
          %v1930 = vunpack.c.l.b16 %v1867
          %v1931 = vunpack.c.l.b16 %v1871
          %v1932 = vunpack.c.l.b16 %v1874
          %v1933 = vunpack.c.l.b16 %v1878
          %v1934 = vunpack.c.l.b16 %v1881
          %v1935 = vunpack.c.l.b16 %v1885
          %v1936 = vunpack.c.l.b16 %v1888
          %v1937 = vunpack.c.l.b16 %v1892
          %v1938 = vunpack.c.l.b16 %v1895
          %v1939 = vunpack.c.l.b16 %v1899
          %v1940 = vunpack.c.l.b16 %v1902
          %v1941 = vunpack.c.l.b16 %v1906
          %v1942 = vunpack.c.l.b16 %v1909
          %v1943 = vpack.c.b16 %v1928, %v1927
          %v1944 = vpack.c.b16 %v1930, %v1929
          %v1945 = vpack.c.b16 %v1932, %v1931
          %v1946 = vpack.c.b16 %v1934, %v1933
          %v1947 = vpack.c.b16 %v1936, %v1935
          %v1948 = vpack.c.b16 %v1938, %v1937
          %v1949 = vpack.c.b16 %v1940, %v1939
          %v1950 = vpack.c.b16 %v1942, %v1941
          %v1975 = vunpack.c.l.b16 %v1911
          %v1976 = vunpack.c.l.b16 %v1912
          %v1977 = vunpack.c.l.b16 %v1913
          %v1978 = vunpack.c.l.b16 %v1914
          %v1979 = vunpack.c.l.b16 %v1915
          %v1980 = vunpack.c.l.b16 %v1916
          %v1981 = vunpack.c.l.b16 %v1917
          %v1982 = vunpack.c.l.b16 %v1918
          %v1983 = vunpack.c.l.b16 %v1919
          %v1984 = vunpack.c.l.b16 %v1920
          %v1985 = vunpack.c.l.b16 %v1921
          %v1986 = vunpack.c.l.b16 %v1922
          %v1987 = vunpack.c.l.b16 %v1923
          %v1988 = vunpack.c.l.b16 %v1924
          %v1989 = vunpack.c.l.b16 %v1925
          %v1990 = vunpack.c.l.b16 %v1926
          %v1991 = vpack.c.b16 %v1976, %v1975
          %v1992 = vpack.c.b16 %v1978, %v1977
          %v1993 = vpack.c.b16 %v1980, %v1979
          %v1994 = vpack.c.b16 %v1982, %v1981
          %v1995 = vpack.c.b16 %v1984, %v1983
          %v1996 = vpack.c.b16 %v1986, %v1985
          %v1997 = vpack.c.b16 %v1988, %v1987
          %v1998 = vpack.c.b16 %v1990, %v1989
          %2007 = vmatprep.subr.bf16.mxu0 0
          %2008 = vmatpush1.bf16.msra.mxu0 %v1998
          %2009 = vmatprep.subr.bf16.mxu0 0
          %2010 = vmatpush1.bf16.msra.mxu0 %v1997
          %2011 = vmatprep.subr.bf16.mxu0 0
          %2012 = vmatpush1.bf16.msra.mxu0 %v1996
          %2013 = vmatprep.subr.bf16.mxu0 0
          %2014 = vmatpush1.bf16.msra.mxu0 %v1995
          %2015 = vmatprep.subr.bf16.mxu0 0
          %2016 = vmatpush1.bf16.msra.mxu0 %v1994
          %2017 = vmatprep.subr.bf16.mxu0 0
          %2018 = vmatpush1.bf16.msra.mxu0 %v1993
          %2019 = vmatprep.subr.bf16.mxu0 0
          %2020 = vmatpush1.bf16.msra.mxu0 %v1992
          %2021 = vmatprep.subr.bf16.mxu0 0
          %2022 = vmatpush1.bf16.msra.mxu0 %v1991
          %2023 = vmatprep.subr.bf16.mxu0 0
          %2024 = vmatpush2.bf16.msra.mxu0 0
          %2025 = vmatprep.subr.bf16.mxu0 0
          %2026 = vmatpush2.bf16.msra.mxu0 0
          %2027 = vmatprep.subr.bf16.mxu0 0
          %2028 = vmatpush2.bf16.msra.mxu0 0
          %2029 = vmatprep.subr.bf16.mxu0 0
          %2030 = vmatpush2.bf16.msra.mxu0 0
          %2031 = vmatprep.subr.bf16.mxu0 0
          %2032 = vmatpush2.bf16.msra.mxu0 0
          %2033 = vmatprep.subr.bf16.mxu0 0
          %2034 = vmatpush2.bf16.msra.mxu0 0
          %2035 = vmatprep.subr.bf16.mxu0 0
          %2036 = vmatpush2.bf16.msra.mxu0 0
          %2037 = vmatprep.subr.bf16.mxu0 0
          %2038 = vmatpush2.bf16.msra.mxu0 0
          %2039 = vmatprep.mubr.bf16.mxu0 0
          %2040 = vmatmul.mubr.bf16.gmra.mxu0 %v1943
          %v2041 = vpop.f32.mrf.mxu0
          %v2042 = vadd.f32 0.0, %v2041
          %v2043 = vpop.f32.mrf.mxu0
          %v2044 = vpop.f32.mrf.mxu0
          %v2045 = vadd.f32 0.0, %v2044
          %v2046 = vpop.f32.mrf.mxu0
          %2047 = vmatprep.mubr.bf16.mxu0 0
          %2048 = vmatmul.mubr.bf16.gmra.mxu0 %v1944
          %v2049 = vpop.f32.mrf.mxu0
          %v2050 = vadd.f32 0.0, %v2049
          %v2051 = vpop.f32.mrf.mxu0
          %v2052 = vpop.f32.mrf.mxu0
          %v2053 = vadd.f32 0.0, %v2052
          %v2054 = vpop.f32.mrf.mxu0
          %2055 = vmatprep.mubr.bf16.mxu0 0
          %2056 = vmatmul.mubr.bf16.gmra.mxu0 %v1945
          %v2057 = vpop.f32.mrf.mxu0
          %v2058 = vadd.f32 0.0, %v2057
          %v2059 = vpop.f32.mrf.mxu0
          %v2060 = vpop.f32.mrf.mxu0
          %v2061 = vadd.f32 0.0, %v2060
          %v2062 = vpop.f32.mrf.mxu0
          %2063 = vmatprep.mubr.bf16.mxu0 0
          %2064 = vmatmul.mubr.bf16.gmra.mxu0 %v1946
          %v2065 = vpop.f32.mrf.mxu0
          %v2066 = vadd.f32 0.0, %v2065
          %v2067 = vpop.f32.mrf.mxu0
          %v2068 = vpop.f32.mrf.mxu0
          %v2069 = vadd.f32 0.0, %v2068
          %v2070 = vpop.f32.mrf.mxu0
          %2071 = vmatprep.mubr.bf16.mxu0 0
          %2072 = vmatmul.mubr.bf16.gmra.mxu0 %v1947
          %v2073 = vpop.f32.mrf.mxu0
          %v2074 = vadd.f32 0.0, %v2073
          %v2075 = vpop.f32.mrf.mxu0
          %v2076 = vpop.f32.mrf.mxu0
          %v2077 = vadd.f32 0.0, %v2076
          %v2078 = vpop.f32.mrf.mxu0
          %2079 = vmatprep.mubr.bf16.mxu0 0
          %2080 = vmatmul.mubr.bf16.gmra.mxu0 %v1948
          %v2081 = vpop.f32.mrf.mxu0
          %v2082 = vadd.f32 0.0, %v2081
          %v2083 = vpop.f32.mrf.mxu0
          %v2084 = vpop.f32.mrf.mxu0
          %v2085 = vadd.f32 0.0, %v2084
          %v2086 = vpop.f32.mrf.mxu0
          %2087 = vmatprep.mubr.bf16.mxu0 0
          %2088 = vmatmul.mubr.bf16.gmra.mxu0 %v1949
          %v2089 = vpop.f32.mrf.mxu0
          %v2090 = vadd.f32 0.0, %v2089
          %v2091 = vpop.f32.mrf.mxu0
          %v2092 = vpop.f32.mrf.mxu0
          %v2093 = vadd.f32 0.0, %v2092
          %v2094 = vpop.f32.mrf.mxu0
          %2095 = vmatprep.mubr.bf16.mxu0 0
          %2096 = vmatmul.mubr.bf16.gmra.mxu0 %v1950
          %v2097 = vpop.f32.mrf.mxu0
          %v2098 = vadd.f32 0.0, %v2097
          %v2099 = vpop.f32.mrf.mxu0
          %v2100 = vpop.f32.mrf.mxu0
          %v2101 = vadd.f32 0.0, %v2100
          %v2102 = vpop.f32.mrf.mxu0
          %2103 = vdwg.mxu0
          %v2104 = vadd.f32 %v1806, %v2042
          %v2105 = vadd.f32 %v1807, %v2045
          %v2106 = vadd.f32 %v1808, %v2050
          %v2107 = vadd.f32 %v1809, %v2053
          %v2108 = vadd.f32 %v1810, %v2058
          %v2109 = vadd.f32 %v1811, %v2061
          %v2110 = vadd.f32 %v1812, %v2066
          %v2111 = vadd.f32 %v1813, %v2069
          %v2112 = vadd.f32 %v1814, %v2074
          %v2113 = vadd.f32 %v1815, %v2077
          %v2114 = vadd.f32 %v1816, %v2082
          %v2115 = vadd.f32 %v1817, %v2085
          %v2116 = vadd.f32 %v1818, %v2090
          %v2117 = vadd.f32 %v1819, %v2093
          %v2118 = vadd.f32 %v1820, %v2098
          %v2119 = vadd.f32 %v1821, %v2101
          %v2120 = vld [vmem:[%s1363 + $0x8] sm:$0x7]
          %v2121 = vld [vmem:[%s1363 + $0x14] sm:$0x7]
          %v2122 = vld [vmem:[%s1363 + $0x20] sm:$0x7]
          %v2123 = vld [vmem:[%s1363 + $0x2c] sm:$0x7]
          %v2124 = vld [vmem:[%s1363 + $0x38] sm:$0x7]
          %v2125 = vld [vmem:[%s1363 + $0x44] sm:$0x7]
          %v2126 = vld [vmem:[%s1363 + $0x50] sm:$0x7]
          %v2127 = vld [vmem:[%s1363 + $0x5c] sm:$0x7]
          %v2129 = vshrl.u32 %v1822, 16
          %v2131 = vrot.slane %v2129, 6
          %v2132 = vshll.u32 %v1822, 16
          %v2134 = vrot.slane %v2132, 7
          %v2135 = vor.u32 %v2131, %v2134
          %v2136 = vrot.slane %v2135, 4
          %v2137 = vrot.slane %v1398, 6
          %v2138 = vrot.slane %v1401, 7
          %v2139 = vor.u32 %v2137, %v2138
          %v2140 = vsel %vm968, %v2136, %v2139
          %v2141 = vrot.slane %v2139, 4
          %v2143 = vshrl.u32 %v2120, 16
          %v2145 = vrot.slane %v2143, 6
          %v2146 = vshll.u32 %v2120, 16
          %v2148 = vrot.slane %v2146, 7
          %v2149 = vor.u32 %v2145, %v2148
          %v2150 = vsel %vm968, %v2141, %v2149
          %v2152 = vshrl.u32 %v1823, 16
          %v2154 = vrot.slane %v2152, 6
          %v2155 = vshll.u32 %v1823, 16
          %v2157 = vrot.slane %v2155, 7
          %v2158 = vor.u32 %v2154, %v2157
          %v2159 = vrot.slane %v2158, 4
          %v2160 = vrot.slane %v1426, 6
          %v2161 = vrot.slane %v1429, 7
          %v2162 = vor.u32 %v2160, %v2161
          %v2163 = vsel %vm968, %v2159, %v2162
          %v2164 = vrot.slane %v2162, 4
          %v2166 = vshrl.u32 %v2121, 16
          %v2168 = vrot.slane %v2166, 6
          %v2169 = vshll.u32 %v2121, 16
          %v2171 = vrot.slane %v2169, 7
          %v2172 = vor.u32 %v2168, %v2171
          %v2173 = vsel %vm968, %v2164, %v2172
          %v2175 = vshrl.u32 %v1824, 16
          %v2177 = vrot.slane %v2175, 6
          %v2178 = vshll.u32 %v1824, 16
          %v2180 = vrot.slane %v2178, 7
          %v2181 = vor.u32 %v2177, %v2180
          %v2182 = vrot.slane %v2181, 4
          %v2183 = vrot.slane %v1454, 6
          %v2184 = vrot.slane %v1457, 7
          %v2185 = vor.u32 %v2183, %v2184
          %v2186 = vsel %vm968, %v2182, %v2185
          %v2187 = vrot.slane %v2185, 4
          %v2189 = vshrl.u32 %v2122, 16
          %v2191 = vrot.slane %v2189, 6
          %v2192 = vshll.u32 %v2122, 16
          %v2194 = vrot.slane %v2192, 7
          %v2195 = vor.u32 %v2191, %v2194
          %v2196 = vsel %vm968, %v2187, %v2195
          %v2198 = vshrl.u32 %v1825, 16
          %v2200 = vrot.slane %v2198, 6
          %v2201 = vshll.u32 %v1825, 16
          %v2203 = vrot.slane %v2201, 7
          %v2204 = vor.u32 %v2200, %v2203
          %v2205 = vrot.slane %v2204, 4
          %v2206 = vrot.slane %v1482, 6
          %v2207 = vrot.slane %v1485, 7
          %v2208 = vor.u32 %v2206, %v2207
          %v2209 = vsel %vm968, %v2205, %v2208
          %v2210 = vrot.slane %v2208, 4
          %v2212 = vshrl.u32 %v2123, 16
          %v2214 = vrot.slane %v2212, 6
          %v2215 = vshll.u32 %v2123, 16
          %v2217 = vrot.slane %v2215, 7
          %v2218 = vor.u32 %v2214, %v2217
          %v2219 = vsel %vm968, %v2210, %v2218
          %v2221 = vshrl.u32 %v1826, 16
          %v2223 = vrot.slane %v2221, 6
          %v2224 = vshll.u32 %v1826, 16
          %v2226 = vrot.slane %v2224, 7
          %v2227 = vor.u32 %v2223, %v2226
          %v2228 = vrot.slane %v2227, 4
          %v2229 = vrot.slane %v1510, 6
          %v2230 = vrot.slane %v1513, 7
          %v2231 = vor.u32 %v2229, %v2230
          %v2232 = vsel %vm968, %v2228, %v2231
          %v2233 = vrot.slane %v2231, 4
          %v2235 = vshrl.u32 %v2124, 16
          %v2237 = vrot.slane %v2235, 6
          %v2238 = vshll.u32 %v2124, 16
          %v2240 = vrot.slane %v2238, 7
          %v2241 = vor.u32 %v2237, %v2240
          %v2242 = vsel %vm968, %v2233, %v2241
          %v2244 = vshrl.u32 %v1827, 16
          %v2246 = vrot.slane %v2244, 6
          %v2247 = vshll.u32 %v1827, 16
          %v2249 = vrot.slane %v2247, 7
          %v2250 = vor.u32 %v2246, %v2249
          %v2251 = vrot.slane %v2250, 4
          %v2252 = vrot.slane %v1538, 6
          %v2253 = vrot.slane %v1541, 7
          %v2254 = vor.u32 %v2252, %v2253
          %v2255 = vsel %vm968, %v2251, %v2254
          %v2256 = vrot.slane %v2254, 4
          %v2258 = vshrl.u32 %v2125, 16
          %v2260 = vrot.slane %v2258, 6
          %v2261 = vshll.u32 %v2125, 16
          %v2263 = vrot.slane %v2261, 7
          %v2264 = vor.u32 %v2260, %v2263
          %v2265 = vsel %vm968, %v2256, %v2264
          %v2267 = vshrl.u32 %v1828, 16
          %v2269 = vrot.slane %v2267, 6
          %v2270 = vshll.u32 %v1828, 16
          %v2272 = vrot.slane %v2270, 7
          %v2273 = vor.u32 %v2269, %v2272
          %v2274 = vrot.slane %v2273, 4
          %v2275 = vrot.slane %v1566, 6
          %v2276 = vrot.slane %v1569, 7
          %v2277 = vor.u32 %v2275, %v2276
          %v2278 = vsel %vm968, %v2274, %v2277
          %v2279 = vrot.slane %v2277, 4
          %v2281 = vshrl.u32 %v2126, 16
          %v2283 = vrot.slane %v2281, 6
          %v2284 = vshll.u32 %v2126, 16
          %v2286 = vrot.slane %v2284, 7
          %v2287 = vor.u32 %v2283, %v2286
          %v2288 = vsel %vm968, %v2279, %v2287
          %v2290 = vshrl.u32 %v1829, 16
          %v2292 = vrot.slane %v2290, 6
          %v2293 = vshll.u32 %v1829, 16
          %v2295 = vrot.slane %v2293, 7
          %v2296 = vor.u32 %v2292, %v2295
          %v2297 = vrot.slane %v2296, 4
          %v2298 = vrot.slane %v1594, 6
          %v2299 = vrot.slane %v1597, 7
          %v2300 = vor.u32 %v2298, %v2299
          %v2301 = vsel %vm968, %v2297, %v2300
          %v2302 = vrot.slane %v2300, 4
          %v2304 = vshrl.u32 %v2127, 16
          %v2306 = vrot.slane %v2304, 6
          %v2307 = vshll.u32 %v2127, 16
          %v2309 = vrot.slane %v2307, 7
          %v2310 = vor.u32 %v2306, %v2309
          %v2311 = vsel %vm968, %v2302, %v2310
          %s2312 = scalar_lea.vmem %s173, 320 [#allocation4]
          %v2313 = vld [vmem:[%s2312] sm:$0xf]
          %v2314 = vld [vmem:[%s2312 + $0x4] sm:$0xf]
          %v2315 = vld [vmem:[%s2312 + $0x8] sm:$0xf]
          %v2316 = vld [vmem:[%s2312 + $0xc] sm:$0xf]
          %v2317 = vld [vmem:[%s2312 + $0x10] sm:$0xf]
          %v2318 = vld [vmem:[%s2312 + $0x14] sm:$0xf]
          %v2319 = vld [vmem:[%s2312 + $0x18] sm:$0xf]
          %v2320 = vld [vmem:[%s2312 + $0x1c] sm:$0xf]
          %v2321 = vld [vmem:[%s2312 + $0x20] sm:$0xf]
          %v2322 = vld [vmem:[%s2312 + $0x24] sm:$0xf]
          %v2323 = vld [vmem:[%s2312 + $0x28] sm:$0xf]
          %v2324 = vld [vmem:[%s2312 + $0x2c] sm:$0xf]
          %v2325 = vld [vmem:[%s2312 + $0x30] sm:$0xf]
          %v2326 = vld [vmem:[%s2312 + $0x34] sm:$0xf]
          %v2327 = vld [vmem:[%s2312 + $0x38] sm:$0xf]
          %v2328 = vld [vmem:[%s2312 + $0x3c] sm:$0xf]
          %v2329 = vunpack.c.l.b16 %v2140
          %v2330 = vunpack.c.l.b16 %v2150
          %v2331 = vunpack.c.l.b16 %v2163
          %v2332 = vunpack.c.l.b16 %v2173
          %v2333 = vunpack.c.l.b16 %v2186
          %v2334 = vunpack.c.l.b16 %v2196
          %v2335 = vunpack.c.l.b16 %v2209
          %v2336 = vunpack.c.l.b16 %v2219
          %v2337 = vunpack.c.l.b16 %v2232
          %v2338 = vunpack.c.l.b16 %v2242
          %v2339 = vunpack.c.l.b16 %v2255
          %v2340 = vunpack.c.l.b16 %v2265
          %v2341 = vunpack.c.l.b16 %v2278
          %v2342 = vunpack.c.l.b16 %v2288
          %v2343 = vunpack.c.l.b16 %v2301
          %v2344 = vunpack.c.l.b16 %v2311
          %v2345 = vpack.c.b16 %v2330, %v2329
          %v2346 = vpack.c.b16 %v2332, %v2331
          %v2347 = vpack.c.b16 %v2334, %v2333
          %v2348 = vpack.c.b16 %v2336, %v2335
          %v2349 = vpack.c.b16 %v2338, %v2337
          %v2350 = vpack.c.b16 %v2340, %v2339
          %v2351 = vpack.c.b16 %v2342, %v2341
          %v2352 = vpack.c.b16 %v2344, %v2343
          %v2377 = vunpack.c.l.b16 %v2313
          %v2378 = vunpack.c.l.b16 %v2314
          %v2379 = vunpack.c.l.b16 %v2315
          %v2380 = vunpack.c.l.b16 %v2316
          %v2381 = vunpack.c.l.b16 %v2317
          %v2382 = vunpack.c.l.b16 %v2318
          %v2383 = vunpack.c.l.b16 %v2319
          %v2384 = vunpack.c.l.b16 %v2320
          %v2385 = vunpack.c.l.b16 %v2321
          %v2386 = vunpack.c.l.b16 %v2322
          %v2387 = vunpack.c.l.b16 %v2323
          %v2388 = vunpack.c.l.b16 %v2324
          %v2389 = vunpack.c.l.b16 %v2325
          %v2390 = vunpack.c.l.b16 %v2326
          %v2391 = vunpack.c.l.b16 %v2327
          %v2392 = vunpack.c.l.b16 %v2328
          %v2393 = vpack.c.b16 %v2378, %v2377
          %v2394 = vpack.c.b16 %v2380, %v2379
          %v2395 = vpack.c.b16 %v2382, %v2381
          %v2396 = vpack.c.b16 %v2384, %v2383
          %v2397 = vpack.c.b16 %v2386, %v2385
          %v2398 = vpack.c.b16 %v2388, %v2387
          %v2399 = vpack.c.b16 %v2390, %v2389
          %v2400 = vpack.c.b16 %v2392, %v2391
          %2409 = vmatprep.subr.bf16.mxu0 0
          %2410 = vmatpush1.bf16.msra.mxu0 %v2400
          %2411 = vmatprep.subr.bf16.mxu0 0
          %2412 = vmatpush1.bf16.msra.mxu0 %v2399
          %2413 = vmatprep.subr.bf16.mxu0 0
          %2414 = vmatpush1.bf16.msra.mxu0 %v2398
          %2415 = vmatprep.subr.bf16.mxu0 0
          %2416 = vmatpush1.bf16.msra.mxu0 %v2397
          %2417 = vmatprep.subr.bf16.mxu0 0
          %2418 = vmatpush1.bf16.msra.mxu0 %v2396
          %2419 = vmatprep.subr.bf16.mxu0 0
          %2420 = vmatpush1.bf16.msra.mxu0 %v2395
          %2421 = vmatprep.subr.bf16.mxu0 0
          %2422 = vmatpush1.bf16.msra.mxu0 %v2394
          %2423 = vmatprep.subr.bf16.mxu0 0
          %2424 = vmatpush1.bf16.msra.mxu0 %v2393
          %2425 = vmatprep.subr.bf16.mxu0 0
          %2426 = vmatpush2.bf16.msra.mxu0 0
          %2427 = vmatprep.subr.bf16.mxu0 0
          %2428 = vmatpush2.bf16.msra.mxu0 0
          %2429 = vmatprep.subr.bf16.mxu0 0
          %2430 = vmatpush2.bf16.msra.mxu0 0
          %2431 = vmatprep.subr.bf16.mxu0 0
          %2432 = vmatpush2.bf16.msra.mxu0 0
          %2433 = vmatprep.subr.bf16.mxu0 0
          %2434 = vmatpush2.bf16.msra.mxu0 0
          %2435 = vmatprep.subr.bf16.mxu0 0
          %2436 = vmatpush2.bf16.msra.mxu0 0
          %2437 = vmatprep.subr.bf16.mxu0 0
          %2438 = vmatpush2.bf16.msra.mxu0 0
          %2439 = vmatprep.subr.bf16.mxu0 0
          %2440 = vmatpush2.bf16.msra.mxu0 0
          %2441 = vmatprep.mubr.bf16.mxu0 0
          %2442 = vmatmul.mubr.bf16.gmra.mxu0 %v2345
          %v2443 = vpop.f32.mrf.mxu0
          %v2444 = vadd.f32 0.0, %v2443
          %v2445 = vpop.f32.mrf.mxu0
          %v2446 = vpop.f32.mrf.mxu0
          %v2447 = vadd.f32 0.0, %v2446
          %v2448 = vpop.f32.mrf.mxu0
          %2449 = vmatprep.mubr.bf16.mxu0 0
          %2450 = vmatmul.mubr.bf16.gmra.mxu0 %v2346
          %v2451 = vpop.f32.mrf.mxu0
          %v2452 = vadd.f32 0.0, %v2451
          %v2453 = vpop.f32.mrf.mxu0
          %v2454 = vpop.f32.mrf.mxu0
          %v2455 = vadd.f32 0.0, %v2454
          %v2456 = vpop.f32.mrf.mxu0
          %2457 = vmatprep.mubr.bf16.mxu0 0
          %2458 = vmatmul.mubr.bf16.gmra.mxu0 %v2347
          %v2459 = vpop.f32.mrf.mxu0
          %v2460 = vadd.f32 0.0, %v2459
          %v2461 = vpop.f32.mrf.mxu0
          %v2462 = vpop.f32.mrf.mxu0
          %v2463 = vadd.f32 0.0, %v2462
          %v2464 = vpop.f32.mrf.mxu0
          %2465 = vmatprep.mubr.bf16.mxu0 0
          %2466 = vmatmul.mubr.bf16.gmra.mxu0 %v2348
          %v2467 = vpop.f32.mrf.mxu0
          %v2468 = vadd.f32 0.0, %v2467
          %v2469 = vpop.f32.mrf.mxu0
          %v2470 = vpop.f32.mrf.mxu0
          %v2471 = vadd.f32 0.0, %v2470
          %v2472 = vpop.f32.mrf.mxu0
          %2473 = vmatprep.mubr.bf16.mxu0 0
          %2474 = vmatmul.mubr.bf16.gmra.mxu0 %v2349
          %v2475 = vpop.f32.mrf.mxu0
          %v2476 = vadd.f32 0.0, %v2475
          %v2477 = vpop.f32.mrf.mxu0
          %v2478 = vpop.f32.mrf.mxu0
          %v2479 = vadd.f32 0.0, %v2478
          %v2480 = vpop.f32.mrf.mxu0
          %2481 = vmatprep.mubr.bf16.mxu0 0
          %2482 = vmatmul.mubr.bf16.gmra.mxu0 %v2350
          %v2483 = vpop.f32.mrf.mxu0
          %v2484 = vadd.f32 0.0, %v2483
          %v2485 = vpop.f32.mrf.mxu0
          %v2486 = vpop.f32.mrf.mxu0
          %v2487 = vadd.f32 0.0, %v2486
          %v2488 = vpop.f32.mrf.mxu0
          %2489 = vmatprep.mubr.bf16.mxu0 0
          %2490 = vmatmul.mubr.bf16.gmra.mxu0 %v2351
          %v2491 = vpop.f32.mrf.mxu0
          %v2492 = vadd.f32 0.0, %v2491
          %v2493 = vpop.f32.mrf.mxu0
          %v2494 = vpop.f32.mrf.mxu0
          %v2495 = vadd.f32 0.0, %v2494
          %v2496 = vpop.f32.mrf.mxu0
          %2497 = vmatprep.mubr.bf16.mxu0 0
          %2498 = vmatmul.mubr.bf16.gmra.mxu0 %v2352
          %v2499 = vpop.f32.mrf.mxu0
          %v2500 = vadd.f32 0.0, %v2499
          %v2501 = vpop.f32.mrf.mxu0
          %v2502 = vpop.f32.mrf.mxu0
          %v2503 = vadd.f32 0.0, %v2502
          %v2504 = vpop.f32.mrf.mxu0
          %2505 = vdwg.mxu0
          %v2506 = vadd.f32 %v2104, %v2444
          %v2507 = vadd.f32 %v2105, %v2447
          %v2508 = vadd.f32 %v2106, %v2452
          %v2509 = vadd.f32 %v2107, %v2455
          %v2510 = vadd.f32 %v2108, %v2460
          %v2511 = vadd.f32 %v2109, %v2463
          %v2512 = vadd.f32 %v2110, %v2468
          %v2513 = vadd.f32 %v2111, %v2471
          %v2514 = vadd.f32 %v2112, %v2476
          %v2515 = vadd.f32 %v2113, %v2479
          %v2516 = vadd.f32 %v2114, %v2484
          %v2517 = vadd.f32 %v2115, %v2487
          %v2518 = vadd.f32 %v2116, %v2492
          %v2519 = vadd.f32 %v2117, %v2495
          %v2520 = vadd.f32 %v2118, %v2500
          %v2521 = vadd.f32 %v2119, %v2503
          %s2522 = scalar_lea.vmem [#allocation2], 60
          %v2523 = vld [vmem:[%s2522] sm:$0xe]
          %v2524 = vld [vmem:[%s2522 + $0x4] sm:$0xf]
          %v2525 = vld [vmem:[%s2522 + $0x8] sm:$0x3]
          %v2526 = vld [vmem:[%s2522 + $0xc] sm:$0xe]
          %v2527 = vld [vmem:[%s2522 + $0x10] sm:$0xf]
          %v2528 = vld [vmem:[%s2522 + $0x14] sm:$0x3]
          %v2529 = vld [vmem:[%s2522 + $0x18] sm:$0xe]
          %v2530 = vld [vmem:[%s2522 + $0x1c] sm:$0xf]
          %v2531 = vld [vmem:[%s2522 + $0x20] sm:$0x3]
          %v2532 = vld [vmem:[%s2522 + $0x24] sm:$0xe]
          %v2533 = vld [vmem:[%s2522 + $0x28] sm:$0xf]
          %v2534 = vld [vmem:[%s2522 + $0x2c] sm:$0x3]
          %v2535 = vld [vmem:[%s2522 + $0x30] sm:$0xe]
          %v2536 = vld [vmem:[%s2522 + $0x34] sm:$0xf]
          %v2537 = vld [vmem:[%s2522 + $0x38] sm:$0x3]
          %v2538 = vld [vmem:[%s2522 + $0x3c] sm:$0xe]
          %v2539 = vld [vmem:[%s2522 + $0x40] sm:$0xf]
          %v2540 = vld [vmem:[%s2522 + $0x44] sm:$0x3]
          %v2541 = vld [vmem:[%s2522 + $0x48] sm:$0xe]
          %v2542 = vld [vmem:[%s2522 + $0x4c] sm:$0xf]
          %v2543 = vld [vmem:[%s2522 + $0x50] sm:$0x3]
          %v2544 = vld [vmem:[%s2522 + $0x54] sm:$0xe]
          %v2545 = vld [vmem:[%s2522 + $0x58] sm:$0xf]
          %v2546 = vld [vmem:[%s2522 + $0x5c] sm:$0x3]
          %v2548 = vshrl.u32 %v2523, 16
          %v2550 = vrot.slane %v2548, 5
          %v2551 = vshll.u32 %v2523, 16
          %v2553 = vrot.slane %v2551, 6
          %v2554 = vor.u32 %v2550, %v2553
          %v2555 = vrot.slane %v2554, 4
          %v2557 = vshrl.u32 %v2524, 16
          %v2559 = vrot.slane %v2557, 5
          %v2560 = vshll.u32 %v2524, 16
          %v2562 = vrot.slane %v2560, 6
          %v2563 = vor.u32 %v2559, %v2562
          %v2564 = vsel %vm255, %v2555, %v2563
          %v2565 = vrot.slane %v2563, 4
          %v2567 = vshrl.u32 %v2525, 16
          %v2569 = vrot.slane %v2567, 5
          %v2570 = vshll.u32 %v2525, 16
          %v2572 = vrot.slane %v2570, 6
          %v2573 = vor.u32 %v2569, %v2572
          %v2574 = vsel %vm255, %v2565, %v2573
          %v2576 = vshrl.u32 %v2526, 16
          %v2578 = vrot.slane %v2576, 5
          %v2579 = vshll.u32 %v2526, 16
          %v2581 = vrot.slane %v2579, 6
          %v2582 = vor.u32 %v2578, %v2581
          %v2583 = vrot.slane %v2582, 4
          %v2585 = vshrl.u32 %v2527, 16
          %v2587 = vrot.slane %v2585, 5
          %v2588 = vshll.u32 %v2527, 16
          %v2590 = vrot.slane %v2588, 6
          %v2591 = vor.u32 %v2587, %v2590
          %v2592 = vsel %vm255, %v2583, %v2591
          %v2593 = vrot.slane %v2591, 4
          %v2595 = vshrl.u32 %v2528, 16
          %v2597 = vrot.slane %v2595, 5
          %v2598 = vshll.u32 %v2528, 16
          %v2600 = vrot.slane %v2598, 6
          %v2601 = vor.u32 %v2597, %v2600
          %v2602 = vsel %vm255, %v2593, %v2601
          %v2604 = vshrl.u32 %v2529, 16
          %v2606 = vrot.slane %v2604, 5
          %v2607 = vshll.u32 %v2529, 16
          %v2609 = vrot.slane %v2607, 6
          %v2610 = vor.u32 %v2606, %v2609
          %v2611 = vrot.slane %v2610, 4
          %v2613 = vshrl.u32 %v2530, 16
          %v2615 = vrot.slane %v2613, 5
          %v2616 = vshll.u32 %v2530, 16
          %v2618 = vrot.slane %v2616, 6
          %v2619 = vor.u32 %v2615, %v2618
          %v2620 = vsel %vm255, %v2611, %v2619
          %v2621 = vrot.slane %v2619, 4
          %v2623 = vshrl.u32 %v2531, 16
          %v2625 = vrot.slane %v2623, 5
          %v2626 = vshll.u32 %v2531, 16
          %v2628 = vrot.slane %v2626, 6
          %v2629 = vor.u32 %v2625, %v2628
          %v2630 = vsel %vm255, %v2621, %v2629
          %v2632 = vshrl.u32 %v2532, 16
          %v2634 = vrot.slane %v2632, 5
          %v2635 = vshll.u32 %v2532, 16
          %v2637 = vrot.slane %v2635, 6
          %v2638 = vor.u32 %v2634, %v2637
          %v2639 = vrot.slane %v2638, 4
          %v2641 = vshrl.u32 %v2533, 16
          %v2643 = vrot.slane %v2641, 5
          %v2644 = vshll.u32 %v2533, 16
          %v2646 = vrot.slane %v2644, 6
          %v2647 = vor.u32 %v2643, %v2646
          %v2648 = vsel %vm255, %v2639, %v2647
          %v2649 = vrot.slane %v2647, 4
          %v2651 = vshrl.u32 %v2534, 16
          %v2653 = vrot.slane %v2651, 5
          %v2654 = vshll.u32 %v2534, 16
          %v2656 = vrot.slane %v2654, 6
          %v2657 = vor.u32 %v2653, %v2656
          %v2658 = vsel %vm255, %v2649, %v2657
          %v2660 = vshrl.u32 %v2535, 16
          %v2662 = vrot.slane %v2660, 5
          %v2663 = vshll.u32 %v2535, 16
          %v2665 = vrot.slane %v2663, 6
          %v2666 = vor.u32 %v2662, %v2665
          %v2667 = vrot.slane %v2666, 4
          %v2669 = vshrl.u32 %v2536, 16
          %v2671 = vrot.slane %v2669, 5
          %v2672 = vshll.u32 %v2536, 16
          %v2674 = vrot.slane %v2672, 6
          %v2675 = vor.u32 %v2671, %v2674
          %v2676 = vsel %vm255, %v2667, %v2675
          %v2677 = vrot.slane %v2675, 4
          %v2679 = vshrl.u32 %v2537, 16
          %v2681 = vrot.slane %v2679, 5
          %v2682 = vshll.u32 %v2537, 16
          %v2684 = vrot.slane %v2682, 6
          %v2685 = vor.u32 %v2681, %v2684
          %v2686 = vsel %vm255, %v2677, %v2685
          %v2688 = vshrl.u32 %v2538, 16
          %v2690 = vrot.slane %v2688, 5
          %v2691 = vshll.u32 %v2538, 16
          %v2693 = vrot.slane %v2691, 6
          %v2694 = vor.u32 %v2690, %v2693
          %v2695 = vrot.slane %v2694, 4
          %v2697 = vshrl.u32 %v2539, 16
          %v2699 = vrot.slane %v2697, 5
          %v2700 = vshll.u32 %v2539, 16
          %v2702 = vrot.slane %v2700, 6
          %v2703 = vor.u32 %v2699, %v2702
          %v2704 = vsel %vm255, %v2695, %v2703
          %v2705 = vrot.slane %v2703, 4
          %v2707 = vshrl.u32 %v2540, 16
          %v2709 = vrot.slane %v2707, 5
          %v2710 = vshll.u32 %v2540, 16
          %v2712 = vrot.slane %v2710, 6
          %v2713 = vor.u32 %v2709, %v2712
          %v2714 = vsel %vm255, %v2705, %v2713
          %v2716 = vshrl.u32 %v2541, 16
          %v2718 = vrot.slane %v2716, 5
          %v2719 = vshll.u32 %v2541, 16
          %v2721 = vrot.slane %v2719, 6
          %v2722 = vor.u32 %v2718, %v2721
          %v2723 = vrot.slane %v2722, 4
          %v2725 = vshrl.u32 %v2542, 16
          %v2727 = vrot.slane %v2725, 5
          %v2728 = vshll.u32 %v2542, 16
          %v2730 = vrot.slane %v2728, 6
          %v2731 = vor.u32 %v2727, %v2730
          %v2732 = vsel %vm255, %v2723, %v2731
          %v2733 = vrot.slane %v2731, 4
          %v2735 = vshrl.u32 %v2543, 16
          %v2737 = vrot.slane %v2735, 5
          %v2738 = vshll.u32 %v2543, 16
          %v2740 = vrot.slane %v2738, 6
          %v2741 = vor.u32 %v2737, %v2740
          %v2742 = vsel %vm255, %v2733, %v2741
          %v2744 = vshrl.u32 %v2544, 16
          %v2746 = vrot.slane %v2744, 5
          %v2747 = vshll.u32 %v2544, 16
          %v2749 = vrot.slane %v2747, 6
          %v2750 = vor.u32 %v2746, %v2749
          %v2751 = vrot.slane %v2750, 4
          %v2753 = vshrl.u32 %v2545, 16
          %v2755 = vrot.slane %v2753, 5
          %v2756 = vshll.u32 %v2545, 16
          %v2758 = vrot.slane %v2756, 6
          %v2759 = vor.u32 %v2755, %v2758
          %v2760 = vsel %vm255, %v2751, %v2759
          %v2761 = vrot.slane %v2759, 4
          %v2763 = vshrl.u32 %v2546, 16
          %v2765 = vrot.slane %v2763, 5
          %v2766 = vshll.u32 %v2546, 16
          %v2768 = vrot.slane %v2766, 6
          %v2769 = vor.u32 %v2765, %v2768
          %v2770 = vsel %vm255, %v2761, %v2769
          %s2771 = scalar_lea.vmem %s173, 384 [#allocation4]
          %v2772 = vld [vmem:[%s2771] sm:$0xf]
          %v2773 = vld [vmem:[%s2771 + $0x4] sm:$0xf]
          %v2774 = vld [vmem:[%s2771 + $0x8] sm:$0xf]
          %v2775 = vld [vmem:[%s2771 + $0xc] sm:$0xf]
          %v2776 = vld [vmem:[%s2771 + $0x10] sm:$0xf]
          %v2777 = vld [vmem:[%s2771 + $0x14] sm:$0xf]
          %v2778 = vld [vmem:[%s2771 + $0x18] sm:$0xf]
          %v2779 = vld [vmem:[%s2771 + $0x1c] sm:$0xf]
          %v2780 = vld [vmem:[%s2771 + $0x20] sm:$0xf]
          %v2781 = vld [vmem:[%s2771 + $0x24] sm:$0xf]
          %v2782 = vld [vmem:[%s2771 + $0x28] sm:$0xf]
          %v2783 = vld [vmem:[%s2771 + $0x2c] sm:$0xf]
          %v2784 = vld [vmem:[%s2771 + $0x30] sm:$0xf]
          %v2785 = vld [vmem:[%s2771 + $0x34] sm:$0xf]
          %v2786 = vld [vmem:[%s2771 + $0x38] sm:$0xf]
          %v2787 = vld [vmem:[%s2771 + $0x3c] sm:$0xf]
          %v2788 = vunpack.c.l.b16 %v2564
          %v2789 = vunpack.c.l.b16 %v2574
          %v2790 = vunpack.c.l.b16 %v2592
          %v2791 = vunpack.c.l.b16 %v2602
          %v2792 = vunpack.c.l.b16 %v2620
          %v2793 = vunpack.c.l.b16 %v2630
          %v2794 = vunpack.c.l.b16 %v2648
          %v2795 = vunpack.c.l.b16 %v2658
          %v2796 = vunpack.c.l.b16 %v2676
          %v2797 = vunpack.c.l.b16 %v2686
          %v2798 = vunpack.c.l.b16 %v2704
          %v2799 = vunpack.c.l.b16 %v2714
          %v2800 = vunpack.c.l.b16 %v2732
          %v2801 = vunpack.c.l.b16 %v2742
          %v2802 = vunpack.c.l.b16 %v2760
          %v2803 = vunpack.c.l.b16 %v2770
          %v2804 = vpack.c.b16 %v2789, %v2788
          %v2805 = vpack.c.b16 %v2791, %v2790
          %v2806 = vpack.c.b16 %v2793, %v2792
          %v2807 = vpack.c.b16 %v2795, %v2794
          %v2808 = vpack.c.b16 %v2797, %v2796
          %v2809 = vpack.c.b16 %v2799, %v2798
          %v2810 = vpack.c.b16 %v2801, %v2800
          %v2811 = vpack.c.b16 %v2803, %v2802
          %v2836 = vunpack.c.l.b16 %v2772
          %v2837 = vunpack.c.l.b16 %v2773
          %v2838 = vunpack.c.l.b16 %v2774
          %v2839 = vunpack.c.l.b16 %v2775
          %v2840 = vunpack.c.l.b16 %v2776
          %v2841 = vunpack.c.l.b16 %v2777
          %v2842 = vunpack.c.l.b16 %v2778
          %v2843 = vunpack.c.l.b16 %v2779
          %v2844 = vunpack.c.l.b16 %v2780
          %v2845 = vunpack.c.l.b16 %v2781
          %v2846 = vunpack.c.l.b16 %v2782
          %v2847 = vunpack.c.l.b16 %v2783
          %v2848 = vunpack.c.l.b16 %v2784
          %v2849 = vunpack.c.l.b16 %v2785
          %v2850 = vunpack.c.l.b16 %v2786
          %v2851 = vunpack.c.l.b16 %v2787
          %v2852 = vpack.c.b16 %v2837, %v2836
          %v2853 = vpack.c.b16 %v2839, %v2838
          %v2854 = vpack.c.b16 %v2841, %v2840
          %v2855 = vpack.c.b16 %v2843, %v2842
          %v2856 = vpack.c.b16 %v2845, %v2844
          %v2857 = vpack.c.b16 %v2847, %v2846
          %v2858 = vpack.c.b16 %v2849, %v2848
          %v2859 = vpack.c.b16 %v2851, %v2850
          %2868 = vmatprep.subr.bf16.mxu0 0
          %2869 = vmatpush1.bf16.msra.mxu0 %v2859
          %2870 = vmatprep.subr.bf16.mxu0 0
          %2871 = vmatpush1.bf16.msra.mxu0 %v2858
          %2872 = vmatprep.subr.bf16.mxu0 0
          %2873 = vmatpush1.bf16.msra.mxu0 %v2857
          %2874 = vmatprep.subr.bf16.mxu0 0
          %2875 = vmatpush1.bf16.msra.mxu0 %v2856
          %2876 = vmatprep.subr.bf16.mxu0 0
          %2877 = vmatpush1.bf16.msra.mxu0 %v2855
          %2878 = vmatprep.subr.bf16.mxu0 0
          %2879 = vmatpush1.bf16.msra.mxu0 %v2854
          %2880 = vmatprep.subr.bf16.mxu0 0
          %2881 = vmatpush1.bf16.msra.mxu0 %v2853
          %2882 = vmatprep.subr.bf16.mxu0 0
          %2883 = vmatpush1.bf16.msra.mxu0 %v2852
          %2884 = vmatprep.subr.bf16.mxu0 0
          %2885 = vmatpush2.bf16.msra.mxu0 0
          %2886 = vmatprep.subr.bf16.mxu0 0
          %2887 = vmatpush2.bf16.msra.mxu0 0
          %2888 = vmatprep.subr.bf16.mxu0 0
          %2889 = vmatpush2.bf16.msra.mxu0 0
          %2890 = vmatprep.subr.bf16.mxu0 0
          %2891 = vmatpush2.bf16.msra.mxu0 0
          %2892 = vmatprep.subr.bf16.mxu0 0
          %2893 = vmatpush2.bf16.msra.mxu0 0
          %2894 = vmatprep.subr.bf16.mxu0 0
          %2895 = vmatpush2.bf16.msra.mxu0 0
          %2896 = vmatprep.subr.bf16.mxu0 0
          %2897 = vmatpush2.bf16.msra.mxu0 0
          %2898 = vmatprep.subr.bf16.mxu0 0
          %2899 = vmatpush2.bf16.msra.mxu0 0
          %2900 = vmatprep.mubr.bf16.mxu0 0
          %2901 = vmatmul.mubr.bf16.gmra.mxu0 %v2804
          %v2902 = vpop.f32.mrf.mxu0
          %v2903 = vadd.f32 0.0, %v2902
          %v2904 = vpop.f32.mrf.mxu0
          %v2905 = vpop.f32.mrf.mxu0
          %v2906 = vadd.f32 0.0, %v2905
          %v2907 = vpop.f32.mrf.mxu0
          %2908 = vmatprep.mubr.bf16.mxu0 0
          %2909 = vmatmul.mubr.bf16.gmra.mxu0 %v2805
          %v2910 = vpop.f32.mrf.mxu0
          %v2911 = vadd.f32 0.0, %v2910
          %v2912 = vpop.f32.mrf.mxu0
          %v2913 = vpop.f32.mrf.mxu0
          %v2914 = vadd.f32 0.0, %v2913
          %v2915 = vpop.f32.mrf.mxu0
          %2916 = vmatprep.mubr.bf16.mxu0 0
          %2917 = vmatmul.mubr.bf16.gmra.mxu0 %v2806
          %v2918 = vpop.f32.mrf.mxu0
          %v2919 = vadd.f32 0.0, %v2918
          %v2920 = vpop.f32.mrf.mxu0
          %v2921 = vpop.f32.mrf.mxu0
          %v2922 = vadd.f32 0.0, %v2921
          %v2923 = vpop.f32.mrf.mxu0
          %2924 = vmatprep.mubr.bf16.mxu0 0
          %2925 = vmatmul.mubr.bf16.gmra.mxu0 %v2807
          %v2926 = vpop.f32.mrf.mxu0
          %v2927 = vadd.f32 0.0, %v2926
          %v2928 = vpop.f32.mrf.mxu0
          %v2929 = vpop.f32.mrf.mxu0
          %v2930 = vadd.f32 0.0, %v2929
          %v2931 = vpop.f32.mrf.mxu0
          %2932 = vmatprep.mubr.bf16.mxu0 0
          %2933 = vmatmul.mubr.bf16.gmra.mxu0 %v2808
          %v2934 = vpop.f32.mrf.mxu0
          %v2935 = vadd.f32 0.0, %v2934
          %v2936 = vpop.f32.mrf.mxu0
          %v2937 = vpop.f32.mrf.mxu0
          %v2938 = vadd.f32 0.0, %v2937
          %v2939 = vpop.f32.mrf.mxu0
          %2940 = vmatprep.mubr.bf16.mxu0 0
          %2941 = vmatmul.mubr.bf16.gmra.mxu0 %v2809
          %v2942 = vpop.f32.mrf.mxu0
          %v2943 = vadd.f32 0.0, %v2942
          %v2944 = vpop.f32.mrf.mxu0
          %v2945 = vpop.f32.mrf.mxu0
          %v2946 = vadd.f32 0.0, %v2945
          %v2947 = vpop.f32.mrf.mxu0
          %2948 = vmatprep.mubr.bf16.mxu0 0
          %2949 = vmatmul.mubr.bf16.gmra.mxu0 %v2810
          %v2950 = vpop.f32.mrf.mxu0
          %v2951 = vadd.f32 0.0, %v2950
          %v2952 = vpop.f32.mrf.mxu0
          %v2953 = vpop.f32.mrf.mxu0
          %v2954 = vadd.f32 0.0, %v2953
          %v2955 = vpop.f32.mrf.mxu0
          %2956 = vmatprep.mubr.bf16.mxu0 0
          %2957 = vmatmul.mubr.bf16.gmra.mxu0 %v2811
          %v2958 = vpop.f32.mrf.mxu0
          %v2959 = vadd.f32 0.0, %v2958
          %v2960 = vpop.f32.mrf.mxu0
          %v2961 = vpop.f32.mrf.mxu0
          %v2962 = vadd.f32 0.0, %v2961
          %v2963 = vpop.f32.mrf.mxu0
          %2964 = vdwg.mxu0
          %v2965 = vadd.f32 %v2506, %v2903
          %v2966 = vadd.f32 %v2507, %v2906
          %v2967 = vadd.f32 %v2508, %v2911
          %v2968 = vadd.f32 %v2509, %v2914
          %v2969 = vadd.f32 %v2510, %v2919
          %v2970 = vadd.f32 %v2511, %v2922
          %v2971 = vadd.f32 %v2512, %v2927
          %v2972 = vadd.f32 %v2513, %v2930
          %v2973 = vadd.f32 %v2514, %v2935
          %v2974 = vadd.f32 %v2515, %v2938
          %v2975 = vadd.f32 %v2516, %v2943
          %v2976 = vadd.f32 %v2517, %v2946
          %v2977 = vadd.f32 %v2518, %v2951
          %v2978 = vadd.f32 %v2519, %v2954
          %v2979 = vadd.f32 %v2520, %v2959
          %v2980 = vadd.f32 %v2521, %v2962
          %v2981 = vld [vmem:[%s2522] sm:$0xc]
          %v2982 = vld [vmem:[%s2522 + $0xc] sm:$0xc]
          %v2983 = vld [vmem:[%s2522 + $0x18] sm:$0xc]
          %v2984 = vld [vmem:[%s2522 + $0x24] sm:$0xc]
          %v2985 = vld [vmem:[%s2522 + $0x30] sm:$0xc]
          %v2986 = vld [vmem:[%s2522 + $0x3c] sm:$0xc]
          %v2987 = vld [vmem:[%s2522 + $0x48] sm:$0xc]
          %v2988 = vld [vmem:[%s2522 + $0x54] sm:$0xc]
          %v3013 = vrot.slane %v2981, 6
          %v3014 = vrot.slane %v3013, 4
          %v3015 = vrot.slane %v2524, 6
          %v3016 = vsel %vm530, %v3014, %v3015
          %v3017 = vrot.slane %v3015, 4
          %v3018 = vrot.slane %v2525, 6
          %v3019 = vsel %vm530, %v3017, %v3018
          %v3020 = vrot.slane %v2982, 6
          %v3021 = vrot.slane %v3020, 4
          %v3022 = vrot.slane %v2527, 6
          %v3023 = vsel %vm530, %v3021, %v3022
          %v3024 = vrot.slane %v3022, 4
          %v3025 = vrot.slane %v2528, 6
          %v3026 = vsel %vm530, %v3024, %v3025
          %v3027 = vrot.slane %v2983, 6
          %v3028 = vrot.slane %v3027, 4
          %v3029 = vrot.slane %v2530, 6
          %v3030 = vsel %vm530, %v3028, %v3029
          %v3031 = vrot.slane %v3029, 4
          %v3032 = vrot.slane %v2531, 6
          %v3033 = vsel %vm530, %v3031, %v3032
          %v3034 = vrot.slane %v2984, 6
          %v3035 = vrot.slane %v3034, 4
          %v3036 = vrot.slane %v2533, 6
          %v3037 = vsel %vm530, %v3035, %v3036
          %v3038 = vrot.slane %v3036, 4
          %v3039 = vrot.slane %v2534, 6
          %v3040 = vsel %vm530, %v3038, %v3039
          %v3041 = vrot.slane %v2985, 6
          %v3042 = vrot.slane %v3041, 4
          %v3043 = vrot.slane %v2536, 6
          %v3044 = vsel %vm530, %v3042, %v3043
          %v3045 = vrot.slane %v3043, 4
          %v3046 = vrot.slane %v2537, 6
          %v3047 = vsel %vm530, %v3045, %v3046
          %v3048 = vrot.slane %v2986, 6
          %v3049 = vrot.slane %v3048, 4
          %v3050 = vrot.slane %v2539, 6
          %v3051 = vsel %vm530, %v3049, %v3050
          %v3052 = vrot.slane %v3050, 4
          %v3053 = vrot.slane %v2540, 6
          %v3054 = vsel %vm530, %v3052, %v3053
          %v3055 = vrot.slane %v2987, 6
          %v3056 = vrot.slane %v3055, 4
          %v3057 = vrot.slane %v2542, 6
          %v3058 = vsel %vm530, %v3056, %v3057
          %v3059 = vrot.slane %v3057, 4
          %v3060 = vrot.slane %v2543, 6
          %v3061 = vsel %vm530, %v3059, %v3060
          %v3062 = vrot.slane %v2988, 6
          %v3063 = vrot.slane %v3062, 4
          %v3064 = vrot.slane %v2545, 6
          %v3065 = vsel %vm530, %v3063, %v3064
          %v3066 = vrot.slane %v3064, 4
          %v3067 = vrot.slane %v2546, 6
          %v3068 = vsel %vm530, %v3066, %v3067
          %s3069 = scalar_lea.vmem %s173, 448 [#allocation4]
          %v3070 = vld [vmem:[%s3069] sm:$0xf]
          %v3071 = vld [vmem:[%s3069 + $0x4] sm:$0xf]
          %v3072 = vld [vmem:[%s3069 + $0x8] sm:$0xf]
          %v3073 = vld [vmem:[%s3069 + $0xc] sm:$0xf]
          %v3074 = vld [vmem:[%s3069 + $0x10] sm:$0xf]
          %v3075 = vld [vmem:[%s3069 + $0x14] sm:$0xf]
          %v3076 = vld [vmem:[%s3069 + $0x18] sm:$0xf]
          %v3077 = vld [vmem:[%s3069 + $0x1c] sm:$0xf]
          %v3078 = vld [vmem:[%s3069 + $0x20] sm:$0xf]
          %v3079 = vld [vmem:[%s3069 + $0x24] sm:$0xf]
          %v3080 = vld [vmem:[%s3069 + $0x28] sm:$0xf]
          %v3081 = vld [vmem:[%s3069 + $0x2c] sm:$0xf]
          %v3082 = vld [vmem:[%s3069 + $0x30] sm:$0xf]
          %v3083 = vld [vmem:[%s3069 + $0x34] sm:$0xf]
          %v3084 = vld [vmem:[%s3069 + $0x38] sm:$0xf]
          %v3085 = vld [vmem:[%s3069 + $0x3c] sm:$0xf]
          %v3086 = vunpack.c.l.b16 %v3016
          %v3087 = vunpack.c.l.b16 %v3019
          %v3088 = vunpack.c.l.b16 %v3023
          %v3089 = vunpack.c.l.b16 %v3026
          %v3090 = vunpack.c.l.b16 %v3030
          %v3091 = vunpack.c.l.b16 %v3033
          %v3092 = vunpack.c.l.b16 %v3037
          %v3093 = vunpack.c.l.b16 %v3040
          %v3094 = vunpack.c.l.b16 %v3044
          %v3095 = vunpack.c.l.b16 %v3047
          %v3096 = vunpack.c.l.b16 %v3051
          %v3097 = vunpack.c.l.b16 %v3054
          %v3098 = vunpack.c.l.b16 %v3058
          %v3099 = vunpack.c.l.b16 %v3061
          %v3100 = vunpack.c.l.b16 %v3065
          %v3101 = vunpack.c.l.b16 %v3068
          %v3102 = vpack.c.b16 %v3087, %v3086
          %v3103 = vpack.c.b16 %v3089, %v3088
          %v3104 = vpack.c.b16 %v3091, %v3090
          %v3105 = vpack.c.b16 %v3093, %v3092
          %v3106 = vpack.c.b16 %v3095, %v3094
          %v3107 = vpack.c.b16 %v3097, %v3096
          %v3108 = vpack.c.b16 %v3099, %v3098
          %v3109 = vpack.c.b16 %v3101, %v3100
          %v3134 = vunpack.c.l.b16 %v3070
          %v3135 = vunpack.c.l.b16 %v3071
          %v3136 = vunpack.c.l.b16 %v3072
          %v3137 = vunpack.c.l.b16 %v3073
          %v3138 = vunpack.c.l.b16 %v3074
          %v3139 = vunpack.c.l.b16 %v3075
          %v3140 = vunpack.c.l.b16 %v3076
          %v3141 = vunpack.c.l.b16 %v3077
          %v3142 = vunpack.c.l.b16 %v3078
          %v3143 = vunpack.c.l.b16 %v3079
          %v3144 = vunpack.c.l.b16 %v3080
          %v3145 = vunpack.c.l.b16 %v3081
          %v3146 = vunpack.c.l.b16 %v3082
          %v3147 = vunpack.c.l.b16 %v3083
          %v3148 = vunpack.c.l.b16 %v3084
          %v3149 = vunpack.c.l.b16 %v3085
          %v3150 = vpack.c.b16 %v3135, %v3134
          %v3151 = vpack.c.b16 %v3137, %v3136
          %v3152 = vpack.c.b16 %v3139, %v3138
          %v3153 = vpack.c.b16 %v3141, %v3140
          %v3154 = vpack.c.b16 %v3143, %v3142
          %v3155 = vpack.c.b16 %v3145, %v3144
          %v3156 = vpack.c.b16 %v3147, %v3146
          %v3157 = vpack.c.b16 %v3149, %v3148
          %3166 = vmatprep.subr.bf16.mxu0 0
          %3167 = vmatpush1.bf16.msra.mxu0 %v3157
          %3168 = vmatprep.subr.bf16.mxu0 0
          %3169 = vmatpush1.bf16.msra.mxu0 %v3156
          %3170 = vmatprep.subr.bf16.mxu0 0
          %3171 = vmatpush1.bf16.msra.mxu0 %v3155
          %3172 = vmatprep.subr.bf16.mxu0 0
          %3173 = vmatpush1.bf16.msra.mxu0 %v3154
          %3174 = vmatprep.subr.bf16.mxu0 0
          %3175 = vmatpush1.bf16.msra.mxu0 %v3153
          %3176 = vmatprep.subr.bf16.mxu0 0
          %3177 = vmatpush1.bf16.msra.mxu0 %v3152
          %3178 = vmatprep.subr.bf16.mxu0 0
          %3179 = vmatpush1.bf16.msra.mxu0 %v3151
          %3180 = vmatprep.subr.bf16.mxu0 0
          %3181 = vmatpush1.bf16.msra.mxu0 %v3150
          %3182 = vmatprep.subr.bf16.mxu0 0
          %3183 = vmatpush2.bf16.msra.mxu0 0
          %3184 = vmatprep.subr.bf16.mxu0 0
          %3185 = vmatpush2.bf16.msra.mxu0 0
          %3186 = vmatprep.subr.bf16.mxu0 0
          %3187 = vmatpush2.bf16.msra.mxu0 0
          %3188 = vmatprep.subr.bf16.mxu0 0
          %3189 = vmatpush2.bf16.msra.mxu0 0
          %3190 = vmatprep.subr.bf16.mxu0 0
          %3191 = vmatpush2.bf16.msra.mxu0 0
          %3192 = vmatprep.subr.bf16.mxu0 0
          %3193 = vmatpush2.bf16.msra.mxu0 0
          %3194 = vmatprep.subr.bf16.mxu0 0
          %3195 = vmatpush2.bf16.msra.mxu0 0
          %3196 = vmatprep.subr.bf16.mxu0 0
          %3197 = vmatpush2.bf16.msra.mxu0 0
          %3198 = vmatprep.mubr.bf16.mxu0 0
          %3199 = vmatmul.mubr.bf16.gmra.mxu0 %v3102
          %v3200 = vpop.f32.mrf.mxu0
          %v3201 = vadd.f32 0.0, %v3200
          %v3202 = vpop.f32.mrf.mxu0
          %v3203 = vpop.f32.mrf.mxu0
          %v3204 = vadd.f32 0.0, %v3203
          %v3205 = vpop.f32.mrf.mxu0
          %3206 = vmatprep.mubr.bf16.mxu0 0
          %3207 = vmatmul.mubr.bf16.gmra.mxu0 %v3103
          %v3208 = vpop.f32.mrf.mxu0
          %v3209 = vadd.f32 0.0, %v3208
          %v3210 = vpop.f32.mrf.mxu0
          %v3211 = vpop.f32.mrf.mxu0
          %v3212 = vadd.f32 0.0, %v3211
          %v3213 = vpop.f32.mrf.mxu0
          %3214 = vmatprep.mubr.bf16.mxu0 0
          %3215 = vmatmul.mubr.bf16.gmra.mxu0 %v3104
          %v3216 = vpop.f32.mrf.mxu0
          %v3217 = vadd.f32 0.0, %v3216
          %v3218 = vpop.f32.mrf.mxu0
          %v3219 = vpop.f32.mrf.mxu0
          %v3220 = vadd.f32 0.0, %v3219
          %v3221 = vpop.f32.mrf.mxu0
          %3222 = vmatprep.mubr.bf16.mxu0 0
          %3223 = vmatmul.mubr.bf16.gmra.mxu0 %v3105
          %v3224 = vpop.f32.mrf.mxu0
          %v3225 = vadd.f32 0.0, %v3224
          %v3226 = vpop.f32.mrf.mxu0
          %v3227 = vpop.f32.mrf.mxu0
          %v3228 = vadd.f32 0.0, %v3227
          %v3229 = vpop.f32.mrf.mxu0
          %3230 = vmatprep.mubr.bf16.mxu0 0
          %3231 = vmatmul.mubr.bf16.gmra.mxu0 %v3106
          %v3232 = vpop.f32.mrf.mxu0
          %v3233 = vadd.f32 0.0, %v3232
          %v3234 = vpop.f32.mrf.mxu0
          %v3235 = vpop.f32.mrf.mxu0
          %v3236 = vadd.f32 0.0, %v3235
          %v3237 = vpop.f32.mrf.mxu0
          %3238 = vmatprep.mubr.bf16.mxu0 0
          %3239 = vmatmul.mubr.bf16.gmra.mxu0 %v3107
          %v3240 = vpop.f32.mrf.mxu0
          %v3241 = vadd.f32 0.0, %v3240
          %v3242 = vpop.f32.mrf.mxu0
          %v3243 = vpop.f32.mrf.mxu0
          %v3244 = vadd.f32 0.0, %v3243
          %v3245 = vpop.f32.mrf.mxu0
          %3246 = vmatprep.mubr.bf16.mxu0 0
          %3247 = vmatmul.mubr.bf16.gmra.mxu0 %v3108
          %v3248 = vpop.f32.mrf.mxu0
          %v3249 = vadd.f32 0.0, %v3248
          %v3250 = vpop.f32.mrf.mxu0
          %v3251 = vpop.f32.mrf.mxu0
          %v3252 = vadd.f32 0.0, %v3251
          %v3253 = vpop.f32.mrf.mxu0
          %3254 = vmatprep.mubr.bf16.mxu0 0
          %3255 = vmatmul.mubr.bf16.gmra.mxu0 %v3109
          %v3256 = vpop.f32.mrf.mxu0
          %v3257 = vadd.f32 0.0, %v3256
          %v3258 = vpop.f32.mrf.mxu0
          %v3259 = vpop.f32.mrf.mxu0
          %v3260 = vadd.f32 0.0, %v3259
          %v3261 = vpop.f32.mrf.mxu0
          %3262 = vdwg.mxu0
          %v3263 = vadd.f32 %v2965, %v3201
          %v3264 = vadd.f32 %v2966, %v3204
          %v3265 = vadd.f32 %v2967, %v3209
          %v3266 = vadd.f32 %v2968, %v3212
          %v3267 = vadd.f32 %v2969, %v3217
          %v3268 = vadd.f32 %v2970, %v3220
          %v3269 = vadd.f32 %v2971, %v3225
          %v3270 = vadd.f32 %v2972, %v3228
          %v3271 = vadd.f32 %v2973, %v3233
          %v3272 = vadd.f32 %v2974, %v3236
          %v3273 = vadd.f32 %v2975, %v3241
          %v3274 = vadd.f32 %v2976, %v3244
          %v3275 = vadd.f32 %v2977, %v3249
          %v3276 = vadd.f32 %v2978, %v3252
          %v3277 = vadd.f32 %v2979, %v3257
          %v3278 = vadd.f32 %v2980, %v3260
          %v3279 = vld [vmem:[%s2522 + $0x8] sm:$0x7]
          %v3280 = vld [vmem:[%s2522 + $0x14] sm:$0x7]
          %v3281 = vld [vmem:[%s2522 + $0x20] sm:$0x7]
          %v3282 = vld [vmem:[%s2522 + $0x2c] sm:$0x7]
          %v3283 = vld [vmem:[%s2522 + $0x38] sm:$0x7]
          %v3284 = vld [vmem:[%s2522 + $0x44] sm:$0x7]
          %v3285 = vld [vmem:[%s2522 + $0x50] sm:$0x7]
          %v3286 = vld [vmem:[%s2522 + $0x5c] sm:$0x7]
          %v3288 = vshrl.u32 %v2981, 16
          %v3290 = vrot.slane %v3288, 6
          %v3291 = vshll.u32 %v2981, 16
          %v3293 = vrot.slane %v3291, 7
          %v3294 = vor.u32 %v3290, %v3293
          %v3295 = vrot.slane %v3294, 4
          %v3296 = vrot.slane %v2557, 6
          %v3297 = vrot.slane %v2560, 7
          %v3298 = vor.u32 %v3296, %v3297
          %v3299 = vsel %vm968, %v3295, %v3298
          %v3300 = vrot.slane %v3298, 4
          %v3302 = vshrl.u32 %v3279, 16
          %v3304 = vrot.slane %v3302, 6
          %v3305 = vshll.u32 %v3279, 16
          %v3307 = vrot.slane %v3305, 7
          %v3308 = vor.u32 %v3304, %v3307
          %v3309 = vsel %vm968, %v3300, %v3308
          %v3311 = vshrl.u32 %v2982, 16
          %v3313 = vrot.slane %v3311, 6
          %v3314 = vshll.u32 %v2982, 16
          %v3316 = vrot.slane %v3314, 7
          %v3317 = vor.u32 %v3313, %v3316
          %v3318 = vrot.slane %v3317, 4
          %v3319 = vrot.slane %v2585, 6
          %v3320 = vrot.slane %v2588, 7
          %v3321 = vor.u32 %v3319, %v3320
          %v3322 = vsel %vm968, %v3318, %v3321
          %v3323 = vrot.slane %v3321, 4
          %v3325 = vshrl.u32 %v3280, 16
          %v3327 = vrot.slane %v3325, 6
          %v3328 = vshll.u32 %v3280, 16
          %v3330 = vrot.slane %v3328, 7
          %v3331 = vor.u32 %v3327, %v3330
          %v3332 = vsel %vm968, %v3323, %v3331
          %v3334 = vshrl.u32 %v2983, 16
          %v3336 = vrot.slane %v3334, 6
          %v3337 = vshll.u32 %v2983, 16
          %v3339 = vrot.slane %v3337, 7
          %v3340 = vor.u32 %v3336, %v3339
          %v3341 = vrot.slane %v3340, 4
          %v3342 = vrot.slane %v2613, 6
          %v3343 = vrot.slane %v2616, 7
          %v3344 = vor.u32 %v3342, %v3343
          %v3345 = vsel %vm968, %v3341, %v3344
          %v3346 = vrot.slane %v3344, 4
          %v3348 = vshrl.u32 %v3281, 16
          %v3350 = vrot.slane %v3348, 6
          %v3351 = vshll.u32 %v3281, 16
          %v3353 = vrot.slane %v3351, 7
          %v3354 = vor.u32 %v3350, %v3353
          %v3355 = vsel %vm968, %v3346, %v3354
          %v3357 = vshrl.u32 %v2984, 16
          %v3359 = vrot.slane %v3357, 6
          %v3360 = vshll.u32 %v2984, 16
          %v3362 = vrot.slane %v3360, 7
          %v3363 = vor.u32 %v3359, %v3362
          %v3364 = vrot.slane %v3363, 4
          %v3365 = vrot.slane %v2641, 6
          %v3366 = vrot.slane %v2644, 7
          %v3367 = vor.u32 %v3365, %v3366
          %v3368 = vsel %vm968, %v3364, %v3367
          %v3369 = vrot.slane %v3367, 4
          %v3371 = vshrl.u32 %v3282, 16
          %v3373 = vrot.slane %v3371, 6
          %v3374 = vshll.u32 %v3282, 16
          %v3376 = vrot.slane %v3374, 7
          %v3377 = vor.u32 %v3373, %v3376
          %v3378 = vsel %vm968, %v3369, %v3377
          %v3380 = vshrl.u32 %v2985, 16
          %v3382 = vrot.slane %v3380, 6
          %v3383 = vshll.u32 %v2985, 16
          %v3385 = vrot.slane %v3383, 7
          %v3386 = vor.u32 %v3382, %v3385
          %v3387 = vrot.slane %v3386, 4
          %v3388 = vrot.slane %v2669, 6
          %v3389 = vrot.slane %v2672, 7
          %v3390 = vor.u32 %v3388, %v3389
          %v3391 = vsel %vm968, %v3387, %v3390
          %v3392 = vrot.slane %v3390, 4
          %v3394 = vshrl.u32 %v3283, 16
          %v3396 = vrot.slane %v3394, 6
          %v3397 = vshll.u32 %v3283, 16
          %v3399 = vrot.slane %v3397, 7
          %v3400 = vor.u32 %v3396, %v3399
          %v3401 = vsel %vm968, %v3392, %v3400
          %v3403 = vshrl.u32 %v2986, 16
          %v3405 = vrot.slane %v3403, 6
          %v3406 = vshll.u32 %v2986, 16
          %v3408 = vrot.slane %v3406, 7
          %v3409 = vor.u32 %v3405, %v3408
          %v3410 = vrot.slane %v3409, 4
          %v3411 = vrot.slane %v2697, 6
          %v3412 = vrot.slane %v2700, 7
          %v3413 = vor.u32 %v3411, %v3412
          %v3414 = vsel %vm968, %v3410, %v3413
          %v3415 = vrot.slane %v3413, 4
          %v3417 = vshrl.u32 %v3284, 16
          %v3419 = vrot.slane %v3417, 6
          %v3420 = vshll.u32 %v3284, 16
          %v3422 = vrot.slane %v3420, 7
          %v3423 = vor.u32 %v3419, %v3422
          %v3424 = vsel %vm968, %v3415, %v3423
          %v3426 = vshrl.u32 %v2987, 16
          %v3428 = vrot.slane %v3426, 6
          %v3429 = vshll.u32 %v2987, 16
          %v3431 = vrot.slane %v3429, 7
          %v3432 = vor.u32 %v3428, %v3431
          %v3433 = vrot.slane %v3432, 4
          %v3434 = vrot.slane %v2725, 6
          %v3435 = vrot.slane %v2728, 7
          %v3436 = vor.u32 %v3434, %v3435
          %v3437 = vsel %vm968, %v3433, %v3436
          %v3438 = vrot.slane %v3436, 4
          %v3440 = vshrl.u32 %v3285, 16
          %v3442 = vrot.slane %v3440, 6
          %v3443 = vshll.u32 %v3285, 16
          %v3445 = vrot.slane %v3443, 7
          %v3446 = vor.u32 %v3442, %v3445
          %v3447 = vsel %vm968, %v3438, %v3446
          %v3449 = vshrl.u32 %v2988, 16
          %v3451 = vrot.slane %v3449, 6
          %v3452 = vshll.u32 %v2988, 16
          %v3454 = vrot.slane %v3452, 7
          %v3455 = vor.u32 %v3451, %v3454
          %v3456 = vrot.slane %v3455, 4
          %v3457 = vrot.slane %v2753, 6
          %v3458 = vrot.slane %v2756, 7
          %v3459 = vor.u32 %v3457, %v3458
          %v3460 = vsel %vm968, %v3456, %v3459
          %v3461 = vrot.slane %v3459, 4
          %v3463 = vshrl.u32 %v3286, 16
          %v3465 = vrot.slane %v3463, 6
          %v3466 = vshll.u32 %v3286, 16
          %v3468 = vrot.slane %v3466, 7
          %v3469 = vor.u32 %v3465, %v3468
          %v3470 = vsel %vm968, %v3461, %v3469
          %s3471 = scalar_lea.vmem %s173, 512 [#allocation4]
          %v3472 = vld [vmem:[%s3471] sm:$0xf]
          %v3473 = vld [vmem:[%s3471 + $0x4] sm:$0xf]
          %v3474 = vld [vmem:[%s3471 + $0x8] sm:$0xf]
          %v3475 = vld [vmem:[%s3471 + $0xc] sm:$0xf]
          %v3476 = vld [vmem:[%s3471 + $0x10] sm:$0xf]
          %v3477 = vld [vmem:[%s3471 + $0x14] sm:$0xf]
          %v3478 = vld [vmem:[%s3471 + $0x18] sm:$0xf]
          %v3479 = vld [vmem:[%s3471 + $0x1c] sm:$0xf]
          %v3480 = vld [vmem:[%s3471 + $0x20] sm:$0xf]
          %v3481 = vld [vmem:[%s3471 + $0x24] sm:$0xf]
          %v3482 = vld [vmem:[%s3471 + $0x28] sm:$0xf]
          %v3483 = vld [vmem:[%s3471 + $0x2c] sm:$0xf]
          %v3484 = vld [vmem:[%s3471 + $0x30] sm:$0xf]
          %v3485 = vld [vmem:[%s3471 + $0x34] sm:$0xf]
          %v3486 = vld [vmem:[%s3471 + $0x38] sm:$0xf]
          %v3487 = vld [vmem:[%s3471 + $0x3c] sm:$0xf]
          %v3488 = vunpack.c.l.b16 %v3299
          %v3489 = vunpack.c.l.b16 %v3309
          %v3490 = vunpack.c.l.b16 %v3322
          %v3491 = vunpack.c.l.b16 %v3332
          %v3492 = vunpack.c.l.b16 %v3345
          %v3493 = vunpack.c.l.b16 %v3355
          %v3494 = vunpack.c.l.b16 %v3368
          %v3495 = vunpack.c.l.b16 %v3378
          %v3496 = vunpack.c.l.b16 %v3391
          %v3497 = vunpack.c.l.b16 %v3401
          %v3498 = vunpack.c.l.b16 %v3414
          %v3499 = vunpack.c.l.b16 %v3424
          %v3500 = vunpack.c.l.b16 %v3437
          %v3501 = vunpack.c.l.b16 %v3447
          %v3502 = vunpack.c.l.b16 %v3460
          %v3503 = vunpack.c.l.b16 %v3470
          %v3504 = vpack.c.b16 %v3489, %v3488
          %v3505 = vpack.c.b16 %v3491, %v3490
          %v3506 = vpack.c.b16 %v3493, %v3492
          %v3507 = vpack.c.b16 %v3495, %v3494
          %v3508 = vpack.c.b16 %v3497, %v3496
          %v3509 = vpack.c.b16 %v3499, %v3498
          %v3510 = vpack.c.b16 %v3501, %v3500
          %v3511 = vpack.c.b16 %v3503, %v3502
          %v3536 = vunpack.c.l.b16 %v3472
          %v3537 = vunpack.c.l.b16 %v3473
          %v3538 = vunpack.c.l.b16 %v3474
          %v3539 = vunpack.c.l.b16 %v3475
          %v3540 = vunpack.c.l.b16 %v3476
          %v3541 = vunpack.c.l.b16 %v3477
          %v3542 = vunpack.c.l.b16 %v3478
          %v3543 = vunpack.c.l.b16 %v3479
          %v3544 = vunpack.c.l.b16 %v3480
          %v3545 = vunpack.c.l.b16 %v3481
          %v3546 = vunpack.c.l.b16 %v3482
          %v3547 = vunpack.c.l.b16 %v3483
          %v3548 = vunpack.c.l.b16 %v3484
          %v3549 = vunpack.c.l.b16 %v3485
          %v3550 = vunpack.c.l.b16 %v3486
          %v3551 = vunpack.c.l.b16 %v3487
          %v3552 = vpack.c.b16 %v3537, %v3536
          %v3553 = vpack.c.b16 %v3539, %v3538
          %v3554 = vpack.c.b16 %v3541, %v3540
          %v3555 = vpack.c.b16 %v3543, %v3542
          %v3556 = vpack.c.b16 %v3545, %v3544
          %v3557 = vpack.c.b16 %v3547, %v3546
          %v3558 = vpack.c.b16 %v3549, %v3548
          %v3559 = vpack.c.b16 %v3551, %v3550
          %3568 = vmatprep.subr.bf16.mxu0 0
          %3569 = vmatpush1.bf16.msra.mxu0 %v3559
          %3570 = vmatprep.subr.bf16.mxu0 0
          %3571 = vmatpush1.bf16.msra.mxu0 %v3558
          %3572 = vmatprep.subr.bf16.mxu0 0
          %3573 = vmatpush1.bf16.msra.mxu0 %v3557
          %3574 = vmatprep.subr.bf16.mxu0 0
          %3575 = vmatpush1.bf16.msra.mxu0 %v3556
          %3576 = vmatprep.subr.bf16.mxu0 0
          %3577 = vmatpush1.bf16.msra.mxu0 %v3555
          %3578 = vmatprep.subr.bf16.mxu0 0
          %3579 = vmatpush1.bf16.msra.mxu0 %v3554
          %3580 = vmatprep.subr.bf16.mxu0 0
          %3581 = vmatpush1.bf16.msra.mxu0 %v3553
          %3582 = vmatprep.subr.bf16.mxu0 0
          %3583 = vmatpush1.bf16.msra.mxu0 %v3552
          %3584 = vmatprep.subr.bf16.mxu0 0
          %3585 = vmatpush2.bf16.msra.mxu0 0
          %3586 = vmatprep.subr.bf16.mxu0 0
          %3587 = vmatpush2.bf16.msra.mxu0 0
          %3588 = vmatprep.subr.bf16.mxu0 0
          %3589 = vmatpush2.bf16.msra.mxu0 0
          %3590 = vmatprep.subr.bf16.mxu0 0
          %3591 = vmatpush2.bf16.msra.mxu0 0
          %3592 = vmatprep.subr.bf16.mxu0 0
          %3593 = vmatpush2.bf16.msra.mxu0 0
          %3594 = vmatprep.subr.bf16.mxu0 0
          %3595 = vmatpush2.bf16.msra.mxu0 0
          %3596 = vmatprep.subr.bf16.mxu0 0
          %3597 = vmatpush2.bf16.msra.mxu0 0
          %3598 = vmatprep.subr.bf16.mxu0 0
          %3599 = vmatpush2.bf16.msra.mxu0 0
          %3600 = vmatprep.mubr.bf16.mxu0 0
          %3601 = vmatmul.mubr.bf16.gmra.mxu0 %v3504
          %v3602 = vpop.f32.mrf.mxu0
          %v3603 = vadd.f32 0.0, %v3602
          %v3604 = vpop.f32.mrf.mxu0
          %v3605 = vpop.f32.mrf.mxu0
          %v3606 = vadd.f32 0.0, %v3605
          %v3607 = vpop.f32.mrf.mxu0
          %3608 = vmatprep.mubr.bf16.mxu0 0
          %3609 = vmatmul.mubr.bf16.gmra.mxu0 %v3505
          %v3610 = vpop.f32.mrf.mxu0
          %v3611 = vadd.f32 0.0, %v3610
          %v3612 = vpop.f32.mrf.mxu0
          %v3613 = vpop.f32.mrf.mxu0
          %v3614 = vadd.f32 0.0, %v3613
          %v3615 = vpop.f32.mrf.mxu0
          %3616 = vmatprep.mubr.bf16.mxu0 0
          %3617 = vmatmul.mubr.bf16.gmra.mxu0 %v3506
          %v3618 = vpop.f32.mrf.mxu0
          %v3619 = vadd.f32 0.0, %v3618
          %v3620 = vpop.f32.mrf.mxu0
          %v3621 = vpop.f32.mrf.mxu0
          %v3622 = vadd.f32 0.0, %v3621
          %v3623 = vpop.f32.mrf.mxu0
          %3624 = vmatprep.mubr.bf16.mxu0 0
          %3625 = vmatmul.mubr.bf16.gmra.mxu0 %v3507
          %v3626 = vpop.f32.mrf.mxu0
          %v3627 = vadd.f32 0.0, %v3626
          %v3628 = vpop.f32.mrf.mxu0
          %v3629 = vpop.f32.mrf.mxu0
          %v3630 = vadd.f32 0.0, %v3629
          %v3631 = vpop.f32.mrf.mxu0
          %3632 = vmatprep.mubr.bf16.mxu0 0
          %3633 = vmatmul.mubr.bf16.gmra.mxu0 %v3508
          %v3634 = vpop.f32.mrf.mxu0
          %v3635 = vadd.f32 0.0, %v3634
          %v3636 = vpop.f32.mrf.mxu0
          %v3637 = vpop.f32.mrf.mxu0
          %v3638 = vadd.f32 0.0, %v3637
          %v3639 = vpop.f32.mrf.mxu0
          %3640 = vmatprep.mubr.bf16.mxu0 0
          %3641 = vmatmul.mubr.bf16.gmra.mxu0 %v3509
          %v3642 = vpop.f32.mrf.mxu0
          %v3643 = vadd.f32 0.0, %v3642
          %v3644 = vpop.f32.mrf.mxu0
          %v3645 = vpop.f32.mrf.mxu0
          %v3646 = vadd.f32 0.0, %v3645
          %v3647 = vpop.f32.mrf.mxu0
          %3648 = vmatprep.mubr.bf16.mxu0 0
          %3649 = vmatmul.mubr.bf16.gmra.mxu0 %v3510
          %v3650 = vpop.f32.mrf.mxu0
          %v3651 = vadd.f32 0.0, %v3650
          %v3652 = vpop.f32.mrf.mxu0
          %v3653 = vpop.f32.mrf.mxu0
          %v3654 = vadd.f32 0.0, %v3653
          %v3655 = vpop.f32.mrf.mxu0
          %3656 = vmatprep.mubr.bf16.mxu0 0
          %3657 = vmatmul.mubr.bf16.gmra.mxu0 %v3511
          %v3658 = vpop.f32.mrf.mxu0
          %v3659 = vadd.f32 0.0, %v3658
          %v3660 = vpop.f32.mrf.mxu0
          %v3661 = vpop.f32.mrf.mxu0
          %v3662 = vadd.f32 0.0, %v3661
          %v3663 = vpop.f32.mrf.mxu0
          %3664 = vdwg.mxu0
          %v3665 = vadd.f32 %v3263, %v3603
          %v3666 = vadd.f32 %v3264, %v3606
          %v3667 = vadd.f32 %v3265, %v3611
          %v3668 = vadd.f32 %v3266, %v3614
          %v3669 = vadd.f32 %v3267, %v3619
          %v3670 = vadd.f32 %v3268, %v3622
          %v3671 = vadd.f32 %v3269, %v3627
          %v3672 = vadd.f32 %v3270, %v3630
          %v3673 = vadd.f32 %v3271, %v3635
          %v3674 = vadd.f32 %v3272, %v3638
          %v3675 = vadd.f32 %v3273, %v3643
          %v3676 = vadd.f32 %v3274, %v3646
          %v3677 = vadd.f32 %v3275, %v3651
          %v3678 = vadd.f32 %v3276, %v3654
          %v3679 = vadd.f32 %v3277, %v3659
          %v3680 = vadd.f32 %v3278, %v3662
          %v3681 = vld [vmem:[%s199] sm:$0x1]
          %v3683 = vlaneseq
          %v3684 = vshrl.u32 %v3683, 7
          %v3685 = vsub.s32 0, %v3684
          %v3686 = vrot.slane %v3681, %v3685
          %v3688 = vadd.f32 %v3665, %v3686
          %v3689 = vadd.f32 %v3666, %v3686
          %v3690 = vadd.f32 %v3667, %v3686
          %v3691 = vadd.f32 %v3668, %v3686
          %v3692 = vadd.f32 %v3669, %v3686
          %v3693 = vadd.f32 %v3670, %v3686
          %v3694 = vadd.f32 %v3671, %v3686
          %v3695 = vadd.f32 %v3672, %v3686
          %v3696 = vadd.f32 %v3673, %v3686
          %v3697 = vadd.f32 %v3674, %v3686
          %v3698 = vadd.f32 %v3675, %v3686
          %v3699 = vadd.f32 %v3676, %v3686
          %v3700 = vadd.f32 %v3677, %v3686
          %v3701 = vadd.f32 %v3678, %v3686
          %v3702 = vadd.f32 %v3679, %v3686
          %v3703 = vadd.f32 %v3680, %v3686
          %v3704 = vmax.f32 %v3688, 0.0
          %v3705 = vmax.f32 %v3689, 0.0
          %v3706 = vmax.f32 %v3690, 0.0
          %v3707 = vmax.f32 %v3691, 0.0
          %v3708 = vmax.f32 %v3692, 0.0
          %v3709 = vmax.f32 %v3693, 0.0
          %v3710 = vmax.f32 %v3694, 0.0
          %v3711 = vmax.f32 %v3695, 0.0
          %v3712 = vmax.f32 %v3696, 0.0
          %v3713 = vmax.f32 %v3697, 0.0
          %v3714 = vmax.f32 %v3698, 0.0
          %v3715 = vmax.f32 %v3699, 0.0
          %v3716 = vmax.f32 %v3700, 0.0
          %v3717 = vmax.f32 %v3701, 0.0
          %v3718 = vmax.f32 %v3702, 0.0
          %v3719 = vmax.f32 %v3703, 0.0
          %v3720 = vpack.c.bf16 %v3705, %v3704
          %v3721 = vpack.c.bf16 %v3707, %v3706
          %v3722 = vpack.c.bf16 %v3709, %v3708
          %v3723 = vpack.c.bf16 %v3711, %v3710
          %v3724 = vpack.c.bf16 %v3713, %v3712
          %v3725 = vpack.c.bf16 %v3715, %v3714
          %v3726 = vpack.c.bf16 %v3717, %v3716
          %v3727 = vpack.c.bf16 %v3719, %v3718
          %v3736 = vunpack.c.l.b16 %v3720
          %v3737 = vunpack.c.h.b16 %v3720
          %v3738 = vunpack.c.l.b16 %v3721
          %v3739 = vunpack.c.h.b16 %v3721
          %v3740 = vunpack.c.l.b16 %v3722
          %v3741 = vunpack.c.h.b16 %v3722
          %v3742 = vunpack.c.l.b16 %v3723
          %v3743 = vunpack.c.h.b16 %v3723
          %v3744 = vunpack.c.l.b16 %v3724
          %v3745 = vunpack.c.h.b16 %v3724
          %v3746 = vunpack.c.l.b16 %v3725
          %v3747 = vunpack.c.h.b16 %v3725
          %v3748 = vunpack.c.l.b16 %v3726
          %v3749 = vunpack.c.h.b16 %v3726
          %v3750 = vunpack.c.l.b16 %v3727
          %v3751 = vunpack.c.h.b16 %v3727
          %v3752 = vpack.c.b16 %v3736, %v3736
          %v3753 = vpack.c.b16 %v3737, %v3737
          %v3754 = vpack.c.b16 %v3738, %v3738
          %v3755 = vpack.c.b16 %v3739, %v3739
          %v3756 = vpack.c.b16 %v3740, %v3740
          %v3757 = vpack.c.b16 %v3741, %v3741
          %v3758 = vpack.c.b16 %v3742, %v3742
          %v3759 = vpack.c.b16 %v3743, %v3743
          %v3760 = vpack.c.b16 %v3744, %v3744
          %v3761 = vpack.c.b16 %v3745, %v3745
          %v3762 = vpack.c.b16 %v3746, %v3746
          %v3763 = vpack.c.b16 %v3747, %v3747
          %v3764 = vpack.c.b16 %v3748, %v3748
          %v3765 = vpack.c.b16 %v3749, %v3749
          %v3766 = vpack.c.b16 %v3750, %v3750
          %v3767 = vpack.c.b16 %v3751, %v3751
          %3784 = vst [vmem:[%s196] sm:$0xf] %v3752
          %3785 = vst [vmem:[%s196 + $0x4] sm:$0xf] %v3753
          %3786 = vst [vmem:[%s196 + $0x8] sm:$0xf] %v3754
          %3787 = vst [vmem:[%s196 + $0xc] sm:$0xf] %v3755
          %3788 = vst [vmem:[%s196 + $0x10] sm:$0xf] %v3756
          %3789 = vst [vmem:[%s196 + $0x14] sm:$0xf] %v3757
          %3790 = vst [vmem:[%s196 + $0x18] sm:$0xf] %v3758
          %3791 = vst [vmem:[%s196 + $0x1c] sm:$0xf] %v3759
          %3792 = vst [vmem:[%s196 + $0x20] sm:$0xf] %v3760
          %3793 = vst [vmem:[%s196 + $0x24] sm:$0xf] %v3761
          %3794 = vst [vmem:[%s196 + $0x28] sm:$0xf] %v3762
          %3795 = vst [vmem:[%s196 + $0x2c] sm:$0xf] %v3763
          %3796 = vst [vmem:[%s196 + $0x30] sm:$0xf] %v3764
          %3797 = vst [vmem:[%s196 + $0x34] sm:$0xf] %v3765
          %3798 = vst [vmem:[%s196 + $0x38] sm:$0xf] %v3766
          %3799 = vst [vmem:[%s196 + $0x3c] sm:$0xf] %v3767
        $region36: #{tpu_custom_call.1} parent=27 // pred_fallthru
          _
        %p3800 = scmp.eq.s32.totalorder %s27, 1
        // Predicated region
        $region41: #{tpu_custom_call.1} parent=27 // pred_check
          %p3801 = pneg %p3800
        $region42: #{tpu_custom_call.1} parent=27 // pred_check_branch
          %3803 = sbr.rel (%p3801) target = $region44
        $region43: #{tpu_custom_call.1} parent=27 // pred_region
          %s3804 = scalar_lea.vmem [#allocation2], 24
          %v3805 = vld [vmem:[%s3804] sm:$0xe]
          %v3806 = vld [vmem:[%s3804 + $0x4] sm:$0xf]
          %v3807 = vld [vmem:[%s3804 + $0x8] sm:$0x1]
          %v3808 = vld [vmem:[%s3804 + $0xc] sm:$0xe]
          %v3809 = vld [vmem:[%s3804 + $0x10] sm:$0xf]
          %v3810 = vld [vmem:[%s3804 + $0x14] sm:$0x1]
          %v3811 = vld [vmem:[%s3804 + $0x18] sm:$0xe]
          %v3812 = vld [vmem:[%s3804 + $0x1c] sm:$0xf]
          %v3813 = vld [vmem:[%s3804 + $0x20] sm:$0x1]
          %v3814 = vld [vmem:[%s3804 + $0x24] sm:$0xe]
          %v3815 = vld [vmem:[%s3804 + $0x28] sm:$0xf]
          %v3816 = vld [vmem:[%s3804 + $0x2c] sm:$0x1]
          %v3817 = vld [vmem:[%s3804 + $0x30] sm:$0xe]
          %v3818 = vld [vmem:[%s3804 + $0x34] sm:$0xf]
          %v3819 = vld [vmem:[%s3804 + $0x38] sm:$0x1]
          %v3820 = vld [vmem:[%s3804 + $0x3c] sm:$0xe]
          %v3821 = vld [vmem:[%s3804 + $0x40] sm:$0xf]
          %v3822 = vld [vmem:[%s3804 + $0x44] sm:$0x1]
          %v3823 = vld [vmem:[%s3804 + $0x48] sm:$0xe]
          %v3824 = vld [vmem:[%s3804 + $0x4c] sm:$0xf]
          %v3825 = vld [vmem:[%s3804 + $0x50] sm:$0x1]
          %v3826 = vld [vmem:[%s3804 + $0x54] sm:$0xe]
          %v3827 = vld [vmem:[%s3804 + $0x58] sm:$0xf]
          %v3828 = vld [vmem:[%s3804 + $0x5c] sm:$0x1]
          %vm3853 = vcmask 1042432
          %vm3854 = vcmask 1046532
          %vm3855 = vmor %vm3853, %vm3854
          %v3856 = vrot.slane %v3805, 5
          %v3857 = vrot.slane %v3856, 4
          %v3858 = vrot.slane %v3806, 5
          %v3859 = vsel %vm3855, %v3857, %v3858
          %v3860 = vrot.slane %v3858, 4
          %v3861 = vrot.slane %v3807, 5
          %v3862 = vsel %vm3855, %v3860, %v3861
          %v3863 = vrot.slane %v3808, 5
          %v3864 = vrot.slane %v3863, 4
          %v3865 = vrot.slane %v3809, 5
          %v3866 = vsel %vm3855, %v3864, %v3865
          %v3867 = vrot.slane %v3865, 4
          %v3868 = vrot.slane %v3810, 5
          %v3869 = vsel %vm3855, %v3867, %v3868
          %v3870 = vrot.slane %v3811, 5
          %v3871 = vrot.slane %v3870, 4
          %v3872 = vrot.slane %v3812, 5
          %v3873 = vsel %vm3855, %v3871, %v3872
          %v3874 = vrot.slane %v3872, 4
          %v3875 = vrot.slane %v3813, 5
          %v3876 = vsel %vm3855, %v3874, %v3875
          %v3877 = vrot.slane %v3814, 5
          %v3878 = vrot.slane %v3877, 4
          %v3879 = vrot.slane %v3815, 5
          %v3880 = vsel %vm3855, %v3878, %v3879
          %v3881 = vrot.slane %v3879, 4
          %v3882 = vrot.slane %v3816, 5
          %v3883 = vsel %vm3855, %v3881, %v3882
          %v3884 = vrot.slane %v3817, 5
          %v3885 = vrot.slane %v3884, 4
          %v3886 = vrot.slane %v3818, 5
          %v3887 = vsel %vm3855, %v3885, %v3886
          %v3888 = vrot.slane %v3886, 4
          %v3889 = vrot.slane %v3819, 5
          %v3890 = vsel %vm3855, %v3888, %v3889
          %v3891 = vrot.slane %v3820, 5
          %v3892 = vrot.slane %v3891, 4
          %v3893 = vrot.slane %v3821, 5
          %v3894 = vsel %vm3855, %v3892, %v3893
          %v3895 = vrot.slane %v3893, 4
          %v3896 = vrot.slane %v3822, 5
          %v3897 = vsel %vm3855, %v3895, %v3896
          %v3898 = vrot.slane %v3823, 5
          %v3899 = vrot.slane %v3898, 4
          %v3900 = vrot.slane %v3824, 5
          %v3901 = vsel %vm3855, %v3899, %v3900
          %v3902 = vrot.slane %v3900, 4
          %v3903 = vrot.slane %v3825, 5
          %v3904 = vsel %vm3855, %v3902, %v3903
          %v3905 = vrot.slane %v3826, 5
          %v3906 = vrot.slane %v3905, 4
          %v3907 = vrot.slane %v3827, 5
          %v3908 = vsel %vm3855, %v3906, %v3907
          %v3909 = vrot.slane %v3907, 4
          %v3910 = vrot.slane %v3828, 5
          %v3911 = vsel %vm3855, %v3909, %v3910
          %v3912 = vld [vmem:[%s173] sm:$0xf]
          %v3913 = vld [vmem:[%s173 + $0x4] sm:$0xf]
          %v3914 = vld [vmem:[%s173 + $0x8] sm:$0xf]
          %v3915 = vld [vmem:[%s173 + $0xc] sm:$0xf]
          %v3916 = vld [vmem:[%s173 + $0x10] sm:$0xf]
          %v3917 = vld [vmem:[%s173 + $0x14] sm:$0xf]
          %v3918 = vld [vmem:[%s173 + $0x18] sm:$0xf]
          %v3919 = vld [vmem:[%s173 + $0x1c] sm:$0xf]
          %v3920 = vld [vmem:[%s173 + $0x20] sm:$0xf]
          %v3921 = vld [vmem:[%s173 + $0x24] sm:$0xf]
          %v3922 = vld [vmem:[%s173 + $0x28] sm:$0xf]
          %v3923 = vld [vmem:[%s173 + $0x2c] sm:$0xf]
          %v3924 = vld [vmem:[%s173 + $0x30] sm:$0xf]
          %v3925 = vld [vmem:[%s173 + $0x34] sm:$0xf]
          %v3926 = vld [vmem:[%s173 + $0x38] sm:$0xf]
          %v3927 = vld [vmem:[%s173 + $0x3c] sm:$0xf]
          %v3928 = vld [vmem:[%s3804] sm:$0xc]
          %v3929 = vld [vmem:[%s3804 + $0x8] sm:$0x3]
          %v3930 = vld [vmem:[%s3804 + $0xc] sm:$0xc]
          %v3931 = vld [vmem:[%s3804 + $0x14] sm:$0x3]
          %v3932 = vld [vmem:[%s3804 + $0x18] sm:$0xc]
          %v3933 = vld [vmem:[%s3804 + $0x20] sm:$0x3]
          %v3934 = vld [vmem:[%s3804 + $0x24] sm:$0xc]
          %v3935 = vld [vmem:[%s3804 + $0x2c] sm:$0x3]
          %v3936 = vld [vmem:[%s3804 + $0x30] sm:$0xc]
          %v3937 = vld [vmem:[%s3804 + $0x38] sm:$0x3]
          %v3938 = vld [vmem:[%s3804 + $0x3c] sm:$0xc]
          %v3939 = vld [vmem:[%s3804 + $0x44] sm:$0x3]
          %v3940 = vld [vmem:[%s3804 + $0x48] sm:$0xc]
          %v3941 = vld [vmem:[%s3804 + $0x50] sm:$0x3]
          %v3942 = vld [vmem:[%s3804 + $0x54] sm:$0xc]
          %v3943 = vld [vmem:[%s3804 + $0x5c] sm:$0x3]
          %vm3960 = vcmask 1041408
          %vm3961 = vcmask 1045508
          %vm3962 = vmor %vm3960, %vm3961
          %v3963 = vrot.slane %v3928, 6
          %v3964 = vrot.slane %v3963, 4
          %v3965 = vrot.slane %v3806, 6
          %v3966 = vsel %vm3962, %v3964, %v3965
          %v3967 = vrot.slane %v3965, 4
          %v3968 = vrot.slane %v3929, 6
          %v3969 = vsel %vm3962, %v3967, %v3968
          %v3970 = vrot.slane %v3930, 6
          %v3971 = vrot.slane %v3970, 4
          %v3972 = vrot.slane %v3809, 6
          %v3973 = vsel %vm3962, %v3971, %v3972
          %v3974 = vrot.slane %v3972, 4
          %v3975 = vrot.slane %v3931, 6
          %v3976 = vsel %vm3962, %v3974, %v3975
          %v3977 = vrot.slane %v3932, 6
          %v3978 = vrot.slane %v3977, 4
          %v3979 = vrot.slane %v3812, 6
          %v3980 = vsel %vm3962, %v3978, %v3979
          %v3981 = vrot.slane %v3979, 4
          %v3982 = vrot.slane %v3933, 6
          %v3983 = vsel %vm3962, %v3981, %v3982
          %v3984 = vrot.slane %v3934, 6
          %v3985 = vrot.slane %v3984, 4
          %v3986 = vrot.slane %v3815, 6
          %v3987 = vsel %vm3962, %v3985, %v3986
          %v3988 = vrot.slane %v3986, 4
          %v3989 = vrot.slane %v3935, 6
          %v3990 = vsel %vm3962, %v3988, %v3989
          %v3991 = vrot.slane %v3936, 6
          %v3992 = vrot.slane %v3991, 4
          %v3993 = vrot.slane %v3818, 6
          %v3994 = vsel %vm3962, %v3992, %v3993
          %v3995 = vrot.slane %v3993, 4
          %v3996 = vrot.slane %v3937, 6
          %v3997 = vsel %vm3962, %v3995, %v3996
          %v3998 = vrot.slane %v3938, 6
          %v3999 = vrot.slane %v3998, 4
          %v4000 = vrot.slane %v3821, 6
          %v4001 = vsel %vm3962, %v3999, %v4000
          %v4002 = vrot.slane %v4000, 4
          %v4003 = vrot.slane %v3939, 6
          %v4004 = vsel %vm3962, %v4002, %v4003
          %v4005 = vrot.slane %v3940, 6
          %v4006 = vrot.slane %v4005, 4
          %v4007 = vrot.slane %v3824, 6
          %v4008 = vsel %vm3962, %v4006, %v4007
          %v4009 = vrot.slane %v4007, 4
          %v4010 = vrot.slane %v3941, 6
          %v4011 = vsel %vm3962, %v4009, %v4010
          %v4012 = vrot.slane %v3942, 6
          %v4013 = vrot.slane %v4012, 4
          %v4014 = vrot.slane %v3827, 6
          %v4015 = vsel %vm3962, %v4013, %v4014
          %v4016 = vrot.slane %v4014, 4
          %v4017 = vrot.slane %v3943, 6
          %v4018 = vsel %vm3962, %v4016, %v4017
          %s4019 = scalar_lea.vmem %s173, 64 [#allocation4]
          %v4020 = vld [vmem:[%s4019] sm:$0xf]
          %v4021 = vld [vmem:[%s4019 + $0x4] sm:$0xf]
          %v4022 = vld [vmem:[%s4019 + $0x8] sm:$0xf]
          %v4023 = vld [vmem:[%s4019 + $0xc] sm:$0xf]
          %v4024 = vld [vmem:[%s4019 + $0x10] sm:$0xf]
          %v4025 = vld [vmem:[%s4019 + $0x14] sm:$0xf]
          %v4026 = vld [vmem:[%s4019 + $0x18] sm:$0xf]
          %v4027 = vld [vmem:[%s4019 + $0x1c] sm:$0xf]
          %v4028 = vld [vmem:[%s4019 + $0x20] sm:$0xf]
          %v4029 = vld [vmem:[%s4019 + $0x24] sm:$0xf]
          %v4030 = vld [vmem:[%s4019 + $0x28] sm:$0xf]
          %v4031 = vld [vmem:[%s4019 + $0x2c] sm:$0xf]
          %v4032 = vld [vmem:[%s4019 + $0x30] sm:$0xf]
          %v4033 = vld [vmem:[%s4019 + $0x34] sm:$0xf]
          %v4034 = vld [vmem:[%s4019 + $0x38] sm:$0xf]
          %v4035 = vld [vmem:[%s4019 + $0x3c] sm:$0xf]
          %v4036 = vunpack.c.l.b16 %v3966
          %v4037 = vunpack.c.l.b16 %v3969
          %v4038 = vunpack.c.l.b16 %v3973
          %v4039 = vunpack.c.l.b16 %v3976
          %v4040 = vunpack.c.l.b16 %v3980
          %v4041 = vunpack.c.l.b16 %v3983
          %v4042 = vunpack.c.l.b16 %v3987
          %v4043 = vunpack.c.l.b16 %v3990
          %v4044 = vunpack.c.l.b16 %v3994
          %v4045 = vunpack.c.l.b16 %v3997
          %v4046 = vunpack.c.l.b16 %v4001
          %v4047 = vunpack.c.l.b16 %v4004
          %v4048 = vunpack.c.l.b16 %v4008
          %v4049 = vunpack.c.l.b16 %v4011
          %v4050 = vunpack.c.l.b16 %v4015
          %v4051 = vunpack.c.l.b16 %v4018
          %v4052 = vpack.c.b16 %v4037, %v4036
          %v4053 = vpack.c.b16 %v4039, %v4038
          %v4054 = vpack.c.b16 %v4041, %v4040
          %v4055 = vpack.c.b16 %v4043, %v4042
          %v4056 = vpack.c.b16 %v4045, %v4044
          %v4057 = vpack.c.b16 %v4047, %v4046
          %v4058 = vpack.c.b16 %v4049, %v4048
          %v4059 = vpack.c.b16 %v4051, %v4050
          %v4084 = vunpack.c.l.b16 %v4020
          %v4085 = vunpack.c.l.b16 %v4021
          %v4086 = vunpack.c.l.b16 %v4022
          %v4087 = vunpack.c.l.b16 %v4023
          %v4088 = vunpack.c.l.b16 %v4024
          %v4089 = vunpack.c.l.b16 %v4025
          %v4090 = vunpack.c.l.b16 %v4026
          %v4091 = vunpack.c.l.b16 %v4027
          %v4092 = vunpack.c.l.b16 %v4028
          %v4093 = vunpack.c.l.b16 %v4029
          %v4094 = vunpack.c.l.b16 %v4030
          %v4095 = vunpack.c.l.b16 %v4031
          %v4096 = vunpack.c.l.b16 %v4032
          %v4097 = vunpack.c.l.b16 %v4033
          %v4098 = vunpack.c.l.b16 %v4034
          %v4099 = vunpack.c.l.b16 %v4035
          %v4100 = vpack.c.b16 %v4085, %v4084
          %v4101 = vpack.c.b16 %v4087, %v4086
          %v4102 = vpack.c.b16 %v4089, %v4088
          %v4103 = vpack.c.b16 %v4091, %v4090
          %v4104 = vpack.c.b16 %v4093, %v4092
          %v4105 = vpack.c.b16 %v4095, %v4094
          %v4106 = vpack.c.b16 %v4097, %v4096
          %v4107 = vpack.c.b16 %v4099, %v4098
          %4116 = vmatprep.subr.bf16.mxu0 0
          %4117 = vmatpush1.bf16.msra.mxu0 %v4107
          %4118 = vmatprep.subr.bf16.mxu0 0
          %4119 = vmatpush1.bf16.msra.mxu0 %v4106
          %4120 = vmatprep.subr.bf16.mxu0 0
          %4121 = vmatpush1.bf16.msra.mxu0 %v4105
          %4122 = vmatprep.subr.bf16.mxu0 0
          %4123 = vmatpush1.bf16.msra.mxu0 %v4104
          %4124 = vmatprep.subr.bf16.mxu0 0
          %4125 = vmatpush1.bf16.msra.mxu0 %v4103
          %4126 = vmatprep.subr.bf16.mxu0 0
          %4127 = vmatpush1.bf16.msra.mxu0 %v4102
          %4128 = vmatprep.subr.bf16.mxu0 0
          %4129 = vmatpush1.bf16.msra.mxu0 %v4101
          %4130 = vmatprep.subr.bf16.mxu0 0
          %4131 = vmatpush1.bf16.msra.mxu0 %v4100
          %4132 = vmatprep.subr.bf16.mxu0 0
          %4133 = vmatpush2.bf16.msra.mxu0 0
          %4134 = vmatprep.subr.bf16.mxu0 0
          %4135 = vmatpush2.bf16.msra.mxu0 0
          %4136 = vmatprep.subr.bf16.mxu0 0
          %4137 = vmatpush2.bf16.msra.mxu0 0
          %4138 = vmatprep.subr.bf16.mxu0 0
          %4139 = vmatpush2.bf16.msra.mxu0 0
          %4140 = vmatprep.subr.bf16.mxu0 0
          %4141 = vmatpush2.bf16.msra.mxu0 0
          %4142 = vmatprep.subr.bf16.mxu0 0
          %4143 = vmatpush2.bf16.msra.mxu0 0
          %4144 = vmatprep.subr.bf16.mxu0 0
          %4145 = vmatpush2.bf16.msra.mxu0 0
          %4146 = vmatprep.subr.bf16.mxu0 0
          %4147 = vmatpush2.bf16.msra.mxu0 0
          %4148 = vmatprep.mubr.bf16.mxu0 0
          %4149 = vmatmul.mubr.bf16.gmra.mxu0 %v4052
          %v4150 = vpop.f32.mrf.mxu0
          %v4151 = vadd.f32 0.0, %v4150
          %v4152 = vpop.f32.mrf.mxu0
          %v4153 = vpop.f32.mrf.mxu0
          %v4154 = vadd.f32 0.0, %v4153
          %v4155 = vpop.f32.mrf.mxu0
          %4156 = vmatprep.mubr.bf16.mxu0 0
          %4157 = vmatmul.mubr.bf16.gmra.mxu0 %v4053
          %v4158 = vpop.f32.mrf.mxu0
          %v4159 = vadd.f32 0.0, %v4158
          %v4160 = vpop.f32.mrf.mxu0
          %v4161 = vpop.f32.mrf.mxu0
          %v4162 = vadd.f32 0.0, %v4161
          %v4163 = vpop.f32.mrf.mxu0
          %4164 = vmatprep.mubr.bf16.mxu0 0
          %4165 = vmatmul.mubr.bf16.gmra.mxu0 %v4054
          %v4166 = vpop.f32.mrf.mxu0
          %v4167 = vadd.f32 0.0, %v4166
          %v4168 = vpop.f32.mrf.mxu0
          %v4169 = vpop.f32.mrf.mxu0
          %v4170 = vadd.f32 0.0, %v4169
          %v4171 = vpop.f32.mrf.mxu0
          %4172 = vmatprep.mubr.bf16.mxu0 0
          %4173 = vmatmul.mubr.bf16.gmra.mxu0 %v4055
          %v4174 = vpop.f32.mrf.mxu0
          %v4175 = vadd.f32 0.0, %v4174
          %v4176 = vpop.f32.mrf.mxu0
          %v4177 = vpop.f32.mrf.mxu0
          %v4178 = vadd.f32 0.0, %v4177
          %v4179 = vpop.f32.mrf.mxu0
          %4180 = vmatprep.mubr.bf16.mxu0 0
          %4181 = vmatmul.mubr.bf16.gmra.mxu0 %v4056
          %v4182 = vpop.f32.mrf.mxu0
          %v4183 = vadd.f32 0.0, %v4182
          %v4184 = vpop.f32.mrf.mxu0
          %v4185 = vpop.f32.mrf.mxu0
          %v4186 = vadd.f32 0.0, %v4185
          %v4187 = vpop.f32.mrf.mxu0
          %4188 = vmatprep.mubr.bf16.mxu0 0
          %4189 = vmatmul.mubr.bf16.gmra.mxu0 %v4057
          %v4190 = vpop.f32.mrf.mxu0
          %v4191 = vadd.f32 0.0, %v4190
          %v4192 = vpop.f32.mrf.mxu0
          %v4193 = vpop.f32.mrf.mxu0
          %v4194 = vadd.f32 0.0, %v4193
          %v4195 = vpop.f32.mrf.mxu0
          %4196 = vmatprep.mubr.bf16.mxu0 0
          %4197 = vmatmul.mubr.bf16.gmra.mxu0 %v4058
          %v4198 = vpop.f32.mrf.mxu0
          %v4199 = vadd.f32 0.0, %v4198
          %v4200 = vpop.f32.mrf.mxu0
          %v4201 = vpop.f32.mrf.mxu0
          %v4202 = vadd.f32 0.0, %v4201
          %v4203 = vpop.f32.mrf.mxu0
          %4204 = vmatprep.mubr.bf16.mxu0 0
          %4205 = vmatmul.mubr.bf16.gmra.mxu0 %v4059
          %v4206 = vpop.f32.mrf.mxu0
          %v4207 = vadd.f32 0.0, %v4206
          %v4208 = vpop.f32.mrf.mxu0
          %v4209 = vpop.f32.mrf.mxu0
          %v4210 = vadd.f32 0.0, %v4209
          %v4211 = vpop.f32.mrf.mxu0
          %4212 = vdwg.mxu0
          %v4213 = vunpack.c.l.b16 %v3859
          %v4214 = vunpack.c.l.b16 %v3862
          %v4215 = vunpack.c.l.b16 %v3866
          %v4216 = vunpack.c.l.b16 %v3869
          %v4217 = vunpack.c.l.b16 %v3873
          %v4218 = vunpack.c.l.b16 %v3876
          %v4219 = vunpack.c.l.b16 %v3880
          %v4220 = vunpack.c.l.b16 %v3883
          %v4221 = vunpack.c.l.b16 %v3887
          %v4222 = vunpack.c.l.b16 %v3890
          %v4223 = vunpack.c.l.b16 %v3894
          %v4224 = vunpack.c.l.b16 %v3897
          %v4225 = vunpack.c.l.b16 %v3901
          %v4226 = vunpack.c.l.b16 %v3904
          %v4227 = vunpack.c.l.b16 %v3908
          %v4228 = vunpack.c.l.b16 %v3911
          %v4229 = vpack.c.b16 %v4214, %v4213
          %v4230 = vpack.c.b16 %v4216, %v4215
          %v4231 = vpack.c.b16 %v4218, %v4217
          %v4232 = vpack.c.b16 %v4220, %v4219
          %v4233 = vpack.c.b16 %v4222, %v4221
          %v4234 = vpack.c.b16 %v4224, %v4223
          %v4235 = vpack.c.b16 %v4226, %v4225
          %v4236 = vpack.c.b16 %v4228, %v4227
          %v4261 = vunpack.c.l.b16 %v3912
          %v4262 = vunpack.c.l.b16 %v3913
          %v4263 = vunpack.c.l.b16 %v3914
          %v4264 = vunpack.c.l.b16 %v3915
          %v4265 = vunpack.c.l.b16 %v3916
          %v4266 = vunpack.c.l.b16 %v3917
          %v4267 = vunpack.c.l.b16 %v3918
          %v4268 = vunpack.c.l.b16 %v3919
          %v4269 = vunpack.c.l.b16 %v3920
          %v4270 = vunpack.c.l.b16 %v3921
          %v4271 = vunpack.c.l.b16 %v3922
          %v4272 = vunpack.c.l.b16 %v3923
          %v4273 = vunpack.c.l.b16 %v3924
          %v4274 = vunpack.c.l.b16 %v3925
          %v4275 = vunpack.c.l.b16 %v3926
          %v4276 = vunpack.c.l.b16 %v3927
          %v4277 = vpack.c.b16 %v4262, %v4261
          %v4278 = vpack.c.b16 %v4264, %v4263
          %v4279 = vpack.c.b16 %v4266, %v4265
          %v4280 = vpack.c.b16 %v4268, %v4267
          %v4281 = vpack.c.b16 %v4270, %v4269
          %v4282 = vpack.c.b16 %v4272, %v4271
          %v4283 = vpack.c.b16 %v4274, %v4273
          %v4284 = vpack.c.b16 %v4276, %v4275
          %4293 = vmatprep.subr.bf16.mxu0 0
          %4294 = vmatpush1.bf16.msra.mxu0 %v4284
          %4295 = vmatprep.subr.bf16.mxu0 0
          %4296 = vmatpush1.bf16.msra.mxu0 %v4283
          %4297 = vmatprep.subr.bf16.mxu0 0
          %4298 = vmatpush1.bf16.msra.mxu0 %v4282
          %4299 = vmatprep.subr.bf16.mxu0 0
          %4300 = vmatpush1.bf16.msra.mxu0 %v4281
          %4301 = vmatprep.subr.bf16.mxu0 0
          %4302 = vmatpush1.bf16.msra.mxu0 %v4280
          %4303 = vmatprep.subr.bf16.mxu0 0
          %4304 = vmatpush1.bf16.msra.mxu0 %v4279
          %4305 = vmatprep.subr.bf16.mxu0 0
          %4306 = vmatpush1.bf16.msra.mxu0 %v4278
          %4307 = vmatprep.subr.bf16.mxu0 0
          %4308 = vmatpush1.bf16.msra.mxu0 %v4277
          %4309 = vmatprep.subr.bf16.mxu0 0
          %4310 = vmatpush2.bf16.msra.mxu0 0
          %4311 = vmatprep.subr.bf16.mxu0 0
          %4312 = vmatpush2.bf16.msra.mxu0 0
          %4313 = vmatprep.subr.bf16.mxu0 0
          %4314 = vmatpush2.bf16.msra.mxu0 0
          %4315 = vmatprep.subr.bf16.mxu0 0
          %4316 = vmatpush2.bf16.msra.mxu0 0
          %4317 = vmatprep.subr.bf16.mxu0 0
          %4318 = vmatpush2.bf16.msra.mxu0 0
          %4319 = vmatprep.subr.bf16.mxu0 0
          %4320 = vmatpush2.bf16.msra.mxu0 0
          %4321 = vmatprep.subr.bf16.mxu0 0
          %4322 = vmatpush2.bf16.msra.mxu0 0
          %4323 = vmatprep.subr.bf16.mxu0 0
          %4324 = vmatpush2.bf16.msra.mxu0 0
          %4325 = vmatprep.mubr.bf16.mxu0 0
          %4326 = vmatmul.mubr.bf16.gmra.mxu0 %v4229
          %v4327 = vpop.f32.mrf.mxu0
          %v4328 = vadd.f32 %v4151, %v4327
          %v4329 = vpop.f32.mrf.mxu0
          %v4330 = vpop.f32.mrf.mxu0
          %v4331 = vadd.f32 %v4154, %v4330
          %v4332 = vpop.f32.mrf.mxu0
          %4333 = vmatprep.mubr.bf16.mxu0 0
          %4334 = vmatmul.mubr.bf16.gmra.mxu0 %v4230
          %v4335 = vpop.f32.mrf.mxu0
          %v4336 = vadd.f32 %v4159, %v4335
          %v4337 = vpop.f32.mrf.mxu0
          %v4338 = vpop.f32.mrf.mxu0
          %v4339 = vadd.f32 %v4162, %v4338
          %v4340 = vpop.f32.mrf.mxu0
          %4341 = vmatprep.mubr.bf16.mxu0 0
          %4342 = vmatmul.mubr.bf16.gmra.mxu0 %v4231
          %v4343 = vpop.f32.mrf.mxu0
          %v4344 = vadd.f32 %v4167, %v4343
          %v4345 = vpop.f32.mrf.mxu0
          %v4346 = vpop.f32.mrf.mxu0
          %v4347 = vadd.f32 %v4170, %v4346
          %v4348 = vpop.f32.mrf.mxu0
          %4349 = vmatprep.mubr.bf16.mxu0 0
          %4350 = vmatmul.mubr.bf16.gmra.mxu0 %v4232
          %v4351 = vpop.f32.mrf.mxu0
          %v4352 = vadd.f32 %v4175, %v4351
          %v4353 = vpop.f32.mrf.mxu0
          %v4354 = vpop.f32.mrf.mxu0
          %v4355 = vadd.f32 %v4178, %v4354
          %v4356 = vpop.f32.mrf.mxu0
          %4357 = vmatprep.mubr.bf16.mxu0 0
          %4358 = vmatmul.mubr.bf16.gmra.mxu0 %v4233
          %v4359 = vpop.f32.mrf.mxu0
          %v4360 = vadd.f32 %v4183, %v4359
          %v4361 = vpop.f32.mrf.mxu0
          %v4362 = vpop.f32.mrf.mxu0
          %v4363 = vadd.f32 %v4186, %v4362
          %v4364 = vpop.f32.mrf.mxu0
          %4365 = vmatprep.mubr.bf16.mxu0 0
          %4366 = vmatmul.mubr.bf16.gmra.mxu0 %v4234
          %v4367 = vpop.f32.mrf.mxu0
          %v4368 = vadd.f32 %v4191, %v4367
          %v4369 = vpop.f32.mrf.mxu0
          %v4370 = vpop.f32.mrf.mxu0
          %v4371 = vadd.f32 %v4194, %v4370
          %v4372 = vpop.f32.mrf.mxu0
          %4373 = vmatprep.mubr.bf16.mxu0 0
          %4374 = vmatmul.mubr.bf16.gmra.mxu0 %v4235
          %v4375 = vpop.f32.mrf.mxu0
          %v4376 = vadd.f32 %v4199, %v4375
          %v4377 = vpop.f32.mrf.mxu0
          %v4378 = vpop.f32.mrf.mxu0
          %v4379 = vadd.f32 %v4202, %v4378
          %v4380 = vpop.f32.mrf.mxu0
          %4381 = vmatprep.mubr.bf16.mxu0 0
          %4382 = vmatmul.mubr.bf16.gmra.mxu0 %v4236
          %v4383 = vpop.f32.mrf.mxu0
          %v4384 = vadd.f32 %v4207, %v4383
          %v4385 = vpop.f32.mrf.mxu0
          %v4386 = vpop.f32.mrf.mxu0
          %v4387 = vadd.f32 %v4210, %v4386
          %v4388 = vpop.f32.mrf.mxu0
          %4389 = vdwg.mxu0
          %v4390 = vld [vmem:[%s3804] sm:$0x8]
          %v4391 = vld [vmem:[%s3804 + $0x8] sm:$0x7]
          %v4392 = vld [vmem:[%s3804 + $0xc] sm:$0x8]
          %v4393 = vld [vmem:[%s3804 + $0x14] sm:$0x7]
          %v4394 = vld [vmem:[%s3804 + $0x18] sm:$0x8]
          %v4395 = vld [vmem:[%s3804 + $0x20] sm:$0x7]
          %v4396 = vld [vmem:[%s3804 + $0x24] sm:$0x8]
          %v4397 = vld [vmem:[%s3804 + $0x2c] sm:$0x7]
          %v4398 = vld [vmem:[%s3804 + $0x30] sm:$0x8]
          %v4399 = vld [vmem:[%s3804 + $0x38] sm:$0x7]
          %v4400 = vld [vmem:[%s3804 + $0x3c] sm:$0x8]
          %v4401 = vld [vmem:[%s3804 + $0x44] sm:$0x7]
          %v4402 = vld [vmem:[%s3804 + $0x48] sm:$0x8]
          %v4403 = vld [vmem:[%s3804 + $0x50] sm:$0x7]
          %v4404 = vld [vmem:[%s3804 + $0x54] sm:$0x8]
          %v4405 = vld [vmem:[%s3804 + $0x5c] sm:$0x7]
          %vm4422 = vcmask 1040384
          %vm4423 = vcmask 1044484
          %vm4424 = vmor %vm4422, %vm4423
          %v4425 = vrot.slane %v4390, 7
          %v4426 = vrot.slane %v4425, 4
          %v4427 = vrot.slane %v3806, 7
          %v4428 = vsel %vm4424, %v4426, %v4427
          %v4429 = vrot.slane %v4427, 4
          %v4430 = vrot.slane %v4391, 7
          %v4431 = vsel %vm4424, %v4429, %v4430
          %v4432 = vrot.slane %v4392, 7
          %v4433 = vrot.slane %v4432, 4
          %v4434 = vrot.slane %v3809, 7
          %v4435 = vsel %vm4424, %v4433, %v4434
          %v4436 = vrot.slane %v4434, 4
          %v4437 = vrot.slane %v4393, 7
          %v4438 = vsel %vm4424, %v4436, %v4437
          %v4439 = vrot.slane %v4394, 7
          %v4440 = vrot.slane %v4439, 4
          %v4441 = vrot.slane %v3812, 7
          %v4442 = vsel %vm4424, %v4440, %v4441
          %v4443 = vrot.slane %v4441, 4
          %v4444 = vrot.slane %v4395, 7
          %v4445 = vsel %vm4424, %v4443, %v4444
          %v4446 = vrot.slane %v4396, 7
          %v4447 = vrot.slane %v4446, 4
          %v4448 = vrot.slane %v3815, 7
          %v4449 = vsel %vm4424, %v4447, %v4448
          %v4450 = vrot.slane %v4448, 4
          %v4451 = vrot.slane %v4397, 7
          %v4452 = vsel %vm4424, %v4450, %v4451
          %v4453 = vrot.slane %v4398, 7
          %v4454 = vrot.slane %v4453, 4
          %v4455 = vrot.slane %v3818, 7
          %v4456 = vsel %vm4424, %v4454, %v4455
          %v4457 = vrot.slane %v4455, 4
          %v4458 = vrot.slane %v4399, 7
          %v4459 = vsel %vm4424, %v4457, %v4458
          %v4460 = vrot.slane %v4400, 7
          %v4461 = vrot.slane %v4460, 4
          %v4462 = vrot.slane %v3821, 7
          %v4463 = vsel %vm4424, %v4461, %v4462
          %v4464 = vrot.slane %v4462, 4
          %v4465 = vrot.slane %v4401, 7
          %v4466 = vsel %vm4424, %v4464, %v4465
          %v4467 = vrot.slane %v4402, 7
          %v4468 = vrot.slane %v4467, 4
          %v4469 = vrot.slane %v3824, 7
          %v4470 = vsel %vm4424, %v4468, %v4469
          %v4471 = vrot.slane %v4469, 4
          %v4472 = vrot.slane %v4403, 7
          %v4473 = vsel %vm4424, %v4471, %v4472
          %v4474 = vrot.slane %v4404, 7
          %v4475 = vrot.slane %v4474, 4
          %v4476 = vrot.slane %v3827, 7
          %v4477 = vsel %vm4424, %v4475, %v4476
          %v4478 = vrot.slane %v4476, 4
          %v4479 = vrot.slane %v4405, 7
          %v4480 = vsel %vm4424, %v4478, %v4479
          %s4481 = scalar_lea.vmem %s173, 128 [#allocation4]
          %v4482 = vld [vmem:[%s4481] sm:$0xf]
          %v4483 = vld [vmem:[%s4481 + $0x4] sm:$0xf]
          %v4484 = vld [vmem:[%s4481 + $0x8] sm:$0xf]
          %v4485 = vld [vmem:[%s4481 + $0xc] sm:$0xf]
          %v4486 = vld [vmem:[%s4481 + $0x10] sm:$0xf]
          %v4487 = vld [vmem:[%s4481 + $0x14] sm:$0xf]
          %v4488 = vld [vmem:[%s4481 + $0x18] sm:$0xf]
          %v4489 = vld [vmem:[%s4481 + $0x1c] sm:$0xf]
          %v4490 = vld [vmem:[%s4481 + $0x20] sm:$0xf]
          %v4491 = vld [vmem:[%s4481 + $0x24] sm:$0xf]
          %v4492 = vld [vmem:[%s4481 + $0x28] sm:$0xf]
          %v4493 = vld [vmem:[%s4481 + $0x2c] sm:$0xf]
          %v4494 = vld [vmem:[%s4481 + $0x30] sm:$0xf]
          %v4495 = vld [vmem:[%s4481 + $0x34] sm:$0xf]
          %v4496 = vld [vmem:[%s4481 + $0x38] sm:$0xf]
          %v4497 = vld [vmem:[%s4481 + $0x3c] sm:$0xf]
          %v4498 = vunpack.c.l.b16 %v4428
          %v4499 = vunpack.c.l.b16 %v4431
          %v4500 = vunpack.c.l.b16 %v4435
          %v4501 = vunpack.c.l.b16 %v4438
          %v4502 = vunpack.c.l.b16 %v4442
          %v4503 = vunpack.c.l.b16 %v4445
          %v4504 = vunpack.c.l.b16 %v4449
          %v4505 = vunpack.c.l.b16 %v4452
          %v4506 = vunpack.c.l.b16 %v4456
          %v4507 = vunpack.c.l.b16 %v4459
          %v4508 = vunpack.c.l.b16 %v4463
          %v4509 = vunpack.c.l.b16 %v4466
          %v4510 = vunpack.c.l.b16 %v4470
          %v4511 = vunpack.c.l.b16 %v4473
          %v4512 = vunpack.c.l.b16 %v4477
          %v4513 = vunpack.c.l.b16 %v4480
          %v4514 = vpack.c.b16 %v4499, %v4498
          %v4515 = vpack.c.b16 %v4501, %v4500
          %v4516 = vpack.c.b16 %v4503, %v4502
          %v4517 = vpack.c.b16 %v4505, %v4504
          %v4518 = vpack.c.b16 %v4507, %v4506
          %v4519 = vpack.c.b16 %v4509, %v4508
          %v4520 = vpack.c.b16 %v4511, %v4510
          %v4521 = vpack.c.b16 %v4513, %v4512
          %v4546 = vunpack.c.l.b16 %v4482
          %v4547 = vunpack.c.l.b16 %v4483
          %v4548 = vunpack.c.l.b16 %v4484
          %v4549 = vunpack.c.l.b16 %v4485
          %v4550 = vunpack.c.l.b16 %v4486
          %v4551 = vunpack.c.l.b16 %v4487
          %v4552 = vunpack.c.l.b16 %v4488
          %v4553 = vunpack.c.l.b16 %v4489
          %v4554 = vunpack.c.l.b16 %v4490
          %v4555 = vunpack.c.l.b16 %v4491
          %v4556 = vunpack.c.l.b16 %v4492
          %v4557 = vunpack.c.l.b16 %v4493
          %v4558 = vunpack.c.l.b16 %v4494
          %v4559 = vunpack.c.l.b16 %v4495
          %v4560 = vunpack.c.l.b16 %v4496
          %v4561 = vunpack.c.l.b16 %v4497
          %v4562 = vpack.c.b16 %v4547, %v4546
          %v4563 = vpack.c.b16 %v4549, %v4548
          %v4564 = vpack.c.b16 %v4551, %v4550
          %v4565 = vpack.c.b16 %v4553, %v4552
          %v4566 = vpack.c.b16 %v4555, %v4554
          %v4567 = vpack.c.b16 %v4557, %v4556
          %v4568 = vpack.c.b16 %v4559, %v4558
          %v4569 = vpack.c.b16 %v4561, %v4560
          %4578 = vmatprep.subr.bf16.mxu0 0
          %4579 = vmatpush1.bf16.msra.mxu0 %v4569
          %4580 = vmatprep.subr.bf16.mxu0 0
          %4581 = vmatpush1.bf16.msra.mxu0 %v4568
          %4582 = vmatprep.subr.bf16.mxu0 0
          %4583 = vmatpush1.bf16.msra.mxu0 %v4567
          %4584 = vmatprep.subr.bf16.mxu0 0
          %4585 = vmatpush1.bf16.msra.mxu0 %v4566
          %4586 = vmatprep.subr.bf16.mxu0 0
          %4587 = vmatpush1.bf16.msra.mxu0 %v4565
          %4588 = vmatprep.subr.bf16.mxu0 0
          %4589 = vmatpush1.bf16.msra.mxu0 %v4564
          %4590 = vmatprep.subr.bf16.mxu0 0
          %4591 = vmatpush1.bf16.msra.mxu0 %v4563
          %4592 = vmatprep.subr.bf16.mxu0 0
          %4593 = vmatpush1.bf16.msra.mxu0 %v4562
          %4594 = vmatprep.subr.bf16.mxu0 0
          %4595 = vmatpush2.bf16.msra.mxu0 0
          %4596 = vmatprep.subr.bf16.mxu0 0
          %4597 = vmatpush2.bf16.msra.mxu0 0
          %4598 = vmatprep.subr.bf16.mxu0 0
          %4599 = vmatpush2.bf16.msra.mxu0 0
          %4600 = vmatprep.subr.bf16.mxu0 0
          %4601 = vmatpush2.bf16.msra.mxu0 0
          %4602 = vmatprep.subr.bf16.mxu0 0
          %4603 = vmatpush2.bf16.msra.mxu0 0
          %4604 = vmatprep.subr.bf16.mxu0 0
          %4605 = vmatpush2.bf16.msra.mxu0 0
          %4606 = vmatprep.subr.bf16.mxu0 0
          %4607 = vmatpush2.bf16.msra.mxu0 0
          %4608 = vmatprep.subr.bf16.mxu0 0
          %4609 = vmatpush2.bf16.msra.mxu0 0
          %4610 = vmatprep.mubr.bf16.mxu0 0
          %4611 = vmatmul.mubr.bf16.gmra.mxu0 %v4514
          %v4612 = vpop.f32.mrf.mxu0
          %v4613 = vadd.f32 0.0, %v4612
          %v4614 = vpop.f32.mrf.mxu0
          %v4615 = vpop.f32.mrf.mxu0
          %v4616 = vadd.f32 0.0, %v4615
          %v4617 = vpop.f32.mrf.mxu0
          %4618 = vmatprep.mubr.bf16.mxu0 0
          %4619 = vmatmul.mubr.bf16.gmra.mxu0 %v4515
          %v4620 = vpop.f32.mrf.mxu0
          %v4621 = vadd.f32 0.0, %v4620
          %v4622 = vpop.f32.mrf.mxu0
          %v4623 = vpop.f32.mrf.mxu0
          %v4624 = vadd.f32 0.0, %v4623
          %v4625 = vpop.f32.mrf.mxu0
          %4626 = vmatprep.mubr.bf16.mxu0 0
          %4627 = vmatmul.mubr.bf16.gmra.mxu0 %v4516
          %v4628 = vpop.f32.mrf.mxu0
          %v4629 = vadd.f32 0.0, %v4628
          %v4630 = vpop.f32.mrf.mxu0
          %v4631 = vpop.f32.mrf.mxu0
          %v4632 = vadd.f32 0.0, %v4631
          %v4633 = vpop.f32.mrf.mxu0
          %4634 = vmatprep.mubr.bf16.mxu0 0
          %4635 = vmatmul.mubr.bf16.gmra.mxu0 %v4517
          %v4636 = vpop.f32.mrf.mxu0
          %v4637 = vadd.f32 0.0, %v4636
          %v4638 = vpop.f32.mrf.mxu0
          %v4639 = vpop.f32.mrf.mxu0
          %v4640 = vadd.f32 0.0, %v4639
          %v4641 = vpop.f32.mrf.mxu0
          %4642 = vmatprep.mubr.bf16.mxu0 0
          %4643 = vmatmul.mubr.bf16.gmra.mxu0 %v4518
          %v4644 = vpop.f32.mrf.mxu0
          %v4645 = vadd.f32 0.0, %v4644
          %v4646 = vpop.f32.mrf.mxu0
          %v4647 = vpop.f32.mrf.mxu0
          %v4648 = vadd.f32 0.0, %v4647
          %v4649 = vpop.f32.mrf.mxu0
          %4650 = vmatprep.mubr.bf16.mxu0 0
          %4651 = vmatmul.mubr.bf16.gmra.mxu0 %v4519
          %v4652 = vpop.f32.mrf.mxu0
          %v4653 = vadd.f32 0.0, %v4652
          %v4654 = vpop.f32.mrf.mxu0
          %v4655 = vpop.f32.mrf.mxu0
          %v4656 = vadd.f32 0.0, %v4655
          %v4657 = vpop.f32.mrf.mxu0
          %4658 = vmatprep.mubr.bf16.mxu0 0
          %4659 = vmatmul.mubr.bf16.gmra.mxu0 %v4520
          %v4660 = vpop.f32.mrf.mxu0
          %v4661 = vadd.f32 0.0, %v4660
          %v4662 = vpop.f32.mrf.mxu0
          %v4663 = vpop.f32.mrf.mxu0
          %v4664 = vadd.f32 0.0, %v4663
          %v4665 = vpop.f32.mrf.mxu0
          %4666 = vmatprep.mubr.bf16.mxu0 0
          %4667 = vmatmul.mubr.bf16.gmra.mxu0 %v4521
          %v4668 = vpop.f32.mrf.mxu0
          %v4669 = vadd.f32 0.0, %v4668
          %v4670 = vpop.f32.mrf.mxu0
          %v4671 = vpop.f32.mrf.mxu0
          %v4672 = vadd.f32 0.0, %v4671
          %v4673 = vpop.f32.mrf.mxu0
          %4674 = vdwg.mxu0
          %v4675 = vadd.f32 %v4328, %v4613
          %v4676 = vadd.f32 %v4331, %v4616
          %v4677 = vadd.f32 %v4336, %v4621
          %v4678 = vadd.f32 %v4339, %v4624
          %v4679 = vadd.f32 %v4344, %v4629
          %v4680 = vadd.f32 %v4347, %v4632
          %v4681 = vadd.f32 %v4352, %v4637
          %v4682 = vadd.f32 %v4355, %v4640
          %v4683 = vadd.f32 %v4360, %v4645
          %v4684 = vadd.f32 %v4363, %v4648
          %v4685 = vadd.f32 %v4368, %v4653
          %v4686 = vadd.f32 %v4371, %v4656
          %v4687 = vadd.f32 %v4376, %v4661
          %v4688 = vadd.f32 %v4379, %v4664
          %v4689 = vadd.f32 %v4384, %v4669
          %v4690 = vadd.f32 %v4387, %v4672
          %s4691 = scalar_lea.vmem [#allocation2], 48
          %v4692 = vld [vmem:[%s4691] sm:$0xe]
          %v4693 = vld [vmem:[%s4691 + $0x4] sm:$0xf]
          %v4694 = vld [vmem:[%s4691 + $0x8] sm:$0x1]
          %v4695 = vld [vmem:[%s4691 + $0xc] sm:$0xe]
          %v4696 = vld [vmem:[%s4691 + $0x10] sm:$0xf]
          %v4697 = vld [vmem:[%s4691 + $0x14] sm:$0x1]
          %v4698 = vld [vmem:[%s4691 + $0x18] sm:$0xe]
          %v4699 = vld [vmem:[%s4691 + $0x1c] sm:$0xf]
          %v4700 = vld [vmem:[%s4691 + $0x20] sm:$0x1]
          %v4701 = vld [vmem:[%s4691 + $0x24] sm:$0xe]
          %v4702 = vld [vmem:[%s4691 + $0x28] sm:$0xf]
          %v4703 = vld [vmem:[%s4691 + $0x2c] sm:$0x1]
          %v4704 = vld [vmem:[%s4691 + $0x30] sm:$0xe]
          %v4705 = vld [vmem:[%s4691 + $0x34] sm:$0xf]
          %v4706 = vld [vmem:[%s4691 + $0x38] sm:$0x1]
          %v4707 = vld [vmem:[%s4691 + $0x3c] sm:$0xe]
          %v4708 = vld [vmem:[%s4691 + $0x40] sm:$0xf]
          %v4709 = vld [vmem:[%s4691 + $0x44] sm:$0x1]
          %v4710 = vld [vmem:[%s4691 + $0x48] sm:$0xe]
          %v4711 = vld [vmem:[%s4691 + $0x4c] sm:$0xf]
          %v4712 = vld [vmem:[%s4691 + $0x50] sm:$0x1]
          %v4713 = vld [vmem:[%s4691 + $0x54] sm:$0xe]
          %v4714 = vld [vmem:[%s4691 + $0x58] sm:$0xf]
          %v4715 = vld [vmem:[%s4691 + $0x5c] sm:$0x1]
          %v4740 = vrot.slane %v4692, 5
          %v4741 = vrot.slane %v4740, 4
          %v4742 = vrot.slane %v4693, 5
          %v4743 = vsel %vm3855, %v4741, %v4742
          %v4744 = vrot.slane %v4742, 4
          %v4745 = vrot.slane %v4694, 5
          %v4746 = vsel %vm3855, %v4744, %v4745
          %v4747 = vrot.slane %v4695, 5
          %v4748 = vrot.slane %v4747, 4
          %v4749 = vrot.slane %v4696, 5
          %v4750 = vsel %vm3855, %v4748, %v4749
          %v4751 = vrot.slane %v4749, 4
          %v4752 = vrot.slane %v4697, 5
          %v4753 = vsel %vm3855, %v4751, %v4752
          %v4754 = vrot.slane %v4698, 5
          %v4755 = vrot.slane %v4754, 4
          %v4756 = vrot.slane %v4699, 5
          %v4757 = vsel %vm3855, %v4755, %v4756
          %v4758 = vrot.slane %v4756, 4
          %v4759 = vrot.slane %v4700, 5
          %v4760 = vsel %vm3855, %v4758, %v4759
          %v4761 = vrot.slane %v4701, 5
          %v4762 = vrot.slane %v4761, 4
          %v4763 = vrot.slane %v4702, 5
          %v4764 = vsel %vm3855, %v4762, %v4763
          %v4765 = vrot.slane %v4763, 4
          %v4766 = vrot.slane %v4703, 5
          %v4767 = vsel %vm3855, %v4765, %v4766
          %v4768 = vrot.slane %v4704, 5
          %v4769 = vrot.slane %v4768, 4
          %v4770 = vrot.slane %v4705, 5
          %v4771 = vsel %vm3855, %v4769, %v4770
          %v4772 = vrot.slane %v4770, 4
          %v4773 = vrot.slane %v4706, 5
          %v4774 = vsel %vm3855, %v4772, %v4773
          %v4775 = vrot.slane %v4707, 5
          %v4776 = vrot.slane %v4775, 4
          %v4777 = vrot.slane %v4708, 5
          %v4778 = vsel %vm3855, %v4776, %v4777
          %v4779 = vrot.slane %v4777, 4
          %v4780 = vrot.slane %v4709, 5
          %v4781 = vsel %vm3855, %v4779, %v4780
          %v4782 = vrot.slane %v4710, 5
          %v4783 = vrot.slane %v4782, 4
          %v4784 = vrot.slane %v4711, 5
          %v4785 = vsel %vm3855, %v4783, %v4784
          %v4786 = vrot.slane %v4784, 4
          %v4787 = vrot.slane %v4712, 5
          %v4788 = vsel %vm3855, %v4786, %v4787
          %v4789 = vrot.slane %v4713, 5
          %v4790 = vrot.slane %v4789, 4
          %v4791 = vrot.slane %v4714, 5
          %v4792 = vsel %vm3855, %v4790, %v4791
          %v4793 = vrot.slane %v4791, 4
          %v4794 = vrot.slane %v4715, 5
          %v4795 = vsel %vm3855, %v4793, %v4794
          %s4796 = scalar_lea.vmem %s173, 192 [#allocation4]
          %v4797 = vld [vmem:[%s4796] sm:$0xf]
          %v4798 = vld [vmem:[%s4796 + $0x4] sm:$0xf]
          %v4799 = vld [vmem:[%s4796 + $0x8] sm:$0xf]
          %v4800 = vld [vmem:[%s4796 + $0xc] sm:$0xf]
          %v4801 = vld [vmem:[%s4796 + $0x10] sm:$0xf]
          %v4802 = vld [vmem:[%s4796 + $0x14] sm:$0xf]
          %v4803 = vld [vmem:[%s4796 + $0x18] sm:$0xf]
          %v4804 = vld [vmem:[%s4796 + $0x1c] sm:$0xf]
          %v4805 = vld [vmem:[%s4796 + $0x20] sm:$0xf]
          %v4806 = vld [vmem:[%s4796 + $0x24] sm:$0xf]
          %v4807 = vld [vmem:[%s4796 + $0x28] sm:$0xf]
          %v4808 = vld [vmem:[%s4796 + $0x2c] sm:$0xf]
          %v4809 = vld [vmem:[%s4796 + $0x30] sm:$0xf]
          %v4810 = vld [vmem:[%s4796 + $0x34] sm:$0xf]
          %v4811 = vld [vmem:[%s4796 + $0x38] sm:$0xf]
          %v4812 = vld [vmem:[%s4796 + $0x3c] sm:$0xf]
          %v4813 = vunpack.c.l.b16 %v4743
          %v4814 = vunpack.c.l.b16 %v4746
          %v4815 = vunpack.c.l.b16 %v4750
          %v4816 = vunpack.c.l.b16 %v4753
          %v4817 = vunpack.c.l.b16 %v4757
          %v4818 = vunpack.c.l.b16 %v4760
          %v4819 = vunpack.c.l.b16 %v4764
          %v4820 = vunpack.c.l.b16 %v4767
          %v4821 = vunpack.c.l.b16 %v4771
          %v4822 = vunpack.c.l.b16 %v4774
          %v4823 = vunpack.c.l.b16 %v4778
          %v4824 = vunpack.c.l.b16 %v4781
          %v4825 = vunpack.c.l.b16 %v4785
          %v4826 = vunpack.c.l.b16 %v4788
          %v4827 = vunpack.c.l.b16 %v4792
          %v4828 = vunpack.c.l.b16 %v4795
          %v4829 = vpack.c.b16 %v4814, %v4813
          %v4830 = vpack.c.b16 %v4816, %v4815
          %v4831 = vpack.c.b16 %v4818, %v4817
          %v4832 = vpack.c.b16 %v4820, %v4819
          %v4833 = vpack.c.b16 %v4822, %v4821
          %v4834 = vpack.c.b16 %v4824, %v4823
          %v4835 = vpack.c.b16 %v4826, %v4825
          %v4836 = vpack.c.b16 %v4828, %v4827
          %v4861 = vunpack.c.l.b16 %v4797
          %v4862 = vunpack.c.l.b16 %v4798
          %v4863 = vunpack.c.l.b16 %v4799
          %v4864 = vunpack.c.l.b16 %v4800
          %v4865 = vunpack.c.l.b16 %v4801
          %v4866 = vunpack.c.l.b16 %v4802
          %v4867 = vunpack.c.l.b16 %v4803
          %v4868 = vunpack.c.l.b16 %v4804
          %v4869 = vunpack.c.l.b16 %v4805
          %v4870 = vunpack.c.l.b16 %v4806
          %v4871 = vunpack.c.l.b16 %v4807
          %v4872 = vunpack.c.l.b16 %v4808
          %v4873 = vunpack.c.l.b16 %v4809
          %v4874 = vunpack.c.l.b16 %v4810
          %v4875 = vunpack.c.l.b16 %v4811
          %v4876 = vunpack.c.l.b16 %v4812
          %v4877 = vpack.c.b16 %v4862, %v4861
          %v4878 = vpack.c.b16 %v4864, %v4863
          %v4879 = vpack.c.b16 %v4866, %v4865
          %v4880 = vpack.c.b16 %v4868, %v4867
          %v4881 = vpack.c.b16 %v4870, %v4869
          %v4882 = vpack.c.b16 %v4872, %v4871
          %v4883 = vpack.c.b16 %v4874, %v4873
          %v4884 = vpack.c.b16 %v4876, %v4875
          %4893 = vmatprep.subr.bf16.mxu0 0
          %4894 = vmatpush1.bf16.msra.mxu0 %v4884
          %4895 = vmatprep.subr.bf16.mxu0 0
          %4896 = vmatpush1.bf16.msra.mxu0 %v4883
          %4897 = vmatprep.subr.bf16.mxu0 0
          %4898 = vmatpush1.bf16.msra.mxu0 %v4882
          %4899 = vmatprep.subr.bf16.mxu0 0
          %4900 = vmatpush1.bf16.msra.mxu0 %v4881
          %4901 = vmatprep.subr.bf16.mxu0 0
          %4902 = vmatpush1.bf16.msra.mxu0 %v4880
          %4903 = vmatprep.subr.bf16.mxu0 0
          %4904 = vmatpush1.bf16.msra.mxu0 %v4879
          %4905 = vmatprep.subr.bf16.mxu0 0
          %4906 = vmatpush1.bf16.msra.mxu0 %v4878
          %4907 = vmatprep.subr.bf16.mxu0 0
          %4908 = vmatpush1.bf16.msra.mxu0 %v4877
          %4909 = vmatprep.subr.bf16.mxu0 0
          %4910 = vmatpush2.bf16.msra.mxu0 0
          %4911 = vmatprep.subr.bf16.mxu0 0
          %4912 = vmatpush2.bf16.msra.mxu0 0
          %4913 = vmatprep.subr.bf16.mxu0 0
          %4914 = vmatpush2.bf16.msra.mxu0 0
          %4915 = vmatprep.subr.bf16.mxu0 0
          %4916 = vmatpush2.bf16.msra.mxu0 0
          %4917 = vmatprep.subr.bf16.mxu0 0
          %4918 = vmatpush2.bf16.msra.mxu0 0
          %4919 = vmatprep.subr.bf16.mxu0 0
          %4920 = vmatpush2.bf16.msra.mxu0 0
          %4921 = vmatprep.subr.bf16.mxu0 0
          %4922 = vmatpush2.bf16.msra.mxu0 0
          %4923 = vmatprep.subr.bf16.mxu0 0
          %4924 = vmatpush2.bf16.msra.mxu0 0
          %4925 = vmatprep.mubr.bf16.mxu0 0
          %4926 = vmatmul.mubr.bf16.gmra.mxu0 %v4829
          %v4927 = vpop.f32.mrf.mxu0
          %v4928 = vadd.f32 0.0, %v4927
          %v4929 = vpop.f32.mrf.mxu0
          %v4930 = vpop.f32.mrf.mxu0
          %v4931 = vadd.f32 0.0, %v4930
          %v4932 = vpop.f32.mrf.mxu0
          %4933 = vmatprep.mubr.bf16.mxu0 0
          %4934 = vmatmul.mubr.bf16.gmra.mxu0 %v4830
          %v4935 = vpop.f32.mrf.mxu0
          %v4936 = vadd.f32 0.0, %v4935
          %v4937 = vpop.f32.mrf.mxu0
          %v4938 = vpop.f32.mrf.mxu0
          %v4939 = vadd.f32 0.0, %v4938
          %v4940 = vpop.f32.mrf.mxu0
          %4941 = vmatprep.mubr.bf16.mxu0 0
          %4942 = vmatmul.mubr.bf16.gmra.mxu0 %v4831
          %v4943 = vpop.f32.mrf.mxu0
          %v4944 = vadd.f32 0.0, %v4943
          %v4945 = vpop.f32.mrf.mxu0
          %v4946 = vpop.f32.mrf.mxu0
          %v4947 = vadd.f32 0.0, %v4946
          %v4948 = vpop.f32.mrf.mxu0
          %4949 = vmatprep.mubr.bf16.mxu0 0
          %4950 = vmatmul.mubr.bf16.gmra.mxu0 %v4832
          %v4951 = vpop.f32.mrf.mxu0
          %v4952 = vadd.f32 0.0, %v4951
          %v4953 = vpop.f32.mrf.mxu0
          %v4954 = vpop.f32.mrf.mxu0
          %v4955 = vadd.f32 0.0, %v4954
          %v4956 = vpop.f32.mrf.mxu0
          %4957 = vmatprep.mubr.bf16.mxu0 0
          %4958 = vmatmul.mubr.bf16.gmra.mxu0 %v4833
          %v4959 = vpop.f32.mrf.mxu0
          %v4960 = vadd.f32 0.0, %v4959
          %v4961 = vpop.f32.mrf.mxu0
          %v4962 = vpop.f32.mrf.mxu0
          %v4963 = vadd.f32 0.0, %v4962
          %v4964 = vpop.f32.mrf.mxu0
          %4965 = vmatprep.mubr.bf16.mxu0 0
          %4966 = vmatmul.mubr.bf16.gmra.mxu0 %v4834
          %v4967 = vpop.f32.mrf.mxu0
          %v4968 = vadd.f32 0.0, %v4967
          %v4969 = vpop.f32.mrf.mxu0
          %v4970 = vpop.f32.mrf.mxu0
          %v4971 = vadd.f32 0.0, %v4970
          %v4972 = vpop.f32.mrf.mxu0
          %4973 = vmatprep.mubr.bf16.mxu0 0
          %4974 = vmatmul.mubr.bf16.gmra.mxu0 %v4835
          %v4975 = vpop.f32.mrf.mxu0
          %v4976 = vadd.f32 0.0, %v4975
          %v4977 = vpop.f32.mrf.mxu0
          %v4978 = vpop.f32.mrf.mxu0
          %v4979 = vadd.f32 0.0, %v4978
          %v4980 = vpop.f32.mrf.mxu0
          %4981 = vmatprep.mubr.bf16.mxu0 0
          %4982 = vmatmul.mubr.bf16.gmra.mxu0 %v4836
          %v4983 = vpop.f32.mrf.mxu0
          %v4984 = vadd.f32 0.0, %v4983
          %v4985 = vpop.f32.mrf.mxu0
          %v4986 = vpop.f32.mrf.mxu0
          %v4987 = vadd.f32 0.0, %v4986
          %v4988 = vpop.f32.mrf.mxu0
          %4989 = vdwg.mxu0
          %v4990 = vadd.f32 %v4675, %v4928
          %v4991 = vadd.f32 %v4676, %v4931
          %v4992 = vadd.f32 %v4677, %v4936
          %v4993 = vadd.f32 %v4678, %v4939
          %v4994 = vadd.f32 %v4679, %v4944
          %v4995 = vadd.f32 %v4680, %v4947
          %v4996 = vadd.f32 %v4681, %v4952
          %v4997 = vadd.f32 %v4682, %v4955
          %v4998 = vadd.f32 %v4683, %v4960
          %v4999 = vadd.f32 %v4684, %v4963
          %v5000 = vadd.f32 %v4685, %v4968
          %v5001 = vadd.f32 %v4686, %v4971
          %v5002 = vadd.f32 %v4687, %v4976
          %v5003 = vadd.f32 %v4688, %v4979
          %v5004 = vadd.f32 %v4689, %v4984
          %v5005 = vadd.f32 %v4690, %v4987
          %v5006 = vld [vmem:[%s4691] sm:$0xc]
          %v5007 = vld [vmem:[%s4691 + $0x8] sm:$0x3]
          %v5008 = vld [vmem:[%s4691 + $0xc] sm:$0xc]
          %v5009 = vld [vmem:[%s4691 + $0x14] sm:$0x3]
          %v5010 = vld [vmem:[%s4691 + $0x18] sm:$0xc]
          %v5011 = vld [vmem:[%s4691 + $0x20] sm:$0x3]
          %v5012 = vld [vmem:[%s4691 + $0x24] sm:$0xc]
          %v5013 = vld [vmem:[%s4691 + $0x2c] sm:$0x3]
          %v5014 = vld [vmem:[%s4691 + $0x30] sm:$0xc]
          %v5015 = vld [vmem:[%s4691 + $0x38] sm:$0x3]
          %v5016 = vld [vmem:[%s4691 + $0x3c] sm:$0xc]
          %v5017 = vld [vmem:[%s4691 + $0x44] sm:$0x3]
          %v5018 = vld [vmem:[%s4691 + $0x48] sm:$0xc]
          %v5019 = vld [vmem:[%s4691 + $0x50] sm:$0x3]
          %v5020 = vld [vmem:[%s4691 + $0x54] sm:$0xc]
          %v5021 = vld [vmem:[%s4691 + $0x5c] sm:$0x3]
          %v5038 = vrot.slane %v5006, 6
          %v5039 = vrot.slane %v5038, 4
          %v5040 = vrot.slane %v4693, 6
          %v5041 = vsel %vm3962, %v5039, %v5040
          %v5042 = vrot.slane %v5040, 4
          %v5043 = vrot.slane %v5007, 6
          %v5044 = vsel %vm3962, %v5042, %v5043
          %v5045 = vrot.slane %v5008, 6
          %v5046 = vrot.slane %v5045, 4
          %v5047 = vrot.slane %v4696, 6
          %v5048 = vsel %vm3962, %v5046, %v5047
          %v5049 = vrot.slane %v5047, 4
          %v5050 = vrot.slane %v5009, 6
          %v5051 = vsel %vm3962, %v5049, %v5050
          %v5052 = vrot.slane %v5010, 6
          %v5053 = vrot.slane %v5052, 4
          %v5054 = vrot.slane %v4699, 6
          %v5055 = vsel %vm3962, %v5053, %v5054
          %v5056 = vrot.slane %v5054, 4
          %v5057 = vrot.slane %v5011, 6
          %v5058 = vsel %vm3962, %v5056, %v5057
          %v5059 = vrot.slane %v5012, 6
          %v5060 = vrot.slane %v5059, 4
          %v5061 = vrot.slane %v4702, 6
          %v5062 = vsel %vm3962, %v5060, %v5061
          %v5063 = vrot.slane %v5061, 4
          %v5064 = vrot.slane %v5013, 6
          %v5065 = vsel %vm3962, %v5063, %v5064
          %v5066 = vrot.slane %v5014, 6
          %v5067 = vrot.slane %v5066, 4
          %v5068 = vrot.slane %v4705, 6
          %v5069 = vsel %vm3962, %v5067, %v5068
          %v5070 = vrot.slane %v5068, 4
          %v5071 = vrot.slane %v5015, 6
          %v5072 = vsel %vm3962, %v5070, %v5071
          %v5073 = vrot.slane %v5016, 6
          %v5074 = vrot.slane %v5073, 4
          %v5075 = vrot.slane %v4708, 6
          %v5076 = vsel %vm3962, %v5074, %v5075
          %v5077 = vrot.slane %v5075, 4
          %v5078 = vrot.slane %v5017, 6
          %v5079 = vsel %vm3962, %v5077, %v5078
          %v5080 = vrot.slane %v5018, 6
          %v5081 = vrot.slane %v5080, 4
          %v5082 = vrot.slane %v4711, 6
          %v5083 = vsel %vm3962, %v5081, %v5082
          %v5084 = vrot.slane %v5082, 4
          %v5085 = vrot.slane %v5019, 6
          %v5086 = vsel %vm3962, %v5084, %v5085
          %v5087 = vrot.slane %v5020, 6
          %v5088 = vrot.slane %v5087, 4
          %v5089 = vrot.slane %v4714, 6
          %v5090 = vsel %vm3962, %v5088, %v5089
          %v5091 = vrot.slane %v5089, 4
          %v5092 = vrot.slane %v5021, 6
          %v5093 = vsel %vm3962, %v5091, %v5092
          %s5094 = scalar_lea.vmem %s173, 256 [#allocation4]
          %v5095 = vld [vmem:[%s5094] sm:$0xf]
          %v5096 = vld [vmem:[%s5094 + $0x4] sm:$0xf]
          %v5097 = vld [vmem:[%s5094 + $0x8] sm:$0xf]
          %v5098 = vld [vmem:[%s5094 + $0xc] sm:$0xf]
          %v5099 = vld [vmem:[%s5094 + $0x10] sm:$0xf]
          %v5100 = vld [vmem:[%s5094 + $0x14] sm:$0xf]
          %v5101 = vld [vmem:[%s5094 + $0x18] sm:$0xf]
          %v5102 = vld [vmem:[%s5094 + $0x1c] sm:$0xf]
          %v5103 = vld [vmem:[%s5094 + $0x20] sm:$0xf]
          %v5104 = vld [vmem:[%s5094 + $0x24] sm:$0xf]
          %v5105 = vld [vmem:[%s5094 + $0x28] sm:$0xf]
          %v5106 = vld [vmem:[%s5094 + $0x2c] sm:$0xf]
          %v5107 = vld [vmem:[%s5094 + $0x30] sm:$0xf]
          %v5108 = vld [vmem:[%s5094 + $0x34] sm:$0xf]
          %v5109 = vld [vmem:[%s5094 + $0x38] sm:$0xf]
          %v5110 = vld [vmem:[%s5094 + $0x3c] sm:$0xf]
          %v5111 = vunpack.c.l.b16 %v5041
          %v5112 = vunpack.c.l.b16 %v5044
          %v5113 = vunpack.c.l.b16 %v5048
          %v5114 = vunpack.c.l.b16 %v5051
          %v5115 = vunpack.c.l.b16 %v5055
          %v5116 = vunpack.c.l.b16 %v5058
          %v5117 = vunpack.c.l.b16 %v5062
          %v5118 = vunpack.c.l.b16 %v5065
          %v5119 = vunpack.c.l.b16 %v5069
          %v5120 = vunpack.c.l.b16 %v5072
          %v5121 = vunpack.c.l.b16 %v5076
          %v5122 = vunpack.c.l.b16 %v5079
          %v5123 = vunpack.c.l.b16 %v5083
          %v5124 = vunpack.c.l.b16 %v5086
          %v5125 = vunpack.c.l.b16 %v5090
          %v5126 = vunpack.c.l.b16 %v5093
          %v5127 = vpack.c.b16 %v5112, %v5111
          %v5128 = vpack.c.b16 %v5114, %v5113
          %v5129 = vpack.c.b16 %v5116, %v5115
          %v5130 = vpack.c.b16 %v5118, %v5117
          %v5131 = vpack.c.b16 %v5120, %v5119
          %v5132 = vpack.c.b16 %v5122, %v5121
          %v5133 = vpack.c.b16 %v5124, %v5123
          %v5134 = vpack.c.b16 %v5126, %v5125
          %v5159 = vunpack.c.l.b16 %v5095
          %v5160 = vunpack.c.l.b16 %v5096
          %v5161 = vunpack.c.l.b16 %v5097
          %v5162 = vunpack.c.l.b16 %v5098
          %v5163 = vunpack.c.l.b16 %v5099
          %v5164 = vunpack.c.l.b16 %v5100
          %v5165 = vunpack.c.l.b16 %v5101
          %v5166 = vunpack.c.l.b16 %v5102
          %v5167 = vunpack.c.l.b16 %v5103
          %v5168 = vunpack.c.l.b16 %v5104
          %v5169 = vunpack.c.l.b16 %v5105
          %v5170 = vunpack.c.l.b16 %v5106
          %v5171 = vunpack.c.l.b16 %v5107
          %v5172 = vunpack.c.l.b16 %v5108
          %v5173 = vunpack.c.l.b16 %v5109
          %v5174 = vunpack.c.l.b16 %v5110
          %v5175 = vpack.c.b16 %v5160, %v5159
          %v5176 = vpack.c.b16 %v5162, %v5161
          %v5177 = vpack.c.b16 %v5164, %v5163
          %v5178 = vpack.c.b16 %v5166, %v5165
          %v5179 = vpack.c.b16 %v5168, %v5167
          %v5180 = vpack.c.b16 %v5170, %v5169
          %v5181 = vpack.c.b16 %v5172, %v5171
          %v5182 = vpack.c.b16 %v5174, %v5173
          %5191 = vmatprep.subr.bf16.mxu0 0
          %5192 = vmatpush1.bf16.msra.mxu0 %v5182
          %5193 = vmatprep.subr.bf16.mxu0 0
          %5194 = vmatpush1.bf16.msra.mxu0 %v5181
          %5195 = vmatprep.subr.bf16.mxu0 0
          %5196 = vmatpush1.bf16.msra.mxu0 %v5180
          %5197 = vmatprep.subr.bf16.mxu0 0
          %5198 = vmatpush1.bf16.msra.mxu0 %v5179
          %5199 = vmatprep.subr.bf16.mxu0 0
          %5200 = vmatpush1.bf16.msra.mxu0 %v5178
          %5201 = vmatprep.subr.bf16.mxu0 0
          %5202 = vmatpush1.bf16.msra.mxu0 %v5177
          %5203 = vmatprep.subr.bf16.mxu0 0
          %5204 = vmatpush1.bf16.msra.mxu0 %v5176
          %5205 = vmatprep.subr.bf16.mxu0 0
          %5206 = vmatpush1.bf16.msra.mxu0 %v5175
          %5207 = vmatprep.subr.bf16.mxu0 0
          %5208 = vmatpush2.bf16.msra.mxu0 0
          %5209 = vmatprep.subr.bf16.mxu0 0
          %5210 = vmatpush2.bf16.msra.mxu0 0
          %5211 = vmatprep.subr.bf16.mxu0 0
          %5212 = vmatpush2.bf16.msra.mxu0 0
          %5213 = vmatprep.subr.bf16.mxu0 0
          %5214 = vmatpush2.bf16.msra.mxu0 0
          %5215 = vmatprep.subr.bf16.mxu0 0
          %5216 = vmatpush2.bf16.msra.mxu0 0
          %5217 = vmatprep.subr.bf16.mxu0 0
          %5218 = vmatpush2.bf16.msra.mxu0 0
          %5219 = vmatprep.subr.bf16.mxu0 0
          %5220 = vmatpush2.bf16.msra.mxu0 0
          %5221 = vmatprep.subr.bf16.mxu0 0
          %5222 = vmatpush2.bf16.msra.mxu0 0
          %5223 = vmatprep.mubr.bf16.mxu0 0
          %5224 = vmatmul.mubr.bf16.gmra.mxu0 %v5127
          %v5225 = vpop.f32.mrf.mxu0
          %v5226 = vadd.f32 0.0, %v5225
          %v5227 = vpop.f32.mrf.mxu0
          %v5228 = vpop.f32.mrf.mxu0
          %v5229 = vadd.f32 0.0, %v5228
          %v5230 = vpop.f32.mrf.mxu0
          %5231 = vmatprep.mubr.bf16.mxu0 0
          %5232 = vmatmul.mubr.bf16.gmra.mxu0 %v5128
          %v5233 = vpop.f32.mrf.mxu0
          %v5234 = vadd.f32 0.0, %v5233
          %v5235 = vpop.f32.mrf.mxu0
          %v5236 = vpop.f32.mrf.mxu0
          %v5237 = vadd.f32 0.0, %v5236
          %v5238 = vpop.f32.mrf.mxu0
          %5239 = vmatprep.mubr.bf16.mxu0 0
          %5240 = vmatmul.mubr.bf16.gmra.mxu0 %v5129
          %v5241 = vpop.f32.mrf.mxu0
          %v5242 = vadd.f32 0.0, %v5241
          %v5243 = vpop.f32.mrf.mxu0
          %v5244 = vpop.f32.mrf.mxu0
          %v5245 = vadd.f32 0.0, %v5244
          %v5246 = vpop.f32.mrf.mxu0
          %5247 = vmatprep.mubr.bf16.mxu0 0
          %5248 = vmatmul.mubr.bf16.gmra.mxu0 %v5130
          %v5249 = vpop.f32.mrf.mxu0
          %v5250 = vadd.f32 0.0, %v5249
          %v5251 = vpop.f32.mrf.mxu0
          %v5252 = vpop.f32.mrf.mxu0
          %v5253 = vadd.f32 0.0, %v5252
          %v5254 = vpop.f32.mrf.mxu0
          %5255 = vmatprep.mubr.bf16.mxu0 0
          %5256 = vmatmul.mubr.bf16.gmra.mxu0 %v5131
          %v5257 = vpop.f32.mrf.mxu0
          %v5258 = vadd.f32 0.0, %v5257
          %v5259 = vpop.f32.mrf.mxu0
          %v5260 = vpop.f32.mrf.mxu0
          %v5261 = vadd.f32 0.0, %v5260
          %v5262 = vpop.f32.mrf.mxu0
          %5263 = vmatprep.mubr.bf16.mxu0 0
          %5264 = vmatmul.mubr.bf16.gmra.mxu0 %v5132
          %v5265 = vpop.f32.mrf.mxu0
          %v5266 = vadd.f32 0.0, %v5265
          %v5267 = vpop.f32.mrf.mxu0
          %v5268 = vpop.f32.mrf.mxu0
          %v5269 = vadd.f32 0.0, %v5268
          %v5270 = vpop.f32.mrf.mxu0
          %5271 = vmatprep.mubr.bf16.mxu0 0
          %5272 = vmatmul.mubr.bf16.gmra.mxu0 %v5133
          %v5273 = vpop.f32.mrf.mxu0
          %v5274 = vadd.f32 0.0, %v5273
          %v5275 = vpop.f32.mrf.mxu0
          %v5276 = vpop.f32.mrf.mxu0
          %v5277 = vadd.f32 0.0, %v5276
          %v5278 = vpop.f32.mrf.mxu0
          %5279 = vmatprep.mubr.bf16.mxu0 0
          %5280 = vmatmul.mubr.bf16.gmra.mxu0 %v5134
          %v5281 = vpop.f32.mrf.mxu0
          %v5282 = vadd.f32 0.0, %v5281
          %v5283 = vpop.f32.mrf.mxu0
          %v5284 = vpop.f32.mrf.mxu0
          %v5285 = vadd.f32 0.0, %v5284
          %v5286 = vpop.f32.mrf.mxu0
          %5287 = vdwg.mxu0
          %v5288 = vadd.f32 %v4990, %v5226
          %v5289 = vadd.f32 %v4991, %v5229
          %v5290 = vadd.f32 %v4992, %v5234
          %v5291 = vadd.f32 %v4993, %v5237
          %v5292 = vadd.f32 %v4994, %v5242
          %v5293 = vadd.f32 %v4995, %v5245
          %v5294 = vadd.f32 %v4996, %v5250
          %v5295 = vadd.f32 %v4997, %v5253
          %v5296 = vadd.f32 %v4998, %v5258
          %v5297 = vadd.f32 %v4999, %v5261
          %v5298 = vadd.f32 %v5000, %v5266
          %v5299 = vadd.f32 %v5001, %v5269
          %v5300 = vadd.f32 %v5002, %v5274
          %v5301 = vadd.f32 %v5003, %v5277
          %v5302 = vadd.f32 %v5004, %v5282
          %v5303 = vadd.f32 %v5005, %v5285
          %v5304 = vld [vmem:[%s4691] sm:$0x8]
          %v5305 = vld [vmem:[%s4691 + $0x8] sm:$0x7]
          %v5306 = vld [vmem:[%s4691 + $0xc] sm:$0x8]
          %v5307 = vld [vmem:[%s4691 + $0x14] sm:$0x7]
          %v5308 = vld [vmem:[%s4691 + $0x18] sm:$0x8]
          %v5309 = vld [vmem:[%s4691 + $0x20] sm:$0x7]
          %v5310 = vld [vmem:[%s4691 + $0x24] sm:$0x8]
          %v5311 = vld [vmem:[%s4691 + $0x2c] sm:$0x7]
          %v5312 = vld [vmem:[%s4691 + $0x30] sm:$0x8]
          %v5313 = vld [vmem:[%s4691 + $0x38] sm:$0x7]
          %v5314 = vld [vmem:[%s4691 + $0x3c] sm:$0x8]
          %v5315 = vld [vmem:[%s4691 + $0x44] sm:$0x7]
          %v5316 = vld [vmem:[%s4691 + $0x48] sm:$0x8]
          %v5317 = vld [vmem:[%s4691 + $0x50] sm:$0x7]
          %v5318 = vld [vmem:[%s4691 + $0x54] sm:$0x8]
          %v5319 = vld [vmem:[%s4691 + $0x5c] sm:$0x7]
          %v5336 = vrot.slane %v5304, 7
          %v5337 = vrot.slane %v5336, 4
          %v5338 = vrot.slane %v4693, 7
          %v5339 = vsel %vm4424, %v5337, %v5338
          %v5340 = vrot.slane %v5338, 4
          %v5341 = vrot.slane %v5305, 7
          %v5342 = vsel %vm4424, %v5340, %v5341
          %v5343 = vrot.slane %v5306, 7
          %v5344 = vrot.slane %v5343, 4
          %v5345 = vrot.slane %v4696, 7
          %v5346 = vsel %vm4424, %v5344, %v5345
          %v5347 = vrot.slane %v5345, 4
          %v5348 = vrot.slane %v5307, 7
          %v5349 = vsel %vm4424, %v5347, %v5348
          %v5350 = vrot.slane %v5308, 7
          %v5351 = vrot.slane %v5350, 4
          %v5352 = vrot.slane %v4699, 7
          %v5353 = vsel %vm4424, %v5351, %v5352
          %v5354 = vrot.slane %v5352, 4
          %v5355 = vrot.slane %v5309, 7
          %v5356 = vsel %vm4424, %v5354, %v5355
          %v5357 = vrot.slane %v5310, 7
          %v5358 = vrot.slane %v5357, 4
          %v5359 = vrot.slane %v4702, 7
          %v5360 = vsel %vm4424, %v5358, %v5359
          %v5361 = vrot.slane %v5359, 4
          %v5362 = vrot.slane %v5311, 7
          %v5363 = vsel %vm4424, %v5361, %v5362
          %v5364 = vrot.slane %v5312, 7
          %v5365 = vrot.slane %v5364, 4
          %v5366 = vrot.slane %v4705, 7
          %v5367 = vsel %vm4424, %v5365, %v5366
          %v5368 = vrot.slane %v5366, 4
          %v5369 = vrot.slane %v5313, 7
          %v5370 = vsel %vm4424, %v5368, %v5369
          %v5371 = vrot.slane %v5314, 7
          %v5372 = vrot.slane %v5371, 4
          %v5373 = vrot.slane %v4708, 7
          %v5374 = vsel %vm4424, %v5372, %v5373
          %v5375 = vrot.slane %v5373, 4
          %v5376 = vrot.slane %v5315, 7
          %v5377 = vsel %vm4424, %v5375, %v5376
          %v5378 = vrot.slane %v5316, 7
          %v5379 = vrot.slane %v5378, 4
          %v5380 = vrot.slane %v4711, 7
          %v5381 = vsel %vm4424, %v5379, %v5380
          %v5382 = vrot.slane %v5380, 4
          %v5383 = vrot.slane %v5317, 7
          %v5384 = vsel %vm4424, %v5382, %v5383
          %v5385 = vrot.slane %v5318, 7
          %v5386 = vrot.slane %v5385, 4
          %v5387 = vrot.slane %v4714, 7
          %v5388 = vsel %vm4424, %v5386, %v5387
          %v5389 = vrot.slane %v5387, 4
          %v5390 = vrot.slane %v5319, 7
          %v5391 = vsel %vm4424, %v5389, %v5390
          %s5392 = scalar_lea.vmem %s173, 320 [#allocation4]
          %v5393 = vld [vmem:[%s5392] sm:$0xf]
          %v5394 = vld [vmem:[%s5392 + $0x4] sm:$0xf]
          %v5395 = vld [vmem:[%s5392 + $0x8] sm:$0xf]
          %v5396 = vld [vmem:[%s5392 + $0xc] sm:$0xf]
          %v5397 = vld [vmem:[%s5392 + $0x10] sm:$0xf]
          %v5398 = vld [vmem:[%s5392 + $0x14] sm:$0xf]
          %v5399 = vld [vmem:[%s5392 + $0x18] sm:$0xf]
          %v5400 = vld [vmem:[%s5392 + $0x1c] sm:$0xf]
          %v5401 = vld [vmem:[%s5392 + $0x20] sm:$0xf]
          %v5402 = vld [vmem:[%s5392 + $0x24] sm:$0xf]
          %v5403 = vld [vmem:[%s5392 + $0x28] sm:$0xf]
          %v5404 = vld [vmem:[%s5392 + $0x2c] sm:$0xf]
          %v5405 = vld [vmem:[%s5392 + $0x30] sm:$0xf]
          %v5406 = vld [vmem:[%s5392 + $0x34] sm:$0xf]
          %v5407 = vld [vmem:[%s5392 + $0x38] sm:$0xf]
          %v5408 = vld [vmem:[%s5392 + $0x3c] sm:$0xf]
          %v5409 = vunpack.c.l.b16 %v5339
          %v5410 = vunpack.c.l.b16 %v5342
          %v5411 = vunpack.c.l.b16 %v5346
          %v5412 = vunpack.c.l.b16 %v5349
          %v5413 = vunpack.c.l.b16 %v5353
          %v5414 = vunpack.c.l.b16 %v5356
          %v5415 = vunpack.c.l.b16 %v5360
          %v5416 = vunpack.c.l.b16 %v5363
          %v5417 = vunpack.c.l.b16 %v5367
          %v5418 = vunpack.c.l.b16 %v5370
          %v5419 = vunpack.c.l.b16 %v5374
          %v5420 = vunpack.c.l.b16 %v5377
          %v5421 = vunpack.c.l.b16 %v5381
          %v5422 = vunpack.c.l.b16 %v5384
          %v5423 = vunpack.c.l.b16 %v5388
          %v5424 = vunpack.c.l.b16 %v5391
          %v5425 = vpack.c.b16 %v5410, %v5409
          %v5426 = vpack.c.b16 %v5412, %v5411
          %v5427 = vpack.c.b16 %v5414, %v5413
          %v5428 = vpack.c.b16 %v5416, %v5415
          %v5429 = vpack.c.b16 %v5418, %v5417
          %v5430 = vpack.c.b16 %v5420, %v5419
          %v5431 = vpack.c.b16 %v5422, %v5421
          %v5432 = vpack.c.b16 %v5424, %v5423
          %v5457 = vunpack.c.l.b16 %v5393
          %v5458 = vunpack.c.l.b16 %v5394
          %v5459 = vunpack.c.l.b16 %v5395
          %v5460 = vunpack.c.l.b16 %v5396
          %v5461 = vunpack.c.l.b16 %v5397
          %v5462 = vunpack.c.l.b16 %v5398
          %v5463 = vunpack.c.l.b16 %v5399
          %v5464 = vunpack.c.l.b16 %v5400
          %v5465 = vunpack.c.l.b16 %v5401
          %v5466 = vunpack.c.l.b16 %v5402
          %v5467 = vunpack.c.l.b16 %v5403
          %v5468 = vunpack.c.l.b16 %v5404
          %v5469 = vunpack.c.l.b16 %v5405
          %v5470 = vunpack.c.l.b16 %v5406
          %v5471 = vunpack.c.l.b16 %v5407
          %v5472 = vunpack.c.l.b16 %v5408
          %v5473 = vpack.c.b16 %v5458, %v5457
          %v5474 = vpack.c.b16 %v5460, %v5459
          %v5475 = vpack.c.b16 %v5462, %v5461
          %v5476 = vpack.c.b16 %v5464, %v5463
          %v5477 = vpack.c.b16 %v5466, %v5465
          %v5478 = vpack.c.b16 %v5468, %v5467
          %v5479 = vpack.c.b16 %v5470, %v5469
          %v5480 = vpack.c.b16 %v5472, %v5471
          %5489 = vmatprep.subr.bf16.mxu0 0
          %5490 = vmatpush1.bf16.msra.mxu0 %v5480
          %5491 = vmatprep.subr.bf16.mxu0 0
          %5492 = vmatpush1.bf16.msra.mxu0 %v5479
          %5493 = vmatprep.subr.bf16.mxu0 0
          %5494 = vmatpush1.bf16.msra.mxu0 %v5478
          %5495 = vmatprep.subr.bf16.mxu0 0
          %5496 = vmatpush1.bf16.msra.mxu0 %v5477
          %5497 = vmatprep.subr.bf16.mxu0 0
          %5498 = vmatpush1.bf16.msra.mxu0 %v5476
          %5499 = vmatprep.subr.bf16.mxu0 0
          %5500 = vmatpush1.bf16.msra.mxu0 %v5475
          %5501 = vmatprep.subr.bf16.mxu0 0
          %5502 = vmatpush1.bf16.msra.mxu0 %v5474
          %5503 = vmatprep.subr.bf16.mxu0 0
          %5504 = vmatpush1.bf16.msra.mxu0 %v5473
          %5505 = vmatprep.subr.bf16.mxu0 0
          %5506 = vmatpush2.bf16.msra.mxu0 0
          %5507 = vmatprep.subr.bf16.mxu0 0
          %5508 = vmatpush2.bf16.msra.mxu0 0
          %5509 = vmatprep.subr.bf16.mxu0 0
          %5510 = vmatpush2.bf16.msra.mxu0 0
          %5511 = vmatprep.subr.bf16.mxu0 0
          %5512 = vmatpush2.bf16.msra.mxu0 0
          %5513 = vmatprep.subr.bf16.mxu0 0
          %5514 = vmatpush2.bf16.msra.mxu0 0
          %5515 = vmatprep.subr.bf16.mxu0 0
          %5516 = vmatpush2.bf16.msra.mxu0 0
          %5517 = vmatprep.subr.bf16.mxu0 0
          %5518 = vmatpush2.bf16.msra.mxu0 0
          %5519 = vmatprep.subr.bf16.mxu0 0
          %5520 = vmatpush2.bf16.msra.mxu0 0
          %5521 = vmatprep.mubr.bf16.mxu0 0
          %5522 = vmatmul.mubr.bf16.gmra.mxu0 %v5425
          %v5523 = vpop.f32.mrf.mxu0
          %v5524 = vadd.f32 0.0, %v5523
          %v5525 = vpop.f32.mrf.mxu0
          %v5526 = vpop.f32.mrf.mxu0
          %v5527 = vadd.f32 0.0, %v5526
          %v5528 = vpop.f32.mrf.mxu0
          %5529 = vmatprep.mubr.bf16.mxu0 0
          %5530 = vmatmul.mubr.bf16.gmra.mxu0 %v5426
          %v5531 = vpop.f32.mrf.mxu0
          %v5532 = vadd.f32 0.0, %v5531
          %v5533 = vpop.f32.mrf.mxu0
          %v5534 = vpop.f32.mrf.mxu0
          %v5535 = vadd.f32 0.0, %v5534
          %v5536 = vpop.f32.mrf.mxu0
          %5537 = vmatprep.mubr.bf16.mxu0 0
          %5538 = vmatmul.mubr.bf16.gmra.mxu0 %v5427
          %v5539 = vpop.f32.mrf.mxu0
          %v5540 = vadd.f32 0.0, %v5539
          %v5541 = vpop.f32.mrf.mxu0
          %v5542 = vpop.f32.mrf.mxu0
          %v5543 = vadd.f32 0.0, %v5542
          %v5544 = vpop.f32.mrf.mxu0
          %5545 = vmatprep.mubr.bf16.mxu0 0
          %5546 = vmatmul.mubr.bf16.gmra.mxu0 %v5428
          %v5547 = vpop.f32.mrf.mxu0
          %v5548 = vadd.f32 0.0, %v5547
          %v5549 = vpop.f32.mrf.mxu0
          %v5550 = vpop.f32.mrf.mxu0
          %v5551 = vadd.f32 0.0, %v5550
          %v5552 = vpop.f32.mrf.mxu0
          %5553 = vmatprep.mubr.bf16.mxu0 0
          %5554 = vmatmul.mubr.bf16.gmra.mxu0 %v5429
          %v5555 = vpop.f32.mrf.mxu0
          %v5556 = vadd.f32 0.0, %v5555
          %v5557 = vpop.f32.mrf.mxu0
          %v5558 = vpop.f32.mrf.mxu0
          %v5559 = vadd.f32 0.0, %v5558
          %v5560 = vpop.f32.mrf.mxu0
          %5561 = vmatprep.mubr.bf16.mxu0 0
          %5562 = vmatmul.mubr.bf16.gmra.mxu0 %v5430
          %v5563 = vpop.f32.mrf.mxu0
          %v5564 = vadd.f32 0.0, %v5563
          %v5565 = vpop.f32.mrf.mxu0
          %v5566 = vpop.f32.mrf.mxu0
          %v5567 = vadd.f32 0.0, %v5566
          %v5568 = vpop.f32.mrf.mxu0
          %5569 = vmatprep.mubr.bf16.mxu0 0
          %5570 = vmatmul.mubr.bf16.gmra.mxu0 %v5431
          %v5571 = vpop.f32.mrf.mxu0
          %v5572 = vadd.f32 0.0, %v5571
          %v5573 = vpop.f32.mrf.mxu0
          %v5574 = vpop.f32.mrf.mxu0
          %v5575 = vadd.f32 0.0, %v5574
          %v5576 = vpop.f32.mrf.mxu0
          %5577 = vmatprep.mubr.bf16.mxu0 0
          %5578 = vmatmul.mubr.bf16.gmra.mxu0 %v5432
          %v5579 = vpop.f32.mrf.mxu0
          %v5580 = vadd.f32 0.0, %v5579
          %v5581 = vpop.f32.mrf.mxu0
          %v5582 = vpop.f32.mrf.mxu0
          %v5583 = vadd.f32 0.0, %v5582
          %v5584 = vpop.f32.mrf.mxu0
          %5585 = vdwg.mxu0
          %v5586 = vadd.f32 %v5288, %v5524
          %v5587 = vadd.f32 %v5289, %v5527
          %v5588 = vadd.f32 %v5290, %v5532
          %v5589 = vadd.f32 %v5291, %v5535
          %v5590 = vadd.f32 %v5292, %v5540
          %v5591 = vadd.f32 %v5293, %v5543
          %v5592 = vadd.f32 %v5294, %v5548
          %v5593 = vadd.f32 %v5295, %v5551
          %v5594 = vadd.f32 %v5296, %v5556
          %v5595 = vadd.f32 %v5297, %v5559
          %v5596 = vadd.f32 %v5298, %v5564
          %v5597 = vadd.f32 %v5299, %v5567
          %v5598 = vadd.f32 %v5300, %v5572
          %v5599 = vadd.f32 %v5301, %v5575
          %v5600 = vadd.f32 %v5302, %v5580
          %v5601 = vadd.f32 %v5303, %v5583
          %s5602 = scalar_lea.vmem [#allocation2], 72
          %v5603 = vld [vmem:[%s5602] sm:$0xe]
          %v5604 = vld [vmem:[%s5602 + $0x4] sm:$0xf]
          %v5605 = vld [vmem:[%s5602 + $0x8] sm:$0x1]
          %v5606 = vld [vmem:[%s5602 + $0xc] sm:$0xe]
          %v5607 = vld [vmem:[%s5602 + $0x10] sm:$0xf]
          %v5608 = vld [vmem:[%s5602 + $0x14] sm:$0x1]
          %v5609 = vld [vmem:[%s5602 + $0x18] sm:$0xe]
          %v5610 = vld [vmem:[%s5602 + $0x1c] sm:$0xf]
          %v5611 = vld [vmem:[%s5602 + $0x20] sm:$0x1]
          %v5612 = vld [vmem:[%s5602 + $0x24] sm:$0xe]
          %v5613 = vld [vmem:[%s5602 + $0x28] sm:$0xf]
          %v5614 = vld [vmem:[%s5602 + $0x2c] sm:$0x1]
          %v5615 = vld [vmem:[%s5602 + $0x30] sm:$0xe]
          %v5616 = vld [vmem:[%s5602 + $0x34] sm:$0xf]
          %v5617 = vld [vmem:[%s5602 + $0x38] sm:$0x1]
          %v5618 = vld [vmem:[%s5602 + $0x3c] sm:$0xe]
          %v5619 = vld [vmem:[%s5602 + $0x40] sm:$0xf]
          %v5620 = vld [vmem:[%s5602 + $0x44] sm:$0x1]
          %v5621 = vld [vmem:[%s5602 + $0x48] sm:$0xe]
          %v5622 = vld [vmem:[%s5602 + $0x4c] sm:$0xf]
          %v5623 = vld [vmem:[%s5602 + $0x50] sm:$0x1]
          %v5624 = vld [vmem:[%s5602 + $0x54] sm:$0xe]
          %v5625 = vld [vmem:[%s5602 + $0x58] sm:$0xf]
          %v5626 = vld [vmem:[%s5602 + $0x5c] sm:$0x1]
          %v5651 = vrot.slane %v5603, 5
          %v5652 = vrot.slane %v5651, 4
          %v5653 = vrot.slane %v5604, 5
          %v5654 = vsel %vm3855, %v5652, %v5653
          %v5655 = vrot.slane %v5653, 4
          %v5656 = vrot.slane %v5605, 5
          %v5657 = vsel %vm3855, %v5655, %v5656
          %v5658 = vrot.slane %v5606, 5
          %v5659 = vrot.slane %v5658, 4
          %v5660 = vrot.slane %v5607, 5
          %v5661 = vsel %vm3855, %v5659, %v5660
          %v5662 = vrot.slane %v5660, 4
          %v5663 = vrot.slane %v5608, 5
          %v5664 = vsel %vm3855, %v5662, %v5663
          %v5665 = vrot.slane %v5609, 5
          %v5666 = vrot.slane %v5665, 4
          %v5667 = vrot.slane %v5610, 5
          %v5668 = vsel %vm3855, %v5666, %v5667
          %v5669 = vrot.slane %v5667, 4
          %v5670 = vrot.slane %v5611, 5
          %v5671 = vsel %vm3855, %v5669, %v5670
          %v5672 = vrot.slane %v5612, 5
          %v5673 = vrot.slane %v5672, 4
          %v5674 = vrot.slane %v5613, 5
          %v5675 = vsel %vm3855, %v5673, %v5674
          %v5676 = vrot.slane %v5674, 4
          %v5677 = vrot.slane %v5614, 5
          %v5678 = vsel %vm3855, %v5676, %v5677
          %v5679 = vrot.slane %v5615, 5
          %v5680 = vrot.slane %v5679, 4
          %v5681 = vrot.slane %v5616, 5
          %v5682 = vsel %vm3855, %v5680, %v5681
          %v5683 = vrot.slane %v5681, 4
          %v5684 = vrot.slane %v5617, 5
          %v5685 = vsel %vm3855, %v5683, %v5684
          %v5686 = vrot.slane %v5618, 5
          %v5687 = vrot.slane %v5686, 4
          %v5688 = vrot.slane %v5619, 5
          %v5689 = vsel %vm3855, %v5687, %v5688
          %v5690 = vrot.slane %v5688, 4
          %v5691 = vrot.slane %v5620, 5
          %v5692 = vsel %vm3855, %v5690, %v5691
          %v5693 = vrot.slane %v5621, 5
          %v5694 = vrot.slane %v5693, 4
          %v5695 = vrot.slane %v5622, 5
          %v5696 = vsel %vm3855, %v5694, %v5695
          %v5697 = vrot.slane %v5695, 4
          %v5698 = vrot.slane %v5623, 5
          %v5699 = vsel %vm3855, %v5697, %v5698
          %v5700 = vrot.slane %v5624, 5
          %v5701 = vrot.slane %v5700, 4
          %v5702 = vrot.slane %v5625, 5
          %v5703 = vsel %vm3855, %v5701, %v5702
          %v5704 = vrot.slane %v5702, 4
          %v5705 = vrot.slane %v5626, 5
          %v5706 = vsel %vm3855, %v5704, %v5705
          %s5707 = scalar_lea.vmem %s173, 384 [#allocation4]
          %v5708 = vld [vmem:[%s5707] sm:$0xf]
          %v5709 = vld [vmem:[%s5707 + $0x4] sm:$0xf]
          %v5710 = vld [vmem:[%s5707 + $0x8] sm:$0xf]
          %v5711 = vld [vmem:[%s5707 + $0xc] sm:$0xf]
          %v5712 = vld [vmem:[%s5707 + $0x10] sm:$0xf]
          %v5713 = vld [vmem:[%s5707 + $0x14] sm:$0xf]
          %v5714 = vld [vmem:[%s5707 + $0x18] sm:$0xf]
          %v5715 = vld [vmem:[%s5707 + $0x1c] sm:$0xf]
          %v5716 = vld [vmem:[%s5707 + $0x20] sm:$0xf]
          %v5717 = vld [vmem:[%s5707 + $0x24] sm:$0xf]
          %v5718 = vld [vmem:[%s5707 + $0x28] sm:$0xf]
          %v5719 = vld [vmem:[%s5707 + $0x2c] sm:$0xf]
          %v5720 = vld [vmem:[%s5707 + $0x30] sm:$0xf]
          %v5721 = vld [vmem:[%s5707 + $0x34] sm:$0xf]
          %v5722 = vld [vmem:[%s5707 + $0x38] sm:$0xf]
          %v5723 = vld [vmem:[%s5707 + $0x3c] sm:$0xf]
          %v5724 = vunpack.c.l.b16 %v5654
          %v5725 = vunpack.c.l.b16 %v5657
          %v5726 = vunpack.c.l.b16 %v5661
          %v5727 = vunpack.c.l.b16 %v5664
          %v5728 = vunpack.c.l.b16 %v5668
          %v5729 = vunpack.c.l.b16 %v5671
          %v5730 = vunpack.c.l.b16 %v5675
          %v5731 = vunpack.c.l.b16 %v5678
          %v5732 = vunpack.c.l.b16 %v5682
          %v5733 = vunpack.c.l.b16 %v5685
          %v5734 = vunpack.c.l.b16 %v5689
          %v5735 = vunpack.c.l.b16 %v5692
          %v5736 = vunpack.c.l.b16 %v5696
          %v5737 = vunpack.c.l.b16 %v5699
          %v5738 = vunpack.c.l.b16 %v5703
          %v5739 = vunpack.c.l.b16 %v5706
          %v5740 = vpack.c.b16 %v5725, %v5724
          %v5741 = vpack.c.b16 %v5727, %v5726
          %v5742 = vpack.c.b16 %v5729, %v5728
          %v5743 = vpack.c.b16 %v5731, %v5730
          %v5744 = vpack.c.b16 %v5733, %v5732
          %v5745 = vpack.c.b16 %v5735, %v5734
          %v5746 = vpack.c.b16 %v5737, %v5736
          %v5747 = vpack.c.b16 %v5739, %v5738
          %v5772 = vunpack.c.l.b16 %v5708
          %v5773 = vunpack.c.l.b16 %v5709
          %v5774 = vunpack.c.l.b16 %v5710
          %v5775 = vunpack.c.l.b16 %v5711
          %v5776 = vunpack.c.l.b16 %v5712
          %v5777 = vunpack.c.l.b16 %v5713
          %v5778 = vunpack.c.l.b16 %v5714
          %v5779 = vunpack.c.l.b16 %v5715
          %v5780 = vunpack.c.l.b16 %v5716
          %v5781 = vunpack.c.l.b16 %v5717
          %v5782 = vunpack.c.l.b16 %v5718
          %v5783 = vunpack.c.l.b16 %v5719
          %v5784 = vunpack.c.l.b16 %v5720
          %v5785 = vunpack.c.l.b16 %v5721
          %v5786 = vunpack.c.l.b16 %v5722
          %v5787 = vunpack.c.l.b16 %v5723
          %v5788 = vpack.c.b16 %v5773, %v5772
          %v5789 = vpack.c.b16 %v5775, %v5774
          %v5790 = vpack.c.b16 %v5777, %v5776
          %v5791 = vpack.c.b16 %v5779, %v5778
          %v5792 = vpack.c.b16 %v5781, %v5780
          %v5793 = vpack.c.b16 %v5783, %v5782
          %v5794 = vpack.c.b16 %v5785, %v5784
          %v5795 = vpack.c.b16 %v5787, %v5786
          %5804 = vmatprep.subr.bf16.mxu0 0
          %5805 = vmatpush1.bf16.msra.mxu0 %v5795
          %5806 = vmatprep.subr.bf16.mxu0 0
          %5807 = vmatpush1.bf16.msra.mxu0 %v5794
          %5808 = vmatprep.subr.bf16.mxu0 0
          %5809 = vmatpush1.bf16.msra.mxu0 %v5793
          %5810 = vmatprep.subr.bf16.mxu0 0
          %5811 = vmatpush1.bf16.msra.mxu0 %v5792
          %5812 = vmatprep.subr.bf16.mxu0 0
          %5813 = vmatpush1.bf16.msra.mxu0 %v5791
          %5814 = vmatprep.subr.bf16.mxu0 0
          %5815 = vmatpush1.bf16.msra.mxu0 %v5790
          %5816 = vmatprep.subr.bf16.mxu0 0
          %5817 = vmatpush1.bf16.msra.mxu0 %v5789
          %5818 = vmatprep.subr.bf16.mxu0 0
          %5819 = vmatpush1.bf16.msra.mxu0 %v5788
          %5820 = vmatprep.subr.bf16.mxu0 0
          %5821 = vmatpush2.bf16.msra.mxu0 0
          %5822 = vmatprep.subr.bf16.mxu0 0
          %5823 = vmatpush2.bf16.msra.mxu0 0
          %5824 = vmatprep.subr.bf16.mxu0 0
          %5825 = vmatpush2.bf16.msra.mxu0 0
          %5826 = vmatprep.subr.bf16.mxu0 0
          %5827 = vmatpush2.bf16.msra.mxu0 0
          %5828 = vmatprep.subr.bf16.mxu0 0
          %5829 = vmatpush2.bf16.msra.mxu0 0
          %5830 = vmatprep.subr.bf16.mxu0 0
          %5831 = vmatpush2.bf16.msra.mxu0 0
          %5832 = vmatprep.subr.bf16.mxu0 0
          %5833 = vmatpush2.bf16.msra.mxu0 0
          %5834 = vmatprep.subr.bf16.mxu0 0
          %5835 = vmatpush2.bf16.msra.mxu0 0
          %5836 = vmatprep.mubr.bf16.mxu0 0
          %5837 = vmatmul.mubr.bf16.gmra.mxu0 %v5740
          %v5838 = vpop.f32.mrf.mxu0
          %v5839 = vadd.f32 0.0, %v5838
          %v5840 = vpop.f32.mrf.mxu0
          %v5841 = vpop.f32.mrf.mxu0
          %v5842 = vadd.f32 0.0, %v5841
          %v5843 = vpop.f32.mrf.mxu0
          %5844 = vmatprep.mubr.bf16.mxu0 0
          %5845 = vmatmul.mubr.bf16.gmra.mxu0 %v5741
          %v5846 = vpop.f32.mrf.mxu0
          %v5847 = vadd.f32 0.0, %v5846
          %v5848 = vpop.f32.mrf.mxu0
          %v5849 = vpop.f32.mrf.mxu0
          %v5850 = vadd.f32 0.0, %v5849
          %v5851 = vpop.f32.mrf.mxu0
          %5852 = vmatprep.mubr.bf16.mxu0 0
          %5853 = vmatmul.mubr.bf16.gmra.mxu0 %v5742
          %v5854 = vpop.f32.mrf.mxu0
          %v5855 = vadd.f32 0.0, %v5854
          %v5856 = vpop.f32.mrf.mxu0
          %v5857 = vpop.f32.mrf.mxu0
          %v5858 = vadd.f32 0.0, %v5857
          %v5859 = vpop.f32.mrf.mxu0
          %5860 = vmatprep.mubr.bf16.mxu0 0
          %5861 = vmatmul.mubr.bf16.gmra.mxu0 %v5743
          %v5862 = vpop.f32.mrf.mxu0
          %v5863 = vadd.f32 0.0, %v5862
          %v5864 = vpop.f32.mrf.mxu0
          %v5865 = vpop.f32.mrf.mxu0
          %v5866 = vadd.f32 0.0, %v5865
          %v5867 = vpop.f32.mrf.mxu0
          %5868 = vmatprep.mubr.bf16.mxu0 0
          %5869 = vmatmul.mubr.bf16.gmra.mxu0 %v5744
          %v5870 = vpop.f32.mrf.mxu0
          %v5871 = vadd.f32 0.0, %v5870
          %v5872 = vpop.f32.mrf.mxu0
          %v5873 = vpop.f32.mrf.mxu0
          %v5874 = vadd.f32 0.0, %v5873
          %v5875 = vpop.f32.mrf.mxu0
          %5876 = vmatprep.mubr.bf16.mxu0 0
          %5877 = vmatmul.mubr.bf16.gmra.mxu0 %v5745
          %v5878 = vpop.f32.mrf.mxu0
          %v5879 = vadd.f32 0.0, %v5878
          %v5880 = vpop.f32.mrf.mxu0
          %v5881 = vpop.f32.mrf.mxu0
          %v5882 = vadd.f32 0.0, %v5881
          %v5883 = vpop.f32.mrf.mxu0
          %5884 = vmatprep.mubr.bf16.mxu0 0
          %5885 = vmatmul.mubr.bf16.gmra.mxu0 %v5746
          %v5886 = vpop.f32.mrf.mxu0
          %v5887 = vadd.f32 0.0, %v5886
          %v5888 = vpop.f32.mrf.mxu0
          %v5889 = vpop.f32.mrf.mxu0
          %v5890 = vadd.f32 0.0, %v5889
          %v5891 = vpop.f32.mrf.mxu0
          %5892 = vmatprep.mubr.bf16.mxu0 0
          %5893 = vmatmul.mubr.bf16.gmra.mxu0 %v5747
          %v5894 = vpop.f32.mrf.mxu0
          %v5895 = vadd.f32 0.0, %v5894
          %v5896 = vpop.f32.mrf.mxu0
          %v5897 = vpop.f32.mrf.mxu0
          %v5898 = vadd.f32 0.0, %v5897
          %v5899 = vpop.f32.mrf.mxu0
          %5900 = vdwg.mxu0
          %v5901 = vadd.f32 %v5586, %v5839
          %v5902 = vadd.f32 %v5587, %v5842
          %v5903 = vadd.f32 %v5588, %v5847
          %v5904 = vadd.f32 %v5589, %v5850
          %v5905 = vadd.f32 %v5590, %v5855
          %v5906 = vadd.f32 %v5591, %v5858
          %v5907 = vadd.f32 %v5592, %v5863
          %v5908 = vadd.f32 %v5593, %v5866
          %v5909 = vadd.f32 %v5594, %v5871
          %v5910 = vadd.f32 %v5595, %v5874
          %v5911 = vadd.f32 %v5596, %v5879
          %v5912 = vadd.f32 %v5597, %v5882
          %v5913 = vadd.f32 %v5598, %v5887
          %v5914 = vadd.f32 %v5599, %v5890
          %v5915 = vadd.f32 %v5600, %v5895
          %v5916 = vadd.f32 %v5601, %v5898
          %v5917 = vld [vmem:[%s5602] sm:$0xc]
          %v5918 = vld [vmem:[%s5602 + $0x8] sm:$0x3]
          %v5919 = vld [vmem:[%s5602 + $0xc] sm:$0xc]
          %v5920 = vld [vmem:[%s5602 + $0x14] sm:$0x3]
          %v5921 = vld [vmem:[%s5602 + $0x18] sm:$0xc]
          %v5922 = vld [vmem:[%s5602 + $0x20] sm:$0x3]
          %v5923 = vld [vmem:[%s5602 + $0x24] sm:$0xc]
          %v5924 = vld [vmem:[%s5602 + $0x2c] sm:$0x3]
          %v5925 = vld [vmem:[%s5602 + $0x30] sm:$0xc]
          %v5926 = vld [vmem:[%s5602 + $0x38] sm:$0x3]
          %v5927 = vld [vmem:[%s5602 + $0x3c] sm:$0xc]
          %v5928 = vld [vmem:[%s5602 + $0x44] sm:$0x3]
          %v5929 = vld [vmem:[%s5602 + $0x48] sm:$0xc]
          %v5930 = vld [vmem:[%s5602 + $0x50] sm:$0x3]
          %v5931 = vld [vmem:[%s5602 + $0x54] sm:$0xc]
          %v5932 = vld [vmem:[%s5602 + $0x5c] sm:$0x3]
          %v5949 = vrot.slane %v5917, 6
          %v5950 = vrot.slane %v5949, 4
          %v5951 = vrot.slane %v5604, 6
          %v5952 = vsel %vm3962, %v5950, %v5951
          %v5953 = vrot.slane %v5951, 4
          %v5954 = vrot.slane %v5918, 6
          %v5955 = vsel %vm3962, %v5953, %v5954
          %v5956 = vrot.slane %v5919, 6
          %v5957 = vrot.slane %v5956, 4
          %v5958 = vrot.slane %v5607, 6
          %v5959 = vsel %vm3962, %v5957, %v5958
          %v5960 = vrot.slane %v5958, 4
          %v5961 = vrot.slane %v5920, 6
          %v5962 = vsel %vm3962, %v5960, %v5961
          %v5963 = vrot.slane %v5921, 6
          %v5964 = vrot.slane %v5963, 4
          %v5965 = vrot.slane %v5610, 6
          %v5966 = vsel %vm3962, %v5964, %v5965
          %v5967 = vrot.slane %v5965, 4
          %v5968 = vrot.slane %v5922, 6
          %v5969 = vsel %vm3962, %v5967, %v5968
          %v5970 = vrot.slane %v5923, 6
          %v5971 = vrot.slane %v5970, 4
          %v5972 = vrot.slane %v5613, 6
          %v5973 = vsel %vm3962, %v5971, %v5972
          %v5974 = vrot.slane %v5972, 4
          %v5975 = vrot.slane %v5924, 6
          %v5976 = vsel %vm3962, %v5974, %v5975
          %v5977 = vrot.slane %v5925, 6
          %v5978 = vrot.slane %v5977, 4
          %v5979 = vrot.slane %v5616, 6
          %v5980 = vsel %vm3962, %v5978, %v5979
          %v5981 = vrot.slane %v5979, 4
          %v5982 = vrot.slane %v5926, 6
          %v5983 = vsel %vm3962, %v5981, %v5982
          %v5984 = vrot.slane %v5927, 6
          %v5985 = vrot.slane %v5984, 4
          %v5986 = vrot.slane %v5619, 6
          %v5987 = vsel %vm3962, %v5985, %v5986
          %v5988 = vrot.slane %v5986, 4
          %v5989 = vrot.slane %v5928, 6
          %v5990 = vsel %vm3962, %v5988, %v5989
          %v5991 = vrot.slane %v5929, 6
          %v5992 = vrot.slane %v5991, 4
          %v5993 = vrot.slane %v5622, 6
          %v5994 = vsel %vm3962, %v5992, %v5993
          %v5995 = vrot.slane %v5993, 4
          %v5996 = vrot.slane %v5930, 6
          %v5997 = vsel %vm3962, %v5995, %v5996
          %v5998 = vrot.slane %v5931, 6
          %v5999 = vrot.slane %v5998, 4
          %v6000 = vrot.slane %v5625, 6
          %v6001 = vsel %vm3962, %v5999, %v6000
          %v6002 = vrot.slane %v6000, 4
          %v6003 = vrot.slane %v5932, 6
          %v6004 = vsel %vm3962, %v6002, %v6003
          %s6005 = scalar_lea.vmem %s173, 448 [#allocation4]
          %v6006 = vld [vmem:[%s6005] sm:$0xf]
          %v6007 = vld [vmem:[%s6005 + $0x4] sm:$0xf]
          %v6008 = vld [vmem:[%s6005 + $0x8] sm:$0xf]
          %v6009 = vld [vmem:[%s6005 + $0xc] sm:$0xf]
          %v6010 = vld [vmem:[%s6005 + $0x10] sm:$0xf]
          %v6011 = vld [vmem:[%s6005 + $0x14] sm:$0xf]
          %v6012 = vld [vmem:[%s6005 + $0x18] sm:$0xf]
          %v6013 = vld [vmem:[%s6005 + $0x1c] sm:$0xf]
          %v6014 = vld [vmem:[%s6005 + $0x20] sm:$0xf]
          %v6015 = vld [vmem:[%s6005 + $0x24] sm:$0xf]
          %v6016 = vld [vmem:[%s6005 + $0x28] sm:$0xf]
          %v6017 = vld [vmem:[%s6005 + $0x2c] sm:$0xf]
          %v6018 = vld [vmem:[%s6005 + $0x30] sm:$0xf]
          %v6019 = vld [vmem:[%s6005 + $0x34] sm:$0xf]
          %v6020 = vld [vmem:[%s6005 + $0x38] sm:$0xf]
          %v6021 = vld [vmem:[%s6005 + $0x3c] sm:$0xf]
          %v6022 = vunpack.c.l.b16 %v5952
          %v6023 = vunpack.c.l.b16 %v5955
          %v6024 = vunpack.c.l.b16 %v5959
          %v6025 = vunpack.c.l.b16 %v5962
          %v6026 = vunpack.c.l.b16 %v5966
          %v6027 = vunpack.c.l.b16 %v5969
          %v6028 = vunpack.c.l.b16 %v5973
          %v6029 = vunpack.c.l.b16 %v5976
          %v6030 = vunpack.c.l.b16 %v5980
          %v6031 = vunpack.c.l.b16 %v5983
          %v6032 = vunpack.c.l.b16 %v5987
          %v6033 = vunpack.c.l.b16 %v5990
          %v6034 = vunpack.c.l.b16 %v5994
          %v6035 = vunpack.c.l.b16 %v5997
          %v6036 = vunpack.c.l.b16 %v6001
          %v6037 = vunpack.c.l.b16 %v6004
          %v6038 = vpack.c.b16 %v6023, %v6022
          %v6039 = vpack.c.b16 %v6025, %v6024
          %v6040 = vpack.c.b16 %v6027, %v6026
          %v6041 = vpack.c.b16 %v6029, %v6028
          %v6042 = vpack.c.b16 %v6031, %v6030
          %v6043 = vpack.c.b16 %v6033, %v6032
          %v6044 = vpack.c.b16 %v6035, %v6034
          %v6045 = vpack.c.b16 %v6037, %v6036
          %v6070 = vunpack.c.l.b16 %v6006
          %v6071 = vunpack.c.l.b16 %v6007
          %v6072 = vunpack.c.l.b16 %v6008
          %v6073 = vunpack.c.l.b16 %v6009
          %v6074 = vunpack.c.l.b16 %v6010
          %v6075 = vunpack.c.l.b16 %v6011
          %v6076 = vunpack.c.l.b16 %v6012
          %v6077 = vunpack.c.l.b16 %v6013
          %v6078 = vunpack.c.l.b16 %v6014
          %v6079 = vunpack.c.l.b16 %v6015
          %v6080 = vunpack.c.l.b16 %v6016
          %v6081 = vunpack.c.l.b16 %v6017
          %v6082 = vunpack.c.l.b16 %v6018
          %v6083 = vunpack.c.l.b16 %v6019
          %v6084 = vunpack.c.l.b16 %v6020
          %v6085 = vunpack.c.l.b16 %v6021
          %v6086 = vpack.c.b16 %v6071, %v6070
          %v6087 = vpack.c.b16 %v6073, %v6072
          %v6088 = vpack.c.b16 %v6075, %v6074
          %v6089 = vpack.c.b16 %v6077, %v6076
          %v6090 = vpack.c.b16 %v6079, %v6078
          %v6091 = vpack.c.b16 %v6081, %v6080
          %v6092 = vpack.c.b16 %v6083, %v6082
          %v6093 = vpack.c.b16 %v6085, %v6084
          %6102 = vmatprep.subr.bf16.mxu0 0
          %6103 = vmatpush1.bf16.msra.mxu0 %v6093
          %6104 = vmatprep.subr.bf16.mxu0 0
          %6105 = vmatpush1.bf16.msra.mxu0 %v6092
          %6106 = vmatprep.subr.bf16.mxu0 0
          %6107 = vmatpush1.bf16.msra.mxu0 %v6091
          %6108 = vmatprep.subr.bf16.mxu0 0
          %6109 = vmatpush1.bf16.msra.mxu0 %v6090
          %6110 = vmatprep.subr.bf16.mxu0 0
          %6111 = vmatpush1.bf16.msra.mxu0 %v6089
          %6112 = vmatprep.subr.bf16.mxu0 0
          %6113 = vmatpush1.bf16.msra.mxu0 %v6088
          %6114 = vmatprep.subr.bf16.mxu0 0
          %6115 = vmatpush1.bf16.msra.mxu0 %v6087
          %6116 = vmatprep.subr.bf16.mxu0 0
          %6117 = vmatpush1.bf16.msra.mxu0 %v6086
          %6118 = vmatprep.subr.bf16.mxu0 0
          %6119 = vmatpush2.bf16.msra.mxu0 0
          %6120 = vmatprep.subr.bf16.mxu0 0
          %6121 = vmatpush2.bf16.msra.mxu0 0
          %6122 = vmatprep.subr.bf16.mxu0 0
          %6123 = vmatpush2.bf16.msra.mxu0 0
          %6124 = vmatprep.subr.bf16.mxu0 0
          %6125 = vmatpush2.bf16.msra.mxu0 0
          %6126 = vmatprep.subr.bf16.mxu0 0
          %6127 = vmatpush2.bf16.msra.mxu0 0
          %6128 = vmatprep.subr.bf16.mxu0 0
          %6129 = vmatpush2.bf16.msra.mxu0 0
          %6130 = vmatprep.subr.bf16.mxu0 0
          %6131 = vmatpush2.bf16.msra.mxu0 0
          %6132 = vmatprep.subr.bf16.mxu0 0
          %6133 = vmatpush2.bf16.msra.mxu0 0
          %6134 = vmatprep.mubr.bf16.mxu0 0
          %6135 = vmatmul.mubr.bf16.gmra.mxu0 %v6038
          %v6136 = vpop.f32.mrf.mxu0
          %v6137 = vadd.f32 0.0, %v6136
          %v6138 = vpop.f32.mrf.mxu0
          %v6139 = vpop.f32.mrf.mxu0
          %v6140 = vadd.f32 0.0, %v6139
          %v6141 = vpop.f32.mrf.mxu0
          %6142 = vmatprep.mubr.bf16.mxu0 0
          %6143 = vmatmul.mubr.bf16.gmra.mxu0 %v6039
          %v6144 = vpop.f32.mrf.mxu0
          %v6145 = vadd.f32 0.0, %v6144
          %v6146 = vpop.f32.mrf.mxu0
          %v6147 = vpop.f32.mrf.mxu0
          %v6148 = vadd.f32 0.0, %v6147
          %v6149 = vpop.f32.mrf.mxu0
          %6150 = vmatprep.mubr.bf16.mxu0 0
          %6151 = vmatmul.mubr.bf16.gmra.mxu0 %v6040
          %v6152 = vpop.f32.mrf.mxu0
          %v6153 = vadd.f32 0.0, %v6152
          %v6154 = vpop.f32.mrf.mxu0
          %v6155 = vpop.f32.mrf.mxu0
          %v6156 = vadd.f32 0.0, %v6155
          %v6157 = vpop.f32.mrf.mxu0
          %6158 = vmatprep.mubr.bf16.mxu0 0
          %6159 = vmatmul.mubr.bf16.gmra.mxu0 %v6041
          %v6160 = vpop.f32.mrf.mxu0
          %v6161 = vadd.f32 0.0, %v6160
          %v6162 = vpop.f32.mrf.mxu0
          %v6163 = vpop.f32.mrf.mxu0
          %v6164 = vadd.f32 0.0, %v6163
          %v6165 = vpop.f32.mrf.mxu0
          %6166 = vmatprep.mubr.bf16.mxu0 0
          %6167 = vmatmul.mubr.bf16.gmra.mxu0 %v6042
          %v6168 = vpop.f32.mrf.mxu0
          %v6169 = vadd.f32 0.0, %v6168
          %v6170 = vpop.f32.mrf.mxu0
          %v6171 = vpop.f32.mrf.mxu0
          %v6172 = vadd.f32 0.0, %v6171
          %v6173 = vpop.f32.mrf.mxu0
          %6174 = vmatprep.mubr.bf16.mxu0 0
          %6175 = vmatmul.mubr.bf16.gmra.mxu0 %v6043
          %v6176 = vpop.f32.mrf.mxu0
          %v6177 = vadd.f32 0.0, %v6176
          %v6178 = vpop.f32.mrf.mxu0
          %v6179 = vpop.f32.mrf.mxu0
          %v6180 = vadd.f32 0.0, %v6179
          %v6181 = vpop.f32.mrf.mxu0
          %6182 = vmatprep.mubr.bf16.mxu0 0
          %6183 = vmatmul.mubr.bf16.gmra.mxu0 %v6044
          %v6184 = vpop.f32.mrf.mxu0
          %v6185 = vadd.f32 0.0, %v6184
          %v6186 = vpop.f32.mrf.mxu0
          %v6187 = vpop.f32.mrf.mxu0
          %v6188 = vadd.f32 0.0, %v6187
          %v6189 = vpop.f32.mrf.mxu0
          %6190 = vmatprep.mubr.bf16.mxu0 0
          %6191 = vmatmul.mubr.bf16.gmra.mxu0 %v6045
          %v6192 = vpop.f32.mrf.mxu0
          %v6193 = vadd.f32 0.0, %v6192
          %v6194 = vpop.f32.mrf.mxu0
          %v6195 = vpop.f32.mrf.mxu0
          %v6196 = vadd.f32 0.0, %v6195
          %v6197 = vpop.f32.mrf.mxu0
          %6198 = vdwg.mxu0
          %v6199 = vadd.f32 %v5901, %v6137
          %v6200 = vadd.f32 %v5902, %v6140
          %v6201 = vadd.f32 %v5903, %v6145
          %v6202 = vadd.f32 %v5904, %v6148
          %v6203 = vadd.f32 %v5905, %v6153
          %v6204 = vadd.f32 %v5906, %v6156
          %v6205 = vadd.f32 %v5907, %v6161
          %v6206 = vadd.f32 %v5908, %v6164
          %v6207 = vadd.f32 %v5909, %v6169
          %v6208 = vadd.f32 %v5910, %v6172
          %v6209 = vadd.f32 %v5911, %v6177
          %v6210 = vadd.f32 %v5912, %v6180
          %v6211 = vadd.f32 %v5913, %v6185
          %v6212 = vadd.f32 %v5914, %v6188
          %v6213 = vadd.f32 %v5915, %v6193
          %v6214 = vadd.f32 %v5916, %v6196
          %v6215 = vld [vmem:[%s5602] sm:$0x8]
          %v6216 = vld [vmem:[%s5602 + $0x8] sm:$0x7]
          %v6217 = vld [vmem:[%s5602 + $0xc] sm:$0x8]
          %v6218 = vld [vmem:[%s5602 + $0x14] sm:$0x7]
          %v6219 = vld [vmem:[%s5602 + $0x18] sm:$0x8]
          %v6220 = vld [vmem:[%s5602 + $0x20] sm:$0x7]
          %v6221 = vld [vmem:[%s5602 + $0x24] sm:$0x8]
          %v6222 = vld [vmem:[%s5602 + $0x2c] sm:$0x7]
          %v6223 = vld [vmem:[%s5602 + $0x30] sm:$0x8]
          %v6224 = vld [vmem:[%s5602 + $0x38] sm:$0x7]
          %v6225 = vld [vmem:[%s5602 + $0x3c] sm:$0x8]
          %v6226 = vld [vmem:[%s5602 + $0x44] sm:$0x7]
          %v6227 = vld [vmem:[%s5602 + $0x48] sm:$0x8]
          %v6228 = vld [vmem:[%s5602 + $0x50] sm:$0x7]
          %v6229 = vld [vmem:[%s5602 + $0x54] sm:$0x8]
          %v6230 = vld [vmem:[%s5602 + $0x5c] sm:$0x7]
          %v6247 = vrot.slane %v6215, 7
          %v6248 = vrot.slane %v6247, 4
          %v6249 = vrot.slane %v5604, 7
          %v6250 = vsel %vm4424, %v6248, %v6249
          %v6251 = vrot.slane %v6249, 4
          %v6252 = vrot.slane %v6216, 7
          %v6253 = vsel %vm4424, %v6251, %v6252
          %v6254 = vrot.slane %v6217, 7
          %v6255 = vrot.slane %v6254, 4
          %v6256 = vrot.slane %v5607, 7
          %v6257 = vsel %vm4424, %v6255, %v6256
          %v6258 = vrot.slane %v6256, 4
          %v6259 = vrot.slane %v6218, 7
          %v6260 = vsel %vm4424, %v6258, %v6259
          %v6261 = vrot.slane %v6219, 7
          %v6262 = vrot.slane %v6261, 4
          %v6263 = vrot.slane %v5610, 7
          %v6264 = vsel %vm4424, %v6262, %v6263
          %v6265 = vrot.slane %v6263, 4
          %v6266 = vrot.slane %v6220, 7
          %v6267 = vsel %vm4424, %v6265, %v6266
          %v6268 = vrot.slane %v6221, 7
          %v6269 = vrot.slane %v6268, 4
          %v6270 = vrot.slane %v5613, 7
          %v6271 = vsel %vm4424, %v6269, %v6270
          %v6272 = vrot.slane %v6270, 4
          %v6273 = vrot.slane %v6222, 7
          %v6274 = vsel %vm4424, %v6272, %v6273
          %v6275 = vrot.slane %v6223, 7
          %v6276 = vrot.slane %v6275, 4
          %v6277 = vrot.slane %v5616, 7
          %v6278 = vsel %vm4424, %v6276, %v6277
          %v6279 = vrot.slane %v6277, 4
          %v6280 = vrot.slane %v6224, 7
          %v6281 = vsel %vm4424, %v6279, %v6280
          %v6282 = vrot.slane %v6225, 7
          %v6283 = vrot.slane %v6282, 4
          %v6284 = vrot.slane %v5619, 7
          %v6285 = vsel %vm4424, %v6283, %v6284
          %v6286 = vrot.slane %v6284, 4
          %v6287 = vrot.slane %v6226, 7
          %v6288 = vsel %vm4424, %v6286, %v6287
          %v6289 = vrot.slane %v6227, 7
          %v6290 = vrot.slane %v6289, 4
          %v6291 = vrot.slane %v5622, 7
          %v6292 = vsel %vm4424, %v6290, %v6291
          %v6293 = vrot.slane %v6291, 4
          %v6294 = vrot.slane %v6228, 7
          %v6295 = vsel %vm4424, %v6293, %v6294
          %v6296 = vrot.slane %v6229, 7
          %v6297 = vrot.slane %v6296, 4
          %v6298 = vrot.slane %v5625, 7
          %v6299 = vsel %vm4424, %v6297, %v6298
          %v6300 = vrot.slane %v6298, 4
          %v6301 = vrot.slane %v6230, 7
          %v6302 = vsel %vm4424, %v6300, %v6301
          %s6303 = scalar_lea.vmem %s173, 512 [#allocation4]
          %v6304 = vld [vmem:[%s6303] sm:$0xf]
          %v6305 = vld [vmem:[%s6303 + $0x4] sm:$0xf]
          %v6306 = vld [vmem:[%s6303 + $0x8] sm:$0xf]
          %v6307 = vld [vmem:[%s6303 + $0xc] sm:$0xf]
          %v6308 = vld [vmem:[%s6303 + $0x10] sm:$0xf]
          %v6309 = vld [vmem:[%s6303 + $0x14] sm:$0xf]
          %v6310 = vld [vmem:[%s6303 + $0x18] sm:$0xf]
          %v6311 = vld [vmem:[%s6303 + $0x1c] sm:$0xf]
          %v6312 = vld [vmem:[%s6303 + $0x20] sm:$0xf]
          %v6313 = vld [vmem:[%s6303 + $0x24] sm:$0xf]
          %v6314 = vld [vmem:[%s6303 + $0x28] sm:$0xf]
          %v6315 = vld [vmem:[%s6303 + $0x2c] sm:$0xf]
          %v6316 = vld [vmem:[%s6303 + $0x30] sm:$0xf]
          %v6317 = vld [vmem:[%s6303 + $0x34] sm:$0xf]
          %v6318 = vld [vmem:[%s6303 + $0x38] sm:$0xf]
          %v6319 = vld [vmem:[%s6303 + $0x3c] sm:$0xf]
          %v6320 = vunpack.c.l.b16 %v6250
          %v6321 = vunpack.c.l.b16 %v6253
          %v6322 = vunpack.c.l.b16 %v6257
          %v6323 = vunpack.c.l.b16 %v6260
          %v6324 = vunpack.c.l.b16 %v6264
          %v6325 = vunpack.c.l.b16 %v6267
          %v6326 = vunpack.c.l.b16 %v6271
          %v6327 = vunpack.c.l.b16 %v6274
          %v6328 = vunpack.c.l.b16 %v6278
          %v6329 = vunpack.c.l.b16 %v6281
          %v6330 = vunpack.c.l.b16 %v6285
          %v6331 = vunpack.c.l.b16 %v6288
          %v6332 = vunpack.c.l.b16 %v6292
          %v6333 = vunpack.c.l.b16 %v6295
          %v6334 = vunpack.c.l.b16 %v6299
          %v6335 = vunpack.c.l.b16 %v6302
          %v6336 = vpack.c.b16 %v6321, %v6320
          %v6337 = vpack.c.b16 %v6323, %v6322
          %v6338 = vpack.c.b16 %v6325, %v6324
          %v6339 = vpack.c.b16 %v6327, %v6326
          %v6340 = vpack.c.b16 %v6329, %v6328
          %v6341 = vpack.c.b16 %v6331, %v6330
          %v6342 = vpack.c.b16 %v6333, %v6332
          %v6343 = vpack.c.b16 %v6335, %v6334
          %v6368 = vunpack.c.l.b16 %v6304
          %v6369 = vunpack.c.l.b16 %v6305
          %v6370 = vunpack.c.l.b16 %v6306
          %v6371 = vunpack.c.l.b16 %v6307
          %v6372 = vunpack.c.l.b16 %v6308
          %v6373 = vunpack.c.l.b16 %v6309
          %v6374 = vunpack.c.l.b16 %v6310
          %v6375 = vunpack.c.l.b16 %v6311
          %v6376 = vunpack.c.l.b16 %v6312
          %v6377 = vunpack.c.l.b16 %v6313
          %v6378 = vunpack.c.l.b16 %v6314
          %v6379 = vunpack.c.l.b16 %v6315
          %v6380 = vunpack.c.l.b16 %v6316
          %v6381 = vunpack.c.l.b16 %v6317
          %v6382 = vunpack.c.l.b16 %v6318
          %v6383 = vunpack.c.l.b16 %v6319
          %v6384 = vpack.c.b16 %v6369, %v6368
          %v6385 = vpack.c.b16 %v6371, %v6370
          %v6386 = vpack.c.b16 %v6373, %v6372
          %v6387 = vpack.c.b16 %v6375, %v6374
          %v6388 = vpack.c.b16 %v6377, %v6376
          %v6389 = vpack.c.b16 %v6379, %v6378
          %v6390 = vpack.c.b16 %v6381, %v6380
          %v6391 = vpack.c.b16 %v6383, %v6382
          %6400 = vmatprep.subr.bf16.mxu0 0
          %6401 = vmatpush1.bf16.msra.mxu0 %v6391
          %6402 = vmatprep.subr.bf16.mxu0 0
          %6403 = vmatpush1.bf16.msra.mxu0 %v6390
          %6404 = vmatprep.subr.bf16.mxu0 0
          %6405 = vmatpush1.bf16.msra.mxu0 %v6389
          %6406 = vmatprep.subr.bf16.mxu0 0
          %6407 = vmatpush1.bf16.msra.mxu0 %v6388
          %6408 = vmatprep.subr.bf16.mxu0 0
          %6409 = vmatpush1.bf16.msra.mxu0 %v6387
          %6410 = vmatprep.subr.bf16.mxu0 0
          %6411 = vmatpush1.bf16.msra.mxu0 %v6386
          %6412 = vmatprep.subr.bf16.mxu0 0
          %6413 = vmatpush1.bf16.msra.mxu0 %v6385
          %6414 = vmatprep.subr.bf16.mxu0 0
          %6415 = vmatpush1.bf16.msra.mxu0 %v6384
          %6416 = vmatprep.subr.bf16.mxu0 0
          %6417 = vmatpush2.bf16.msra.mxu0 0
          %6418 = vmatprep.subr.bf16.mxu0 0
          %6419 = vmatpush2.bf16.msra.mxu0 0
          %6420 = vmatprep.subr.bf16.mxu0 0
          %6421 = vmatpush2.bf16.msra.mxu0 0
          %6422 = vmatprep.subr.bf16.mxu0 0
          %6423 = vmatpush2.bf16.msra.mxu0 0
          %6424 = vmatprep.subr.bf16.mxu0 0
          %6425 = vmatpush2.bf16.msra.mxu0 0
          %6426 = vmatprep.subr.bf16.mxu0 0
          %6427 = vmatpush2.bf16.msra.mxu0 0
          %6428 = vmatprep.subr.bf16.mxu0 0
          %6429 = vmatpush2.bf16.msra.mxu0 0
          %6430 = vmatprep.subr.bf16.mxu0 0
          %6431 = vmatpush2.bf16.msra.mxu0 0
          %6432 = vmatprep.mubr.bf16.mxu0 0
          %6433 = vmatmul.mubr.bf16.gmra.mxu0 %v6336
          %v6434 = vpop.f32.mrf.mxu0
          %v6435 = vadd.f32 0.0, %v6434
          %v6436 = vpop.f32.mrf.mxu0
          %v6437 = vpop.f32.mrf.mxu0
          %v6438 = vadd.f32 0.0, %v6437
          %v6439 = vpop.f32.mrf.mxu0
          %6440 = vmatprep.mubr.bf16.mxu0 0
          %6441 = vmatmul.mubr.bf16.gmra.mxu0 %v6337
          %v6442 = vpop.f32.mrf.mxu0
          %v6443 = vadd.f32 0.0, %v6442
          %v6444 = vpop.f32.mrf.mxu0
          %v6445 = vpop.f32.mrf.mxu0
          %v6446 = vadd.f32 0.0, %v6445
          %v6447 = vpop.f32.mrf.mxu0
          %6448 = vmatprep.mubr.bf16.mxu0 0
          %6449 = vmatmul.mubr.bf16.gmra.mxu0 %v6338
          %v6450 = vpop.f32.mrf.mxu0
          %v6451 = vadd.f32 0.0, %v6450
          %v6452 = vpop.f32.mrf.mxu0
          %v6453 = vpop.f32.mrf.mxu0
          %v6454 = vadd.f32 0.0, %v6453
          %v6455 = vpop.f32.mrf.mxu0
          %6456 = vmatprep.mubr.bf16.mxu0 0
          %6457 = vmatmul.mubr.bf16.gmra.mxu0 %v6339
          %v6458 = vpop.f32.mrf.mxu0
          %v6459 = vadd.f32 0.0, %v6458
          %v6460 = vpop.f32.mrf.mxu0
          %v6461 = vpop.f32.mrf.mxu0
          %v6462 = vadd.f32 0.0, %v6461
          %v6463 = vpop.f32.mrf.mxu0
          %6464 = vmatprep.mubr.bf16.mxu0 0
          %6465 = vmatmul.mubr.bf16.gmra.mxu0 %v6340
          %v6466 = vpop.f32.mrf.mxu0
          %v6467 = vadd.f32 0.0, %v6466
          %v6468 = vpop.f32.mrf.mxu0
          %v6469 = vpop.f32.mrf.mxu0
          %v6470 = vadd.f32 0.0, %v6469
          %v6471 = vpop.f32.mrf.mxu0
          %6472 = vmatprep.mubr.bf16.mxu0 0
          %6473 = vmatmul.mubr.bf16.gmra.mxu0 %v6341
          %v6474 = vpop.f32.mrf.mxu0
          %v6475 = vadd.f32 0.0, %v6474
          %v6476 = vpop.f32.mrf.mxu0
          %v6477 = vpop.f32.mrf.mxu0
          %v6478 = vadd.f32 0.0, %v6477
          %v6479 = vpop.f32.mrf.mxu0
          %6480 = vmatprep.mubr.bf16.mxu0 0
          %6481 = vmatmul.mubr.bf16.gmra.mxu0 %v6342
          %v6482 = vpop.f32.mrf.mxu0
          %v6483 = vadd.f32 0.0, %v6482
          %v6484 = vpop.f32.mrf.mxu0
          %v6485 = vpop.f32.mrf.mxu0
          %v6486 = vadd.f32 0.0, %v6485
          %v6487 = vpop.f32.mrf.mxu0
          %6488 = vmatprep.mubr.bf16.mxu0 0
          %6489 = vmatmul.mubr.bf16.gmra.mxu0 %v6343
          %v6490 = vpop.f32.mrf.mxu0
          %v6491 = vadd.f32 0.0, %v6490
          %v6492 = vpop.f32.mrf.mxu0
          %v6493 = vpop.f32.mrf.mxu0
          %v6494 = vadd.f32 0.0, %v6493
          %v6495 = vpop.f32.mrf.mxu0
          %6496 = vdwg.mxu0
          %v6497 = vadd.f32 %v6199, %v6435
          %v6498 = vadd.f32 %v6200, %v6438
          %v6499 = vadd.f32 %v6201, %v6443
          %v6500 = vadd.f32 %v6202, %v6446
          %v6501 = vadd.f32 %v6203, %v6451
          %v6502 = vadd.f32 %v6204, %v6454
          %v6503 = vadd.f32 %v6205, %v6459
          %v6504 = vadd.f32 %v6206, %v6462
          %v6505 = vadd.f32 %v6207, %v6467
          %v6506 = vadd.f32 %v6208, %v6470
          %v6507 = vadd.f32 %v6209, %v6475
          %v6508 = vadd.f32 %v6210, %v6478
          %v6509 = vadd.f32 %v6211, %v6483
          %v6510 = vadd.f32 %v6212, %v6486
          %v6511 = vadd.f32 %v6213, %v6491
          %v6512 = vadd.f32 %v6214, %v6494
          %v6513 = vld [vmem:[%s199] sm:$0x1]
          %v6515 = vlaneseq
          %v6516 = vshrl.u32 %v6515, 7
          %v6517 = vsub.s32 0, %v6516
          %v6518 = vrot.slane %v6513, %v6517
          %v6520 = vadd.f32 %v6497, %v6518
          %v6521 = vadd.f32 %v6498, %v6518
          %v6522 = vadd.f32 %v6499, %v6518
          %v6523 = vadd.f32 %v6500, %v6518
          %v6524 = vadd.f32 %v6501, %v6518
          %v6525 = vadd.f32 %v6502, %v6518
          %v6526 = vadd.f32 %v6503, %v6518
          %v6527 = vadd.f32 %v6504, %v6518
          %v6528 = vadd.f32 %v6505, %v6518
          %v6529 = vadd.f32 %v6506, %v6518
          %v6530 = vadd.f32 %v6507, %v6518
          %v6531 = vadd.f32 %v6508, %v6518
          %v6532 = vadd.f32 %v6509, %v6518
          %v6533 = vadd.f32 %v6510, %v6518
          %v6534 = vadd.f32 %v6511, %v6518
          %v6535 = vadd.f32 %v6512, %v6518
          %v6536 = vmax.f32 %v6520, 0.0
          %v6537 = vmax.f32 %v6521, 0.0
          %v6538 = vmax.f32 %v6522, 0.0
          %v6539 = vmax.f32 %v6523, 0.0
          %v6540 = vmax.f32 %v6524, 0.0
          %v6541 = vmax.f32 %v6525, 0.0
          %v6542 = vmax.f32 %v6526, 0.0
          %v6543 = vmax.f32 %v6527, 0.0
          %v6544 = vmax.f32 %v6528, 0.0
          %v6545 = vmax.f32 %v6529, 0.0
          %v6546 = vmax.f32 %v6530, 0.0
          %v6547 = vmax.f32 %v6531, 0.0
          %v6548 = vmax.f32 %v6532, 0.0
          %v6549 = vmax.f32 %v6533, 0.0
          %v6550 = vmax.f32 %v6534, 0.0
          %v6551 = vmax.f32 %v6535, 0.0
          %v6552 = vpack.c.bf16 %v6537, %v6536
          %v6553 = vpack.c.bf16 %v6539, %v6538
          %v6554 = vpack.c.bf16 %v6541, %v6540
          %v6555 = vpack.c.bf16 %v6543, %v6542
          %v6556 = vpack.c.bf16 %v6545, %v6544
          %v6557 = vpack.c.bf16 %v6547, %v6546
          %v6558 = vpack.c.bf16 %v6549, %v6548
          %v6559 = vpack.c.bf16 %v6551, %v6550
          %v6568 = vunpack.c.l.b16 %v6552
          %v6569 = vunpack.c.h.b16 %v6552
          %v6570 = vunpack.c.l.b16 %v6553
          %v6571 = vunpack.c.h.b16 %v6553
          %v6572 = vunpack.c.l.b16 %v6554
          %v6573 = vunpack.c.h.b16 %v6554
          %v6574 = vunpack.c.l.b16 %v6555
          %v6575 = vunpack.c.h.b16 %v6555
          %v6576 = vunpack.c.l.b16 %v6556
          %v6577 = vunpack.c.h.b16 %v6556
          %v6578 = vunpack.c.l.b16 %v6557
          %v6579 = vunpack.c.h.b16 %v6557
          %v6580 = vunpack.c.l.b16 %v6558
          %v6581 = vunpack.c.h.b16 %v6558
          %v6582 = vunpack.c.l.b16 %v6559
          %v6583 = vunpack.c.h.b16 %v6559
          %v6584 = vpack.c.b16 %v6568, %v6568
          %v6585 = vpack.c.b16 %v6569, %v6569
          %v6586 = vpack.c.b16 %v6570, %v6570
          %v6587 = vpack.c.b16 %v6571, %v6571
          %v6588 = vpack.c.b16 %v6572, %v6572
          %v6589 = vpack.c.b16 %v6573, %v6573
          %v6590 = vpack.c.b16 %v6574, %v6574
          %v6591 = vpack.c.b16 %v6575, %v6575
          %v6592 = vpack.c.b16 %v6576, %v6576
          %v6593 = vpack.c.b16 %v6577, %v6577
          %v6594 = vpack.c.b16 %v6578, %v6578
          %v6595 = vpack.c.b16 %v6579, %v6579
          %v6596 = vpack.c.b16 %v6580, %v6580
          %v6597 = vpack.c.b16 %v6581, %v6581
          %v6598 = vpack.c.b16 %v6582, %v6582
          %v6599 = vpack.c.b16 %v6583, %v6583
          %6616 = vst [vmem:[%s196] sm:$0xf] %v6584
          %6617 = vst [vmem:[%s196 + $0x4] sm:$0xf] %v6585
          %6618 = vst [vmem:[%s196 + $0x8] sm:$0xf] %v6586
          %6619 = vst [vmem:[%s196 + $0xc] sm:$0xf] %v6587
          %6620 = vst [vmem:[%s196 + $0x10] sm:$0xf] %v6588
          %6621 = vst [vmem:[%s196 + $0x14] sm:$0xf] %v6589
          %6622 = vst [vmem:[%s196 + $0x18] sm:$0xf] %v6590
          %6623 = vst [vmem:[%s196 + $0x1c] sm:$0xf] %v6591
          %6624 = vst [vmem:[%s196 + $0x20] sm:$0xf] %v6592
          %6625 = vst [vmem:[%s196 + $0x24] sm:$0xf] %v6593
          %6626 = vst [vmem:[%s196 + $0x28] sm:$0xf] %v6594
          %6627 = vst [vmem:[%s196 + $0x2c] sm:$0xf] %v6595
          %6628 = vst [vmem:[%s196 + $0x30] sm:$0xf] %v6596
          %6629 = vst [vmem:[%s196 + $0x34] sm:$0xf] %v6597
          %6630 = vst [vmem:[%s196 + $0x38] sm:$0xf] %v6598
          %6631 = vst [vmem:[%s196 + $0x3c] sm:$0xf] %v6599
        $region44: #{tpu_custom_call.1} parent=27 // pred_fallthru
          _
        %p6632 = scmp.eq.s32.totalorder %s27, 2
        // Predicated region
        $region45: #{tpu_custom_call.1} parent=27 // pred_check
          %p6633 = pneg %p6632
        $region46: #{tpu_custom_call.1} parent=27 // pred_check_branch
          %6635 = sbr.rel (%p6633) target = $region48
        $region47: #{tpu_custom_call.1} parent=27 // pred_region
          %v6636 = vld [vmem:[#allocation2] sm:$0xf]
          %v6637 = vld [vmem:[#allocation2 + $0x4] sm:$0xf]
          %v6638 = vld [vmem:[#allocation2 + $0xc] sm:$0xf]
          %v6639 = vld [vmem:[#allocation2 + $0x10] sm:$0xf]
          %v6640 = vld [vmem:[#allocation2 + $0x18] sm:$0xf]
          %v6641 = vld [vmem:[#allocation2 + $0x1c] sm:$0xf]
          %v6642 = vld [vmem:[#allocation2 + $0x24] sm:$0xf]
          %v6643 = vld [vmem:[#allocation2 + $0x28] sm:$0xf]
          %v6644 = vld [vmem:[#allocation2 + $0x30] sm:$0xf]
          %v6645 = vld [vmem:[#allocation2 + $0x34] sm:$0xf]
          %v6646 = vld [vmem:[#allocation2 + $0x3c] sm:$0xf]
          %v6647 = vld [vmem:[#allocation2 + $0x40] sm:$0xf]
          %v6648 = vld [vmem:[#allocation2 + $0x48] sm:$0xf]
          %v6649 = vld [vmem:[#allocation2 + $0x4c] sm:$0xf]
          %v6650 = vld [vmem:[#allocation2 + $0x54] sm:$0xf]
          %v6651 = vld [vmem:[#allocation2 + $0x58] sm:$0xf]
          %v6652 = vld [vmem:[%s173] sm:$0xf]
          %v6653 = vld [vmem:[%s173 + $0x4] sm:$0xf]
          %v6654 = vld [vmem:[%s173 + $0x8] sm:$0xf]
          %v6655 = vld [vmem:[%s173 + $0xc] sm:$0xf]
          %v6656 = vld [vmem:[%s173 + $0x10] sm:$0xf]
          %v6657 = vld [vmem:[%s173 + $0x14] sm:$0xf]
          %v6658 = vld [vmem:[%s173 + $0x18] sm:$0xf]
          %v6659 = vld [vmem:[%s173 + $0x1c] sm:$0xf]
          %v6660 = vld [vmem:[%s173 + $0x20] sm:$0xf]
          %v6661 = vld [vmem:[%s173 + $0x24] sm:$0xf]
          %v6662 = vld [vmem:[%s173 + $0x28] sm:$0xf]
          %v6663 = vld [vmem:[%s173 + $0x2c] sm:$0xf]
          %v6664 = vld [vmem:[%s173 + $0x30] sm:$0xf]
          %v6665 = vld [vmem:[%s173 + $0x34] sm:$0xf]
          %v6666 = vld [vmem:[%s173 + $0x38] sm:$0xf]
          %v6667 = vld [vmem:[%s173 + $0x3c] sm:$0xf]
          %v6668 = vld [vmem:[#allocation2] sm:$0xc]
          %v6669 = vld [vmem:[#allocation2 + $0x8] sm:$0x3]
          %v6670 = vld [vmem:[#allocation2 + $0xc] sm:$0xc]
          %v6671 = vld [vmem:[#allocation2 + $0x14] sm:$0x3]
          %v6672 = vld [vmem:[#allocation2 + $0x18] sm:$0xc]
          %v6673 = vld [vmem:[#allocation2 + $0x20] sm:$0x3]
          %v6674 = vld [vmem:[#allocation2 + $0x24] sm:$0xc]
          %v6675 = vld [vmem:[#allocation2 + $0x2c] sm:$0x3]
          %v6676 = vld [vmem:[#allocation2 + $0x30] sm:$0xc]
          %v6677 = vld [vmem:[#allocation2 + $0x38] sm:$0x3]
          %v6678 = vld [vmem:[#allocation2 + $0x3c] sm:$0xc]
          %v6679 = vld [vmem:[#allocation2 + $0x44] sm:$0x3]
          %v6680 = vld [vmem:[#allocation2 + $0x48] sm:$0xc]
          %v6681 = vld [vmem:[#allocation2 + $0x50] sm:$0x3]
          %v6682 = vld [vmem:[#allocation2 + $0x54] sm:$0xc]
          %v6683 = vld [vmem:[#allocation2 + $0x5c] sm:$0x3]
          %vm6708 = vcmask 1041408
          %vm6709 = vcmask 1045508
          %vm6710 = vmor %vm6708, %vm6709
          %v6711 = vrot.slane %v6668, 6
          %v6712 = vrot.slane %v6711, 4
          %v6713 = vrot.slane %v6637, 6
          %v6714 = vsel %vm6710, %v6712, %v6713
          %v6715 = vrot.slane %v6713, 4
          %v6716 = vrot.slane %v6669, 6
          %v6717 = vsel %vm6710, %v6715, %v6716
          %v6718 = vrot.slane %v6670, 6
          %v6719 = vrot.slane %v6718, 4
          %v6720 = vrot.slane %v6639, 6
          %v6721 = vsel %vm6710, %v6719, %v6720
          %v6722 = vrot.slane %v6720, 4
          %v6723 = vrot.slane %v6671, 6
          %v6724 = vsel %vm6710, %v6722, %v6723
          %v6725 = vrot.slane %v6672, 6
          %v6726 = vrot.slane %v6725, 4
          %v6727 = vrot.slane %v6641, 6
          %v6728 = vsel %vm6710, %v6726, %v6727
          %v6729 = vrot.slane %v6727, 4
          %v6730 = vrot.slane %v6673, 6
          %v6731 = vsel %vm6710, %v6729, %v6730
          %v6732 = vrot.slane %v6674, 6
          %v6733 = vrot.slane %v6732, 4
          %v6734 = vrot.slane %v6643, 6
          %v6735 = vsel %vm6710, %v6733, %v6734
          %v6736 = vrot.slane %v6734, 4
          %v6737 = vrot.slane %v6675, 6
          %v6738 = vsel %vm6710, %v6736, %v6737
          %v6739 = vrot.slane %v6676, 6
          %v6740 = vrot.slane %v6739, 4
          %v6741 = vrot.slane %v6645, 6
          %v6742 = vsel %vm6710, %v6740, %v6741
          %v6743 = vrot.slane %v6741, 4
          %v6744 = vrot.slane %v6677, 6
          %v6745 = vsel %vm6710, %v6743, %v6744
          %v6746 = vrot.slane %v6678, 6
          %v6747 = vrot.slane %v6746, 4
          %v6748 = vrot.slane %v6647, 6
          %v6749 = vsel %vm6710, %v6747, %v6748
          %v6750 = vrot.slane %v6748, 4
          %v6751 = vrot.slane %v6679, 6
          %v6752 = vsel %vm6710, %v6750, %v6751
          %v6753 = vrot.slane %v6680, 6
          %v6754 = vrot.slane %v6753, 4
          %v6755 = vrot.slane %v6649, 6
          %v6756 = vsel %vm6710, %v6754, %v6755
          %v6757 = vrot.slane %v6755, 4
          %v6758 = vrot.slane %v6681, 6
          %v6759 = vsel %vm6710, %v6757, %v6758
          %v6760 = vrot.slane %v6682, 6
          %v6761 = vrot.slane %v6760, 4
          %v6762 = vrot.slane %v6651, 6
          %v6763 = vsel %vm6710, %v6761, %v6762
          %v6764 = vrot.slane %v6762, 4
          %v6765 = vrot.slane %v6683, 6
          %v6766 = vsel %vm6710, %v6764, %v6765
          %s6767 = scalar_lea.vmem %s173, 64 [#allocation4]
          %v6768 = vld [vmem:[%s6767] sm:$0xf]
          %v6769 = vld [vmem:[%s6767 + $0x4] sm:$0xf]
          %v6770 = vld [vmem:[%s6767 + $0x8] sm:$0xf]
          %v6771 = vld [vmem:[%s6767 + $0xc] sm:$0xf]
          %v6772 = vld [vmem:[%s6767 + $0x10] sm:$0xf]
          %v6773 = vld [vmem:[%s6767 + $0x14] sm:$0xf]
          %v6774 = vld [vmem:[%s6767 + $0x18] sm:$0xf]
          %v6775 = vld [vmem:[%s6767 + $0x1c] sm:$0xf]
          %v6776 = vld [vmem:[%s6767 + $0x20] sm:$0xf]
          %v6777 = vld [vmem:[%s6767 + $0x24] sm:$0xf]
          %v6778 = vld [vmem:[%s6767 + $0x28] sm:$0xf]
          %v6779 = vld [vmem:[%s6767 + $0x2c] sm:$0xf]
          %v6780 = vld [vmem:[%s6767 + $0x30] sm:$0xf]
          %v6781 = vld [vmem:[%s6767 + $0x34] sm:$0xf]
          %v6782 = vld [vmem:[%s6767 + $0x38] sm:$0xf]
          %v6783 = vld [vmem:[%s6767 + $0x3c] sm:$0xf]
          %v6784 = vunpack.c.l.b16 %v6714
          %v6785 = vunpack.c.l.b16 %v6717
          %v6786 = vunpack.c.l.b16 %v6721
          %v6787 = vunpack.c.l.b16 %v6724
          %v6788 = vunpack.c.l.b16 %v6728
          %v6789 = vunpack.c.l.b16 %v6731
          %v6790 = vunpack.c.l.b16 %v6735
          %v6791 = vunpack.c.l.b16 %v6738
          %v6792 = vunpack.c.l.b16 %v6742
          %v6793 = vunpack.c.l.b16 %v6745
          %v6794 = vunpack.c.l.b16 %v6749
          %v6795 = vunpack.c.l.b16 %v6752
          %v6796 = vunpack.c.l.b16 %v6756
          %v6797 = vunpack.c.l.b16 %v6759
          %v6798 = vunpack.c.l.b16 %v6763
          %v6799 = vunpack.c.l.b16 %v6766
          %v6800 = vpack.c.b16 %v6785, %v6784
          %v6801 = vpack.c.b16 %v6787, %v6786
          %v6802 = vpack.c.b16 %v6789, %v6788
          %v6803 = vpack.c.b16 %v6791, %v6790
          %v6804 = vpack.c.b16 %v6793, %v6792
          %v6805 = vpack.c.b16 %v6795, %v6794
          %v6806 = vpack.c.b16 %v6797, %v6796
          %v6807 = vpack.c.b16 %v6799, %v6798
          %v6832 = vunpack.c.l.b16 %v6768
          %v6833 = vunpack.c.l.b16 %v6769
          %v6834 = vunpack.c.l.b16 %v6770
          %v6835 = vunpack.c.l.b16 %v6771
          %v6836 = vunpack.c.l.b16 %v6772
          %v6837 = vunpack.c.l.b16 %v6773
          %v6838 = vunpack.c.l.b16 %v6774
          %v6839 = vunpack.c.l.b16 %v6775
          %v6840 = vunpack.c.l.b16 %v6776
          %v6841 = vunpack.c.l.b16 %v6777
          %v6842 = vunpack.c.l.b16 %v6778
          %v6843 = vunpack.c.l.b16 %v6779
          %v6844 = vunpack.c.l.b16 %v6780
          %v6845 = vunpack.c.l.b16 %v6781
          %v6846 = vunpack.c.l.b16 %v6782
          %v6847 = vunpack.c.l.b16 %v6783
          %v6848 = vpack.c.b16 %v6833, %v6832
          %v6849 = vpack.c.b16 %v6835, %v6834
          %v6850 = vpack.c.b16 %v6837, %v6836
          %v6851 = vpack.c.b16 %v6839, %v6838
          %v6852 = vpack.c.b16 %v6841, %v6840
          %v6853 = vpack.c.b16 %v6843, %v6842
          %v6854 = vpack.c.b16 %v6845, %v6844
          %v6855 = vpack.c.b16 %v6847, %v6846
          %6864 = vmatprep.subr.bf16.mxu0 0
          %6865 = vmatpush1.bf16.msra.mxu0 %v6855
          %6866 = vmatprep.subr.bf16.mxu0 0
          %6867 = vmatpush1.bf16.msra.mxu0 %v6854
          %6868 = vmatprep.subr.bf16.mxu0 0
          %6869 = vmatpush1.bf16.msra.mxu0 %v6853
          %6870 = vmatprep.subr.bf16.mxu0 0
          %6871 = vmatpush1.bf16.msra.mxu0 %v6852
          %6872 = vmatprep.subr.bf16.mxu0 0
          %6873 = vmatpush1.bf16.msra.mxu0 %v6851
          %6874 = vmatprep.subr.bf16.mxu0 0
          %6875 = vmatpush1.bf16.msra.mxu0 %v6850
          %6876 = vmatprep.subr.bf16.mxu0 0
          %6877 = vmatpush1.bf16.msra.mxu0 %v6849
          %6878 = vmatprep.subr.bf16.mxu0 0
          %6879 = vmatpush1.bf16.msra.mxu0 %v6848
          %6880 = vmatprep.subr.bf16.mxu0 0
          %6881 = vmatpush2.bf16.msra.mxu0 0
          %6882 = vmatprep.subr.bf16.mxu0 0
          %6883 = vmatpush2.bf16.msra.mxu0 0
          %6884 = vmatprep.subr.bf16.mxu0 0
          %6885 = vmatpush2.bf16.msra.mxu0 0
          %6886 = vmatprep.subr.bf16.mxu0 0
          %6887 = vmatpush2.bf16.msra.mxu0 0
          %6888 = vmatprep.subr.bf16.mxu0 0
          %6889 = vmatpush2.bf16.msra.mxu0 0
          %6890 = vmatprep.subr.bf16.mxu0 0
          %6891 = vmatpush2.bf16.msra.mxu0 0
          %6892 = vmatprep.subr.bf16.mxu0 0
          %6893 = vmatpush2.bf16.msra.mxu0 0
          %6894 = vmatprep.subr.bf16.mxu0 0
          %6895 = vmatpush2.bf16.msra.mxu0 0
          %6896 = vmatprep.mubr.bf16.mxu0 0
          %6897 = vmatmul.mubr.bf16.gmra.mxu0 %v6800
          %v6898 = vpop.f32.mrf.mxu0
          %v6899 = vadd.f32 0.0, %v6898
          %v6900 = vpop.f32.mrf.mxu0
          %v6901 = vpop.f32.mrf.mxu0
          %v6902 = vadd.f32 0.0, %v6901
          %v6903 = vpop.f32.mrf.mxu0
          %6904 = vmatprep.mubr.bf16.mxu0 0
          %6905 = vmatmul.mubr.bf16.gmra.mxu0 %v6801
          %v6906 = vpop.f32.mrf.mxu0
          %v6907 = vadd.f32 0.0, %v6906
          %v6908 = vpop.f32.mrf.mxu0
          %v6909 = vpop.f32.mrf.mxu0
          %v6910 = vadd.f32 0.0, %v6909
          %v6911 = vpop.f32.mrf.mxu0
          %6912 = vmatprep.mubr.bf16.mxu0 0
          %6913 = vmatmul.mubr.bf16.gmra.mxu0 %v6802
          %v6914 = vpop.f32.mrf.mxu0
          %v6915 = vadd.f32 0.0, %v6914
          %v6916 = vpop.f32.mrf.mxu0
          %v6917 = vpop.f32.mrf.mxu0
          %v6918 = vadd.f32 0.0, %v6917
          %v6919 = vpop.f32.mrf.mxu0
          %6920 = vmatprep.mubr.bf16.mxu0 0
          %6921 = vmatmul.mubr.bf16.gmra.mxu0 %v6803
          %v6922 = vpop.f32.mrf.mxu0
          %v6923 = vadd.f32 0.0, %v6922
          %v6924 = vpop.f32.mrf.mxu0
          %v6925 = vpop.f32.mrf.mxu0
          %v6926 = vadd.f32 0.0, %v6925
          %v6927 = vpop.f32.mrf.mxu0
          %6928 = vmatprep.mubr.bf16.mxu0 0
          %6929 = vmatmul.mubr.bf16.gmra.mxu0 %v6804
          %v6930 = vpop.f32.mrf.mxu0
          %v6931 = vadd.f32 0.0, %v6930
          %v6932 = vpop.f32.mrf.mxu0
          %v6933 = vpop.f32.mrf.mxu0
          %v6934 = vadd.f32 0.0, %v6933
          %v6935 = vpop.f32.mrf.mxu0
          %6936 = vmatprep.mubr.bf16.mxu0 0
          %6937 = vmatmul.mubr.bf16.gmra.mxu0 %v6805
          %v6938 = vpop.f32.mrf.mxu0
          %v6939 = vadd.f32 0.0, %v6938
          %v6940 = vpop.f32.mrf.mxu0
          %v6941 = vpop.f32.mrf.mxu0
          %v6942 = vadd.f32 0.0, %v6941
          %v6943 = vpop.f32.mrf.mxu0
          %6944 = vmatprep.mubr.bf16.mxu0 0
          %6945 = vmatmul.mubr.bf16.gmra.mxu0 %v6806
          %v6946 = vpop.f32.mrf.mxu0
          %v6947 = vadd.f32 0.0, %v6946
          %v6948 = vpop.f32.mrf.mxu0
          %v6949 = vpop.f32.mrf.mxu0
          %v6950 = vadd.f32 0.0, %v6949
          %v6951 = vpop.f32.mrf.mxu0
          %6952 = vmatprep.mubr.bf16.mxu0 0
          %6953 = vmatmul.mubr.bf16.gmra.mxu0 %v6807
          %v6954 = vpop.f32.mrf.mxu0
          %v6955 = vadd.f32 0.0, %v6954
          %v6956 = vpop.f32.mrf.mxu0
          %v6957 = vpop.f32.mrf.mxu0
          %v6958 = vadd.f32 0.0, %v6957
          %v6959 = vpop.f32.mrf.mxu0
          %6960 = vdwg.mxu0
          %v6969 = vunpack.c.l.b16 %v6636
          %v6970 = vunpack.c.l.b16 %v6637
          %v6971 = vunpack.c.l.b16 %v6638
          %v6972 = vunpack.c.l.b16 %v6639
          %v6973 = vunpack.c.l.b16 %v6640
          %v6974 = vunpack.c.l.b16 %v6641
          %v6975 = vunpack.c.l.b16 %v6642
          %v6976 = vunpack.c.l.b16 %v6643
          %v6977 = vunpack.c.l.b16 %v6644
          %v6978 = vunpack.c.l.b16 %v6645
          %v6979 = vunpack.c.l.b16 %v6646
          %v6980 = vunpack.c.l.b16 %v6647
          %v6981 = vunpack.c.l.b16 %v6648
          %v6982 = vunpack.c.l.b16 %v6649
          %v6983 = vunpack.c.l.b16 %v6650
          %v6984 = vunpack.c.l.b16 %v6651
          %v6985 = vpack.c.b16 %v6970, %v6969
          %v6986 = vpack.c.b16 %v6972, %v6971
          %v6987 = vpack.c.b16 %v6974, %v6973
          %v6988 = vpack.c.b16 %v6976, %v6975
          %v6989 = vpack.c.b16 %v6978, %v6977
          %v6990 = vpack.c.b16 %v6980, %v6979
          %v6991 = vpack.c.b16 %v6982, %v6981
          %v6992 = vpack.c.b16 %v6984, %v6983
          %v7017 = vunpack.c.l.b16 %v6652
          %v7018 = vunpack.c.l.b16 %v6653
          %v7019 = vunpack.c.l.b16 %v6654
          %v7020 = vunpack.c.l.b16 %v6655
          %v7021 = vunpack.c.l.b16 %v6656
          %v7022 = vunpack.c.l.b16 %v6657
          %v7023 = vunpack.c.l.b16 %v6658
          %v7024 = vunpack.c.l.b16 %v6659
          %v7025 = vunpack.c.l.b16 %v6660
          %v7026 = vunpack.c.l.b16 %v6661
          %v7027 = vunpack.c.l.b16 %v6662
          %v7028 = vunpack.c.l.b16 %v6663
          %v7029 = vunpack.c.l.b16 %v6664
          %v7030 = vunpack.c.l.b16 %v6665
          %v7031 = vunpack.c.l.b16 %v6666
          %v7032 = vunpack.c.l.b16 %v6667
          %v7033 = vpack.c.b16 %v7018, %v7017
          %v7034 = vpack.c.b16 %v7020, %v7019
          %v7035 = vpack.c.b16 %v7022, %v7021
          %v7036 = vpack.c.b16 %v7024, %v7023
          %v7037 = vpack.c.b16 %v7026, %v7025
          %v7038 = vpack.c.b16 %v7028, %v7027
          %v7039 = vpack.c.b16 %v7030, %v7029
          %v7040 = vpack.c.b16 %v7032, %v7031
          %7049 = vmatprep.subr.bf16.mxu0 0
          %7050 = vmatpush1.bf16.msra.mxu0 %v7040
          %7051 = vmatprep.subr.bf16.mxu0 0
          %7052 = vmatpush1.bf16.msra.mxu0 %v7039
          %7053 = vmatprep.subr.bf16.mxu0 0
          %7054 = vmatpush1.bf16.msra.mxu0 %v7038
          %7055 = vmatprep.subr.bf16.mxu0 0
          %7056 = vmatpush1.bf16.msra.mxu0 %v7037
          %7057 = vmatprep.subr.bf16.mxu0 0
          %7058 = vmatpush1.bf16.msra.mxu0 %v7036
          %7059 = vmatprep.subr.bf16.mxu0 0
          %7060 = vmatpush1.bf16.msra.mxu0 %v7035
          %7061 = vmatprep.subr.bf16.mxu0 0
          %7062 = vmatpush1.bf16.msra.mxu0 %v7034
          %7063 = vmatprep.subr.bf16.mxu0 0
          %7064 = vmatpush1.bf16.msra.mxu0 %v7033
          %7065 = vmatprep.subr.bf16.mxu0 0
          %7066 = vmatpush2.bf16.msra.mxu0 0
          %7067 = vmatprep.subr.bf16.mxu0 0
          %7068 = vmatpush2.bf16.msra.mxu0 0
          %7069 = vmatprep.subr.bf16.mxu0 0
          %7070 = vmatpush2.bf16.msra.mxu0 0
          %7071 = vmatprep.subr.bf16.mxu0 0
          %7072 = vmatpush2.bf16.msra.mxu0 0
          %7073 = vmatprep.subr.bf16.mxu0 0
          %7074 = vmatpush2.bf16.msra.mxu0 0
          %7075 = vmatprep.subr.bf16.mxu0 0
          %7076 = vmatpush2.bf16.msra.mxu0 0
          %7077 = vmatprep.subr.bf16.mxu0 0
          %7078 = vmatpush2.bf16.msra.mxu0 0
          %7079 = vmatprep.subr.bf16.mxu0 0
          %7080 = vmatpush2.bf16.msra.mxu0 0
          %7081 = vmatprep.mubr.bf16.mxu0 0
          %7082 = vmatmul.mubr.bf16.gmra.mxu0 %v6985
          %v7083 = vpop.f32.mrf.mxu0
          %v7084 = vadd.f32 %v6899, %v7083
          %v7085 = vpop.f32.mrf.mxu0
          %v7086 = vpop.f32.mrf.mxu0
          %v7087 = vadd.f32 %v6902, %v7086
          %v7088 = vpop.f32.mrf.mxu0
          %7089 = vmatprep.mubr.bf16.mxu0 0
          %7090 = vmatmul.mubr.bf16.gmra.mxu0 %v6986
          %v7091 = vpop.f32.mrf.mxu0
          %v7092 = vadd.f32 %v6907, %v7091
          %v7093 = vpop.f32.mrf.mxu0
          %v7094 = vpop.f32.mrf.mxu0
          %v7095 = vadd.f32 %v6910, %v7094
          %v7096 = vpop.f32.mrf.mxu0
          %7097 = vmatprep.mubr.bf16.mxu0 0
          %7098 = vmatmul.mubr.bf16.gmra.mxu0 %v6987
          %v7099 = vpop.f32.mrf.mxu0
          %v7100 = vadd.f32 %v6915, %v7099
          %v7101 = vpop.f32.mrf.mxu0
          %v7102 = vpop.f32.mrf.mxu0
          %v7103 = vadd.f32 %v6918, %v7102
          %v7104 = vpop.f32.mrf.mxu0
          %7105 = vmatprep.mubr.bf16.mxu0 0
          %7106 = vmatmul.mubr.bf16.gmra.mxu0 %v6988
          %v7107 = vpop.f32.mrf.mxu0
          %v7108 = vadd.f32 %v6923, %v7107
          %v7109 = vpop.f32.mrf.mxu0
          %v7110 = vpop.f32.mrf.mxu0
          %v7111 = vadd.f32 %v6926, %v7110
          %v7112 = vpop.f32.mrf.mxu0
          %7113 = vmatprep.mubr.bf16.mxu0 0
          %7114 = vmatmul.mubr.bf16.gmra.mxu0 %v6989
          %v7115 = vpop.f32.mrf.mxu0
          %v7116 = vadd.f32 %v6931, %v7115
          %v7117 = vpop.f32.mrf.mxu0
          %v7118 = vpop.f32.mrf.mxu0
          %v7119 = vadd.f32 %v6934, %v7118
          %v7120 = vpop.f32.mrf.mxu0
          %7121 = vmatprep.mubr.bf16.mxu0 0
          %7122 = vmatmul.mubr.bf16.gmra.mxu0 %v6990
          %v7123 = vpop.f32.mrf.mxu0
          %v7124 = vadd.f32 %v6939, %v7123
          %v7125 = vpop.f32.mrf.mxu0
          %v7126 = vpop.f32.mrf.mxu0
          %v7127 = vadd.f32 %v6942, %v7126
          %v7128 = vpop.f32.mrf.mxu0
          %7129 = vmatprep.mubr.bf16.mxu0 0
          %7130 = vmatmul.mubr.bf16.gmra.mxu0 %v6991
          %v7131 = vpop.f32.mrf.mxu0
          %v7132 = vadd.f32 %v6947, %v7131
          %v7133 = vpop.f32.mrf.mxu0
          %v7134 = vpop.f32.mrf.mxu0
          %v7135 = vadd.f32 %v6950, %v7134
          %v7136 = vpop.f32.mrf.mxu0
          %7137 = vmatprep.mubr.bf16.mxu0 0
          %7138 = vmatmul.mubr.bf16.gmra.mxu0 %v6992
          %v7139 = vpop.f32.mrf.mxu0
          %v7140 = vadd.f32 %v6955, %v7139
          %v7141 = vpop.f32.mrf.mxu0
          %v7142 = vpop.f32.mrf.mxu0
          %v7143 = vadd.f32 %v6958, %v7142
          %v7144 = vpop.f32.mrf.mxu0
          %7145 = vdwg.mxu0
          %v7146 = vld [vmem:[#allocation2 + $0x8] sm:$0xf]
          %v7147 = vld [vmem:[#allocation2 + $0x14] sm:$0xf]
          %v7148 = vld [vmem:[#allocation2 + $0x20] sm:$0xf]
          %v7149 = vld [vmem:[#allocation2 + $0x2c] sm:$0xf]
          %v7150 = vld [vmem:[#allocation2 + $0x38] sm:$0xf]
          %v7151 = vld [vmem:[#allocation2 + $0x44] sm:$0xf]
          %v7152 = vld [vmem:[#allocation2 + $0x50] sm:$0xf]
          %v7153 = vld [vmem:[#allocation2 + $0x5c] sm:$0xf]
          %s7154 = scalar_lea.vmem %s173, 128 [#allocation4]
          %v7155 = vld [vmem:[%s7154] sm:$0xf]
          %v7156 = vld [vmem:[%s7154 + $0x4] sm:$0xf]
          %v7157 = vld [vmem:[%s7154 + $0x8] sm:$0xf]
          %v7158 = vld [vmem:[%s7154 + $0xc] sm:$0xf]
          %v7159 = vld [vmem:[%s7154 + $0x10] sm:$0xf]
          %v7160 = vld [vmem:[%s7154 + $0x14] sm:$0xf]
          %v7161 = vld [vmem:[%s7154 + $0x18] sm:$0xf]
          %v7162 = vld [vmem:[%s7154 + $0x1c] sm:$0xf]
          %v7163 = vld [vmem:[%s7154 + $0x20] sm:$0xf]
          %v7164 = vld [vmem:[%s7154 + $0x24] sm:$0xf]
          %v7165 = vld [vmem:[%s7154 + $0x28] sm:$0xf]
          %v7166 = vld [vmem:[%s7154 + $0x2c] sm:$0xf]
          %v7167 = vld [vmem:[%s7154 + $0x30] sm:$0xf]
          %v7168 = vld [vmem:[%s7154 + $0x34] sm:$0xf]
          %v7169 = vld [vmem:[%s7154 + $0x38] sm:$0xf]
          %v7170 = vld [vmem:[%s7154 + $0x3c] sm:$0xf]
          %v7179 = vunpack.c.l.b16 %v7146
          %v7180 = vunpack.c.l.b16 %v7147
          %v7181 = vunpack.c.l.b16 %v7148
          %v7182 = vunpack.c.l.b16 %v7149
          %v7183 = vunpack.c.l.b16 %v7150
          %v7184 = vunpack.c.l.b16 %v7151
          %v7185 = vunpack.c.l.b16 %v7152
          %v7186 = vunpack.c.l.b16 %v7153
          %v7187 = vpack.c.b16 %v7179, %v6970
          %v7188 = vpack.c.b16 %v7180, %v6972
          %v7189 = vpack.c.b16 %v7181, %v6974
          %v7190 = vpack.c.b16 %v7182, %v6976
          %v7191 = vpack.c.b16 %v7183, %v6978
          %v7192 = vpack.c.b16 %v7184, %v6980
          %v7193 = vpack.c.b16 %v7185, %v6982
          %v7194 = vpack.c.b16 %v7186, %v6984
          %v7219 = vunpack.c.l.b16 %v7155
          %v7220 = vunpack.c.l.b16 %v7156
          %v7221 = vunpack.c.l.b16 %v7157
          %v7222 = vunpack.c.l.b16 %v7158
          %v7223 = vunpack.c.l.b16 %v7159
          %v7224 = vunpack.c.l.b16 %v7160
          %v7225 = vunpack.c.l.b16 %v7161
          %v7226 = vunpack.c.l.b16 %v7162
          %v7227 = vunpack.c.l.b16 %v7163
          %v7228 = vunpack.c.l.b16 %v7164
          %v7229 = vunpack.c.l.b16 %v7165
          %v7230 = vunpack.c.l.b16 %v7166
          %v7231 = vunpack.c.l.b16 %v7167
          %v7232 = vunpack.c.l.b16 %v7168
          %v7233 = vunpack.c.l.b16 %v7169
          %v7234 = vunpack.c.l.b16 %v7170
          %v7235 = vpack.c.b16 %v7220, %v7219
          %v7236 = vpack.c.b16 %v7222, %v7221
          %v7237 = vpack.c.b16 %v7224, %v7223
          %v7238 = vpack.c.b16 %v7226, %v7225
          %v7239 = vpack.c.b16 %v7228, %v7227
          %v7240 = vpack.c.b16 %v7230, %v7229
          %v7241 = vpack.c.b16 %v7232, %v7231
          %v7242 = vpack.c.b16 %v7234, %v7233
          %7251 = vmatprep.subr.bf16.mxu0 0
          %7252 = vmatpush1.bf16.msra.mxu0 %v7242
          %7253 = vmatprep.subr.bf16.mxu0 0
          %7254 = vmatpush1.bf16.msra.mxu0 %v7241
          %7255 = vmatprep.subr.bf16.mxu0 0
          %7256 = vmatpush1.bf16.msra.mxu0 %v7240
          %7257 = vmatprep.subr.bf16.mxu0 0
          %7258 = vmatpush1.bf16.msra.mxu0 %v7239
          %7259 = vmatprep.subr.bf16.mxu0 0
          %7260 = vmatpush1.bf16.msra.mxu0 %v7238
          %7261 = vmatprep.subr.bf16.mxu0 0
          %7262 = vmatpush1.bf16.msra.mxu0 %v7237
          %7263 = vmatprep.subr.bf16.mxu0 0
          %7264 = vmatpush1.bf16.msra.mxu0 %v7236
          %7265 = vmatprep.subr.bf16.mxu0 0
          %7266 = vmatpush1.bf16.msra.mxu0 %v7235
          %7267 = vmatprep.subr.bf16.mxu0 0
          %7268 = vmatpush2.bf16.msra.mxu0 0
          %7269 = vmatprep.subr.bf16.mxu0 0
          %7270 = vmatpush2.bf16.msra.mxu0 0
          %7271 = vmatprep.subr.bf16.mxu0 0
          %7272 = vmatpush2.bf16.msra.mxu0 0
          %7273 = vmatprep.subr.bf16.mxu0 0
          %7274 = vmatpush2.bf16.msra.mxu0 0
          %7275 = vmatprep.subr.bf16.mxu0 0
          %7276 = vmatpush2.bf16.msra.mxu0 0
          %7277 = vmatprep.subr.bf16.mxu0 0
          %7278 = vmatpush2.bf16.msra.mxu0 0
          %7279 = vmatprep.subr.bf16.mxu0 0
          %7280 = vmatpush2.bf16.msra.mxu0 0
          %7281 = vmatprep.subr.bf16.mxu0 0
          %7282 = vmatpush2.bf16.msra.mxu0 0
          %7283 = vmatprep.mubr.bf16.mxu0 0
          %7284 = vmatmul.mubr.bf16.gmra.mxu0 %v7187
          %v7285 = vpop.f32.mrf.mxu0
          %v7286 = vadd.f32 0.0, %v7285
          %v7287 = vpop.f32.mrf.mxu0
          %v7288 = vpop.f32.mrf.mxu0
          %v7289 = vadd.f32 0.0, %v7288
          %v7290 = vpop.f32.mrf.mxu0
          %7291 = vmatprep.mubr.bf16.mxu0 0
          %7292 = vmatmul.mubr.bf16.gmra.mxu0 %v7188
          %v7293 = vpop.f32.mrf.mxu0
          %v7294 = vadd.f32 0.0, %v7293
          %v7295 = vpop.f32.mrf.mxu0
          %v7296 = vpop.f32.mrf.mxu0
          %v7297 = vadd.f32 0.0, %v7296
          %v7298 = vpop.f32.mrf.mxu0
          %7299 = vmatprep.mubr.bf16.mxu0 0
          %7300 = vmatmul.mubr.bf16.gmra.mxu0 %v7189
          %v7301 = vpop.f32.mrf.mxu0
          %v7302 = vadd.f32 0.0, %v7301
          %v7303 = vpop.f32.mrf.mxu0
          %v7304 = vpop.f32.mrf.mxu0
          %v7305 = vadd.f32 0.0, %v7304
          %v7306 = vpop.f32.mrf.mxu0
          %7307 = vmatprep.mubr.bf16.mxu0 0
          %7308 = vmatmul.mubr.bf16.gmra.mxu0 %v7190
          %v7309 = vpop.f32.mrf.mxu0
          %v7310 = vadd.f32 0.0, %v7309
          %v7311 = vpop.f32.mrf.mxu0
          %v7312 = vpop.f32.mrf.mxu0
          %v7313 = vadd.f32 0.0, %v7312
          %v7314 = vpop.f32.mrf.mxu0
          %7315 = vmatprep.mubr.bf16.mxu0 0
          %7316 = vmatmul.mubr.bf16.gmra.mxu0 %v7191
          %v7317 = vpop.f32.mrf.mxu0
          %v7318 = vadd.f32 0.0, %v7317
          %v7319 = vpop.f32.mrf.mxu0
          %v7320 = vpop.f32.mrf.mxu0
          %v7321 = vadd.f32 0.0, %v7320
          %v7322 = vpop.f32.mrf.mxu0
          %7323 = vmatprep.mubr.bf16.mxu0 0
          %7324 = vmatmul.mubr.bf16.gmra.mxu0 %v7192
          %v7325 = vpop.f32.mrf.mxu0
          %v7326 = vadd.f32 0.0, %v7325
          %v7327 = vpop.f32.mrf.mxu0
          %v7328 = vpop.f32.mrf.mxu0
          %v7329 = vadd.f32 0.0, %v7328
          %v7330 = vpop.f32.mrf.mxu0
          %7331 = vmatprep.mubr.bf16.mxu0 0
          %7332 = vmatmul.mubr.bf16.gmra.mxu0 %v7193
          %v7333 = vpop.f32.mrf.mxu0
          %v7334 = vadd.f32 0.0, %v7333
          %v7335 = vpop.f32.mrf.mxu0
          %v7336 = vpop.f32.mrf.mxu0
          %v7337 = vadd.f32 0.0, %v7336
          %v7338 = vpop.f32.mrf.mxu0
          %7339 = vmatprep.mubr.bf16.mxu0 0
          %7340 = vmatmul.mubr.bf16.gmra.mxu0 %v7194
          %v7341 = vpop.f32.mrf.mxu0
          %v7342 = vadd.f32 0.0, %v7341
          %v7343 = vpop.f32.mrf.mxu0
          %v7344 = vpop.f32.mrf.mxu0
          %v7345 = vadd.f32 0.0, %v7344
          %v7346 = vpop.f32.mrf.mxu0
          %7347 = vdwg.mxu0
          %v7348 = vadd.f32 %v7084, %v7286
          %v7349 = vadd.f32 %v7087, %v7289
          %v7350 = vadd.f32 %v7092, %v7294
          %v7351 = vadd.f32 %v7095, %v7297
          %v7352 = vadd.f32 %v7100, %v7302
          %v7353 = vadd.f32 %v7103, %v7305
          %v7354 = vadd.f32 %v7108, %v7310
          %v7355 = vadd.f32 %v7111, %v7313
          %v7356 = vadd.f32 %v7116, %v7318
          %v7357 = vadd.f32 %v7119, %v7321
          %v7358 = vadd.f32 %v7124, %v7326
          %v7359 = vadd.f32 %v7127, %v7329
          %v7360 = vadd.f32 %v7132, %v7334
          %v7361 = vadd.f32 %v7135, %v7337
          %v7362 = vadd.f32 %v7140, %v7342
          %v7363 = vadd.f32 %v7143, %v7345
          %s7364 = scalar_lea.vmem [#allocation2], 48
          %v7365 = vld [vmem:[%s7364] sm:$0xf]
          %v7366 = vld [vmem:[%s7364 + $0x4] sm:$0xf]
          %v7367 = vld [vmem:[%s7364 + $0xc] sm:$0xf]
          %v7368 = vld [vmem:[%s7364 + $0x10] sm:$0xf]
          %v7369 = vld [vmem:[%s7364 + $0x18] sm:$0xf]
          %v7370 = vld [vmem:[%s7364 + $0x1c] sm:$0xf]
          %v7371 = vld [vmem:[%s7364 + $0x24] sm:$0xf]
          %v7372 = vld [vmem:[%s7364 + $0x28] sm:$0xf]
          %v7373 = vld [vmem:[%s7364 + $0x30] sm:$0xf]
          %v7374 = vld [vmem:[%s7364 + $0x34] sm:$0xf]
          %v7375 = vld [vmem:[%s7364 + $0x3c] sm:$0xf]
          %v7376 = vld [vmem:[%s7364 + $0x40] sm:$0xf]
          %v7377 = vld [vmem:[%s7364 + $0x48] sm:$0xf]
          %v7378 = vld [vmem:[%s7364 + $0x4c] sm:$0xf]
          %v7379 = vld [vmem:[%s7364 + $0x54] sm:$0xf]
          %v7380 = vld [vmem:[%s7364 + $0x58] sm:$0xf]
          %s7381 = scalar_lea.vmem %s173, 192 [#allocation4]
          %v7382 = vld [vmem:[%s7381] sm:$0xf]
          %v7383 = vld [vmem:[%s7381 + $0x4] sm:$0xf]
          %v7384 = vld [vmem:[%s7381 + $0x8] sm:$0xf]
          %v7385 = vld [vmem:[%s7381 + $0xc] sm:$0xf]
          %v7386 = vld [vmem:[%s7381 + $0x10] sm:$0xf]
          %v7387 = vld [vmem:[%s7381 + $0x14] sm:$0xf]
          %v7388 = vld [vmem:[%s7381 + $0x18] sm:$0xf]
          %v7389 = vld [vmem:[%s7381 + $0x1c] sm:$0xf]
          %v7390 = vld [vmem:[%s7381 + $0x20] sm:$0xf]
          %v7391 = vld [vmem:[%s7381 + $0x24] sm:$0xf]
          %v7392 = vld [vmem:[%s7381 + $0x28] sm:$0xf]
          %v7393 = vld [vmem:[%s7381 + $0x2c] sm:$0xf]
          %v7394 = vld [vmem:[%s7381 + $0x30] sm:$0xf]
          %v7395 = vld [vmem:[%s7381 + $0x34] sm:$0xf]
          %v7396 = vld [vmem:[%s7381 + $0x38] sm:$0xf]
          %v7397 = vld [vmem:[%s7381 + $0x3c] sm:$0xf]
          %v7414 = vunpack.c.l.b16 %v7365
          %v7415 = vunpack.c.l.b16 %v7366
          %v7416 = vunpack.c.l.b16 %v7367
          %v7417 = vunpack.c.l.b16 %v7368
          %v7418 = vunpack.c.l.b16 %v7369
          %v7419 = vunpack.c.l.b16 %v7370
          %v7420 = vunpack.c.l.b16 %v7371
          %v7421 = vunpack.c.l.b16 %v7372
          %v7422 = vunpack.c.l.b16 %v7373
          %v7423 = vunpack.c.l.b16 %v7374
          %v7424 = vunpack.c.l.b16 %v7375
          %v7425 = vunpack.c.l.b16 %v7376
          %v7426 = vunpack.c.l.b16 %v7377
          %v7427 = vunpack.c.l.b16 %v7378
          %v7428 = vunpack.c.l.b16 %v7379
          %v7429 = vunpack.c.l.b16 %v7380
          %v7430 = vpack.c.b16 %v7415, %v7414
          %v7431 = vpack.c.b16 %v7417, %v7416
          %v7432 = vpack.c.b16 %v7419, %v7418
          %v7433 = vpack.c.b16 %v7421, %v7420
          %v7434 = vpack.c.b16 %v7423, %v7422
          %v7435 = vpack.c.b16 %v7425, %v7424
          %v7436 = vpack.c.b16 %v7427, %v7426
          %v7437 = vpack.c.b16 %v7429, %v7428
          %v7462 = vunpack.c.l.b16 %v7382
          %v7463 = vunpack.c.l.b16 %v7383
          %v7464 = vunpack.c.l.b16 %v7384
          %v7465 = vunpack.c.l.b16 %v7385
          %v7466 = vunpack.c.l.b16 %v7386
          %v7467 = vunpack.c.l.b16 %v7387
          %v7468 = vunpack.c.l.b16 %v7388
          %v7469 = vunpack.c.l.b16 %v7389
          %v7470 = vunpack.c.l.b16 %v7390
          %v7471 = vunpack.c.l.b16 %v7391
          %v7472 = vunpack.c.l.b16 %v7392
          %v7473 = vunpack.c.l.b16 %v7393
          %v7474 = vunpack.c.l.b16 %v7394
          %v7475 = vunpack.c.l.b16 %v7395
          %v7476 = vunpack.c.l.b16 %v7396
          %v7477 = vunpack.c.l.b16 %v7397
          %v7478 = vpack.c.b16 %v7463, %v7462
          %v7479 = vpack.c.b16 %v7465, %v7464
          %v7480 = vpack.c.b16 %v7467, %v7466
          %v7481 = vpack.c.b16 %v7469, %v7468
          %v7482 = vpack.c.b16 %v7471, %v7470
          %v7483 = vpack.c.b16 %v7473, %v7472
          %v7484 = vpack.c.b16 %v7475, %v7474
          %v7485 = vpack.c.b16 %v7477, %v7476
          %7494 = vmatprep.subr.bf16.mxu0 0
          %7495 = vmatpush1.bf16.msra.mxu0 %v7485
          %7496 = vmatprep.subr.bf16.mxu0 0
          %7497 = vmatpush1.bf16.msra.mxu0 %v7484
          %7498 = vmatprep.subr.bf16.mxu0 0
          %7499 = vmatpush1.bf16.msra.mxu0 %v7483
          %7500 = vmatprep.subr.bf16.mxu0 0
          %7501 = vmatpush1.bf16.msra.mxu0 %v7482
          %7502 = vmatprep.subr.bf16.mxu0 0
          %7503 = vmatpush1.bf16.msra.mxu0 %v7481
          %7504 = vmatprep.subr.bf16.mxu0 0
          %7505 = vmatpush1.bf16.msra.mxu0 %v7480
          %7506 = vmatprep.subr.bf16.mxu0 0
          %7507 = vmatpush1.bf16.msra.mxu0 %v7479
          %7508 = vmatprep.subr.bf16.mxu0 0
          %7509 = vmatpush1.bf16.msra.mxu0 %v7478
          %7510 = vmatprep.subr.bf16.mxu0 0
          %7511 = vmatpush2.bf16.msra.mxu0 0
          %7512 = vmatprep.subr.bf16.mxu0 0
          %7513 = vmatpush2.bf16.msra.mxu0 0
          %7514 = vmatprep.subr.bf16.mxu0 0
          %7515 = vmatpush2.bf16.msra.mxu0 0
          %7516 = vmatprep.subr.bf16.mxu0 0
          %7517 = vmatpush2.bf16.msra.mxu0 0
          %7518 = vmatprep.subr.bf16.mxu0 0
          %7519 = vmatpush2.bf16.msra.mxu0 0
          %7520 = vmatprep.subr.bf16.mxu0 0
          %7521 = vmatpush2.bf16.msra.mxu0 0
          %7522 = vmatprep.subr.bf16.mxu0 0
          %7523 = vmatpush2.bf16.msra.mxu0 0
          %7524 = vmatprep.subr.bf16.mxu0 0
          %7525 = vmatpush2.bf16.msra.mxu0 0
          %7526 = vmatprep.mubr.bf16.mxu0 0
          %7527 = vmatmul.mubr.bf16.gmra.mxu0 %v7430
          %v7528 = vpop.f32.mrf.mxu0
          %v7529 = vadd.f32 0.0, %v7528
          %v7530 = vpop.f32.mrf.mxu0
          %v7531 = vpop.f32.mrf.mxu0
          %v7532 = vadd.f32 0.0, %v7531
          %v7533 = vpop.f32.mrf.mxu0
          %7534 = vmatprep.mubr.bf16.mxu0 0
          %7535 = vmatmul.mubr.bf16.gmra.mxu0 %v7431
          %v7536 = vpop.f32.mrf.mxu0
          %v7537 = vadd.f32 0.0, %v7536
          %v7538 = vpop.f32.mrf.mxu0
          %v7539 = vpop.f32.mrf.mxu0
          %v7540 = vadd.f32 0.0, %v7539
          %v7541 = vpop.f32.mrf.mxu0
          %7542 = vmatprep.mubr.bf16.mxu0 0
          %7543 = vmatmul.mubr.bf16.gmra.mxu0 %v7432
          %v7544 = vpop.f32.mrf.mxu0
          %v7545 = vadd.f32 0.0, %v7544
          %v7546 = vpop.f32.mrf.mxu0
          %v7547 = vpop.f32.mrf.mxu0
          %v7548 = vadd.f32 0.0, %v7547
          %v7549 = vpop.f32.mrf.mxu0
          %7550 = vmatprep.mubr.bf16.mxu0 0
          %7551 = vmatmul.mubr.bf16.gmra.mxu0 %v7433
          %v7552 = vpop.f32.mrf.mxu0
          %v7553 = vadd.f32 0.0, %v7552
          %v7554 = vpop.f32.mrf.mxu0
          %v7555 = vpop.f32.mrf.mxu0
          %v7556 = vadd.f32 0.0, %v7555
          %v7557 = vpop.f32.mrf.mxu0
          %7558 = vmatprep.mubr.bf16.mxu0 0
          %7559 = vmatmul.mubr.bf16.gmra.mxu0 %v7434
          %v7560 = vpop.f32.mrf.mxu0
          %v7561 = vadd.f32 0.0, %v7560
          %v7562 = vpop.f32.mrf.mxu0
          %v7563 = vpop.f32.mrf.mxu0
          %v7564 = vadd.f32 0.0, %v7563
          %v7565 = vpop.f32.mrf.mxu0
          %7566 = vmatprep.mubr.bf16.mxu0 0
          %7567 = vmatmul.mubr.bf16.gmra.mxu0 %v7435
          %v7568 = vpop.f32.mrf.mxu0
          %v7569 = vadd.f32 0.0, %v7568
          %v7570 = vpop.f32.mrf.mxu0
          %v7571 = vpop.f32.mrf.mxu0
          %v7572 = vadd.f32 0.0, %v7571
          %v7573 = vpop.f32.mrf.mxu0
          %7574 = vmatprep.mubr.bf16.mxu0 0
          %7575 = vmatmul.mubr.bf16.gmra.mxu0 %v7436
          %v7576 = vpop.f32.mrf.mxu0
          %v7577 = vadd.f32 0.0, %v7576
          %v7578 = vpop.f32.mrf.mxu0
          %v7579 = vpop.f32.mrf.mxu0
          %v7580 = vadd.f32 0.0, %v7579
          %v7581 = vpop.f32.mrf.mxu0
          %7582 = vmatprep.mubr.bf16.mxu0 0
          %7583 = vmatmul.mubr.bf16.gmra.mxu0 %v7437
          %v7584 = vpop.f32.mrf.mxu0
          %v7585 = vadd.f32 0.0, %v7584
          %v7586 = vpop.f32.mrf.mxu0
          %v7587 = vpop.f32.mrf.mxu0
          %v7588 = vadd.f32 0.0, %v7587
          %v7589 = vpop.f32.mrf.mxu0
          %7590 = vdwg.mxu0
          %v7591 = vadd.f32 %v7348, %v7529
          %v7592 = vadd.f32 %v7349, %v7532
          %v7593 = vadd.f32 %v7350, %v7537
          %v7594 = vadd.f32 %v7351, %v7540
          %v7595 = vadd.f32 %v7352, %v7545
          %v7596 = vadd.f32 %v7353, %v7548
          %v7597 = vadd.f32 %v7354, %v7553
          %v7598 = vadd.f32 %v7355, %v7556
          %v7599 = vadd.f32 %v7356, %v7561
          %v7600 = vadd.f32 %v7357, %v7564
          %v7601 = vadd.f32 %v7358, %v7569
          %v7602 = vadd.f32 %v7359, %v7572
          %v7603 = vadd.f32 %v7360, %v7577
          %v7604 = vadd.f32 %v7361, %v7580
          %v7605 = vadd.f32 %v7362, %v7585
          %v7606 = vadd.f32 %v7363, %v7588
          %v7607 = vld [vmem:[%s7364] sm:$0xc]
          %v7608 = vld [vmem:[%s7364 + $0x4] sm:$0xf]
          %v7609 = vld [vmem:[%s7364 + $0x8] sm:$0x3]
          %v7610 = vld [vmem:[%s7364 + $0xc] sm:$0xc]
          %v7611 = vld [vmem:[%s7364 + $0x10] sm:$0xf]
          %v7612 = vld [vmem:[%s7364 + $0x14] sm:$0x3]
          %v7613 = vld [vmem:[%s7364 + $0x18] sm:$0xc]
          %v7614 = vld [vmem:[%s7364 + $0x1c] sm:$0xf]
          %v7615 = vld [vmem:[%s7364 + $0x20] sm:$0x3]
          %v7616 = vld [vmem:[%s7364 + $0x24] sm:$0xc]
          %v7617 = vld [vmem:[%s7364 + $0x28] sm:$0xf]
          %v7618 = vld [vmem:[%s7364 + $0x2c] sm:$0x3]
          %v7619 = vld [vmem:[%s7364 + $0x30] sm:$0xc]
          %v7620 = vld [vmem:[%s7364 + $0x34] sm:$0xf]
          %v7621 = vld [vmem:[%s7364 + $0x38] sm:$0x3]
          %v7622 = vld [vmem:[%s7364 + $0x3c] sm:$0xc]
          %v7623 = vld [vmem:[%s7364 + $0x40] sm:$0xf]
          %v7624 = vld [vmem:[%s7364 + $0x44] sm:$0x3]
          %v7625 = vld [vmem:[%s7364 + $0x48] sm:$0xc]
          %v7626 = vld [vmem:[%s7364 + $0x4c] sm:$0xf]
          %v7627 = vld [vmem:[%s7364 + $0x50] sm:$0x3]
          %v7628 = vld [vmem:[%s7364 + $0x54] sm:$0xc]
          %v7629 = vld [vmem:[%s7364 + $0x58] sm:$0xf]
          %v7630 = vld [vmem:[%s7364 + $0x5c] sm:$0x3]
          %v7655 = vrot.slane %v7607, 6
          %v7656 = vrot.slane %v7655, 4
          %v7657 = vrot.slane %v7608, 6
          %v7658 = vsel %vm6710, %v7656, %v7657
          %v7659 = vrot.slane %v7657, 4
          %v7660 = vrot.slane %v7609, 6
          %v7661 = vsel %vm6710, %v7659, %v7660
          %v7662 = vrot.slane %v7610, 6
          %v7663 = vrot.slane %v7662, 4
          %v7664 = vrot.slane %v7611, 6
          %v7665 = vsel %vm6710, %v7663, %v7664
          %v7666 = vrot.slane %v7664, 4
          %v7667 = vrot.slane %v7612, 6
          %v7668 = vsel %vm6710, %v7666, %v7667
          %v7669 = vrot.slane %v7613, 6
          %v7670 = vrot.slane %v7669, 4
          %v7671 = vrot.slane %v7614, 6
          %v7672 = vsel %vm6710, %v7670, %v7671
          %v7673 = vrot.slane %v7671, 4
          %v7674 = vrot.slane %v7615, 6
          %v7675 = vsel %vm6710, %v7673, %v7674
          %v7676 = vrot.slane %v7616, 6
          %v7677 = vrot.slane %v7676, 4
          %v7678 = vrot.slane %v7617, 6
          %v7679 = vsel %vm6710, %v7677, %v7678
          %v7680 = vrot.slane %v7678, 4
          %v7681 = vrot.slane %v7618, 6
          %v7682 = vsel %vm6710, %v7680, %v7681
          %v7683 = vrot.slane %v7619, 6
          %v7684 = vrot.slane %v7683, 4
          %v7685 = vrot.slane %v7620, 6
          %v7686 = vsel %vm6710, %v7684, %v7685
          %v7687 = vrot.slane %v7685, 4
          %v7688 = vrot.slane %v7621, 6
          %v7689 = vsel %vm6710, %v7687, %v7688
          %v7690 = vrot.slane %v7622, 6
          %v7691 = vrot.slane %v7690, 4
          %v7692 = vrot.slane %v7623, 6
          %v7693 = vsel %vm6710, %v7691, %v7692
          %v7694 = vrot.slane %v7692, 4
          %v7695 = vrot.slane %v7624, 6
          %v7696 = vsel %vm6710, %v7694, %v7695
          %v7697 = vrot.slane %v7625, 6
          %v7698 = vrot.slane %v7697, 4
          %v7699 = vrot.slane %v7626, 6
          %v7700 = vsel %vm6710, %v7698, %v7699
          %v7701 = vrot.slane %v7699, 4
          %v7702 = vrot.slane %v7627, 6
          %v7703 = vsel %vm6710, %v7701, %v7702
          %v7704 = vrot.slane %v7628, 6
          %v7705 = vrot.slane %v7704, 4
          %v7706 = vrot.slane %v7629, 6
          %v7707 = vsel %vm6710, %v7705, %v7706
          %v7708 = vrot.slane %v7706, 4
          %v7709 = vrot.slane %v7630, 6
          %v7710 = vsel %vm6710, %v7708, %v7709
          %s7711 = scalar_lea.vmem %s173, 256 [#allocation4]
          %v7712 = vld [vmem:[%s7711] sm:$0xf]
          %v7713 = vld [vmem:[%s7711 + $0x4] sm:$0xf]
          %v7714 = vld [vmem:[%s7711 + $0x8] sm:$0xf]
          %v7715 = vld [vmem:[%s7711 + $0xc] sm:$0xf]
          %v7716 = vld [vmem:[%s7711 + $0x10] sm:$0xf]
          %v7717 = vld [vmem:[%s7711 + $0x14] sm:$0xf]
          %v7718 = vld [vmem:[%s7711 + $0x18] sm:$0xf]
          %v7719 = vld [vmem:[%s7711 + $0x1c] sm:$0xf]
          %v7720 = vld [vmem:[%s7711 + $0x20] sm:$0xf]
          %v7721 = vld [vmem:[%s7711 + $0x24] sm:$0xf]
          %v7722 = vld [vmem:[%s7711 + $0x28] sm:$0xf]
          %v7723 = vld [vmem:[%s7711 + $0x2c] sm:$0xf]
          %v7724 = vld [vmem:[%s7711 + $0x30] sm:$0xf]
          %v7725 = vld [vmem:[%s7711 + $0x34] sm:$0xf]
          %v7726 = vld [vmem:[%s7711 + $0x38] sm:$0xf]
          %v7727 = vld [vmem:[%s7711 + $0x3c] sm:$0xf]
          %v7728 = vunpack.c.l.b16 %v7658
          %v7729 = vunpack.c.l.b16 %v7661
          %v7730 = vunpack.c.l.b16 %v7665
          %v7731 = vunpack.c.l.b16 %v7668
          %v7732 = vunpack.c.l.b16 %v7672
          %v7733 = vunpack.c.l.b16 %v7675
          %v7734 = vunpack.c.l.b16 %v7679
          %v7735 = vunpack.c.l.b16 %v7682
          %v7736 = vunpack.c.l.b16 %v7686
          %v7737 = vunpack.c.l.b16 %v7689
          %v7738 = vunpack.c.l.b16 %v7693
          %v7739 = vunpack.c.l.b16 %v7696
          %v7740 = vunpack.c.l.b16 %v7700
          %v7741 = vunpack.c.l.b16 %v7703
          %v7742 = vunpack.c.l.b16 %v7707
          %v7743 = vunpack.c.l.b16 %v7710
          %v7744 = vpack.c.b16 %v7729, %v7728
          %v7745 = vpack.c.b16 %v7731, %v7730
          %v7746 = vpack.c.b16 %v7733, %v7732
          %v7747 = vpack.c.b16 %v7735, %v7734
          %v7748 = vpack.c.b16 %v7737, %v7736
          %v7749 = vpack.c.b16 %v7739, %v7738
          %v7750 = vpack.c.b16 %v7741, %v7740
          %v7751 = vpack.c.b16 %v7743, %v7742
          %v7776 = vunpack.c.l.b16 %v7712
          %v7777 = vunpack.c.l.b16 %v7713
          %v7778 = vunpack.c.l.b16 %v7714
          %v7779 = vunpack.c.l.b16 %v7715
          %v7780 = vunpack.c.l.b16 %v7716
          %v7781 = vunpack.c.l.b16 %v7717
          %v7782 = vunpack.c.l.b16 %v7718
          %v7783 = vunpack.c.l.b16 %v7719
          %v7784 = vunpack.c.l.b16 %v7720
          %v7785 = vunpack.c.l.b16 %v7721
          %v7786 = vunpack.c.l.b16 %v7722
          %v7787 = vunpack.c.l.b16 %v7723
          %v7788 = vunpack.c.l.b16 %v7724
          %v7789 = vunpack.c.l.b16 %v7725
          %v7790 = vunpack.c.l.b16 %v7726
          %v7791 = vunpack.c.l.b16 %v7727
          %v7792 = vpack.c.b16 %v7777, %v7776
          %v7793 = vpack.c.b16 %v7779, %v7778
          %v7794 = vpack.c.b16 %v7781, %v7780
          %v7795 = vpack.c.b16 %v7783, %v7782
          %v7796 = vpack.c.b16 %v7785, %v7784
          %v7797 = vpack.c.b16 %v7787, %v7786
          %v7798 = vpack.c.b16 %v7789, %v7788
          %v7799 = vpack.c.b16 %v7791, %v7790
          %7808 = vmatprep.subr.bf16.mxu0 0
          %7809 = vmatpush1.bf16.msra.mxu0 %v7799
          %7810 = vmatprep.subr.bf16.mxu0 0
          %7811 = vmatpush1.bf16.msra.mxu0 %v7798
          %7812 = vmatprep.subr.bf16.mxu0 0
          %7813 = vmatpush1.bf16.msra.mxu0 %v7797
          %7814 = vmatprep.subr.bf16.mxu0 0
          %7815 = vmatpush1.bf16.msra.mxu0 %v7796
          %7816 = vmatprep.subr.bf16.mxu0 0
          %7817 = vmatpush1.bf16.msra.mxu0 %v7795
          %7818 = vmatprep.subr.bf16.mxu0 0
          %7819 = vmatpush1.bf16.msra.mxu0 %v7794
          %7820 = vmatprep.subr.bf16.mxu0 0
          %7821 = vmatpush1.bf16.msra.mxu0 %v7793
          %7822 = vmatprep.subr.bf16.mxu0 0
          %7823 = vmatpush1.bf16.msra.mxu0 %v7792
          %7824 = vmatprep.subr.bf16.mxu0 0
          %7825 = vmatpush2.bf16.msra.mxu0 0
          %7826 = vmatprep.subr.bf16.mxu0 0
          %7827 = vmatpush2.bf16.msra.mxu0 0
          %7828 = vmatprep.subr.bf16.mxu0 0
          %7829 = vmatpush2.bf16.msra.mxu0 0
          %7830 = vmatprep.subr.bf16.mxu0 0
          %7831 = vmatpush2.bf16.msra.mxu0 0
          %7832 = vmatprep.subr.bf16.mxu0 0
          %7833 = vmatpush2.bf16.msra.mxu0 0
          %7834 = vmatprep.subr.bf16.mxu0 0
          %7835 = vmatpush2.bf16.msra.mxu0 0
          %7836 = vmatprep.subr.bf16.mxu0 0
          %7837 = vmatpush2.bf16.msra.mxu0 0
          %7838 = vmatprep.subr.bf16.mxu0 0
          %7839 = vmatpush2.bf16.msra.mxu0 0
          %7840 = vmatprep.mubr.bf16.mxu0 0
          %7841 = vmatmul.mubr.bf16.gmra.mxu0 %v7744
          %v7842 = vpop.f32.mrf.mxu0
          %v7843 = vadd.f32 0.0, %v7842
          %v7844 = vpop.f32.mrf.mxu0
          %v7845 = vpop.f32.mrf.mxu0
          %v7846 = vadd.f32 0.0, %v7845
          %v7847 = vpop.f32.mrf.mxu0
          %7848 = vmatprep.mubr.bf16.mxu0 0
          %7849 = vmatmul.mubr.bf16.gmra.mxu0 %v7745
          %v7850 = vpop.f32.mrf.mxu0
          %v7851 = vadd.f32 0.0, %v7850
          %v7852 = vpop.f32.mrf.mxu0
          %v7853 = vpop.f32.mrf.mxu0
          %v7854 = vadd.f32 0.0, %v7853
          %v7855 = vpop.f32.mrf.mxu0
          %7856 = vmatprep.mubr.bf16.mxu0 0
          %7857 = vmatmul.mubr.bf16.gmra.mxu0 %v7746
          %v7858 = vpop.f32.mrf.mxu0
          %v7859 = vadd.f32 0.0, %v7858
          %v7860 = vpop.f32.mrf.mxu0
          %v7861 = vpop.f32.mrf.mxu0
          %v7862 = vadd.f32 0.0, %v7861
          %v7863 = vpop.f32.mrf.mxu0
          %7864 = vmatprep.mubr.bf16.mxu0 0
          %7865 = vmatmul.mubr.bf16.gmra.mxu0 %v7747
          %v7866 = vpop.f32.mrf.mxu0
          %v7867 = vadd.f32 0.0, %v7866
          %v7868 = vpop.f32.mrf.mxu0
          %v7869 = vpop.f32.mrf.mxu0
          %v7870 = vadd.f32 0.0, %v7869
          %v7871 = vpop.f32.mrf.mxu0
          %7872 = vmatprep.mubr.bf16.mxu0 0
          %7873 = vmatmul.mubr.bf16.gmra.mxu0 %v7748
          %v7874 = vpop.f32.mrf.mxu0
          %v7875 = vadd.f32 0.0, %v7874
          %v7876 = vpop.f32.mrf.mxu0
          %v7877 = vpop.f32.mrf.mxu0
          %v7878 = vadd.f32 0.0, %v7877
          %v7879 = vpop.f32.mrf.mxu0
          %7880 = vmatprep.mubr.bf16.mxu0 0
          %7881 = vmatmul.mubr.bf16.gmra.mxu0 %v7749
          %v7882 = vpop.f32.mrf.mxu0
          %v7883 = vadd.f32 0.0, %v7882
          %v7884 = vpop.f32.mrf.mxu0
          %v7885 = vpop.f32.mrf.mxu0
          %v7886 = vadd.f32 0.0, %v7885
          %v7887 = vpop.f32.mrf.mxu0
          %7888 = vmatprep.mubr.bf16.mxu0 0
          %7889 = vmatmul.mubr.bf16.gmra.mxu0 %v7750
          %v7890 = vpop.f32.mrf.mxu0
          %v7891 = vadd.f32 0.0, %v7890
          %v7892 = vpop.f32.mrf.mxu0
          %v7893 = vpop.f32.mrf.mxu0
          %v7894 = vadd.f32 0.0, %v7893
          %v7895 = vpop.f32.mrf.mxu0
          %7896 = vmatprep.mubr.bf16.mxu0 0
          %7897 = vmatmul.mubr.bf16.gmra.mxu0 %v7751
          %v7898 = vpop.f32.mrf.mxu0
          %v7899 = vadd.f32 0.0, %v7898
          %v7900 = vpop.f32.mrf.mxu0
          %v7901 = vpop.f32.mrf.mxu0
          %v7902 = vadd.f32 0.0, %v7901
          %v7903 = vpop.f32.mrf.mxu0
          %7904 = vdwg.mxu0
          %v7905 = vadd.f32 %v7591, %v7843
          %v7906 = vadd.f32 %v7592, %v7846
          %v7907 = vadd.f32 %v7593, %v7851
          %v7908 = vadd.f32 %v7594, %v7854
          %v7909 = vadd.f32 %v7595, %v7859
          %v7910 = vadd.f32 %v7596, %v7862
          %v7911 = vadd.f32 %v7597, %v7867
          %v7912 = vadd.f32 %v7598, %v7870
          %v7913 = vadd.f32 %v7599, %v7875
          %v7914 = vadd.f32 %v7600, %v7878
          %v7915 = vadd.f32 %v7601, %v7883
          %v7916 = vadd.f32 %v7602, %v7886
          %v7917 = vadd.f32 %v7603, %v7891
          %v7918 = vadd.f32 %v7604, %v7894
          %v7919 = vadd.f32 %v7605, %v7899
          %v7920 = vadd.f32 %v7606, %v7902
          %v7921 = vld [vmem:[%s7364 + $0x8] sm:$0xf]
          %v7922 = vld [vmem:[%s7364 + $0x14] sm:$0xf]
          %v7923 = vld [vmem:[%s7364 + $0x20] sm:$0xf]
          %v7924 = vld [vmem:[%s7364 + $0x2c] sm:$0xf]
          %v7925 = vld [vmem:[%s7364 + $0x38] sm:$0xf]
          %v7926 = vld [vmem:[%s7364 + $0x44] sm:$0xf]
          %v7927 = vld [vmem:[%s7364 + $0x50] sm:$0xf]
          %v7928 = vld [vmem:[%s7364 + $0x5c] sm:$0xf]
          %s7929 = scalar_lea.vmem %s173, 320 [#allocation4]
          %v7930 = vld [vmem:[%s7929] sm:$0xf]
          %v7931 = vld [vmem:[%s7929 + $0x4] sm:$0xf]
          %v7932 = vld [vmem:[%s7929 + $0x8] sm:$0xf]
          %v7933 = vld [vmem:[%s7929 + $0xc] sm:$0xf]
          %v7934 = vld [vmem:[%s7929 + $0x10] sm:$0xf]
          %v7935 = vld [vmem:[%s7929 + $0x14] sm:$0xf]
          %v7936 = vld [vmem:[%s7929 + $0x18] sm:$0xf]
          %v7937 = vld [vmem:[%s7929 + $0x1c] sm:$0xf]
          %v7938 = vld [vmem:[%s7929 + $0x20] sm:$0xf]
          %v7939 = vld [vmem:[%s7929 + $0x24] sm:$0xf]
          %v7940 = vld [vmem:[%s7929 + $0x28] sm:$0xf]
          %v7941 = vld [vmem:[%s7929 + $0x2c] sm:$0xf]
          %v7942 = vld [vmem:[%s7929 + $0x30] sm:$0xf]
          %v7943 = vld [vmem:[%s7929 + $0x34] sm:$0xf]
          %v7944 = vld [vmem:[%s7929 + $0x38] sm:$0xf]
          %v7945 = vld [vmem:[%s7929 + $0x3c] sm:$0xf]
          %v7954 = vunpack.c.l.b16 %v7608
          %v7955 = vunpack.c.l.b16 %v7921
          %v7956 = vunpack.c.l.b16 %v7611
          %v7957 = vunpack.c.l.b16 %v7922
          %v7958 = vunpack.c.l.b16 %v7614
          %v7959 = vunpack.c.l.b16 %v7923
          %v7960 = vunpack.c.l.b16 %v7617
          %v7961 = vunpack.c.l.b16 %v7924
          %v7962 = vunpack.c.l.b16 %v7620
          %v7963 = vunpack.c.l.b16 %v7925
          %v7964 = vunpack.c.l.b16 %v7623
          %v7965 = vunpack.c.l.b16 %v7926
          %v7966 = vunpack.c.l.b16 %v7626
          %v7967 = vunpack.c.l.b16 %v7927
          %v7968 = vunpack.c.l.b16 %v7629
          %v7969 = vunpack.c.l.b16 %v7928
          %v7970 = vpack.c.b16 %v7955, %v7954
          %v7971 = vpack.c.b16 %v7957, %v7956
          %v7972 = vpack.c.b16 %v7959, %v7958
          %v7973 = vpack.c.b16 %v7961, %v7960
          %v7974 = vpack.c.b16 %v7963, %v7962
          %v7975 = vpack.c.b16 %v7965, %v7964
          %v7976 = vpack.c.b16 %v7967, %v7966
          %v7977 = vpack.c.b16 %v7969, %v7968
          %v8002 = vunpack.c.l.b16 %v7930
          %v8003 = vunpack.c.l.b16 %v7931
          %v8004 = vunpack.c.l.b16 %v7932
          %v8005 = vunpack.c.l.b16 %v7933
          %v8006 = vunpack.c.l.b16 %v7934
          %v8007 = vunpack.c.l.b16 %v7935
          %v8008 = vunpack.c.l.b16 %v7936
          %v8009 = vunpack.c.l.b16 %v7937
          %v8010 = vunpack.c.l.b16 %v7938
          %v8011 = vunpack.c.l.b16 %v7939
          %v8012 = vunpack.c.l.b16 %v7940
          %v8013 = vunpack.c.l.b16 %v7941
          %v8014 = vunpack.c.l.b16 %v7942
          %v8015 = vunpack.c.l.b16 %v7943
          %v8016 = vunpack.c.l.b16 %v7944
          %v8017 = vunpack.c.l.b16 %v7945
          %v8018 = vpack.c.b16 %v8003, %v8002
          %v8019 = vpack.c.b16 %v8005, %v8004
          %v8020 = vpack.c.b16 %v8007, %v8006
          %v8021 = vpack.c.b16 %v8009, %v8008
          %v8022 = vpack.c.b16 %v8011, %v8010
          %v8023 = vpack.c.b16 %v8013, %v8012
          %v8024 = vpack.c.b16 %v8015, %v8014
          %v8025 = vpack.c.b16 %v8017, %v8016
          %8034 = vmatprep.subr.bf16.mxu0 0
          %8035 = vmatpush1.bf16.msra.mxu0 %v8025
          %8036 = vmatprep.subr.bf16.mxu0 0
          %8037 = vmatpush1.bf16.msra.mxu0 %v8024
          %8038 = vmatprep.subr.bf16.mxu0 0
          %8039 = vmatpush1.bf16.msra.mxu0 %v8023
          %8040 = vmatprep.subr.bf16.mxu0 0
          %8041 = vmatpush1.bf16.msra.mxu0 %v8022
          %8042 = vmatprep.subr.bf16.mxu0 0
          %8043 = vmatpush1.bf16.msra.mxu0 %v8021
          %8044 = vmatprep.subr.bf16.mxu0 0
          %8045 = vmatpush1.bf16.msra.mxu0 %v8020
          %8046 = vmatprep.subr.bf16.mxu0 0
          %8047 = vmatpush1.bf16.msra.mxu0 %v8019
          %8048 = vmatprep.subr.bf16.mxu0 0
          %8049 = vmatpush1.bf16.msra.mxu0 %v8018
          %8050 = vmatprep.subr.bf16.mxu0 0
          %8051 = vmatpush2.bf16.msra.mxu0 0
          %8052 = vmatprep.subr.bf16.mxu0 0
          %8053 = vmatpush2.bf16.msra.mxu0 0
          %8054 = vmatprep.subr.bf16.mxu0 0
          %8055 = vmatpush2.bf16.msra.mxu0 0
          %8056 = vmatprep.subr.bf16.mxu0 0
          %8057 = vmatpush2.bf16.msra.mxu0 0
          %8058 = vmatprep.subr.bf16.mxu0 0
          %8059 = vmatpush2.bf16.msra.mxu0 0
          %8060 = vmatprep.subr.bf16.mxu0 0
          %8061 = vmatpush2.bf16.msra.mxu0 0
          %8062 = vmatprep.subr.bf16.mxu0 0
          %8063 = vmatpush2.bf16.msra.mxu0 0
          %8064 = vmatprep.subr.bf16.mxu0 0
          %8065 = vmatpush2.bf16.msra.mxu0 0
          %8066 = vmatprep.mubr.bf16.mxu0 0
          %8067 = vmatmul.mubr.bf16.gmra.mxu0 %v7970
          %v8068 = vpop.f32.mrf.mxu0
          %v8069 = vadd.f32 0.0, %v8068
          %v8070 = vpop.f32.mrf.mxu0
          %v8071 = vpop.f32.mrf.mxu0
          %v8072 = vadd.f32 0.0, %v8071
          %v8073 = vpop.f32.mrf.mxu0
          %8074 = vmatprep.mubr.bf16.mxu0 0
          %8075 = vmatmul.mubr.bf16.gmra.mxu0 %v7971
          %v8076 = vpop.f32.mrf.mxu0
          %v8077 = vadd.f32 0.0, %v8076
          %v8078 = vpop.f32.mrf.mxu0
          %v8079 = vpop.f32.mrf.mxu0
          %v8080 = vadd.f32 0.0, %v8079
          %v8081 = vpop.f32.mrf.mxu0
          %8082 = vmatprep.mubr.bf16.mxu0 0
          %8083 = vmatmul.mubr.bf16.gmra.mxu0 %v7972
          %v8084 = vpop.f32.mrf.mxu0
          %v8085 = vadd.f32 0.0, %v8084
          %v8086 = vpop.f32.mrf.mxu0
          %v8087 = vpop.f32.mrf.mxu0
          %v8088 = vadd.f32 0.0, %v8087
          %v8089 = vpop.f32.mrf.mxu0
          %8090 = vmatprep.mubr.bf16.mxu0 0
          %8091 = vmatmul.mubr.bf16.gmra.mxu0 %v7973
          %v8092 = vpop.f32.mrf.mxu0
          %v8093 = vadd.f32 0.0, %v8092
          %v8094 = vpop.f32.mrf.mxu0
          %v8095 = vpop.f32.mrf.mxu0
          %v8096 = vadd.f32 0.0, %v8095
          %v8097 = vpop.f32.mrf.mxu0
          %8098 = vmatprep.mubr.bf16.mxu0 0
          %8099 = vmatmul.mubr.bf16.gmra.mxu0 %v7974
          %v8100 = vpop.f32.mrf.mxu0
          %v8101 = vadd.f32 0.0, %v8100
          %v8102 = vpop.f32.mrf.mxu0
          %v8103 = vpop.f32.mrf.mxu0
          %v8104 = vadd.f32 0.0, %v8103
          %v8105 = vpop.f32.mrf.mxu0
          %8106 = vmatprep.mubr.bf16.mxu0 0
          %8107 = vmatmul.mubr.bf16.gmra.mxu0 %v7975
          %v8108 = vpop.f32.mrf.mxu0
          %v8109 = vadd.f32 0.0, %v8108
          %v8110 = vpop.f32.mrf.mxu0
          %v8111 = vpop.f32.mrf.mxu0
          %v8112 = vadd.f32 0.0, %v8111
          %v8113 = vpop.f32.mrf.mxu0
          %8114 = vmatprep.mubr.bf16.mxu0 0
          %8115 = vmatmul.mubr.bf16.gmra.mxu0 %v7976
          %v8116 = vpop.f32.mrf.mxu0
          %v8117 = vadd.f32 0.0, %v8116
          %v8118 = vpop.f32.mrf.mxu0
          %v8119 = vpop.f32.mrf.mxu0
          %v8120 = vadd.f32 0.0, %v8119
          %v8121 = vpop.f32.mrf.mxu0
          %8122 = vmatprep.mubr.bf16.mxu0 0
          %8123 = vmatmul.mubr.bf16.gmra.mxu0 %v7977
          %v8124 = vpop.f32.mrf.mxu0
          %v8125 = vadd.f32 0.0, %v8124
          %v8126 = vpop.f32.mrf.mxu0
          %v8127 = vpop.f32.mrf.mxu0
          %v8128 = vadd.f32 0.0, %v8127
          %v8129 = vpop.f32.mrf.mxu0
          %8130 = vdwg.mxu0
          %v8131 = vadd.f32 %v7905, %v8069
          %v8132 = vadd.f32 %v7906, %v8072
          %v8133 = vadd.f32 %v7907, %v8077
          %v8134 = vadd.f32 %v7908, %v8080
          %v8135 = vadd.f32 %v7909, %v8085
          %v8136 = vadd.f32 %v7910, %v8088
          %v8137 = vadd.f32 %v7911, %v8093
          %v8138 = vadd.f32 %v7912, %v8096
          %v8139 = vadd.f32 %v7913, %v8101
          %v8140 = vadd.f32 %v7914, %v8104
          %v8141 = vadd.f32 %v7915, %v8109
          %v8142 = vadd.f32 %v7916, %v8112
          %v8143 = vadd.f32 %v7917, %v8117
          %v8144 = vadd.f32 %v7918, %v8120
          %v8145 = vadd.f32 %v7919, %v8125
          %v8146 = vadd.f32 %v7920, %v8128
          %s8147 = scalar_lea.vmem [#allocation2], 96
          %v8148 = vld [vmem:[%s8147] sm:$0xf]
          %v8149 = vld [vmem:[%s8147 + $0x4] sm:$0xf]
          %v8150 = vld [vmem:[%s8147 + $0xc] sm:$0xf]
          %v8151 = vld [vmem:[%s8147 + $0x10] sm:$0xf]
          %v8152 = vld [vmem:[%s8147 + $0x18] sm:$0xf]
          %v8153 = vld [vmem:[%s8147 + $0x1c] sm:$0xf]
          %v8154 = vld [vmem:[%s8147 + $0x24] sm:$0xf]
          %v8155 = vld [vmem:[%s8147 + $0x28] sm:$0xf]
          %v8156 = vld [vmem:[%s8147 + $0x30] sm:$0xf]
          %v8157 = vld [vmem:[%s8147 + $0x34] sm:$0xf]
          %v8158 = vld [vmem:[%s8147 + $0x3c] sm:$0xf]
          %v8159 = vld [vmem:[%s8147 + $0x40] sm:$0xf]
          %v8160 = vld [vmem:[%s8147 + $0x48] sm:$0xf]
          %v8161 = vld [vmem:[%s8147 + $0x4c] sm:$0xf]
          %v8162 = vld [vmem:[%s8147 + $0x54] sm:$0xf]
          %v8163 = vld [vmem:[%s8147 + $0x58] sm:$0xf]
          %s8164 = scalar_lea.vmem %s173, 384 [#allocation4]
          %v8165 = vld [vmem:[%s8164] sm:$0xf]
          %v8166 = vld [vmem:[%s8164 + $0x4] sm:$0xf]
          %v8167 = vld [vmem:[%s8164 + $0x8] sm:$0xf]
          %v8168 = vld [vmem:[%s8164 + $0xc] sm:$0xf]
          %v8169 = vld [vmem:[%s8164 + $0x10] sm:$0xf]
          %v8170 = vld [vmem:[%s8164 + $0x14] sm:$0xf]
          %v8171 = vld [vmem:[%s8164 + $0x18] sm:$0xf]
          %v8172 = vld [vmem:[%s8164 + $0x1c] sm:$0xf]
          %v8173 = vld [vmem:[%s8164 + $0x20] sm:$0xf]
          %v8174 = vld [vmem:[%s8164 + $0x24] sm:$0xf]
          %v8175 = vld [vmem:[%s8164 + $0x28] sm:$0xf]
          %v8176 = vld [vmem:[%s8164 + $0x2c] sm:$0xf]
          %v8177 = vld [vmem:[%s8164 + $0x30] sm:$0xf]
          %v8178 = vld [vmem:[%s8164 + $0x34] sm:$0xf]
          %v8179 = vld [vmem:[%s8164 + $0x38] sm:$0xf]
          %v8180 = vld [vmem:[%s8164 + $0x3c] sm:$0xf]
          %v8197 = vunpack.c.l.b16 %v8148
          %v8198 = vunpack.c.l.b16 %v8149
          %v8199 = vunpack.c.l.b16 %v8150
          %v8200 = vunpack.c.l.b16 %v8151
          %v8201 = vunpack.c.l.b16 %v8152
          %v8202 = vunpack.c.l.b16 %v8153
          %v8203 = vunpack.c.l.b16 %v8154
          %v8204 = vunpack.c.l.b16 %v8155
          %v8205 = vunpack.c.l.b16 %v8156
          %v8206 = vunpack.c.l.b16 %v8157
          %v8207 = vunpack.c.l.b16 %v8158
          %v8208 = vunpack.c.l.b16 %v8159
          %v8209 = vunpack.c.l.b16 %v8160
          %v8210 = vunpack.c.l.b16 %v8161
          %v8211 = vunpack.c.l.b16 %v8162
          %v8212 = vunpack.c.l.b16 %v8163
          %v8213 = vpack.c.b16 %v8198, %v8197
          %v8214 = vpack.c.b16 %v8200, %v8199
          %v8215 = vpack.c.b16 %v8202, %v8201
          %v8216 = vpack.c.b16 %v8204, %v8203
          %v8217 = vpack.c.b16 %v8206, %v8205
          %v8218 = vpack.c.b16 %v8208, %v8207
          %v8219 = vpack.c.b16 %v8210, %v8209
          %v8220 = vpack.c.b16 %v8212, %v8211
          %v8245 = vunpack.c.l.b16 %v8165
          %v8246 = vunpack.c.l.b16 %v8166
          %v8247 = vunpack.c.l.b16 %v8167
          %v8248 = vunpack.c.l.b16 %v8168
          %v8249 = vunpack.c.l.b16 %v8169
          %v8250 = vunpack.c.l.b16 %v8170
          %v8251 = vunpack.c.l.b16 %v8171
          %v8252 = vunpack.c.l.b16 %v8172
          %v8253 = vunpack.c.l.b16 %v8173
          %v8254 = vunpack.c.l.b16 %v8174
          %v8255 = vunpack.c.l.b16 %v8175
          %v8256 = vunpack.c.l.b16 %v8176
          %v8257 = vunpack.c.l.b16 %v8177
          %v8258 = vunpack.c.l.b16 %v8178
          %v8259 = vunpack.c.l.b16 %v8179
          %v8260 = vunpack.c.l.b16 %v8180
          %v8261 = vpack.c.b16 %v8246, %v8245
          %v8262 = vpack.c.b16 %v8248, %v8247
          %v8263 = vpack.c.b16 %v8250, %v8249
          %v8264 = vpack.c.b16 %v8252, %v8251
          %v8265 = vpack.c.b16 %v8254, %v8253
          %v8266 = vpack.c.b16 %v8256, %v8255
          %v8267 = vpack.c.b16 %v8258, %v8257
          %v8268 = vpack.c.b16 %v8260, %v8259
          %8277 = vmatprep.subr.bf16.mxu0 0
          %8278 = vmatpush1.bf16.msra.mxu0 %v8268
          %8279 = vmatprep.subr.bf16.mxu0 0
          %8280 = vmatpush1.bf16.msra.mxu0 %v8267
          %8281 = vmatprep.subr.bf16.mxu0 0
          %8282 = vmatpush1.bf16.msra.mxu0 %v8266
          %8283 = vmatprep.subr.bf16.mxu0 0
          %8284 = vmatpush1.bf16.msra.mxu0 %v8265
          %8285 = vmatprep.subr.bf16.mxu0 0
          %8286 = vmatpush1.bf16.msra.mxu0 %v8264
          %8287 = vmatprep.subr.bf16.mxu0 0
          %8288 = vmatpush1.bf16.msra.mxu0 %v8263
          %8289 = vmatprep.subr.bf16.mxu0 0
          %8290 = vmatpush1.bf16.msra.mxu0 %v8262
          %8291 = vmatprep.subr.bf16.mxu0 0
          %8292 = vmatpush1.bf16.msra.mxu0 %v8261
          %8293 = vmatprep.subr.bf16.mxu0 0
          %8294 = vmatpush2.bf16.msra.mxu0 0
          %8295 = vmatprep.subr.bf16.mxu0 0
          %8296 = vmatpush2.bf16.msra.mxu0 0
          %8297 = vmatprep.subr.bf16.mxu0 0
          %8298 = vmatpush2.bf16.msra.mxu0 0
          %8299 = vmatprep.subr.bf16.mxu0 0
          %8300 = vmatpush2.bf16.msra.mxu0 0
          %8301 = vmatprep.subr.bf16.mxu0 0
          %8302 = vmatpush2.bf16.msra.mxu0 0
          %8303 = vmatprep.subr.bf16.mxu0 0
          %8304 = vmatpush2.bf16.msra.mxu0 0
          %8305 = vmatprep.subr.bf16.mxu0 0
          %8306 = vmatpush2.bf16.msra.mxu0 0
          %8307 = vmatprep.subr.bf16.mxu0 0
          %8308 = vmatpush2.bf16.msra.mxu0 0
          %8309 = vmatprep.mubr.bf16.mxu0 0
          %8310 = vmatmul.mubr.bf16.gmra.mxu0 %v8213
          %v8311 = vpop.f32.mrf.mxu0
          %v8312 = vadd.f32 0.0, %v8311
          %v8313 = vpop.f32.mrf.mxu0
          %v8314 = vpop.f32.mrf.mxu0
          %v8315 = vadd.f32 0.0, %v8314
          %v8316 = vpop.f32.mrf.mxu0
          %8317 = vmatprep.mubr.bf16.mxu0 0
          %8318 = vmatmul.mubr.bf16.gmra.mxu0 %v8214
          %v8319 = vpop.f32.mrf.mxu0
          %v8320 = vadd.f32 0.0, %v8319
          %v8321 = vpop.f32.mrf.mxu0
          %v8322 = vpop.f32.mrf.mxu0
          %v8323 = vadd.f32 0.0, %v8322
          %v8324 = vpop.f32.mrf.mxu0
          %8325 = vmatprep.mubr.bf16.mxu0 0
          %8326 = vmatmul.mubr.bf16.gmra.mxu0 %v8215
          %v8327 = vpop.f32.mrf.mxu0
          %v8328 = vadd.f32 0.0, %v8327
          %v8329 = vpop.f32.mrf.mxu0
          %v8330 = vpop.f32.mrf.mxu0
          %v8331 = vadd.f32 0.0, %v8330
          %v8332 = vpop.f32.mrf.mxu0
          %8333 = vmatprep.mubr.bf16.mxu0 0
          %8334 = vmatmul.mubr.bf16.gmra.mxu0 %v8216
          %v8335 = vpop.f32.mrf.mxu0
          %v8336 = vadd.f32 0.0, %v8335
          %v8337 = vpop.f32.mrf.mxu0
          %v8338 = vpop.f32.mrf.mxu0
          %v8339 = vadd.f32 0.0, %v8338
          %v8340 = vpop.f32.mrf.mxu0
          %8341 = vmatprep.mubr.bf16.mxu0 0
          %8342 = vmatmul.mubr.bf16.gmra.mxu0 %v8217
          %v8343 = vpop.f32.mrf.mxu0
          %v8344 = vadd.f32 0.0, %v8343
          %v8345 = vpop.f32.mrf.mxu0
          %v8346 = vpop.f32.mrf.mxu0
          %v8347 = vadd.f32 0.0, %v8346
          %v8348 = vpop.f32.mrf.mxu0
          %8349 = vmatprep.mubr.bf16.mxu0 0
          %8350 = vmatmul.mubr.bf16.gmra.mxu0 %v8218
          %v8351 = vpop.f32.mrf.mxu0
          %v8352 = vadd.f32 0.0, %v8351
          %v8353 = vpop.f32.mrf.mxu0
          %v8354 = vpop.f32.mrf.mxu0
          %v8355 = vadd.f32 0.0, %v8354
          %v8356 = vpop.f32.mrf.mxu0
          %8357 = vmatprep.mubr.bf16.mxu0 0
          %8358 = vmatmul.mubr.bf16.gmra.mxu0 %v8219
          %v8359 = vpop.f32.mrf.mxu0
          %v8360 = vadd.f32 0.0, %v8359
          %v8361 = vpop.f32.mrf.mxu0
          %v8362 = vpop.f32.mrf.mxu0
          %v8363 = vadd.f32 0.0, %v8362
          %v8364 = vpop.f32.mrf.mxu0
          %8365 = vmatprep.mubr.bf16.mxu0 0
          %8366 = vmatmul.mubr.bf16.gmra.mxu0 %v8220
          %v8367 = vpop.f32.mrf.mxu0
          %v8368 = vadd.f32 0.0, %v8367
          %v8369 = vpop.f32.mrf.mxu0
          %v8370 = vpop.f32.mrf.mxu0
          %v8371 = vadd.f32 0.0, %v8370
          %v8372 = vpop.f32.mrf.mxu0
          %8373 = vdwg.mxu0
          %v8374 = vadd.f32 %v8131, %v8312
          %v8375 = vadd.f32 %v8132, %v8315
          %v8376 = vadd.f32 %v8133, %v8320
          %v8377 = vadd.f32 %v8134, %v8323
          %v8378 = vadd.f32 %v8135, %v8328
          %v8379 = vadd.f32 %v8136, %v8331
          %v8380 = vadd.f32 %v8137, %v8336
          %v8381 = vadd.f32 %v8138, %v8339
          %v8382 = vadd.f32 %v8139, %v8344
          %v8383 = vadd.f32 %v8140, %v8347
          %v8384 = vadd.f32 %v8141, %v8352
          %v8385 = vadd.f32 %v8142, %v8355
          %v8386 = vadd.f32 %v8143, %v8360
          %v8387 = vadd.f32 %v8144, %v8363
          %v8388 = vadd.f32 %v8145, %v8368
          %v8389 = vadd.f32 %v8146, %v8371
          %v8390 = vld [vmem:[%s8147] sm:$0xc]
          %v8391 = vld [vmem:[%s8147 + $0x4] sm:$0xf]
          %v8392 = vld [vmem:[%s8147 + $0x8] sm:$0x3]
          %v8393 = vld [vmem:[%s8147 + $0xc] sm:$0xc]
          %v8394 = vld [vmem:[%s8147 + $0x10] sm:$0xf]
          %v8395 = vld [vmem:[%s8147 + $0x14] sm:$0x3]
          %v8396 = vld [vmem:[%s8147 + $0x18] sm:$0xc]
          %v8397 = vld [vmem:[%s8147 + $0x1c] sm:$0xf]
          %v8398 = vld [vmem:[%s8147 + $0x20] sm:$0x3]
          %v8399 = vld [vmem:[%s8147 + $0x24] sm:$0xc]
          %v8400 = vld [vmem:[%s8147 + $0x28] sm:$0xf]
          %v8401 = vld [vmem:[%s8147 + $0x2c] sm:$0x3]
          %v8402 = vld [vmem:[%s8147 + $0x30] sm:$0xc]
          %v8403 = vld [vmem:[%s8147 + $0x34] sm:$0xf]
          %v8404 = vld [vmem:[%s8147 + $0x38] sm:$0x3]
          %v8405 = vld [vmem:[%s8147 + $0x3c] sm:$0xc]
          %v8406 = vld [vmem:[%s8147 + $0x40] sm:$0xf]
          %v8407 = vld [vmem:[%s8147 + $0x44] sm:$0x3]
          %v8408 = vld [vmem:[%s8147 + $0x48] sm:$0xc]
          %v8409 = vld [vmem:[%s8147 + $0x4c] sm:$0xf]
          %v8410 = vld [vmem:[%s8147 + $0x50] sm:$0x3]
          %v8411 = vld [vmem:[%s8147 + $0x54] sm:$0xc]
          %v8412 = vld [vmem:[%s8147 + $0x58] sm:$0xf]
          %v8413 = vld [vmem:[%s8147 + $0x5c] sm:$0x3]
          %v8438 = vrot.slane %v8390, 6
          %v8439 = vrot.slane %v8438, 4
          %v8440 = vrot.slane %v8391, 6
          %v8441 = vsel %vm6710, %v8439, %v8440
          %v8442 = vrot.slane %v8440, 4
          %v8443 = vrot.slane %v8392, 6
          %v8444 = vsel %vm6710, %v8442, %v8443
          %v8445 = vrot.slane %v8393, 6
          %v8446 = vrot.slane %v8445, 4
          %v8447 = vrot.slane %v8394, 6
          %v8448 = vsel %vm6710, %v8446, %v8447
          %v8449 = vrot.slane %v8447, 4
          %v8450 = vrot.slane %v8395, 6
          %v8451 = vsel %vm6710, %v8449, %v8450
          %v8452 = vrot.slane %v8396, 6
          %v8453 = vrot.slane %v8452, 4
          %v8454 = vrot.slane %v8397, 6
          %v8455 = vsel %vm6710, %v8453, %v8454
          %v8456 = vrot.slane %v8454, 4
          %v8457 = vrot.slane %v8398, 6
          %v8458 = vsel %vm6710, %v8456, %v8457
          %v8459 = vrot.slane %v8399, 6
          %v8460 = vrot.slane %v8459, 4
          %v8461 = vrot.slane %v8400, 6
          %v8462 = vsel %vm6710, %v8460, %v8461
          %v8463 = vrot.slane %v8461, 4
          %v8464 = vrot.slane %v8401, 6
          %v8465 = vsel %vm6710, %v8463, %v8464
          %v8466 = vrot.slane %v8402, 6
          %v8467 = vrot.slane %v8466, 4
          %v8468 = vrot.slane %v8403, 6
          %v8469 = vsel %vm6710, %v8467, %v8468
          %v8470 = vrot.slane %v8468, 4
          %v8471 = vrot.slane %v8404, 6
          %v8472 = vsel %vm6710, %v8470, %v8471
          %v8473 = vrot.slane %v8405, 6
          %v8474 = vrot.slane %v8473, 4
          %v8475 = vrot.slane %v8406, 6
          %v8476 = vsel %vm6710, %v8474, %v8475
          %v8477 = vrot.slane %v8475, 4
          %v8478 = vrot.slane %v8407, 6
          %v8479 = vsel %vm6710, %v8477, %v8478
          %v8480 = vrot.slane %v8408, 6
          %v8481 = vrot.slane %v8480, 4
          %v8482 = vrot.slane %v8409, 6
          %v8483 = vsel %vm6710, %v8481, %v8482
          %v8484 = vrot.slane %v8482, 4
          %v8485 = vrot.slane %v8410, 6
          %v8486 = vsel %vm6710, %v8484, %v8485
          %v8487 = vrot.slane %v8411, 6
          %v8488 = vrot.slane %v8487, 4
          %v8489 = vrot.slane %v8412, 6
          %v8490 = vsel %vm6710, %v8488, %v8489
          %v8491 = vrot.slane %v8489, 4
          %v8492 = vrot.slane %v8413, 6
          %v8493 = vsel %vm6710, %v8491, %v8492
          %s8494 = scalar_lea.vmem %s173, 448 [#allocation4]
          %v8495 = vld [vmem:[%s8494] sm:$0xf]
          %v8496 = vld [vmem:[%s8494 + $0x4] sm:$0xf]
          %v8497 = vld [vmem:[%s8494 + $0x8] sm:$0xf]
          %v8498 = vld [vmem:[%s8494 + $0xc] sm:$0xf]
          %v8499 = vld [vmem:[%s8494 + $0x10] sm:$0xf]
          %v8500 = vld [vmem:[%s8494 + $0x14] sm:$0xf]
          %v8501 = vld [vmem:[%s8494 + $0x18] sm:$0xf]
          %v8502 = vld [vmem:[%s8494 + $0x1c] sm:$0xf]
          %v8503 = vld [vmem:[%s8494 + $0x20] sm:$0xf]
          %v8504 = vld [vmem:[%s8494 + $0x24] sm:$0xf]
          %v8505 = vld [vmem:[%s8494 + $0x28] sm:$0xf]
          %v8506 = vld [vmem:[%s8494 + $0x2c] sm:$0xf]
          %v8507 = vld [vmem:[%s8494 + $0x30] sm:$0xf]
          %v8508 = vld [vmem:[%s8494 + $0x34] sm:$0xf]
          %v8509 = vld [vmem:[%s8494 + $0x38] sm:$0xf]
          %v8510 = vld [vmem:[%s8494 + $0x3c] sm:$0xf]
          %v8511 = vunpack.c.l.b16 %v8441
          %v8512 = vunpack.c.l.b16 %v8444
          %v8513 = vunpack.c.l.b16 %v8448
          %v8514 = vunpack.c.l.b16 %v8451
          %v8515 = vunpack.c.l.b16 %v8455
          %v8516 = vunpack.c.l.b16 %v8458
          %v8517 = vunpack.c.l.b16 %v8462
          %v8518 = vunpack.c.l.b16 %v8465
          %v8519 = vunpack.c.l.b16 %v8469
          %v8520 = vunpack.c.l.b16 %v8472
          %v8521 = vunpack.c.l.b16 %v8476
          %v8522 = vunpack.c.l.b16 %v8479
          %v8523 = vunpack.c.l.b16 %v8483
          %v8524 = vunpack.c.l.b16 %v8486
          %v8525 = vunpack.c.l.b16 %v8490
          %v8526 = vunpack.c.l.b16 %v8493
          %v8527 = vpack.c.b16 %v8512, %v8511
          %v8528 = vpack.c.b16 %v8514, %v8513
          %v8529 = vpack.c.b16 %v8516, %v8515
          %v8530 = vpack.c.b16 %v8518, %v8517
          %v8531 = vpack.c.b16 %v8520, %v8519
          %v8532 = vpack.c.b16 %v8522, %v8521
          %v8533 = vpack.c.b16 %v8524, %v8523
          %v8534 = vpack.c.b16 %v8526, %v8525
          %v8559 = vunpack.c.l.b16 %v8495
          %v8560 = vunpack.c.l.b16 %v8496
          %v8561 = vunpack.c.l.b16 %v8497
          %v8562 = vunpack.c.l.b16 %v8498
          %v8563 = vunpack.c.l.b16 %v8499
          %v8564 = vunpack.c.l.b16 %v8500
          %v8565 = vunpack.c.l.b16 %v8501
          %v8566 = vunpack.c.l.b16 %v8502
          %v8567 = vunpack.c.l.b16 %v8503
          %v8568 = vunpack.c.l.b16 %v8504
          %v8569 = vunpack.c.l.b16 %v8505
          %v8570 = vunpack.c.l.b16 %v8506
          %v8571 = vunpack.c.l.b16 %v8507
          %v8572 = vunpack.c.l.b16 %v8508
          %v8573 = vunpack.c.l.b16 %v8509
          %v8574 = vunpack.c.l.b16 %v8510
          %v8575 = vpack.c.b16 %v8560, %v8559
          %v8576 = vpack.c.b16 %v8562, %v8561
          %v8577 = vpack.c.b16 %v8564, %v8563
          %v8578 = vpack.c.b16 %v8566, %v8565
          %v8579 = vpack.c.b16 %v8568, %v8567
          %v8580 = vpack.c.b16 %v8570, %v8569
          %v8581 = vpack.c.b16 %v8572, %v8571
          %v8582 = vpack.c.b16 %v8574, %v8573
          %8591 = vmatprep.subr.bf16.mxu0 0
          %8592 = vmatpush1.bf16.msra.mxu0 %v8582
          %8593 = vmatprep.subr.bf16.mxu0 0
          %8594 = vmatpush1.bf16.msra.mxu0 %v8581
          %8595 = vmatprep.subr.bf16.mxu0 0
          %8596 = vmatpush1.bf16.msra.mxu0 %v8580
          %8597 = vmatprep.subr.bf16.mxu0 0
          %8598 = vmatpush1.bf16.msra.mxu0 %v8579
          %8599 = vmatprep.subr.bf16.mxu0 0
          %8600 = vmatpush1.bf16.msra.mxu0 %v8578
          %8601 = vmatprep.subr.bf16.mxu0 0
          %8602 = vmatpush1.bf16.msra.mxu0 %v8577
          %8603 = vmatprep.subr.bf16.mxu0 0
          %8604 = vmatpush1.bf16.msra.mxu0 %v8576
          %8605 = vmatprep.subr.bf16.mxu0 0
          %8606 = vmatpush1.bf16.msra.mxu0 %v8575
          %8607 = vmatprep.subr.bf16.mxu0 0
          %8608 = vmatpush2.bf16.msra.mxu0 0
          %8609 = vmatprep.subr.bf16.mxu0 0
          %8610 = vmatpush2.bf16.msra.mxu0 0
          %8611 = vmatprep.subr.bf16.mxu0 0
          %8612 = vmatpush2.bf16.msra.mxu0 0
          %8613 = vmatprep.subr.bf16.mxu0 0
          %8614 = vmatpush2.bf16.msra.mxu0 0
          %8615 = vmatprep.subr.bf16.mxu0 0
          %8616 = vmatpush2.bf16.msra.mxu0 0
          %8617 = vmatprep.subr.bf16.mxu0 0
          %8618 = vmatpush2.bf16.msra.mxu0 0
          %8619 = vmatprep.subr.bf16.mxu0 0
          %8620 = vmatpush2.bf16.msra.mxu0 0
          %8621 = vmatprep.subr.bf16.mxu0 0
          %8622 = vmatpush2.bf16.msra.mxu0 0
          %8623 = vmatprep.mubr.bf16.mxu0 0
          %8624 = vmatmul.mubr.bf16.gmra.mxu0 %v8527
          %v8625 = vpop.f32.mrf.mxu0
          %v8626 = vadd.f32 0.0, %v8625
          %v8627 = vpop.f32.mrf.mxu0
          %v8628 = vpop.f32.mrf.mxu0
          %v8629 = vadd.f32 0.0, %v8628
          %v8630 = vpop.f32.mrf.mxu0
          %8631 = vmatprep.mubr.bf16.mxu0 0
          %8632 = vmatmul.mubr.bf16.gmra.mxu0 %v8528
          %v8633 = vpop.f32.mrf.mxu0
          %v8634 = vadd.f32 0.0, %v8633
          %v8635 = vpop.f32.mrf.mxu0
          %v8636 = vpop.f32.mrf.mxu0
          %v8637 = vadd.f32 0.0, %v8636
          %v8638 = vpop.f32.mrf.mxu0
          %8639 = vmatprep.mubr.bf16.mxu0 0
          %8640 = vmatmul.mubr.bf16.gmra.mxu0 %v8529
          %v8641 = vpop.f32.mrf.mxu0
          %v8642 = vadd.f32 0.0, %v8641
          %v8643 = vpop.f32.mrf.mxu0
          %v8644 = vpop.f32.mrf.mxu0
          %v8645 = vadd.f32 0.0, %v8644
          %v8646 = vpop.f32.mrf.mxu0
          %8647 = vmatprep.mubr.bf16.mxu0 0
          %8648 = vmatmul.mubr.bf16.gmra.mxu0 %v8530
          %v8649 = vpop.f32.mrf.mxu0
          %v8650 = vadd.f32 0.0, %v8649
          %v8651 = vpop.f32.mrf.mxu0
          %v8652 = vpop.f32.mrf.mxu0
          %v8653 = vadd.f32 0.0, %v8652
          %v8654 = vpop.f32.mrf.mxu0
          %8655 = vmatprep.mubr.bf16.mxu0 0
          %8656 = vmatmul.mubr.bf16.gmra.mxu0 %v8531
          %v8657 = vpop.f32.mrf.mxu0
          %v8658 = vadd.f32 0.0, %v8657
          %v8659 = vpop.f32.mrf.mxu0
          %v8660 = vpop.f32.mrf.mxu0
          %v8661 = vadd.f32 0.0, %v8660
          %v8662 = vpop.f32.mrf.mxu0
          %8663 = vmatprep.mubr.bf16.mxu0 0
          %8664 = vmatmul.mubr.bf16.gmra.mxu0 %v8532
          %v8665 = vpop.f32.mrf.mxu0
          %v8666 = vadd.f32 0.0, %v8665
          %v8667 = vpop.f32.mrf.mxu0
          %v8668 = vpop.f32.mrf.mxu0
          %v8669 = vadd.f32 0.0, %v8668
          %v8670 = vpop.f32.mrf.mxu0
          %8671 = vmatprep.mubr.bf16.mxu0 0
          %8672 = vmatmul.mubr.bf16.gmra.mxu0 %v8533
          %v8673 = vpop.f32.mrf.mxu0
          %v8674 = vadd.f32 0.0, %v8673
          %v8675 = vpop.f32.mrf.mxu0
          %v8676 = vpop.f32.mrf.mxu0
          %v8677 = vadd.f32 0.0, %v8676
          %v8678 = vpop.f32.mrf.mxu0
          %8679 = vmatprep.mubr.bf16.mxu0 0
          %8680 = vmatmul.mubr.bf16.gmra.mxu0 %v8534
          %v8681 = vpop.f32.mrf.mxu0
          %v8682 = vadd.f32 0.0, %v8681
          %v8683 = vpop.f32.mrf.mxu0
          %v8684 = vpop.f32.mrf.mxu0
          %v8685 = vadd.f32 0.0, %v8684
          %v8686 = vpop.f32.mrf.mxu0
          %8687 = vdwg.mxu0
          %v8688 = vadd.f32 %v8374, %v8626
          %v8689 = vadd.f32 %v8375, %v8629
          %v8690 = vadd.f32 %v8376, %v8634
          %v8691 = vadd.f32 %v8377, %v8637
          %v8692 = vadd.f32 %v8378, %v8642
          %v8693 = vadd.f32 %v8379, %v8645
          %v8694 = vadd.f32 %v8380, %v8650
          %v8695 = vadd.f32 %v8381, %v8653
          %v8696 = vadd.f32 %v8382, %v8658
          %v8697 = vadd.f32 %v8383, %v8661
          %v8698 = vadd.f32 %v8384, %v8666
          %v8699 = vadd.f32 %v8385, %v8669
          %v8700 = vadd.f32 %v8386, %v8674
          %v8701 = vadd.f32 %v8387, %v8677
          %v8702 = vadd.f32 %v8388, %v8682
          %v8703 = vadd.f32 %v8389, %v8685
          %v8704 = vld [vmem:[%s8147 + $0x8] sm:$0xf]
          %v8705 = vld [vmem:[%s8147 + $0x14] sm:$0xf]
          %v8706 = vld [vmem:[%s8147 + $0x20] sm:$0xf]
          %v8707 = vld [vmem:[%s8147 + $0x2c] sm:$0xf]
          %v8708 = vld [vmem:[%s8147 + $0x38] sm:$0xf]
          %v8709 = vld [vmem:[%s8147 + $0x44] sm:$0xf]
          %v8710 = vld [vmem:[%s8147 + $0x50] sm:$0xf]
          %v8711 = vld [vmem:[%s8147 + $0x5c] sm:$0xf]
          %s8712 = scalar_lea.vmem %s173, 512 [#allocation4]
          %v8713 = vld [vmem:[%s8712] sm:$0xf]
          %v8714 = vld [vmem:[%s8712 + $0x4] sm:$0xf]
          %v8715 = vld [vmem:[%s8712 + $0x8] sm:$0xf]
          %v8716 = vld [vmem:[%s8712 + $0xc] sm:$0xf]
          %v8717 = vld [vmem:[%s8712 + $0x10] sm:$0xf]
          %v8718 = vld [vmem:[%s8712 + $0x14] sm:$0xf]
          %v8719 = vld [vmem:[%s8712 + $0x18] sm:$0xf]
          %v8720 = vld [vmem:[%s8712 + $0x1c] sm:$0xf]
          %v8721 = vld [vmem:[%s8712 + $0x20] sm:$0xf]
          %v8722 = vld [vmem:[%s8712 + $0x24] sm:$0xf]
          %v8723 = vld [vmem:[%s8712 + $0x28] sm:$0xf]
          %v8724 = vld [vmem:[%s8712 + $0x2c] sm:$0xf]
          %v8725 = vld [vmem:[%s8712 + $0x30] sm:$0xf]
          %v8726 = vld [vmem:[%s8712 + $0x34] sm:$0xf]
          %v8727 = vld [vmem:[%s8712 + $0x38] sm:$0xf]
          %v8728 = vld [vmem:[%s8712 + $0x3c] sm:$0xf]
          %v8737 = vunpack.c.l.b16 %v8391
          %v8738 = vunpack.c.l.b16 %v8704
          %v8739 = vunpack.c.l.b16 %v8394
          %v8740 = vunpack.c.l.b16 %v8705
          %v8741 = vunpack.c.l.b16 %v8397
          %v8742 = vunpack.c.l.b16 %v8706
          %v8743 = vunpack.c.l.b16 %v8400
          %v8744 = vunpack.c.l.b16 %v8707
          %v8745 = vunpack.c.l.b16 %v8403
          %v8746 = vunpack.c.l.b16 %v8708
          %v8747 = vunpack.c.l.b16 %v8406
          %v8748 = vunpack.c.l.b16 %v8709
          %v8749 = vunpack.c.l.b16 %v8409
          %v8750 = vunpack.c.l.b16 %v8710
          %v8751 = vunpack.c.l.b16 %v8412
          %v8752 = vunpack.c.l.b16 %v8711
          %v8753 = vpack.c.b16 %v8738, %v8737
          %v8754 = vpack.c.b16 %v8740, %v8739
          %v8755 = vpack.c.b16 %v8742, %v8741
          %v8756 = vpack.c.b16 %v8744, %v8743
          %v8757 = vpack.c.b16 %v8746, %v8745
          %v8758 = vpack.c.b16 %v8748, %v8747
          %v8759 = vpack.c.b16 %v8750, %v8749
          %v8760 = vpack.c.b16 %v8752, %v8751
          %v8785 = vunpack.c.l.b16 %v8713
          %v8786 = vunpack.c.l.b16 %v8714
          %v8787 = vunpack.c.l.b16 %v8715
          %v8788 = vunpack.c.l.b16 %v8716
          %v8789 = vunpack.c.l.b16 %v8717
          %v8790 = vunpack.c.l.b16 %v8718
          %v8791 = vunpack.c.l.b16 %v8719
          %v8792 = vunpack.c.l.b16 %v8720
          %v8793 = vunpack.c.l.b16 %v8721
          %v8794 = vunpack.c.l.b16 %v8722
          %v8795 = vunpack.c.l.b16 %v8723
          %v8796 = vunpack.c.l.b16 %v8724
          %v8797 = vunpack.c.l.b16 %v8725
          %v8798 = vunpack.c.l.b16 %v8726
          %v8799 = vunpack.c.l.b16 %v8727
          %v8800 = vunpack.c.l.b16 %v8728
          %v8801 = vpack.c.b16 %v8786, %v8785
          %v8802 = vpack.c.b16 %v8788, %v8787
          %v8803 = vpack.c.b16 %v8790, %v8789
          %v8804 = vpack.c.b16 %v8792, %v8791
          %v8805 = vpack.c.b16 %v8794, %v8793
          %v8806 = vpack.c.b16 %v8796, %v8795
          %v8807 = vpack.c.b16 %v8798, %v8797
          %v8808 = vpack.c.b16 %v8800, %v8799
          %8817 = vmatprep.subr.bf16.mxu0 0
          %8818 = vmatpush1.bf16.msra.mxu0 %v8808
          %8819 = vmatprep.subr.bf16.mxu0 0
          %8820 = vmatpush1.bf16.msra.mxu0 %v8807
          %8821 = vmatprep.subr.bf16.mxu0 0
          %8822 = vmatpush1.bf16.msra.mxu0 %v8806
          %8823 = vmatprep.subr.bf16.mxu0 0
          %8824 = vmatpush1.bf16.msra.mxu0 %v8805
          %8825 = vmatprep.subr.bf16.mxu0 0
          %8826 = vmatpush1.bf16.msra.mxu0 %v8804
          %8827 = vmatprep.subr.bf16.mxu0 0
          %8828 = vmatpush1.bf16.msra.mxu0 %v8803
          %8829 = vmatprep.subr.bf16.mxu0 0
          %8830 = vmatpush1.bf16.msra.mxu0 %v8802
          %8831 = vmatprep.subr.bf16.mxu0 0
          %8832 = vmatpush1.bf16.msra.mxu0 %v8801
          %8833 = vmatprep.subr.bf16.mxu0 0
          %8834 = vmatpush2.bf16.msra.mxu0 0
          %8835 = vmatprep.subr.bf16.mxu0 0
          %8836 = vmatpush2.bf16.msra.mxu0 0
          %8837 = vmatprep.subr.bf16.mxu0 0
          %8838 = vmatpush2.bf16.msra.mxu0 0
          %8839 = vmatprep.subr.bf16.mxu0 0
          %8840 = vmatpush2.bf16.msra.mxu0 0
          %8841 = vmatprep.subr.bf16.mxu0 0
          %8842 = vmatpush2.bf16.msra.mxu0 0
          %8843 = vmatprep.subr.bf16.mxu0 0
          %8844 = vmatpush2.bf16.msra.mxu0 0
          %8845 = vmatprep.subr.bf16.mxu0 0
          %8846 = vmatpush2.bf16.msra.mxu0 0
          %8847 = vmatprep.subr.bf16.mxu0 0
          %8848 = vmatpush2.bf16.msra.mxu0 0
          %8849 = vmatprep.mubr.bf16.mxu0 0
          %8850 = vmatmul.mubr.bf16.gmra.mxu0 %v8753
          %v8851 = vpop.f32.mrf.mxu0
          %v8852 = vadd.f32 0.0, %v8851
          %v8853 = vpop.f32.mrf.mxu0
          %v8854 = vpop.f32.mrf.mxu0
          %v8855 = vadd.f32 0.0, %v8854
          %v8856 = vpop.f32.mrf.mxu0
          %8857 = vmatprep.mubr.bf16.mxu0 0
          %8858 = vmatmul.mubr.bf16.gmra.mxu0 %v8754
          %v8859 = vpop.f32.mrf.mxu0
          %v8860 = vadd.f32 0.0, %v8859
          %v8861 = vpop.f32.mrf.mxu0
          %v8862 = vpop.f32.mrf.mxu0
          %v8863 = vadd.f32 0.0, %v8862
          %v8864 = vpop.f32.mrf.mxu0
          %8865 = vmatprep.mubr.bf16.mxu0 0
          %8866 = vmatmul.mubr.bf16.gmra.mxu0 %v8755
          %v8867 = vpop.f32.mrf.mxu0
          %v8868 = vadd.f32 0.0, %v8867
          %v8869 = vpop.f32.mrf.mxu0
          %v8870 = vpop.f32.mrf.mxu0
          %v8871 = vadd.f32 0.0, %v8870
          %v8872 = vpop.f32.mrf.mxu0
          %8873 = vmatprep.mubr.bf16.mxu0 0
          %8874 = vmatmul.mubr.bf16.gmra.mxu0 %v8756
          %v8875 = vpop.f32.mrf.mxu0
          %v8876 = vadd.f32 0.0, %v8875
          %v8877 = vpop.f32.mrf.mxu0
          %v8878 = vpop.f32.mrf.mxu0
          %v8879 = vadd.f32 0.0, %v8878
          %v8880 = vpop.f32.mrf.mxu0
          %8881 = vmatprep.mubr.bf16.mxu0 0
          %8882 = vmatmul.mubr.bf16.gmra.mxu0 %v8757
          %v8883 = vpop.f32.mrf.mxu0
          %v8884 = vadd.f32 0.0, %v8883
          %v8885 = vpop.f32.mrf.mxu0
          %v8886 = vpop.f32.mrf.mxu0
          %v8887 = vadd.f32 0.0, %v8886
          %v8888 = vpop.f32.mrf.mxu0
          %8889 = vmatprep.mubr.bf16.mxu0 0
          %8890 = vmatmul.mubr.bf16.gmra.mxu0 %v8758
          %v8891 = vpop.f32.mrf.mxu0
          %v8892 = vadd.f32 0.0, %v8891
          %v8893 = vpop.f32.mrf.mxu0
          %v8894 = vpop.f32.mrf.mxu0
          %v8895 = vadd.f32 0.0, %v8894
          %v8896 = vpop.f32.mrf.mxu0
          %8897 = vmatprep.mubr.bf16.mxu0 0
          %8898 = vmatmul.mubr.bf16.gmra.mxu0 %v8759
          %v8899 = vpop.f32.mrf.mxu0
          %v8900 = vadd.f32 0.0, %v8899
          %v8901 = vpop.f32.mrf.mxu0
          %v8902 = vpop.f32.mrf.mxu0
          %v8903 = vadd.f32 0.0, %v8902
          %v8904 = vpop.f32.mrf.mxu0
          %8905 = vmatprep.mubr.bf16.mxu0 0
          %8906 = vmatmul.mubr.bf16.gmra.mxu0 %v8760
          %v8907 = vpop.f32.mrf.mxu0
          %v8908 = vadd.f32 0.0, %v8907
          %v8909 = vpop.f32.mrf.mxu0
          %v8910 = vpop.f32.mrf.mxu0
          %v8911 = vadd.f32 0.0, %v8910
          %v8912 = vpop.f32.mrf.mxu0
          %8913 = vdwg.mxu0
          %v8914 = vadd.f32 %v8688, %v8852
          %v8915 = vadd.f32 %v8689, %v8855
          %v8916 = vadd.f32 %v8690, %v8860
          %v8917 = vadd.f32 %v8691, %v8863
          %v8918 = vadd.f32 %v8692, %v8868
          %v8919 = vadd.f32 %v8693, %v8871
          %v8920 = vadd.f32 %v8694, %v8876
          %v8921 = vadd.f32 %v8695, %v8879
          %v8922 = vadd.f32 %v8696, %v8884
          %v8923 = vadd.f32 %v8697, %v8887
          %v8924 = vadd.f32 %v8698, %v8892
          %v8925 = vadd.f32 %v8699, %v8895
          %v8926 = vadd.f32 %v8700, %v8900
          %v8927 = vadd.f32 %v8701, %v8903
          %v8928 = vadd.f32 %v8702, %v8908
          %v8929 = vadd.f32 %v8703, %v8911
          %v8930 = vld [vmem:[%s199] sm:$0x1]
          %v8932 = vlaneseq
          %v8933 = vshrl.u32 %v8932, 7
          %v8934 = vsub.s32 0, %v8933
          %v8935 = vrot.slane %v8930, %v8934
          %v8937 = vadd.f32 %v8914, %v8935
          %v8938 = vadd.f32 %v8915, %v8935
          %v8939 = vadd.f32 %v8916, %v8935
          %v8940 = vadd.f32 %v8917, %v8935
          %v8941 = vadd.f32 %v8918, %v8935
          %v8942 = vadd.f32 %v8919, %v8935
          %v8943 = vadd.f32 %v8920, %v8935
          %v8944 = vadd.f32 %v8921, %v8935
          %v8945 = vadd.f32 %v8922, %v8935
          %v8946 = vadd.f32 %v8923, %v8935
          %v8947 = vadd.f32 %v8924, %v8935
          %v8948 = vadd.f32 %v8925, %v8935
          %v8949 = vadd.f32 %v8926, %v8935
          %v8950 = vadd.f32 %v8927, %v8935
          %v8951 = vadd.f32 %v8928, %v8935
          %v8952 = vadd.f32 %v8929, %v8935
          %v8953 = vmax.f32 %v8937, 0.0
          %v8954 = vmax.f32 %v8938, 0.0
          %v8955 = vmax.f32 %v8939, 0.0
          %v8956 = vmax.f32 %v8940, 0.0
          %v8957 = vmax.f32 %v8941, 0.0
          %v8958 = vmax.f32 %v8942, 0.0
          %v8959 = vmax.f32 %v8943, 0.0
          %v8960 = vmax.f32 %v8944, 0.0
          %v8961 = vmax.f32 %v8945, 0.0
          %v8962 = vmax.f32 %v8946, 0.0
          %v8963 = vmax.f32 %v8947, 0.0
          %v8964 = vmax.f32 %v8948, 0.0
          %v8965 = vmax.f32 %v8949, 0.0
          %v8966 = vmax.f32 %v8950, 0.0
          %v8967 = vmax.f32 %v8951, 0.0
          %v8968 = vmax.f32 %v8952, 0.0
          %v8969 = vpack.c.bf16 %v8954, %v8953
          %v8970 = vpack.c.bf16 %v8956, %v8955
          %v8971 = vpack.c.bf16 %v8958, %v8957
          %v8972 = vpack.c.bf16 %v8960, %v8959
          %v8973 = vpack.c.bf16 %v8962, %v8961
          %v8974 = vpack.c.bf16 %v8964, %v8963
          %v8975 = vpack.c.bf16 %v8966, %v8965
          %v8976 = vpack.c.bf16 %v8968, %v8967
          %v8985 = vunpack.c.l.b16 %v8969
          %v8986 = vunpack.c.h.b16 %v8969
          %v8987 = vunpack.c.l.b16 %v8970
          %v8988 = vunpack.c.h.b16 %v8970
          %v8989 = vunpack.c.l.b16 %v8971
          %v8990 = vunpack.c.h.b16 %v8971
          %v8991 = vunpack.c.l.b16 %v8972
          %v8992 = vunpack.c.h.b16 %v8972
          %v8993 = vunpack.c.l.b16 %v8973
          %v8994 = vunpack.c.h.b16 %v8973
          %v8995 = vunpack.c.l.b16 %v8974
          %v8996 = vunpack.c.h.b16 %v8974
          %v8997 = vunpack.c.l.b16 %v8975
          %v8998 = vunpack.c.h.b16 %v8975
          %v8999 = vunpack.c.l.b16 %v8976
          %v9000 = vunpack.c.h.b16 %v8976
          %v9001 = vpack.c.b16 %v8985, %v8985
          %v9002 = vpack.c.b16 %v8986, %v8986
          %v9003 = vpack.c.b16 %v8987, %v8987
          %v9004 = vpack.c.b16 %v8988, %v8988
          %v9005 = vpack.c.b16 %v8989, %v8989
          %v9006 = vpack.c.b16 %v8990, %v8990
          %v9007 = vpack.c.b16 %v8991, %v8991
          %v9008 = vpack.c.b16 %v8992, %v8992
          %v9009 = vpack.c.b16 %v8993, %v8993
          %v9010 = vpack.c.b16 %v8994, %v8994
          %v9011 = vpack.c.b16 %v8995, %v8995
          %v9012 = vpack.c.b16 %v8996, %v8996
          %v9013 = vpack.c.b16 %v8997, %v8997
          %v9014 = vpack.c.b16 %v8998, %v8998
          %v9015 = vpack.c.b16 %v8999, %v8999
          %v9016 = vpack.c.b16 %v9000, %v9000
          %9033 = vst [vmem:[%s196] sm:$0xf] %v9001
          %9034 = vst [vmem:[%s196 + $0x4] sm:$0xf] %v9002
          %9035 = vst [vmem:[%s196 + $0x8] sm:$0xf] %v9003
          %9036 = vst [vmem:[%s196 + $0xc] sm:$0xf] %v9004
          %9037 = vst [vmem:[%s196 + $0x10] sm:$0xf] %v9005
          %9038 = vst [vmem:[%s196 + $0x14] sm:$0xf] %v9006
          %9039 = vst [vmem:[%s196 + $0x18] sm:$0xf] %v9007
          %9040 = vst [vmem:[%s196 + $0x1c] sm:$0xf] %v9008
          %9041 = vst [vmem:[%s196 + $0x20] sm:$0xf] %v9009
          %9042 = vst [vmem:[%s196 + $0x24] sm:$0xf] %v9010
          %9043 = vst [vmem:[%s196 + $0x28] sm:$0xf] %v9011
          %9044 = vst [vmem:[%s196 + $0x2c] sm:$0xf] %v9012
          %9045 = vst [vmem:[%s196 + $0x30] sm:$0xf] %v9013
          %9046 = vst [vmem:[%s196 + $0x34] sm:$0xf] %v9014
          %9047 = vst [vmem:[%s196 + $0x38] sm:$0xf] %v9015
          %9048 = vst [vmem:[%s196 + $0x3c] sm:$0xf] %v9016
        $region48: #{tpu_custom_call.1} parent=27 // pred_fallthru
          _
        %s9049 = sand.u32 %s103, 1
        %s9050 = scalar_lea.sflag [#allocation6], %s9049
        %s9051 = sand.u32 %s103, 1
        %s9052 = smul.addr %s9051, 64
        %s9053 = scalar_lea.vmem [#allocation7], %s9052
        // Predicated region
        $region49: #{tpu_custom_call.1} parent=27 // pred_check
          %p9054 = pneg %p113
        $region50: #{tpu_custom_call.1} parent=27 // pred_check_branch
          %9056 = sbr.rel (%p9054) target = $region52
        $region51: #{tpu_custom_call.1} parent=27 // pred_region
          %s9057 = smul.u32 8, %s26
          %s9059 = ssub.s32 1024, 1024
          %9060 = vsyncadd %s9050, %s9059
          %s9061 = smul.addr %s9057, 2
          %s9062 = smul.addr %s27, 32
          %s9063 = sadd.s32 %s9061, %s9062
          %s9064 = smul.addr %s25, 96
          %s9065 = sadd.s32 %s9063, %s9064
          %s9066 = smul.addr %s9065, 64
          %s9067 = scalar_lea.hbm %s3, %s9066
          %s9068 = sshll.u32 %s9053, 4
          %s9069 = int_to_ptr.vmem [resolvable:$true] %s9068
          %9074 = dma.vmem_to_hbm [thread:$0]  %s9069, 1024, %s9067, %s9050, 64, 64, 4
        $region52: #{tpu_custom_call.1} parent=27 // pred_fallthru
          _
      $region28: #{tpu_custom_call.1} parent=5 // pred_fallthru
        _
      %p9075 = scmp.le.s32.totalorder 2, %s15
      // Predicated region
      $region53: #{tpu_custom_call.1} parent=5 // pred_check
        %p9076 = pneg %p9075
      $region54: #{tpu_custom_call.1} parent=5 // pred_check_branch
        %9078 = sbr.rel (%p9076) target = $region56
      $region55: #{tpu_custom_call.1} parent=5 // pred_region
        %s9079 = ssub.s32 %s15, 2
        // Predicated region
        $region57: #{tpu_custom_call.1} parent=55 // pred_check
          %p9080 = pneg %p119
        $region58: #{tpu_custom_call.1} parent=55 // pred_check_branch
          %9082 = sbr.rel (%p9080) target = $region60
        $region59: #{tpu_custom_call.1} parent=55 // pred_region
          %s9083 = sand.u32 %s104, 1
          %s9084 = scalar_lea.sflag [#allocation6], %s9083
          %s9085 = sand.u32 %s104, 1
          %s9086 = smul.addr %s9085, 64
          %s9087 = scalar_lea.vmem [#allocation7], %s9086
          %9088 = dma.done %s9084, 1024
        $region60: #{tpu_custom_call.1} parent=55 // pred_fallthru
          _
      $region56: #{tpu_custom_call.1} parent=5 // pred_fallthru
        _
    $region6: #{tpu_custom_call.1} parent=1 // loop_footer
      %s19 = sadd.s32 1, %s15
    $region7: #{tpu_custom_call.1} parent=1 // loop_footer_branch
      %14 = sbr.rel target = $region3
    $region8: #{tpu_custom_call.1} parent=1 // loop_exit
      _
    %9089 = vsyncpa [#allocation5], 1
    %s9090 = scalar_lea.sflag [#allocation5], 1
    %9091 = vsyncpa %s9090, 1
    %9092 = vsyncpa [#allocation6], 1
    %s9093 = scalar_lea.sflag [#allocation6], 1
    %9094 = vsyncpa %s9093, 1
  %9095 = vsyncmov [#allocation3]
  %s9096 = vpop.sfrf %9095
  %p9097 = scmp.eq.s32.totalorder %s9096, 0
  %p9098 = pneg %p9097
  %9100 = shalt.err (%p9098)

</llo_original>
